<compile_context>
chip_gen: v6e
topology: v6e:2x2x1
jax: 0.10.0
libtpu: 0.0.40
codegen_flags: <defaults>
</compile_context>

<pallas_src>
import functools

import jax
import jax.numpy as jnp
from jax.experimental import pallas as pl
from jax.experimental.pallas import tpu as pltpu

LN_EPS = 1e-5   # nn.LayerNorm default eps
BN_EPS = 1e-5   # nn.BatchNorm1d default eps
GCN_EPS = 1e-5  # GatedGCN epsilon


# ----------------------------- in-kernel helpers -----------------------------

def _sigmoid(x):
    return 1.0 / (1.0 + jnp.exp(-x))


def _silu(x):
    return x * _sigmoid(x)


def _layernorm(h, g, b):
    mu = jnp.mean(h, axis=-1, keepdims=True)
    var = jnp.mean((h - mu) ** 2, axis=-1, keepdims=True)
    return (h - mu) * jax.lax.rsqrt(var + LN_EPS) * g + b


def _dot(a, b):
    return jnp.dot(a, b, preferred_element_type=jnp.float32)


# ----------------------------- Pallas kernels -----------------------------

def pre_fc_kernel(x1_ref, x2_ref, x3_ref, w1_ref, b1_ref, w2_ref, b2_ref,
                  w3_ref, b3_ref, o1_ref, o2_ref, o3_ref):
    # Three Linear + SiLU (pre_lin_list1/2/3) fused in one kernel invocation.
    o1_ref[...] = _silu(_dot(x1_ref[...], w1_ref[...]) + b1_ref[...])
    o2_ref[...] = _silu(_dot(x2_ref[...], w2_ref[...]) + b2_ref[...])
    o3_ref[...] = _silu(_dot(x3_ref[...], w3_ref[...]) + b3_ref[...])


def gated_gcn_kernel(row_ref, rowt_ref, col_ref, colt_ref, x_ref, e_ref,
                     w_src_ref, b_src_ref, w_dst_ref, b_dst_ref,
                     w_e_ref, b_e_ref, ln_x_g_ref, ln_x_b_ref,
                     ln_e_g_ref, ln_e_b_ref,
                     x_out_ref, e_out_ref, *, eps):
    """One full GatedGCN layer.  Graph gather/scatter done as one-hot matmuls
    on the MXU so everything stays in VMEM (no HBM round-trips / JAX glue).

    Reference semantics (i = edge_index[0], j = edge_index[1], PyG source_to_target):
      sigma_e = sigmoid(e);  e_sum = scatter_add(sigma_e, index=i)
      e_gated = sigma_e / (e_sum[i] + eps)
      agg     = scatter_add(e_gated * W_dst(x[i]), index=j)
      x_out   = x + SiLU(LN(W_src(x) + agg))
      e_out   = e + SiLU(LN(W_e([x[i] || x[j] || e])))
    """
    x = x_ref[...]                        # (N, D)
    e = e_ref[...]                        # (E, D)
    n_nodes = x.shape[0]
    n_edges = e.shape[0]
    dim = x.shape[1]

    # one-hot gather / scatter matrices built directly in VMEM from int32 indices
    iota_en = jax.lax.broadcasted_iota(jnp.int32, (n_edges, n_nodes), 1)
    iota_ne = jax.lax.broadcasted_iota(jnp.int32, (n_nodes, n_edges), 0)
    g_row = (iota_en == row_ref[...]).astype(jnp.float32)    # (E, N): gathers x[row]
    g_col = (iota_en == col_ref[...]).astype(jnp.float32)    # (E, N): gathers x[col]
    s_row = (iota_ne == rowt_ref[...]).astype(jnp.float32)   # (N, E): scatter-add by row
    s_col = (iota_ne == colt_ref[...]).astype(jnp.float32)   # (N, E): scatter-add by col

    # --- edge gating ---
    sigma_e = _sigmoid(e)
    e_sum = _dot(s_row, sigma_e)                 # segment_sum over edge_index[0]
    e_sum_row = _dot(g_row, e_sum)               # gather back by edge_index[0]
    e_gated = sigma_e * pl.reciprocal(e_sum_row + eps, approx=True)

    # --- message + aggregation (scatter-add onto edge_index[1]) ---
    x_row = _dot(g_row, x)                       # x_j (source nodes) = x[edge_index[0]]
    msg = e_gated * (_dot(x_row, w_dst_ref[...]) + b_dst_ref[...])
    agg = _dot(s_col, msg)                       # (N, D)

    # --- node update ---
    h = _dot(x, w_src_ref[...]) + b_src_ref[...] + agg
    x_out_ref[...] = x + _silu(_layernorm(h, ln_x_g_ref[...], ln_x_b_ref[...]))

    # --- edge update: W_e([x_i || x_j || e]) as sum of three sublane-sliced matmuls ---
    # TODO(synk): fuse into a single K=3*dim matmul via minor-dim concat once verified
    #             on the target Mosaic build (deepens K for the 256-deep v6e/v7x MXU).
    x_col = _dot(g_col, x)                       # x[edge_index[1]]
    w_e = w_e_ref[...]                           # (3*D, D)
    he = (_dot(x_row, w_e[:dim]) + _dot(x_col, w_e[dim:2 * dim])
          + _dot(e, w_e[2 * dim:]) + b_e_ref[...])
    e_out_ref[...] = e + _silu(_layernorm(he, ln_e_g_ref[...], ln_e_b_ref[...]))


def tail_kernel(batcht_ref, x_ref, bn_g_ref, bn_b_ref, post_w_ref, post_b_ref,
                out_w_ref, out_b_ref, y_ref):
    # BatchNorm1d(train stats) + SiLU + post-FC + SiLU + global_mean_pool + lin_out.
    x = x_ref[...]                               # (N, D)
    n_nodes = x.shape[0]
    n_graphs = y_ref.shape[0]

    mu = jnp.mean(x, axis=0, keepdims=True)
    var = jnp.mean((x - mu) ** 2, axis=0, keepdims=True)
    h = (x - mu) * jax.lax.rsqrt(var + BN_EPS) * bn_g_ref[...] + bn_b_ref[...]
    h = _silu(h)

    h = _silu(_dot(h, post_w_ref[...]) + post_b_ref[...])    # (N, P)

    # global_mean_pool via one-hot matmul on the MXU
    iota_gn = jax.lax.broadcasted_iota(jnp.int32, (n_graphs, n_nodes), 0)
    pool = (iota_gn == batcht_ref[...]).astype(jnp.float32)  # (G, N)
    counts = jnp.sum(pool, axis=1, keepdims=True)            # (G, 1)
    pooled = _dot(pool, h) / counts                          # (G, P)

    y_ref[...] = _dot(pooled, out_w_ref[...]) + out_b_ref[...]


# ----------------------------- pallas_call glue -----------------------------

def _full_spec(shape):
    nd = len(shape)
    return pl.BlockSpec(shape, lambda i, nd=nd: (0,) * nd)


def run_kernel(kernel, out_shapes, *args):
    """Invoke `kernel` with every operand as a single full-array VMEM block.

    out_shapes: either one shape tuple, or a tuple of shape tuples (multi-output).
    All outputs are float32.
    """
    multi = isinstance(out_shapes[0], (tuple, list))
    shapes = tuple(tuple(s) for s in out_shapes) if multi else (tuple(out_shapes),)
    res = pl.pallas_call(
        kernel,
        out_shape=tuple(jax.ShapeDtypeStruct(s, jnp.float32) for s in shapes),
        grid=(1,),
        in_specs=[_full_spec(a.shape) for a in args],
        out_specs=tuple(_full_spec(s) for s in shapes),
        compiler_params=pltpu.CompilerParams(dimension_semantics=("arbitrary",)),
    )(*args)
    return res if multi else res[0]


# ----------------------------- model (wrapper side) -----------------------------

def gated_gcn(x, edge_index, edge_attr, p):
    """One GatedGCN layer == one pallas_call."""
    n_edges = edge_attr.shape[0]
    row = edge_index[0].astype(jnp.int32)
    col = edge_index[1].astype(jnp.int32)
    x_new, e_new = run_kernel(
        functools.partial(gated_gcn_kernel, eps=GCN_EPS),
        (x.shape, edge_attr.shape),
        row.reshape(n_edges, 1), row.reshape(1, n_edges),
        col.reshape(n_edges, 1), col.reshape(1, n_edges),
        x, edge_attr,
        p["W_src"], p["b_src"], p["W_dst"], p["b_dst"],
        p["W_e"], p["b_e"],
        p["ln_x_g"], p["ln_x_b"], p["ln_e_g"], p["ln_e_b"])
    return x_new, e_new


def algnn_forward(params, x_atom, edge_index, edge_attr_atom, edge_index_line,
                  edge_attr_line, batch, num_graphs):
    dim = params["pre1_W"].shape[1]

    # --- pre FC (all three) + activation: one fused pallas_call ---
    node, e_atom, e_line = run_kernel(
        pre_fc_kernel,
        ((x_atom.shape[0], dim),
         (edge_attr_atom.shape[0], dim),
         (edge_attr_line.shape[0], dim)),
        x_atom, edge_attr_atom, edge_attr_line,
        params["pre1_W"], params["pre1_b"],
        params["pre2_W"], params["pre2_b"],
        params["pre3_W"], params["pre3_b"])

    # --- GatedGCN stack: line graph conv then atom graph conv ---
    for p_line, p_atom in zip(params["conv_line"], params["conv_atom"]):
        e_atom, e_line = gated_gcn(e_atom, edge_index_line, e_line, p_line)
        node, e_atom = gated_gcn(node, edge_index, e_atom, p_atom)
        # dropout_rate = 0.0 -> identity

    # --- BN + act + post FC + act + global_mean_pool + lin_out: one fused pallas_call ---
    y = run_kernel(
        tail_kernel, (num_graphs, 1),
        batch.astype(jnp.int32).reshape(1, -1), node,
        params["bn_g"], params["bn_b"],
        params["post_W"], params["post_b"],
        params["out_W"], params["out_b"])
    return y.reshape(-1)


# ----------------------------- deterministic parameters -----------------------------

def _glorot(key, fan_in, fan_out):
    limit = (6.0 / (fan_in + fan_out)) ** 0.5
    return jax.random.uniform(key, (fan_in, fan_out), jnp.float32, -limit, limit)


def make_gcn_params(key, dim):
    ks = jax.random.split(key, 3)
    return {
        "W_src": _glorot(ks[0], dim, dim), "b_src": jnp.zeros((1, dim), jnp.float32),
        "W_dst": _glorot(ks[1], dim, dim), "b_dst": jnp.zeros((1, dim), jnp.float32),
        "W_e": _glorot(ks[2], 3 * dim, dim), "b_e": jnp.zeros((1, dim), jnp.float32),
        "ln_x_g": jnp.ones((1, dim), jnp.float32), "ln_x_b": jnp.zeros((1, dim), jnp.float32),
        "ln_e_g": jnp.ones((1, dim), jnp.float32), "ln_e_b": jnp.zeros((1, dim), jnp.float32),
    }


def make_params(key, n_feat_node, n_feat_edge, n_feat_line, dim, post_dim, conv_num):
    ks = jax.random.split(key, 8 + conv_num * 2)
    return {
        "pre1_W": _glorot(ks[0], n_feat_node, dim), "pre1_b": jnp.zeros((1, dim), jnp.float32),
        "pre2_W": _glorot(ks[1], n_feat_edge, dim), "pre2_b": jnp.zeros((1, dim), jnp.float32),
        "pre3_W": _glorot(ks[2], n_feat_line, dim), "pre3_b": jnp.zeros((1, dim), jnp.float32),
        "post_W": _glorot(ks[3], dim, post_dim), "post_b": jnp.zeros((1, post_dim), jnp.float32),
        "out_W": _glorot(ks[4], post_dim, 1), "out_b": jnp.zeros((1, 1), jnp.float32),
        "bn_g": jnp.ones((1, dim), jnp.float32), "bn_b": jnp.zeros((1, dim), jnp.float32),
        "conv_line": [make_gcn_params(ks[8 + 2 * i], dim) for i in range(conv_num)],
        "conv_atom": [make_gcn_params(ks[9 + 2 * i], dim) for i in range(conv_num)],
    }


# ----------------------------- main -----------------------------

if __name__ == "__main__":
    key = jax.random.PRNGKey(0)

    # synthetic graph sizes
    N_NODES = 16            # atoms
    N_EDGES = 32            # atom-graph edges (== nodes of the line graph)
    N_EDGES_LINE = 64       # line-graph edges
    F_NODE, F_EDGE, F_LINE = 11, 9, 7
    DIM, POST_DIM = 64, 32  # pre_out_channel, post_out_channel
    CONV_NUM = 2
    NUM_GRAPHS = 2

    k_data, k_param = jax.random.split(key)
    kd = jax.random.split(k_data, 6)

    x_atom = jax.random.normal(kd[0], (N_NODES, F_NODE), jnp.float32)
    edge_attr_atom = jax.random.normal(kd[1], (N_EDGES, F_EDGE), jnp.float32)
    edge_attr_line = jax.random.normal(kd[2], (N_EDGES_LINE, F_LINE), jnp.float32)
    edge_index = jax.random.randint(kd[3], (2, N_EDGES), 0, N_NODES, jnp.int32)
    edge_index_line = jax.random.randint(kd[4], (2, N_EDGES_LINE), 0, N_EDGES, jnp.int32)
    batch = jnp.concatenate([jnp.zeros((N_NODES // 2,), jnp.int32),
                             jnp.ones((N_NODES - N_NODES // 2,), jnp.int32)])

    params = make_params(k_param, F_NODE, F_EDGE, F_LINE, DIM, POST_DIM, CONV_NUM)

    fwd = jax.jit(functools.partial(algnn_forward, num_graphs=NUM_GRAPHS))
    out = fwd(params, x_atom, edge_index, edge_attr_atom,
              edge_index_line, edge_attr_line, batch)
    out = jax.block_until_ready(out)

    assert out.shape == (NUM_GRAPHS,)
    assert jnp.all(jnp.isfinite(out))
    print("KERNEL_OK")
</pallas_src>

<mosaic_0001>
module attributes {stable_mosaic.version = 11 : i64} {
  func.func @gated_gcn_kernel(%arg0: i32, %arg1: memref<32x1xi32, #tpu.memory_space<vmem>>, %arg2: memref<1x32xi32, #tpu.memory_space<vmem>>, %arg3: memref<32x1xi32, #tpu.memory_space<vmem>>, %arg4: memref<1x32xi32, #tpu.memory_space<vmem>>, %arg5: memref<16x64xf32, #tpu.memory_space<vmem>>, %arg6: memref<32x64xf32, #tpu.memory_space<vmem>>, %arg7: memref<64x64xf32, #tpu.memory_space<vmem>>, %arg8: memref<1x64xf32, #tpu.memory_space<vmem>>, %arg9: memref<64x64xf32, #tpu.memory_space<vmem>>, %arg10: memref<1x64xf32, #tpu.memory_space<vmem>>, %arg11: memref<192x64xf32, #tpu.memory_space<vmem>>, %arg12: memref<1x64xf32, #tpu.memory_space<vmem>>, %arg13: memref<1x64xf32, #tpu.memory_space<vmem>>, %arg14: memref<1x64xf32, #tpu.memory_space<vmem>>, %arg15: memref<1x64xf32, #tpu.memory_space<vmem>>, %arg16: memref<1x64xf32, #tpu.memory_space<vmem>>, %arg17: memref<16x64xf32, #tpu.memory_space<vmem>>, %arg18: memref<32x64xf32, #tpu.memory_space<vmem>>) attributes {dimension_semantics = [#tpu.dimension_semantics<arbitrary>], iteration_bounds = array<i64: 1>, scalar_prefetch = 0 : i64, scratch_operands = 0 : i64, tpu.core_type = #tpu.core_type<tc>, window_params = [{pipeline_mode = #tpu.pipeline_mode<synchronous>, transform_indices = @transform_0, window_bounds = array<i64: 32, 1>}, {pipeline_mode = #tpu.pipeline_mode<synchronous>, transform_indices = @transform_1, window_bounds = array<i64: 1, 32>}, {pipeline_mode = #tpu.pipeline_mode<synchronous>, transform_indices = @transform_2, window_bounds = array<i64: 32, 1>}, {pipeline_mode = #tpu.pipeline_mode<synchronous>, transform_indices = @transform_3, window_bounds = array<i64: 1, 32>}, {pipeline_mode = #tpu.pipeline_mode<synchronous>, transform_indices = @transform_4, window_bounds = array<i64: 16, 64>}, {pipeline_mode = #tpu.pipeline_mode<synchronous>, transform_indices = @transform_5, window_bounds = array<i64: 32, 64>}, {pipeline_mode = #tpu.pipeline_mode<synchronous>, transform_indices = @transform_6, window_bounds = array<i64: 64, 64>}, {pipeline_mode = #tpu.pipeline_mode<synchronous>, transform_indices = @transform_7, window_bounds = array<i64: 1, 64>}, {pipeline_mode = #tpu.pipeline_mode<synchronous>, transform_indices = @transform_8, window_bounds = array<i64: 64, 64>}, {pipeline_mode = #tpu.pipeline_mode<synchronous>, transform_indices = @transform_9, window_bounds = array<i64: 1, 64>}, {pipeline_mode = #tpu.pipeline_mode<synchronous>, transform_indices = @transform_10, window_bounds = array<i64: 192, 64>}, {pipeline_mode = #tpu.pipeline_mode<synchronous>, transform_indices = @transform_11, window_bounds = array<i64: 1, 64>}, {pipeline_mode = #tpu.pipeline_mode<synchronous>, transform_indices = @transform_12, window_bounds = array<i64: 1, 64>}, {pipeline_mode = #tpu.pipeline_mode<synchronous>, transform_indices = @transform_13, window_bounds = array<i64: 1, 64>}, {pipeline_mode = #tpu.pipeline_mode<synchronous>, transform_indices = @transform_14, window_bounds = array<i64: 1, 64>}, {pipeline_mode = #tpu.pipeline_mode<synchronous>, transform_indices = @transform_15, window_bounds = array<i64: 1, 64>}, {pipeline_mode = #tpu.pipeline_mode<synchronous>, transform_indices = @transform_16, window_bounds = array<i64: 16, 64>}, {pipeline_mode = #tpu.pipeline_mode<synchronous>, transform_indices = @transform_17, window_bounds = array<i64: 32, 64>}]} {
    %c0 = arith.constant 0 : index
    %c0_0 = arith.constant 0 : index
    %0 = vector.load %arg5[%c0, %c0_0] : memref<16x64xf32, #tpu.memory_space<vmem>>, vector<16x64xf32>
    %c0_1 = arith.constant 0 : index
    %c0_2 = arith.constant 0 : index
    %1 = vector.load %arg6[%c0_1, %c0_2] : memref<32x64xf32, #tpu.memory_space<vmem>>, vector<32x64xf32>
    %2 = tpu.iota {dimensions = array<i32: 1>} : vector<32x16xi32>
    %3 = tpu.iota {dimensions = array<i32: 0>} : vector<16x32xi32>
    %c0_3 = arith.constant 0 : index
    %c0_4 = arith.constant 0 : index
    %4 = vector.load %arg1[%c0_3, %c0_4] : memref<32x1xi32, #tpu.memory_space<vmem>>, vector<32x1xi32>
    %5 = vector.broadcast %4 : vector<32x1xi32> to vector<32x16xi32>
    %6 = arith.cmpi eq, %2, %5 : vector<32x16xi32>
    %7 = arith.extui %6 : vector<32x16xi1> to vector<32x16xi32>
    %8 = arith.sitofp %7 : vector<32x16xi32> to vector<32x16xf32>
    %c0_5 = arith.constant 0 : index
    %c0_6 = arith.constant 0 : index
    %9 = vector.load %arg3[%c0_5, %c0_6] : memref<32x1xi32, #tpu.memory_space<vmem>>, vector<32x1xi32>
    %10 = vector.broadcast %9 : vector<32x1xi32> to vector<32x16xi32>
    %11 = arith.cmpi eq, %2, %10 : vector<32x16xi32>
    %12 = arith.extui %11 : vector<32x16xi1> to vector<32x16xi32>
    %13 = arith.sitofp %12 : vector<32x16xi32> to vector<32x16xf32>
    %c0_7 = arith.constant 0 : index
    %c0_8 = arith.constant 0 : index
    %14 = vector.load %arg2[%c0_7, %c0_8] : memref<1x32xi32, #tpu.memory_space<vmem>>, vector<1x32xi32>
    %15 = vector.broadcast %14 : vector<1x32xi32> to vector<16x32xi32>
    %16 = arith.cmpi eq, %3, %15 : vector<16x32xi32>
    %17 = arith.extui %16 : vector<16x32xi1> to vector<16x32xi32>
    %18 = arith.sitofp %17 : vector<16x32xi32> to vector<16x32xf32>
    %c0_9 = arith.constant 0 : index
    %c0_10 = arith.constant 0 : index
    %19 = vector.load %arg4[%c0_9, %c0_10] : memref<1x32xi32, #tpu.memory_space<vmem>>, vector<1x32xi32>
    %20 = vector.broadcast %19 : vector<1x32xi32> to vector<16x32xi32>
    %21 = arith.cmpi eq, %3, %20 : vector<16x32xi32>
    %22 = arith.extui %21 : vector<16x32xi1> to vector<16x32xi32>
    %23 = arith.sitofp %22 : vector<16x32xi32> to vector<16x32xf32>
    %cst = arith.constant 0.000000e+00 : f32
    %24 = vector.broadcast %cst : f32 to vector<32x64xf32>
    %25 = arith.subf %24, %1 : vector<32x64xf32>
    %26 = math.exp %25 : vector<32x64xf32>
    %cst_11 = arith.constant 1.000000e+00 : f32
    %27 = vector.broadcast %cst_11 : f32 to vector<32x64xf32>
    %28 = arith.addf %27, %26 : vector<32x64xf32>
    %cst_12 = arith.constant 1.000000e+00 : f32
    %29 = vector.broadcast %cst_12 : f32 to vector<32x64xf32>
    %30 = arith.divf %29, %28 : vector<32x64xf32>
    %cst_13 = arith.constant dense<0.000000e+00> : vector<16x64xf32>
    %31 = tpu.matmul %18, %30, %cst_13 {dimension_numbers = #tpu.dot_dimension_numbers<[1], [0], [0], [1], [0, 0, 1, 1], [], []>} : vector<16x32xf32>, vector<32x64xf32>, vector<16x64xf32> -> vector<16x64xf32>
    %cst_14 = arith.constant dense<0.000000e+00> : vector<32x64xf32>
    %32 = tpu.matmul %8, %31, %cst_14 {dimension_numbers = #tpu.dot_dimension_numbers<[1], [0], [0], [1], [0, 0, 1, 1], [], []>} : vector<32x16xf32>, vector<16x64xf32>, vector<32x64xf32> -> vector<32x64xf32>
    %cst_15 = arith.constant 9.99999974E-6 : f32
    %33 = vector.broadcast %cst_15 : f32 to vector<32x64xf32>
    %34 = arith.addf %32, %33 : vector<32x64xf32>
    %35 = tpu.reciprocal %34 {approx = true} : vector<32x64xf32> -> vector<32x64xf32>
    %36 = arith.mulf %30, %35 : vector<32x64xf32>
    %cst_16 = arith.constant dense<0.000000e+00> : vector<32x64xf32>
    %37 = tpu.matmul %8, %0, %cst_16 {dimension_numbers = #tpu.dot_dimension_numbers<[1], [0], [0], [1], [0, 0, 1, 1], [], []>} : vector<32x16xf32>, vector<16x64xf32>, vector<32x64xf32> -> vector<32x64xf32>
    %c0_17 = arith.constant 0 : index
    %c0_18 = arith.constant 0 : index
    %38 = vector.load %arg9[%c0_17, %c0_18] : memref<64x64xf32, #tpu.memory_space<vmem>>, vector<64x64xf32>
    %cst_19 = arith.constant dense<0.000000e+00> : vector<32x64xf32>
    %39 = tpu.matmul %37, %38, %cst_19 {dimension_numbers = #tpu.dot_dimension_numbers<[1], [0], [0], [1], [0, 0, 1, 1], [], []>} : vector<32x64xf32>, vector<64x64xf32>, vector<32x64xf32> -> vector<32x64xf32>
    %c0_20 = arith.constant 0 : index
    %c0_21 = arith.constant 0 : index
    %40 = vector.load %arg10[%c0_20, %c0_21] : memref<1x64xf32, #tpu.memory_space<vmem>>, vector<1x64xf32>
    %41 = vector.broadcast %40 : vector<1x64xf32> to vector<32x64xf32>
    %42 = arith.addf %39, %41 : vector<32x64xf32>
    %43 = arith.mulf %36, %42 : vector<32x64xf32>
    %cst_22 = arith.constant dense<0.000000e+00> : vector<16x64xf32>
    %44 = tpu.matmul %23, %43, %cst_22 {dimension_numbers = #tpu.dot_dimension_numbers<[1], [0], [0], [1], [0, 0, 1, 1], [], []>} : vector<16x32xf32>, vector<32x64xf32>, vector<16x64xf32> -> vector<16x64xf32>
    %c0_23 = arith.constant 0 : index
    %c0_24 = arith.constant 0 : index
    %45 = vector.load %arg7[%c0_23, %c0_24] : memref<64x64xf32, #tpu.memory_space<vmem>>, vector<64x64xf32>
    %cst_25 = arith.constant dense<0.000000e+00> : vector<16x64xf32>
    %46 = tpu.matmul %0, %45, %cst_25 {dimension_numbers = #tpu.dot_dimension_numbers<[1], [0], [0], [1], [0, 0, 1, 1], [], []>} : vector<16x64xf32>, vector<64x64xf32>, vector<16x64xf32> -> vector<16x64xf32>
    %c0_26 = arith.constant 0 : index
    %c0_27 = arith.constant 0 : index
    %47 = vector.load %arg8[%c0_26, %c0_27] : memref<1x64xf32, #tpu.memory_space<vmem>>, vector<1x64xf32>
    %48 = vector.broadcast %47 : vector<1x64xf32> to vector<16x64xf32>
    %49 = arith.addf %46, %48 : vector<16x64xf32>
    %50 = arith.addf %49, %44 : vector<16x64xf32>
    %c0_28 = arith.constant 0 : index
    %c0_29 = arith.constant 0 : index
    %51 = vector.load %arg13[%c0_28, %c0_29] : memref<1x64xf32, #tpu.memory_space<vmem>>, vector<1x64xf32>
    %c0_30 = arith.constant 0 : index
    %c0_31 = arith.constant 0 : index
    %52 = vector.load %arg14[%c0_30, %c0_31] : memref<1x64xf32, #tpu.memory_space<vmem>>, vector<1x64xf32>
    %cst_32 = arith.constant dense<0.000000e+00> : vector<16xf32>
    %53 = vector.multi_reduction <add>, %50, %cst_32 [1] : vector<16x64xf32> to vector<16xf32>
    %54 = vector.shape_cast %53 : vector<16xf32> to vector<16x1xf32>
    %cst_33 = arith.constant 6.400000e+01 : f32
    %55 = vector.broadcast %cst_33 : f32 to vector<16x1xf32>
    %56 = arith.divf %54, %55 : vector<16x1xf32>
    %57 = vector.broadcast %56 : vector<16x1xf32> to vector<16x64xf32>
    %58 = arith.subf %50, %57 : vector<16x64xf32>
    %59 = arith.mulf %58, %58 : vector<16x64xf32>
    %cst_34 = arith.constant dense<0.000000e+00> : vector<16xf32>
    %60 = vector.multi_reduction <add>, %59, %cst_34 [1] : vector<16x64xf32> to vector<16xf32>
    %61 = vector.shape_cast %60 : vector<16xf32> to vector<16x1xf32>
    %cst_35 = arith.constant 6.400000e+01 : f32
    %62 = vector.broadcast %cst_35 : f32 to vector<16x1xf32>
    %63 = arith.divf %61, %62 : vector<16x1xf32>
    %64 = vector.broadcast %56 : vector<16x1xf32> to vector<16x64xf32>
    %65 = arith.subf %50, %64 : vector<16x64xf32>
    %cst_36 = arith.constant 9.99999974E-6 : f32
    %66 = vector.broadcast %cst_36 : f32 to vector<16x1xf32>
    %67 = arith.addf %63, %66 : vector<16x1xf32>
    %68 = math.rsqrt %67 : vector<16x1xf32>
    %69 = vector.broadcast %68 : vector<16x1xf32> to vector<16x64xf32>
    %70 = arith.mulf %65, %69 : vector<16x64xf32>
    %71 = vector.broadcast %51 : vector<1x64xf32> to vector<16x64xf32>
    %72 = arith.mulf %70, %71 : vector<16x64xf32>
    %73 = vector.broadcast %52 : vector<1x64xf32> to vector<16x64xf32>
    %74 = arith.addf %72, %73 : vector<16x64xf32>
    %cst_37 = arith.constant 0.000000e+00 : f32
    %75 = vector.broadcast %cst_37 : f32 to vector<16x64xf32>
    %76 = arith.subf %75, %74 : vector<16x64xf32>
    %77 = math.exp %76 : vector<16x64xf32>
    %cst_38 = arith.constant 1.000000e+00 : f32
    %78 = vector.broadcast %cst_38 : f32 to vector<16x64xf32>
    %79 = arith.addf %78, %77 : vector<16x64xf32>
    %cst_39 = arith.constant 1.000000e+00 : f32
    %80 = vector.broadcast %cst_39 : f32 to vector<16x64xf32>
    %81 = arith.divf %80, %79 : vector<16x64xf32>
    %82 = arith.mulf %74, %81 : vector<16x64xf32>
    %83 = arith.addf %0, %82 : vector<16x64xf32>
    %c0_40 = arith.constant 0 : index
    %c0_41 = arith.constant 0 : index
    %84 = vector.load %arg17[%c0_40, %c0_41] : memref<16x64xf32, #tpu.memory_space<vmem>>, vector<16x64xf32>
    tpu.vector_store %arg17[%c0_40, %c0_41], %83 {strides = array<i32>} : memref<16x64xf32, #tpu.memory_space<vmem>>, vector<16x64xf32>,
    %cst_42 = arith.constant dense<0.000000e+00> : vector<32x64xf32>
    %85 = tpu.matmul %13, %0, %cst_42 {dimension_numbers = #tpu.dot_dimension_numbers<[1], [0], [0], [1], [0, 0, 1, 1], [], []>} : vector<32x16xf32>, vector<16x64xf32>, vector<32x64xf32> -> vector<32x64xf32>
    %c0_43 = arith.constant 0 : index
    %c0_44 = arith.constant 0 : index
    %86 = vector.load %arg11[%c0_43, %c0_44] : memref<192x64xf32, #tpu.memory_space<vmem>>, vector<192x64xf32>
    %87 = vector.extract_strided_slice %86 {offsets = [0, 0], sizes = [64, 64], strides = [1, 1]} : vector<192x64xf32> to vector<64x64xf32>
    %cst_45 = arith.constant dense<0.000000e+00> : vector<32x64xf32>
    %88 = tpu.matmul %37, %87, %cst_45 {dimension_numbers = #tpu.dot_dimension_numbers<[1], [0], [0], [1], [0, 0, 1, 1], [], []>} : vector<32x64xf32>, vector<64x64xf32>, vector<32x64xf32> -> vector<32x64xf32>
    %89 = vector.extract_strided_slice %86 {offsets = [64, 0], sizes = [64, 64], strides = [1, 1]} : vector<192x64xf32> to vector<64x64xf32>
    %cst_46 = arith.constant dense<0.000000e+00> : vector<32x64xf32>
    %90 = tpu.matmul %85, %89, %cst_46 {dimension_numbers = #tpu.dot_dimension_numbers<[1], [0], [0], [1], [0, 0, 1, 1], [], []>} : vector<32x64xf32>, vector<64x64xf32>, vector<32x64xf32> -> vector<32x64xf32>
    %91 = arith.addf %88, %90 : vector<32x64xf32>
    %92 = vector.extract_strided_slice %86 {offsets = [128, 0], sizes = [64, 64], strides = [1, 1]} : vector<192x64xf32> to vector<64x64xf32>
    %cst_47 = arith.constant dense<0.000000e+00> : vector<32x64xf32>
    %93 = tpu.matmul %1, %92, %cst_47 {dimension_numbers = #tpu.dot_dimension_numbers<[1], [0], [0], [1], [0, 0, 1, 1], [], []>} : vector<32x64xf32>, vector<64x64xf32>, vector<32x64xf32> -> vector<32x64xf32>
    %94 = arith.addf %91, %93 : vector<32x64xf32>
    %c0_48 = arith.constant 0 : index
    %c0_49 = arith.constant 0 : index
    %95 = vector.load %arg12[%c0_48, %c0_49] : memref<1x64xf32, #tpu.memory_space<vmem>>, vector<1x64xf32>
    %96 = vector.broadcast %95 : vector<1x64xf32> to vector<32x64xf32>
    %97 = arith.addf %94, %96 : vector<32x64xf32>
    %c0_50 = arith.constant 0 : index
    %c0_51 = arith.constant 0 : index
    %98 = vector.load %arg15[%c0_50, %c0_51] : memref<1x64xf32, #tpu.memory_space<vmem>>, vector<1x64xf32>
    %c0_52 = arith.constant 0 : index
    %c0_53 = arith.constant 0 : index
    %99 = vector.load %arg16[%c0_52, %c0_53] : memref<1x64xf32, #tpu.memory_space<vmem>>, vector<1x64xf32>
    %cst_54 = arith.constant dense<0.000000e+00> : vector<32xf32>
    %100 = vector.multi_reduction <add>, %97, %cst_54 [1] : vector<32x64xf32> to vector<32xf32>
    %101 = vector.shape_cast %100 : vector<32xf32> to vector<32x1xf32>
    %cst_55 = arith.constant 6.400000e+01 : f32
    %102 = vector.broadcast %cst_55 : f32 to vector<32x1xf32>
    %103 = arith.divf %101, %102 : vector<32x1xf32>
    %104 = vector.broadcast %103 : vector<32x1xf32> to vector<32x64xf32>
    %105 = arith.subf %97, %104 : vector<32x64xf32>
    %106 = arith.mulf %105, %105 : vector<32x64xf32>
    %cst_56 = arith.constant dense<0.000000e+00> : vector<32xf32>
    %107 = vector.multi_reduction <add>, %106, %cst_56 [1] : vector<32x64xf32> to vector<32xf32>
    %108 = vector.shape_cast %107 : vector<32xf32> to vector<32x1xf32>
    %cst_57 = arith.constant 6.400000e+01 : f32
    %109 = vector.broadcast %cst_57 : f32 to vector<32x1xf32>
    %110 = arith.divf %108, %109 : vector<32x1xf32>
    %111 = vector.broadcast %103 : vector<32x1xf32> to vector<32x64xf32>
    %112 = arith.subf %97, %111 : vector<32x64xf32>
    %cst_58 = arith.constant 9.99999974E-6 : f32
    %113 = vector.broadcast %cst_58 : f32 to vector<32x1xf32>
    %114 = arith.addf %110, %113 : vector<32x1xf32>
    %115 = math.rsqrt %114 : vector<32x1xf32>
    %116 = vector.broadcast %115 : vector<32x1xf32> to vector<32x64xf32>
    %117 = arith.mulf %112, %116 : vector<32x64xf32>
    %118 = vector.broadcast %98 : vector<1x64xf32> to vector<32x64xf32>
    %119 = arith.mulf %117, %118 : vector<32x64xf32>
    %120 = vector.broadcast %99 : vector<1x64xf32> to vector<32x64xf32>
    %121 = arith.addf %119, %120 : vector<32x64xf32>
    %cst_59 = arith.constant 0.000000e+00 : f32
    %122 = vector.broadcast %cst_59 : f32 to vector<32x64xf32>
    %123 = arith.subf %122, %121 : vector<32x64xf32>
    %124 = math.exp %123 : vector<32x64xf32>
    %cst_60 = arith.constant 1.000000e+00 : f32
    %125 = vector.broadcast %cst_60 : f32 to vector<32x64xf32>
    %126 = arith.addf %125, %124 : vector<32x64xf32>
    %cst_61 = arith.constant 1.000000e+00 : f32
    %127 = vector.broadcast %cst_61 : f32 to vector<32x64xf32>
    %128 = arith.divf %127, %126 : vector<32x64xf32>
    %129 = arith.mulf %121, %128 : vector<32x64xf32>
    %130 = arith.addf %1, %129 : vector<32x64xf32>
    %c0_62 = arith.constant 0 : index
    %c0_63 = arith.constant 0 : index
    %131 = vector.load %arg18[%c0_62, %c0_63] : memref<32x64xf32, #tpu.memory_space<vmem>>, vector<32x64xf32>
    tpu.vector_store %arg18[%c0_62, %c0_63], %130 {strides = array<i32>} : memref<32x64xf32, #tpu.memory_space<vmem>>, vector<32x64xf32>,
    return
  }
  func.func @transform_0(%arg0: i32) -> (i32, i32) {
    %c0_i32 = arith.constant 0 : i32
    %c0_i32_0 = arith.constant 0 : i32
    %c0_i32_1 = arith.constant 0 : i32
    return %c0_i32, %c0_i32_0 : i32, i32
  }
  func.func @transform_1(%arg0: i32) -> (i32, i32) {
    %c0_i32 = arith.constant 0 : i32
    %c0_i32_0 = arith.constant 0 : i32
    %c0_i32_1 = arith.constant 0 : i32
    return %c0_i32, %c0_i32_0 : i32, i32
  }
  func.func @transform_2(%arg0: i32) -> (i32, i32) {
    %c0_i32 = arith.constant 0 : i32
    %c0_i32_0 = arith.constant 0 : i32
    %c0_i32_1 = arith.constant 0 : i32
    return %c0_i32, %c0_i32_0 : i32, i32
  }
  func.func @transform_3(%arg0: i32) -> (i32, i32) {
    %c0_i32 = arith.constant 0 : i32
    %c0_i32_0 = arith.constant 0 : i32
    %c0_i32_1 = arith.constant 0 : i32
    return %c0_i32, %c0_i32_0 : i32, i32
  }
  func.func @transform_4(%arg0: i32) -> (i32, i32) {
    %c0_i32 = arith.constant 0 : i32
    %c0_i32_0 = arith.constant 0 : i32
    %c0_i32_1 = arith.constant 0 : i32
    return %c0_i32, %c0_i32_0 : i32, i32
  }
  func.func @transform_5(%arg0: i32) -> (i32, i32) {
    %c0_i32 = arith.constant 0 : i32
    %c0_i32_0 = arith.constant 0 : i32
    %c0_i32_1 = arith.constant 0 : i32
    return %c0_i32, %c0_i32_0 : i32, i32
  }
  func.func @transform_6(%arg0: i32) -> (i32, i32) {
    %c0_i32 = arith.constant 0 : i32
    %c0_i32_0 = arith.constant 0 : i32
    %c0_i32_1 = arith.constant 0 : i32
    return %c0_i32, %c0_i32_0 : i32, i32
  }
  func.func @transform_7(%arg0: i32) -> (i32, i32) {
    %c0_i32 = arith.constant 0 : i32
    %c0_i32_0 = arith.constant 0 : i32
    %c0_i32_1 = arith.constant 0 : i32
    return %c0_i32, %c0_i32_0 : i32, i32
  }
  func.func @transform_8(%arg0: i32) -> (i32, i32) {
    %c0_i32 = arith.constant 0 : i32
    %c0_i32_0 = arith.constant 0 : i32
    %c0_i32_1 = arith.constant 0 : i32
    return %c0_i32, %c0_i32_0 : i32, i32
  }
  func.func @transform_9(%arg0: i32) -> (i32, i32) {
    %c0_i32 = arith.constant 0 : i32
    %c0_i32_0 = arith.constant 0 : i32
    %c0_i32_1 = arith.constant 0 : i32
    return %c0_i32, %c0_i32_0 : i32, i32
  }
  func.func @transform_10(%arg0: i32) -> (i32, i32) {
    %c0_i32 = arith.constant 0 : i32
    %c0_i32_0 = arith.constant 0 : i32
    %c0_i32_1 = arith.constant 0 : i32
    return %c0_i32, %c0_i32_0 : i32, i32
  }
  func.func @transform_11(%arg0: i32) -> (i32, i32) {
    %c0_i32 = arith.constant 0 : i32
    %c0_i32_0 = arith.constant 0 : i32
    %c0_i32_1 = arith.constant 0 : i32
    return %c0_i32, %c0_i32_0 : i32, i32
  }
  func.func @transform_12(%arg0: i32) -> (i32, i32) {
    %c0_i32 = arith.constant 0 : i32
    %c0_i32_0 = arith.constant 0 : i32
    %c0_i32_1 = arith.constant 0 : i32
    return %c0_i32, %c0_i32_0 : i32, i32
  }
  func.func @transform_13(%arg0: i32) -> (i32, i32) {
    %c0_i32 = arith.constant 0 : i32
    %c0_i32_0 = arith.constant 0 : i32
    %c0_i32_1 = arith.constant 0 : i32
    return %c0_i32, %c0_i32_0 : i32, i32
  }
  func.func @transform_14(%arg0: i32) -> (i32, i32) {
    %c0_i32 = arith.constant 0 : i32
    %c0_i32_0 = arith.constant 0 : i32
    %c0_i32_1 = arith.constant 0 : i32
    return %c0_i32, %c0_i32_0 : i32, i32
  }
  func.func @transform_15(%arg0: i32) -> (i32, i32) {
    %c0_i32 = arith.constant 0 : i32
    %c0_i32_0 = arith.constant 0 : i32
    %c0_i32_1 = arith.constant 0 : i32
    return %c0_i32, %c0_i32_0 : i32, i32
  }
  func.func @transform_16(%arg0: i32) -> (i32, i32) {
    %c0_i32 = arith.constant 0 : i32
    %c0_i32_0 = arith.constant 0 : i32
    %c0_i32_1 = arith.constant 0 : i32
    return %c0_i32, %c0_i32_0 : i32, i32
  }
  func.func @transform_17(%arg0: i32) -> (i32, i32) {
    %c0_i32 = arith.constant 0 : i32
    %c0_i32_0 = arith.constant 0 : i32
    %c0_i32_1 = arith.constant 0 : i32
    return %c0_i32, %c0_i32_0 : i32, i32
  }
}

module attributes {stable_mosaic.version = 11 : i64} {
  func.func @pre_fc_kernel(%arg0: i32, %arg1: memref<16x11xf32, #tpu.memory_space<vmem>>, %arg2: memref<32x9xf32, #tpu.memory_space<vmem>>, %arg3: memref<64x7xf32, #tpu.memory_space<vmem>>, %arg4: memref<11x64xf32, #tpu.memory_space<vmem>>, %arg5: memref<1x64xf32, #tpu.memory_space<vmem>>, %arg6: memref<9x64xf32, #tpu.memory_space<vmem>>, %arg7: memref<1x64xf32, #tpu.memory_space<vmem>>, %arg8: memref<7x64xf32, #tpu.memory_space<vmem>>, %arg9: memref<1x64xf32, #tpu.memory_space<vmem>>, %arg10: memref<16x64xf32, #tpu.memory_space<vmem>>, %arg11: memref<32x64xf32, #tpu.memory_space<vmem>>, %arg12: memref<64x64xf32, #tpu.memory_space<vmem>>) attributes {dimension_semantics = [#tpu.dimension_semantics<arbitrary>], iteration_bounds = array<i64: 1>, scalar_prefetch = 0 : i64, scratch_operands = 0 : i64, tpu.core_type = #tpu.core_type<tc>, window_params = [{pipeline_mode = #tpu.pipeline_mode<synchronous>, transform_indices = @transform_0, window_bounds = array<i64: 16, 11>}, {pipeline_mode = #tpu.pipeline_mode<synchronous>, transform_indices = @transform_1, window_bounds = array<i64: 32, 9>}, {pipeline_mode = #tpu.pipeline_mode<synchronous>, transform_indices = @transform_2, window_bounds = array<i64: 64, 7>}, {pipeline_mode = #tpu.pipeline_mode<synchronous>, transform_indices = @transform_3, window_bounds = array<i64: 11, 64>}, {pipeline_mode = #tpu.pipeline_mode<synchronous>, transform_indices = @transform_4, window_bounds = array<i64: 1, 64>}, {pipeline_mode = #tpu.pipeline_mode<synchronous>, transform_indices = @transform_5, window_bounds = array<i64: 9, 64>}, {pipeline_mode = #tpu.pipeline_mode<synchronous>, transform_indices = @transform_6, window_bounds = array<i64: 1, 64>}, {pipeline_mode = #tpu.pipeline_mode<synchronous>, transform_indices = @transform_7, window_bounds = array<i64: 7, 64>}, {pipeline_mode = #tpu.pipeline_mode<synchronous>, transform_indices = @transform_8, window_bounds = array<i64: 1, 64>}, {pipeline_mode = #tpu.pipeline_mode<synchronous>, transform_indices = @transform_9, window_bounds = array<i64: 16, 64>}, {pipeline_mode = #tpu.pipeline_mode<synchronous>, transform_indices = @transform_10, window_bounds = array<i64: 32, 64>}, {pipeline_mode = #tpu.pipeline_mode<synchronous>, transform_indices = @transform_11, window_bounds = array<i64: 64, 64>}]} {
    %c0 = arith.constant 0 : index
    %c0_0 = arith.constant 0 : index
    %0 = vector.load %arg1[%c0, %c0_0] : memref<16x11xf32, #tpu.memory_space<vmem>>, vector<16x11xf32>
    %c0_1 = arith.constant 0 : index
    %c0_2 = arith.constant 0 : index
    %1 = vector.load %arg4[%c0_1, %c0_2] : memref<11x64xf32, #tpu.memory_space<vmem>>, vector<11x64xf32>
    %cst = arith.constant dense<0.000000e+00> : vector<16x64xf32>
    %2 = tpu.matmul %0, %1, %cst {dimension_numbers = #tpu.dot_dimension_numbers<[1], [0], [0], [1], [0, 0, 1, 1], [], []>} : vector<16x11xf32>, vector<11x64xf32>, vector<16x64xf32> -> vector<16x64xf32>
    %c0_3 = arith.constant 0 : index
    %c0_4 = arith.constant 0 : index
    %3 = vector.load %arg5[%c0_3, %c0_4] : memref<1x64xf32, #tpu.memory_space<vmem>>, vector<1x64xf32>
    %4 = vector.broadcast %3 : vector<1x64xf32> to vector<16x64xf32>
    %5 = arith.addf %2, %4 : vector<16x64xf32>
    %cst_5 = arith.constant 0.000000e+00 : f32
    %6 = vector.broadcast %cst_5 : f32 to vector<16x64xf32>
    %7 = arith.subf %6, %5 : vector<16x64xf32>
    %8 = math.exp %7 : vector<16x64xf32>
    %cst_6 = arith.constant 1.000000e+00 : f32
    %9 = vector.broadcast %cst_6 : f32 to vector<16x64xf32>
    %10 = arith.addf %9, %8 : vector<16x64xf32>
    %cst_7 = arith.constant 1.000000e+00 : f32
    %11 = vector.broadcast %cst_7 : f32 to vector<16x64xf32>
    %12 = arith.divf %11, %10 : vector<16x64xf32>
    %13 = arith.mulf %5, %12 : vector<16x64xf32>
    %c0_8 = arith.constant 0 : index
    %c0_9 = arith.constant 0 : index
    %14 = vector.load %arg10[%c0_8, %c0_9] : memref<16x64xf32, #tpu.memory_space<vmem>>, vector<16x64xf32>
    tpu.vector_store %arg10[%c0_8, %c0_9], %13 {strides = array<i32>} : memref<16x64xf32, #tpu.memory_space<vmem>>, vector<16x64xf32>,
    %c0_10 = arith.constant 0 : index
    %c0_11 = arith.constant 0 : index
    %15 = vector.load %arg2[%c0_10, %c0_11] : memref<32x9xf32, #tpu.memory_space<vmem>>, vector<32x9xf32>
    %c0_12 = arith.constant 0 : index
    %c0_13 = arith.constant 0 : index
    %16 = vector.load %arg6[%c0_12, %c0_13] : memref<9x64xf32, #tpu.memory_space<vmem>>, vector<9x64xf32>
    %cst_14 = arith.constant dense<0.000000e+00> : vector<32x64xf32>
    %17 = tpu.matmul %15, %16, %cst_14 {dimension_numbers = #tpu.dot_dimension_numbers<[1], [0], [0], [1], [0, 0, 1, 1], [], []>} : vector<32x9xf32>, vector<9x64xf32>, vector<32x64xf32> -> vector<32x64xf32>
    %c0_15 = arith.constant 0 : index
    %c0_16 = arith.constant 0 : index
    %18 = vector.load %arg7[%c0_15, %c0_16] : memref<1x64xf32, #tpu.memory_space<vmem>>, vector<1x64xf32>
    %19 = vector.broadcast %18 : vector<1x64xf32> to vector<32x64xf32>
    %20 = arith.addf %17, %19 : vector<32x64xf32>
    %cst_17 = arith.constant 0.000000e+00 : f32
    %21 = vector.broadcast %cst_17 : f32 to vector<32x64xf32>
    %22 = arith.subf %21, %20 : vector<32x64xf32>
    %23 = math.exp %22 : vector<32x64xf32>
    %cst_18 = arith.constant 1.000000e+00 : f32
    %24 = vector.broadcast %cst_18 : f32 to vector<32x64xf32>
    %25 = arith.addf %24, %23 : vector<32x64xf32>
    %cst_19 = arith.constant 1.000000e+00 : f32
    %26 = vector.broadcast %cst_19 : f32 to vector<32x64xf32>
    %27 = arith.divf %26, %25 : vector<32x64xf32>
    %28 = arith.mulf %20, %27 : vector<32x64xf32>
    %c0_20 = arith.constant 0 : index
    %c0_21 = arith.constant 0 : index
    %29 = vector.load %arg11[%c0_20, %c0_21] : memref<32x64xf32, #tpu.memory_space<vmem>>, vector<32x64xf32>
    tpu.vector_store %arg11[%c0_20, %c0_21], %28 {strides = array<i32>} : memref<32x64xf32, #tpu.memory_space<vmem>>, vector<32x64xf32>,
    %c0_22 = arith.constant 0 : index
    %c0_23 = arith.constant 0 : index
    %30 = vector.load %arg3[%c0_22, %c0_23] : memref<64x7xf32, #tpu.memory_space<vmem>>, vector<64x7xf32>
    %c0_24 = arith.constant 0 : index
    %c0_25 = arith.constant 0 : index
    %31 = vector.load %arg8[%c0_24, %c0_25] : memref<7x64xf32, #tpu.memory_space<vmem>>, vector<7x64xf32>
    %cst_26 = arith.constant dense<0.000000e+00> : vector<64x64xf32>
    %32 = tpu.matmul %30, %31, %cst_26 {dimension_numbers = #tpu.dot_dimension_numbers<[1], [0], [0], [1], [0, 0, 1, 1], [], []>} : vector<64x7xf32>, vector<7x64xf32>, vector<64x64xf32> -> vector<64x64xf32>
    %c0_27 = arith.constant 0 : index
    %c0_28 = arith.constant 0 : index
    %33 = vector.load %arg9[%c0_27, %c0_28] : memref<1x64xf32, #tpu.memory_space<vmem>>, vector<1x64xf32>
    %34 = vector.broadcast %33 : vector<1x64xf32> to vector<64x64xf32>
    %35 = arith.addf %32, %34 : vector<64x64xf32>
    %cst_29 = arith.constant 0.000000e+00 : f32
    %36 = vector.broadcast %cst_29 : f32 to vector<64x64xf32>
    %37 = arith.subf %36, %35 : vector<64x64xf32>
    %38 = math.exp %37 : vector<64x64xf32>
    %cst_30 = arith.constant 1.000000e+00 : f32
    %39 = vector.broadcast %cst_30 : f32 to vector<64x64xf32>
    %40 = arith.addf %39, %38 : vector<64x64xf32>
    %cst_31 = arith.constant 1.000000e+00 : f32
    %41 = vector.broadcast %cst_31 : f32 to vector<64x64xf32>
    %42 = arith.divf %41, %40 : vector<64x64xf32>
    %43 = arith.mulf %35, %42 : vector<64x64xf32>
    %c0_32 = arith.constant 0 : index
    %c0_33 = arith.constant 0 : index
    %44 = vector.load %arg12[%c0_32, %c0_33] : memref<64x64xf32, #tpu.memory_space<vmem>>, vector<64x64xf32>
    tpu.vector_store %arg12[%c0_32, %c0_33], %43 {strides = array<i32>} : memref<64x64xf32, #tpu.memory_space<vmem>>, vector<64x64xf32>,
    return
  }
  func.func @transform_0(%arg0: i32) -> (i32, i32) {
    %c0_i32 = arith.constant 0 : i32
    %c0_i32_0 = arith.constant 0 : i32
    %c0_i32_1 = arith.constant 0 : i32
    return %c0_i32, %c0_i32_0 : i32, i32
  }
  func.func @transform_1(%arg0: i32) -> (i32, i32) {
    %c0_i32 = arith.constant 0 : i32
    %c0_i32_0 = arith.constant 0 : i32
    %c0_i32_1 = arith.constant 0 : i32
    return %c0_i32, %c0_i32_0 : i32, i32
  }
  func.func @transform_2(%arg0: i32) -> (i32, i32) {
    %c0_i32 = arith.constant 0 : i32
    %c0_i32_0 = arith.constant 0 : i32
    %c0_i32_1 = arith.constant 0 : i32
    return %c0_i32, %c0_i32_0 : i32, i32
  }
  func.func @transform_3(%arg0: i32) -> (i32, i32) {
    %c0_i32 = arith.constant 0 : i32
    %c0_i32_0 = arith.constant 0 : i32
    %c0_i32_1 = arith.constant 0 : i32
    return %c0_i32, %c0_i32_0 : i32, i32
  }
  func.func @transform_4(%arg0: i32) -> (i32, i32) {
    %c0_i32 = arith.constant 0 : i32
    %c0_i32_0 = arith.constant 0 : i32
    %c0_i32_1 = arith.constant 0 : i32
    return %c0_i32, %c0_i32_0 : i32, i32
  }
  func.func @transform_5(%arg0: i32) -> (i32, i32) {
    %c0_i32 = arith.constant 0 : i32
    %c0_i32_0 = arith.constant 0 : i32
    %c0_i32_1 = arith.constant 0 : i32
    return %c0_i32, %c0_i32_0 : i32, i32
  }
  func.func @transform_6(%arg0: i32) -> (i32, i32) {
    %c0_i32 = arith.constant 0 : i32
    %c0_i32_0 = arith.constant 0 : i32
    %c0_i32_1 = arith.constant 0 : i32
    return %c0_i32, %c0_i32_0 : i32, i32
  }
  func.func @transform_7(%arg0: i32) -> (i32, i32) {
    %c0_i32 = arith.constant 0 : i32
    %c0_i32_0 = arith.constant 0 : i32
    %c0_i32_1 = arith.constant 0 : i32
    return %c0_i32, %c0_i32_0 : i32, i32
  }
  func.func @transform_8(%arg0: i32) -> (i32, i32) {
    %c0_i32 = arith.constant 0 : i32
    %c0_i32_0 = arith.constant 0 : i32
    %c0_i32_1 = arith.constant 0 : i32
    return %c0_i32, %c0_i32_0 : i32, i32
  }
  func.func @transform_9(%arg0: i32) -> (i32, i32) {
    %c0_i32 = arith.constant 0 : i32
    %c0_i32_0 = arith.constant 0 : i32
    %c0_i32_1 = arith.constant 0 : i32
    return %c0_i32, %c0_i32_0 : i32, i32
  }
  func.func @transform_10(%arg0: i32) -> (i32, i32) {
    %c0_i32 = arith.constant 0 : i32
    %c0_i32_0 = arith.constant 0 : i32
    %c0_i32_1 = arith.constant 0 : i32
    return %c0_i32, %c0_i32_0 : i32, i32
  }
  func.func @transform_11(%arg0: i32) -> (i32, i32) {
    %c0_i32 = arith.constant 0 : i32
    %c0_i32_0 = arith.constant 0 : i32
    %c0_i32_1 = arith.constant 0 : i32
    return %c0_i32, %c0_i32_0 : i32, i32
  }
}

module attributes {stable_mosaic.version = 11 : i64} {
  func.func @gated_gcn_kernel(%arg0: i32, %arg1: memref<64x1xi32, #tpu.memory_space<vmem>>, %arg2: memref<1x64xi32, #tpu.memory_space<vmem>>, %arg3: memref<64x1xi32, #tpu.memory_space<vmem>>, %arg4: memref<1x64xi32, #tpu.memory_space<vmem>>, %arg5: memref<32x64xf32, #tpu.memory_space<vmem>>, %arg6: memref<64x64xf32, #tpu.memory_space<vmem>>, %arg7: memref<64x64xf32, #tpu.memory_space<vmem>>, %arg8: memref<1x64xf32, #tpu.memory_space<vmem>>, %arg9: memref<64x64xf32, #tpu.memory_space<vmem>>, %arg10: memref<1x64xf32, #tpu.memory_space<vmem>>, %arg11: memref<192x64xf32, #tpu.memory_space<vmem>>, %arg12: memref<1x64xf32, #tpu.memory_space<vmem>>, %arg13: memref<1x64xf32, #tpu.memory_space<vmem>>, %arg14: memref<1x64xf32, #tpu.memory_space<vmem>>, %arg15: memref<1x64xf32, #tpu.memory_space<vmem>>, %arg16: memref<1x64xf32, #tpu.memory_space<vmem>>, %arg17: memref<32x64xf32, #tpu.memory_space<vmem>>, %arg18: memref<64x64xf32, #tpu.memory_space<vmem>>) attributes {dimension_semantics = [#tpu.dimension_semantics<arbitrary>], iteration_bounds = array<i64: 1>, scalar_prefetch = 0 : i64, scratch_operands = 0 : i64, tpu.core_type = #tpu.core_type<tc>, window_params = [{pipeline_mode = #tpu.pipeline_mode<synchronous>, transform_indices = @transform_0, window_bounds = array<i64: 64, 1>}, {pipeline_mode = #tpu.pipeline_mode<synchronous>, transform_indices = @transform_1, window_bounds = array<i64: 1, 64>}, {pipeline_mode = #tpu.pipeline_mode<synchronous>, transform_indices = @transform_2, window_bounds = array<i64: 64, 1>}, {pipeline_mode = #tpu.pipeline_mode<synchronous>, transform_indices = @transform_3, window_bounds = array<i64: 1, 64>}, {pipeline_mode = #tpu.pipeline_mode<synchronous>, transform_indices = @transform_4, window_bounds = array<i64: 32, 64>}, {pipeline_mode = #tpu.pipeline_mode<synchronous>, transform_indices = @transform_5, window_bounds = array<i64: 64, 64>}, {pipeline_mode = #tpu.pipeline_mode<synchronous>, transform_indices = @transform_6, window_bounds = array<i64: 64, 64>}, {pipeline_mode = #tpu.pipeline_mode<synchronous>, transform_indices = @transform_7, window_bounds = array<i64: 1, 64>}, {pipeline_mode = #tpu.pipeline_mode<synchronous>, transform_indices = @transform_8, window_bounds = array<i64: 64, 64>}, {pipeline_mode = #tpu.pipeline_mode<synchronous>, transform_indices = @transform_9, window_bounds = array<i64: 1, 64>}, {pipeline_mode = #tpu.pipeline_mode<synchronous>, transform_indices = @transform_10, window_bounds = array<i64: 192, 64>}, {pipeline_mode = #tpu.pipeline_mode<synchronous>, transform_indices = @transform_11, window_bounds = array<i64: 1, 64>}, {pipeline_mode = #tpu.pipeline_mode<synchronous>, transform_indices = @transform_12, window_bounds = array<i64: 1, 64>}, {pipeline_mode = #tpu.pipeline_mode<synchronous>, transform_indices = @transform_13, window_bounds = array<i64: 1, 64>}, {pipeline_mode = #tpu.pipeline_mode<synchronous>, transform_indices = @transform_14, window_bounds = array<i64: 1, 64>}, {pipeline_mode = #tpu.pipeline_mode<synchronous>, transform_indices = @transform_15, window_bounds = array<i64: 1, 64>}, {pipeline_mode = #tpu.pipeline_mode<synchronous>, transform_indices = @transform_16, window_bounds = array<i64: 32, 64>}, {pipeline_mode = #tpu.pipeline_mode<synchronous>, transform_indices = @transform_17, window_bounds = array<i64: 64, 64>}]} {
    %c0 = arith.constant 0 : index
    %c0_0 = arith.constant 0 : index
    %0 = vector.load %arg5[%c0, %c0_0] : memref<32x64xf32, #tpu.memory_space<vmem>>, vector<32x64xf32>
    %c0_1 = arith.constant 0 : index
    %c0_2 = arith.constant 0 : index
    %1 = vector.load %arg6[%c0_1, %c0_2] : memref<64x64xf32, #tpu.memory_space<vmem>>, vector<64x64xf32>
    %2 = tpu.iota {dimensions = array<i32: 1>} : vector<64x32xi32>
    %3 = tpu.iota {dimensions = array<i32: 0>} : vector<32x64xi32>
    %c0_3 = arith.constant 0 : index
    %c0_4 = arith.constant 0 : index
    %4 = vector.load %arg1[%c0_3, %c0_4] : memref<64x1xi32, #tpu.memory_space<vmem>>, vector<64x1xi32>
    %5 = vector.broadcast %4 : vector<64x1xi32> to vector<64x32xi32>
    %6 = arith.cmpi eq, %2, %5 : vector<64x32xi32>
    %7 = arith.extui %6 : vector<64x32xi1> to vector<64x32xi32>
    %8 = arith.sitofp %7 : vector<64x32xi32> to vector<64x32xf32>
    %c0_5 = arith.constant 0 : index
    %c0_6 = arith.constant 0 : index
    %9 = vector.load %arg3[%c0_5, %c0_6] : memref<64x1xi32, #tpu.memory_space<vmem>>, vector<64x1xi32>
    %10 = vector.broadcast %9 : vector<64x1xi32> to vector<64x32xi32>
    %11 = arith.cmpi eq, %2, %10 : vector<64x32xi32>
    %12 = arith.extui %11 : vector<64x32xi1> to vector<64x32xi32>
    %13 = arith.sitofp %12 : vector<64x32xi32> to vector<64x32xf32>
    %c0_7 = arith.constant 0 : index
    %c0_8 = arith.constant 0 : index
    %14 = vector.load %arg2[%c0_7, %c0_8] : memref<1x64xi32, #tpu.memory_space<vmem>>, vector<1x64xi32>
    %15 = vector.broadcast %14 : vector<1x64xi32> to vector<32x64xi32>
    %16 = arith.cmpi eq, %3, %15 : vector<32x64xi32>
    %17 = arith.extui %16 : vector<32x64xi1> to vector<32x64xi32>
    %18 = arith.sitofp %17 : vector<32x64xi32> to vector<32x64xf32>
    %c0_9 = arith.constant 0 : index
    %c0_10 = arith.constant 0 : index
    %19 = vector.load %arg4[%c0_9, %c0_10] : memref<1x64xi32, #tpu.memory_space<vmem>>, vector<1x64xi32>
    %20 = vector.broadcast %19 : vector<1x64xi32> to vector<32x64xi32>
    %21 = arith.cmpi eq, %3, %20 : vector<32x64xi32>
    %22 = arith.extui %21 : vector<32x64xi1> to vector<32x64xi32>
    %23 = arith.sitofp %22 : vector<32x64xi32> to vector<32x64xf32>
    %cst = arith.constant 0.000000e+00 : f32
    %24 = vector.broadcast %cst : f32 to vector<64x64xf32>
    %25 = arith.subf %24, %1 : vector<64x64xf32>
    %26 = math.exp %25 : vector<64x64xf32>
    %cst_11 = arith.constant 1.000000e+00 : f32
    %27 = vector.broadcast %cst_11 : f32 to vector<64x64xf32>
    %28 = arith.addf %27, %26 : vector<64x64xf32>
    %cst_12 = arith.constant 1.000000e+00 : f32
    %29 = vector.broadcast %cst_12 : f32 to vector<64x64xf32>
    %30 = arith.divf %29, %28 : vector<64x64xf32>
    %cst_13 = arith.constant dense<0.000000e+00> : vector<32x64xf32>
    %31 = tpu.matmul %18, %30, %cst_13 {dimension_numbers = #tpu.dot_dimension_numbers<[1], [0], [0], [1], [0, 0, 1, 1], [], []>} : vector<32x64xf32>, vector<64x64xf32>, vector<32x64xf32> -> vector<32x64xf32>
    %cst_14 = arith.constant dense<0.000000e+00> : vector<64x64xf32>
    %32 = tpu.matmul %8, %31, %cst_14 {dimension_numbers = #tpu.dot_dimension_numbers<[1], [0], [0], [1], [0, 0, 1, 1], [], []>} : vector<64x32xf32>, vector<32x64xf32>, vector<64x64xf32> -> vector<64x64xf32>
    %cst_15 = arith.constant 9.99999974E-6 : f32
    %33 = vector.broadcast %cst_15 : f32 to vector<64x64xf32>
    %34 = arith.addf %32, %33 : vector<64x64xf32>
    %35 = tpu.reciprocal %34 {approx = true} : vector<64x64xf32> -> vector<64x64xf32>
    %36 = arith.mulf %30, %35 : vector<64x64xf32>
    %cst_16 = arith.constant dense<0.000000e+00> : vector<64x64xf32>
    %37 = tpu.matmul %8, %0, %cst_16 {dimension_numbers = #tpu.dot_dimension_numbers<[1], [0], [0], [1], [0, 0, 1, 1], [], []>} : vector<64x32xf32>, vector<32x64xf32>, vector<64x64xf32> -> vector<64x64xf32>
    %c0_17 = arith.constant 0 : index
    %c0_18 = arith.constant 0 : index
    %38 = vector.load %arg9[%c0_17, %c0_18] : memref<64x64xf32, #tpu.memory_space<vmem>>, vector<64x64xf32>
    %cst_19 = arith.constant dense<0.000000e+00> : vector<64x64xf32>
    %39 = tpu.matmul %37, %38, %cst_19 {dimension_numbers = #tpu.dot_dimension_numbers<[1], [0], [0], [1], [0, 0, 1, 1], [], []>} : vector<64x64xf32>, vector<64x64xf32>, vector<64x64xf32> -> vector<64x64xf32>
    %c0_20 = arith.constant 0 : index
    %c0_21 = arith.constant 0 : index
    %40 = vector.load %arg10[%c0_20, %c0_21] : memref<1x64xf32, #tpu.memory_space<vmem>>, vector<1x64xf32>
    %41 = vector.broadcast %40 : vector<1x64xf32> to vector<64x64xf32>
    %42 = arith.addf %39, %41 : vector<64x64xf32>
    %43 = arith.mulf %36, %42 : vector<64x64xf32>
    %cst_22 = arith.constant dense<0.000000e+00> : vector<32x64xf32>
    %44 = tpu.matmul %23, %43, %cst_22 {dimension_numbers = #tpu.dot_dimension_numbers<[1], [0], [0], [1], [0, 0, 1, 1], [], []>} : vector<32x64xf32>, vector<64x64xf32>, vector<32x64xf32> -> vector<32x64xf32>
    %c0_23 = arith.constant 0 : index
    %c0_24 = arith.constant 0 : index
    %45 = vector.load %arg7[%c0_23, %c0_24] : memref<64x64xf32, #tpu.memory_space<vmem>>, vector<64x64xf32>
    %cst_25 = arith.constant dense<0.000000e+00> : vector<32x64xf32>
    %46 = tpu.matmul %0, %45, %cst_25 {dimension_numbers = #tpu.dot_dimension_numbers<[1], [0], [0], [1], [0, 0, 1, 1], [], []>} : vector<32x64xf32>, vector<64x64xf32>, vector<32x64xf32> -> vector<32x64xf32>
    %c0_26 = arith.constant 0 : index
    %c0_27 = arith.constant 0 : index
    %47 = vector.load %arg8[%c0_26, %c0_27] : memref<1x64xf32, #tpu.memory_space<vmem>>, vector<1x64xf32>
    %48 = vector.broadcast %47 : vector<1x64xf32> to vector<32x64xf32>
    %49 = arith.addf %46, %48 : vector<32x64xf32>
    %50 = arith.addf %49, %44 : vector<32x64xf32>
    %c0_28 = arith.constant 0 : index
    %c0_29 = arith.constant 0 : index
    %51 = vector.load %arg13[%c0_28, %c0_29] : memref<1x64xf32, #tpu.memory_space<vmem>>, vector<1x64xf32>
    %c0_30 = arith.constant 0 : index
    %c0_31 = arith.constant 0 : index
    %52 = vector.load %arg14[%c0_30, %c0_31] : memref<1x64xf32, #tpu.memory_space<vmem>>, vector<1x64xf32>
    %cst_32 = arith.constant dense<0.000000e+00> : vector<32xf32>
    %53 = vector.multi_reduction <add>, %50, %cst_32 [1] : vector<32x64xf32> to vector<32xf32>
    %54 = vector.shape_cast %53 : vector<32xf32> to vector<32x1xf32>
    %cst_33 = arith.constant 6.400000e+01 : f32
    %55 = vector.broadcast %cst_33 : f32 to vector<32x1xf32>
    %56 = arith.divf %54, %55 : vector<32x1xf32>
    %57 = vector.broadcast %56 : vector<32x1xf32> to vector<32x64xf32>
    %58 = arith.subf %50, %57 : vector<32x64xf32>
    %59 = arith.mulf %58, %58 : vector<32x64xf32>
    %cst_34 = arith.constant dense<0.000000e+00> : vector<32xf32>
    %60 = vector.multi_reduction <add>, %59, %cst_34 [1] : vector<32x64xf32> to vector<32xf32>
    %61 = vector.shape_cast %60 : vector<32xf32> to vector<32x1xf32>
    %cst_35 = arith.constant 6.400000e+01 : f32
    %62 = vector.broadcast %cst_35 : f32 to vector<32x1xf32>
    %63 = arith.divf %61, %62 : vector<32x1xf32>
    %64 = vector.broadcast %56 : vector<32x1xf32> to vector<32x64xf32>
    %65 = arith.subf %50, %64 : vector<32x64xf32>
    %cst_36 = arith.constant 9.99999974E-6 : f32
    %66 = vector.broadcast %cst_36 : f32 to vector<32x1xf32>
    %67 = arith.addf %63, %66 : vector<32x1xf32>
    %68 = math.rsqrt %67 : vector<32x1xf32>
    %69 = vector.broadcast %68 : vector<32x1xf32> to vector<32x64xf32>
    %70 = arith.mulf %65, %69 : vector<32x64xf32>
    %71 = vector.broadcast %51 : vector<1x64xf32> to vector<32x64xf32>
    %72 = arith.mulf %70, %71 : vector<32x64xf32>
    %73 = vector.broadcast %52 : vector<1x64xf32> to vector<32x64xf32>
    %74 = arith.addf %72, %73 : vector<32x64xf32>
    %cst_37 = arith.constant 0.000000e+00 : f32
    %75 = vector.broadcast %cst_37 : f32 to vector<32x64xf32>
    %76 = arith.subf %75, %74 : vector<32x64xf32>
    %77 = math.exp %76 : vector<32x64xf32>
    %cst_38 = arith.constant 1.000000e+00 : f32
    %78 = vector.broadcast %cst_38 : f32 to vector<32x64xf32>
    %79 = arith.addf %78, %77 : vector<32x64xf32>
    %cst_39 = arith.constant 1.000000e+00 : f32
    %80 = vector.broadcast %cst_39 : f32 to vector<32x64xf32>
    %81 = arith.divf %80, %79 : vector<32x64xf32>
    %82 = arith.mulf %74, %81 : vector<32x64xf32>
    %83 = arith.addf %0, %82 : vector<32x64xf32>
    %c0_40 = arith.constant 0 : index
    %c0_41 = arith.constant 0 : index
    %84 = vector.load %arg17[%c0_40, %c0_41] : memref<32x64xf32, #tpu.memory_space<vmem>>, vector<32x64xf32>
    tpu.vector_store %arg17[%c0_40, %c0_41], %83 {strides = array<i32>} : memref<32x64xf32, #tpu.memory_space<vmem>>, vector<32x64xf32>,
    %cst_42 = arith.constant dense<0.000000e+00> : vector<64x64xf32>
    %85 = tpu.matmul %13, %0, %cst_42 {dimension_numbers = #tpu.dot_dimension_numbers<[1], [0], [0], [1], [0, 0, 1, 1], [], []>} : vector<64x32xf32>, vector<32x64xf32>, vector<64x64xf32> -> vector<64x64xf32>
    %c0_43 = arith.constant 0 : index
    %c0_44 = arith.constant 0 : index
    %86 = vector.load %arg11[%c0_43, %c0_44] : memref<192x64xf32, #tpu.memory_space<vmem>>, vector<192x64xf32>
    %87 = vector.extract_strided_slice %86 {offsets = [0, 0], sizes = [64, 64], strides = [1, 1]} : vector<192x64xf32> to vector<64x64xf32>
    %cst_45 = arith.constant dense<0.000000e+00> : vector<64x64xf32>
    %88 = tpu.matmul %37, %87, %cst_45 {dimension_numbers = #tpu.dot_dimension_numbers<[1], [0], [0], [1], [0, 0, 1, 1], [], []>} : vector<64x64xf32>, vector<64x64xf32>, vector<64x64xf32> -> vector<64x64xf32>
    %89 = vector.extract_strided_slice %86 {offsets = [64, 0], sizes = [64, 64], strides = [1, 1]} : vector<192x64xf32> to vector<64x64xf32>
    %cst_46 = arith.constant dense<0.000000e+00> : vector<64x64xf32>
    %90 = tpu.matmul %85, %89, %cst_46 {dimension_numbers = #tpu.dot_dimension_numbers<[1], [0], [0], [1], [0, 0, 1, 1], [], []>} : vector<64x64xf32>, vector<64x64xf32>, vector<64x64xf32> -> vector<64x64xf32>
    %91 = arith.addf %88, %90 : vector<64x64xf32>
    %92 = vector.extract_strided_slice %86 {offsets = [128, 0], sizes = [64, 64], strides = [1, 1]} : vector<192x64xf32> to vector<64x64xf32>
    %cst_47 = arith.constant dense<0.000000e+00> : vector<64x64xf32>
    %93 = tpu.matmul %1, %92, %cst_47 {dimension_numbers = #tpu.dot_dimension_numbers<[1], [0], [0], [1], [0, 0, 1, 1], [], []>} : vector<64x64xf32>, vector<64x64xf32>, vector<64x64xf32> -> vector<64x64xf32>
    %94 = arith.addf %91, %93 : vector<64x64xf32>
    %c0_48 = arith.constant 0 : index
    %c0_49 = arith.constant 0 : index
    %95 = vector.load %arg12[%c0_48, %c0_49] : memref<1x64xf32, #tpu.memory_space<vmem>>, vector<1x64xf32>
    %96 = vector.broadcast %95 : vector<1x64xf32> to vector<64x64xf32>
    %97 = arith.addf %94, %96 : vector<64x64xf32>
    %c0_50 = arith.constant 0 : index
    %c0_51 = arith.constant 0 : index
    %98 = vector.load %arg15[%c0_50, %c0_51] : memref<1x64xf32, #tpu.memory_space<vmem>>, vector<1x64xf32>
    %c0_52 = arith.constant 0 : index
    %c0_53 = arith.constant 0 : index
    %99 = vector.load %arg16[%c0_52, %c0_53] : memref<1x64xf32, #tpu.memory_space<vmem>>, vector<1x64xf32>
    %cst_54 = arith.constant dense<0.000000e+00> : vector<64xf32>
    %100 = vector.multi_reduction <add>, %97, %cst_54 [1] : vector<64x64xf32> to vector<64xf32>
    %101 = vector.shape_cast %100 : vector<64xf32> to vector<64x1xf32>
    %cst_55 = arith.constant 6.400000e+01 : f32
    %102 = vector.broadcast %cst_55 : f32 to vector<64x1xf32>
    %103 = arith.divf %101, %102 : vector<64x1xf32>
    %104 = vector.broadcast %103 : vector<64x1xf32> to vector<64x64xf32>
    %105 = arith.subf %97, %104 : vector<64x64xf32>
    %106 = arith.mulf %105, %105 : vector<64x64xf32>
    %cst_56 = arith.constant dense<0.000000e+00> : vector<64xf32>
    %107 = vector.multi_reduction <add>, %106, %cst_56 [1] : vector<64x64xf32> to vector<64xf32>
    %108 = vector.shape_cast %107 : vector<64xf32> to vector<64x1xf32>
    %cst_57 = arith.constant 6.400000e+01 : f32
    %109 = vector.broadcast %cst_57 : f32 to vector<64x1xf32>
    %110 = arith.divf %108, %109 : vector<64x1xf32>
    %111 = vector.broadcast %103 : vector<64x1xf32> to vector<64x64xf32>
    %112 = arith.subf %97, %111 : vector<64x64xf32>
    %cst_58 = arith.constant 9.99999974E-6 : f32
    %113 = vector.broadcast %cst_58 : f32 to vector<64x1xf32>
    %114 = arith.addf %110, %113 : vector<64x1xf32>
    %115 = math.rsqrt %114 : vector<64x1xf32>
    %116 = vector.broadcast %115 : vector<64x1xf32> to vector<64x64xf32>
    %117 = arith.mulf %112, %116 : vector<64x64xf32>
    %118 = vector.broadcast %98 : vector<1x64xf32> to vector<64x64xf32>
    %119 = arith.mulf %117, %118 : vector<64x64xf32>
    %120 = vector.broadcast %99 : vector<1x64xf32> to vector<64x64xf32>
    %121 = arith.addf %119, %120 : vector<64x64xf32>
    %cst_59 = arith.constant 0.000000e+00 : f32
    %122 = vector.broadcast %cst_59 : f32 to vector<64x64xf32>
    %123 = arith.subf %122, %121 : vector<64x64xf32>
    %124 = math.exp %123 : vector<64x64xf32>
    %cst_60 = arith.constant 1.000000e+00 : f32
    %125 = vector.broadcast %cst_60 : f32 to vector<64x64xf32>
    %126 = arith.addf %125, %124 : vector<64x64xf32>
    %cst_61 = arith.constant 1.000000e+00 : f32
    %127 = vector.broadcast %cst_61 : f32 to vector<64x64xf32>
    %128 = arith.divf %127, %126 : vector<64x64xf32>
    %129 = arith.mulf %121, %128 : vector<64x64xf32>
    %130 = arith.addf %1, %129 : vector<64x64xf32>
    %c0_62 = arith.constant 0 : index
    %c0_63 = arith.constant 0 : index
    %131 = vector.load %arg18[%c0_62, %c0_63] : memref<64x64xf32, #tpu.memory_space<vmem>>, vector<64x64xf32>
    tpu.vector_store %arg18[%c0_62, %c0_63], %130 {strides = array<i32>} : memref<64x64xf32, #tpu.memory_space<vmem>>, vector<64x64xf32>,
    return
  }
  func.func @transform_0(%arg0: i32) -> (i32, i32) {
    %c0_i32 = arith.constant 0 : i32
    %c0_i32_0 = arith.constant 0 : i32
    %c0_i32_1 = arith.constant 0 : i32
    return %c0_i32, %c0_i32_0 : i32, i32
  }
  func.func @transform_1(%arg0: i32) -> (i32, i32) {
    %c0_i32 = arith.constant 0 : i32
    %c0_i32_0 = arith.constant 0 : i32
    %c0_i32_1 = arith.constant 0 : i32
    return %c0_i32, %c0_i32_0 : i32, i32
  }
  func.func @transform_2(%arg0: i32) -> (i32, i32) {
    %c0_i32 = arith.constant 0 : i32
    %c0_i32_0 = arith.constant 0 : i32
    %c0_i32_1 = arith.constant 0 : i32
    return %c0_i32, %c0_i32_0 : i32, i32
  }
  func.func @transform_3(%arg0: i32) -> (i32, i32) {
    %c0_i32 = arith.constant 0 : i32
    %c0_i32_0 = arith.constant 0 : i32
    %c0_i32_1 = arith.constant 0 : i32
    return %c0_i32, %c0_i32_0 : i32, i32
  }
  func.func @transform_4(%arg0: i32) -> (i32, i32) {
    %c0_i32 = arith.constant 0 : i32
    %c0_i32_0 = arith.constant 0 : i32
    %c0_i32_1 = arith.constant 0 : i32
    return %c0_i32, %c0_i32_0 : i32, i32
  }
  func.func @transform_5(%arg0: i32) -> (i32, i32) {
    %c0_i32 = arith.constant 0 : i32
    %c0_i32_0 = arith.constant 0 : i32
    %c0_i32_1 = arith.constant 0 : i32
    return %c0_i32, %c0_i32_0 : i32, i32
  }
  func.func @transform_6(%arg0: i32) -> (i32, i32) {
    %c0_i32 = arith.constant 0 : i32
    %c0_i32_0 = arith.constant 0 : i32
    %c0_i32_1 = arith.constant 0 : i32
    return %c0_i32, %c0_i32_0 : i32, i32
  }
  func.func @transform_7(%arg0: i32) -> (i32, i32) {
    %c0_i32 = arith.constant 0 : i32
    %c0_i32_0 = arith.constant 0 : i32
    %c0_i32_1 = arith.constant 0 : i32
    return %c0_i32, %c0_i32_0 : i32, i32
  }
  func.func @transform_8(%arg0: i32) -> (i32, i32) {
    %c0_i32 = arith.constant 0 : i32
    %c0_i32_0 = arith.constant 0 : i32
    %c0_i32_1 = arith.constant 0 : i32
    return %c0_i32, %c0_i32_0 : i32, i32
  }
  func.func @transform_9(%arg0: i32) -> (i32, i32) {
    %c0_i32 = arith.constant 0 : i32
    %c0_i32_0 = arith.constant 0 : i32
    %c0_i32_1 = arith.constant 0 : i32
    return %c0_i32, %c0_i32_0 : i32, i32
  }
  func.func @transform_10(%arg0: i32) -> (i32, i32) {
    %c0_i32 = arith.constant 0 : i32
    %c0_i32_0 = arith.constant 0 : i32
    %c0_i32_1 = arith.constant 0 : i32
    return %c0_i32, %c0_i32_0 : i32, i32
  }
  func.func @transform_11(%arg0: i32) -> (i32, i32) {
    %c0_i32 = arith.constant 0 : i32
    %c0_i32_0 = arith.constant 0 : i32
    %c0_i32_1 = arith.constant 0 : i32
    return %c0_i32, %c0_i32_0 : i32, i32
  }
  func.func @transform_12(%arg0: i32) -> (i32, i32) {
    %c0_i32 = arith.constant 0 : i32
    %c0_i32_0 = arith.constant 0 : i32
    %c0_i32_1 = arith.constant 0 : i32
    return %c0_i32, %c0_i32_0 : i32, i32
  }
  func.func @transform_13(%arg0: i32) -> (i32, i32) {
    %c0_i32 = arith.constant 0 : i32
    %c0_i32_0 = arith.constant 0 : i32
    %c0_i32_1 = arith.constant 0 : i32
    return %c0_i32, %c0_i32_0 : i32, i32
  }
  func.func @transform_14(%arg0: i32) -> (i32, i32) {
    %c0_i32 = arith.constant 0 : i32
    %c0_i32_0 = arith.constant 0 : i32
    %c0_i32_1 = arith.constant 0 : i32
    return %c0_i32, %c0_i32_0 : i32, i32
  }
  func.func @transform_15(%arg0: i32) -> (i32, i32) {
    %c0_i32 = arith.constant 0 : i32
    %c0_i32_0 = arith.constant 0 : i32
    %c0_i32_1 = arith.constant 0 : i32
    return %c0_i32, %c0_i32_0 : i32, i32
  }
  func.func @transform_16(%arg0: i32) -> (i32, i32) {
    %c0_i32 = arith.constant 0 : i32
    %c0_i32_0 = arith.constant 0 : i32
    %c0_i32_1 = arith.constant 0 : i32
    return %c0_i32, %c0_i32_0 : i32, i32
  }
  func.func @transform_17(%arg0: i32) -> (i32, i32) {
    %c0_i32 = arith.constant 0 : i32
    %c0_i32_0 = arith.constant 0 : i32
    %c0_i32_1 = arith.constant 0 : i32
    return %c0_i32, %c0_i32_0 : i32, i32
  }
}

module attributes {stable_mosaic.version = 11 : i64} {
  func.func @gated_gcn_kernel(%arg0: i32, %arg1: memref<64x1xi32, #tpu.memory_space<vmem>>, %arg2: memref<1x64xi32, #tpu.memory_space<vmem>>, %arg3: memref<64x1xi32, #tpu.memory_space<vmem>>, %arg4: memref<1x64xi32, #tpu.memory_space<vmem>>, %arg5: memref<32x64xf32, #tpu.memory_space<vmem>>, %arg6: memref<64x64xf32, #tpu.memory_space<vmem>>, %arg7: memref<64x64xf32, #tpu.memory_space<vmem>>, %arg8: memref<1x64xf32, #tpu.memory_space<vmem>>, %arg9: memref<64x64xf32, #tpu.memory_space<vmem>>, %arg10: memref<1x64xf32, #tpu.memory_space<vmem>>, %arg11: memref<192x64xf32, #tpu.memory_space<vmem>>, %arg12: memref<1x64xf32, #tpu.memory_space<vmem>>, %arg13: memref<1x64xf32, #tpu.memory_space<vmem>>, %arg14: memref<1x64xf32, #tpu.memory_space<vmem>>, %arg15: memref<1x64xf32, #tpu.memory_space<vmem>>, %arg16: memref<1x64xf32, #tpu.memory_space<vmem>>, %arg17: memref<32x64xf32, #tpu.memory_space<vmem>>, %arg18: memref<64x64xf32, #tpu.memory_space<vmem>>) attributes {dimension_semantics = [#tpu.dimension_semantics<arbitrary>], iteration_bounds = array<i64: 1>, scalar_prefetch = 0 : i64, scratch_operands = 0 : i64, tpu.core_type = #tpu.core_type<tc>, window_params = [{pipeline_mode = #tpu.pipeline_mode<synchronous>, transform_indices = @transform_0, window_bounds = array<i64: 64, 1>}, {pipeline_mode = #tpu.pipeline_mode<synchronous>, transform_indices = @transform_1, window_bounds = array<i64: 1, 64>}, {pipeline_mode = #tpu.pipeline_mode<synchronous>, transform_indices = @transform_2, window_bounds = array<i64: 64, 1>}, {pipeline_mode = #tpu.pipeline_mode<synchronous>, transform_indices = @transform_3, window_bounds = array<i64: 1, 64>}, {pipeline_mode = #tpu.pipeline_mode<synchronous>, transform_indices = @transform_4, window_bounds = array<i64: 32, 64>}, {pipeline_mode = #tpu.pipeline_mode<synchronous>, transform_indices = @transform_5, window_bounds = array<i64: 64, 64>}, {pipeline_mode = #tpu.pipeline_mode<synchronous>, transform_indices = @transform_6, window_bounds = array<i64: 64, 64>}, {pipeline_mode = #tpu.pipeline_mode<synchronous>, transform_indices = @transform_7, window_bounds = array<i64: 1, 64>}, {pipeline_mode = #tpu.pipeline_mode<synchronous>, transform_indices = @transform_8, window_bounds = array<i64: 64, 64>}, {pipeline_mode = #tpu.pipeline_mode<synchronous>, transform_indices = @transform_9, window_bounds = array<i64: 1, 64>}, {pipeline_mode = #tpu.pipeline_mode<synchronous>, transform_indices = @transform_10, window_bounds = array<i64: 192, 64>}, {pipeline_mode = #tpu.pipeline_mode<synchronous>, transform_indices = @transform_11, window_bounds = array<i64: 1, 64>}, {pipeline_mode = #tpu.pipeline_mode<synchronous>, transform_indices = @transform_12, window_bounds = array<i64: 1, 64>}, {pipeline_mode = #tpu.pipeline_mode<synchronous>, transform_indices = @transform_13, window_bounds = array<i64: 1, 64>}, {pipeline_mode = #tpu.pipeline_mode<synchronous>, transform_indices = @transform_14, window_bounds = array<i64: 1, 64>}, {pipeline_mode = #tpu.pipeline_mode<synchronous>, transform_indices = @transform_15, window_bounds = array<i64: 1, 64>}, {pipeline_mode = #tpu.pipeline_mode<synchronous>, transform_indices = @transform_16, window_bounds = array<i64: 32, 64>}, {pipeline_mode = #tpu.pipeline_mode<synchronous>, transform_indices = @transform_17, window_bounds = array<i64: 64, 64>}]} {
    %c0 = arith.constant 0 : index
    %c0_0 = arith.constant 0 : index
    %0 = vector.load %arg5[%c0, %c0_0] : memref<32x64xf32, #tpu.memory_space<vmem>>, vector<32x64xf32>
    %c0_1 = arith.constant 0 : index
    %c0_2 = arith.constant 0 : index
    %1 = vector.load %arg6[%c0_1, %c0_2] : memref<64x64xf32, #tpu.memory_space<vmem>>, vector<64x64xf32>
    %2 = tpu.iota {dimensions = array<i32: 1>} : vector<64x32xi32>
    %3 = tpu.iota {dimensions = array<i32: 0>} : vector<32x64xi32>
    %c0_3 = arith.constant 0 : index
    %c0_4 = arith.constant 0 : index
    %4 = vector.load %arg1[%c0_3, %c0_4] : memref<64x1xi32, #tpu.memory_space<vmem>>, vector<64x1xi32>
    %5 = vector.broadcast %4 : vector<64x1xi32> to vector<64x32xi32>
    %6 = arith.cmpi eq, %2, %5 : vector<64x32xi32>
    %7 = arith.extui %6 : vector<64x32xi1> to vector<64x32xi32>
    %8 = arith.sitofp %7 : vector<64x32xi32> to vector<64x32xf32>
    %c0_5 = arith.constant 0 : index
    %c0_6 = arith.constant 0 : index
    %9 = vector.load %arg3[%c0_5, %c0_6] : memref<64x1xi32, #tpu.memory_space<vmem>>, vector<64x1xi32>
    %10 = vector.broadcast %9 : vector<64x1xi32> to vector<64x32xi32>
    %11 = arith.cmpi eq, %2, %10 : vector<64x32xi32>
    %12 = arith.extui %11 : vector<64x32xi1> to vector<64x32xi32>
    %13 = arith.sitofp %12 : vector<64x32xi32> to vector<64x32xf32>
    %c0_7 = arith.constant 0 : index
    %c0_8 = arith.constant 0 : index
    %14 = vector.load %arg2[%c0_7, %c0_8] : memref<1x64xi32, #tpu.memory_space<vmem>>, vector<1x64xi32>
    %15 = vector.broadcast %14 : vector<1x64xi32> to vector<32x64xi32>
    %16 = arith.cmpi eq, %3, %15 : vector<32x64xi32>
    %17 = arith.extui %16 : vector<32x64xi1> to vector<32x64xi32>
    %18 = arith.sitofp %17 : vector<32x64xi32> to vector<32x64xf32>
    %c0_9 = arith.constant 0 : index
    %c0_10 = arith.constant 0 : index
    %19 = vector.load %arg4[%c0_9, %c0_10] : memref<1x64xi32, #tpu.memory_space<vmem>>, vector<1x64xi32>
    %20 = vector.broadcast %19 : vector<1x64xi32> to vector<32x64xi32>
    %21 = arith.cmpi eq, %3, %20 : vector<32x64xi32>
    %22 = arith.extui %21 : vector<32x64xi1> to vector<32x64xi32>
    %23 = arith.sitofp %22 : vector<32x64xi32> to vector<32x64xf32>
    %cst = arith.constant 0.000000e+00 : f32
    %24 = vector.broadcast %cst : f32 to vector<64x64xf32>
    %25 = arith.subf %24, %1 : vector<64x64xf32>
    %26 = math.exp %25 : vector<64x64xf32>
    %cst_11 = arith.constant 1.000000e+00 : f32
    %27 = vector.broadcast %cst_11 : f32 to vector<64x64xf32>
    %28 = arith.addf %27, %26 : vector<64x64xf32>
    %cst_12 = arith.constant 1.000000e+00 : f32
    %29 = vector.broadcast %cst_12 : f32 to vector<64x64xf32>
    %30 = arith.divf %29, %28 : vector<64x64xf32>
    %cst_13 = arith.constant dense<0.000000e+00> : vector<32x64xf32>
    %31 = tpu.matmul %18, %30, %cst_13 {dimension_numbers = #tpu.dot_dimension_numbers<[1], [0], [0], [1], [0, 0, 1, 1], [], []>} : vector<32x64xf32>, vector<64x64xf32>, vector<32x64xf32> -> vector<32x64xf32>
    %cst_14 = arith.constant dense<0.000000e+00> : vector<64x64xf32>
    %32 = tpu.matmul %8, %31, %cst_14 {dimension_numbers = #tpu.dot_dimension_numbers<[1], [0], [0], [1], [0, 0, 1, 1], [], []>} : vector<64x32xf32>, vector<32x64xf32>, vector<64x64xf32> -> vector<64x64xf32>
    %cst_15 = arith.constant 9.99999974E-6 : f32
    %33 = vector.broadcast %cst_15 : f32 to vector<64x64xf32>
    %34 = arith.addf %32, %33 : vector<64x64xf32>
    %35 = tpu.reciprocal %34 {approx = true} : vector<64x64xf32> -> vector<64x64xf32>
    %36 = arith.mulf %30, %35 : vector<64x64xf32>
    %cst_16 = arith.constant dense<0.000000e+00> : vector<64x64xf32>
    %37 = tpu.matmul %8, %0, %cst_16 {dimension_numbers = #tpu.dot_dimension_numbers<[1], [0], [0], [1], [0, 0, 1, 1], [], []>} : vector<64x32xf32>, vector<32x64xf32>, vector<64x64xf32> -> vector<64x64xf32>
    %c0_17 = arith.constant 0 : index
    %c0_18 = arith.constant 0 : index
    %38 = vector.load %arg9[%c0_17, %c0_18] : memref<64x64xf32, #tpu.memory_space<vmem>>, vector<64x64xf32>
    %cst_19 = arith.constant dense<0.000000e+00> : vector<64x64xf32>
    %39 = tpu.matmul %37, %38, %cst_19 {dimension_numbers = #tpu.dot_dimension_numbers<[1], [0], [0], [1], [0, 0, 1, 1], [], []>} : vector<64x64xf32>, vector<64x64xf32>, vector<64x64xf32> -> vector<64x64xf32>
    %c0_20 = arith.constant 0 : index
    %c0_21 = arith.constant 0 : index
    %40 = vector.load %arg10[%c0_20, %c0_21] : memref<1x64xf32, #tpu.memory_space<vmem>>, vector<1x64xf32>
    %41 = vector.broadcast %40 : vector<1x64xf32> to vector<64x64xf32>
    %42 = arith.addf %39, %41 : vector<64x64xf32>
    %43 = arith.mulf %36, %42 : vector<64x64xf32>
    %cst_22 = arith.constant dense<0.000000e+00> : vector<32x64xf32>
    %44 = tpu.matmul %23, %43, %cst_22 {dimension_numbers = #tpu.dot_dimension_numbers<[1], [0], [0], [1], [0, 0, 1, 1], [], []>} : vector<32x64xf32>, vector<64x64xf32>, vector<32x64xf32> -> vector<32x64xf32>
    %c0_23 = arith.constant 0 : index
    %c0_24 = arith.constant 0 : index
    %45 = vector.load %arg7[%c0_23, %c0_24] : memref<64x64xf32, #tpu.memory_space<vmem>>, vector<64x64xf32>
    %cst_25 = arith.constant dense<0.000000e+00> : vector<32x64xf32>
    %46 = tpu.matmul %0, %45, %cst_25 {dimension_numbers = #tpu.dot_dimension_numbers<[1], [0], [0], [1], [0, 0, 1, 1], [], []>} : vector<32x64xf32>, vector<64x64xf32>, vector<32x64xf32> -> vector<32x64xf32>
    %c0_26 = arith.constant 0 : index
    %c0_27 = arith.constant 0 : index
    %47 = vector.load %arg8[%c0_26, %c0_27] : memref<1x64xf32, #tpu.memory_space<vmem>>, vector<1x64xf32>
    %48 = vector.broadcast %47 : vector<1x64xf32> to vector<32x64xf32>
    %49 = arith.addf %46, %48 : vector<32x64xf32>
    %50 = arith.addf %49, %44 : vector<32x64xf32>
    %c0_28 = arith.constant 0 : index
    %c0_29 = arith.constant 0 : index
    %51 = vector.load %arg13[%c0_28, %c0_29] : memref<1x64xf32, #tpu.memory_space<vmem>>, vector<1x64xf32>
    %c0_30 = arith.constant 0 : index
    %c0_31 = arith.constant 0 : index
    %52 = vector.load %arg14[%c0_30, %c0_31] : memref<1x64xf32, #tpu.memory_space<vmem>>, vector<1x64xf32>
    %cst_32 = arith.constant dense<0.000000e+00> : vector<32xf32>
    %53 = vector.multi_reduction <add>, %50, %cst_32 [1] : vector<32x64xf32> to vector<32xf32>
    %54 = vector.shape_cast %53 : vector<32xf32> to vector<32x1xf32>
    %cst_33 = arith.constant 6.400000e+01 : f32
    %55 = vector.broadcast %cst_33 : f32 to vector<32x1xf32>
    %56 = arith.divf %54, %55 : vector<32x1xf32>
    %57 = vector.broadcast %56 : vector<32x1xf32> to vector<32x64xf32>
    %58 = arith.subf %50, %57 : vector<32x64xf32>
    %59 = arith.mulf %58, %58 : vector<32x64xf32>
    %cst_34 = arith.constant dense<0.000000e+00> : vector<32xf32>
    %60 = vector.multi_reduction <add>, %59, %cst_34 [1] : vector<32x64xf32> to vector<32xf32>
    %61 = vector.shape_cast %60 : vector<32xf32> to vector<32x1xf32>
    %cst_35 = arith.constant 6.400000e+01 : f32
    %62 = vector.broadcast %cst_35 : f32 to vector<32x1xf32>
    %63 = arith.divf %61, %62 : vector<32x1xf32>
    %64 = vector.broadcast %56 : vector<32x1xf32> to vector<32x64xf32>
    %65 = arith.subf %50, %64 : vector<32x64xf32>
    %cst_36 = arith.constant 9.99999974E-6 : f32
    %66 = vector.broadcast %cst_36 : f32 to vector<32x1xf32>
    %67 = arith.addf %63, %66 : vector<32x1xf32>
    %68 = math.rsqrt %67 : vector<32x1xf32>
    %69 = vector.broadcast %68 : vector<32x1xf32> to vector<32x64xf32>
    %70 = arith.mulf %65, %69 : vector<32x64xf32>
    %71 = vector.broadcast %51 : vector<1x64xf32> to vector<32x64xf32>
    %72 = arith.mulf %70, %71 : vector<32x64xf32>
    %73 = vector.broadcast %52 : vector<1x64xf32> to vector<32x64xf32>
    %74 = arith.addf %72, %73 : vector<32x64xf32>
    %cst_37 = arith.constant 0.000000e+00 : f32
    %75 = vector.broadcast %cst_37 : f32 to vector<32x64xf32>
    %76 = arith.subf %75, %74 : vector<32x64xf32>
    %77 = math.exp %76 : vector<32x64xf32>
    %cst_38 = arith.constant 1.000000e+00 : f32
    %78 = vector.broadcast %cst_38 : f32 to vector<32x64xf32>
    %79 = arith.addf %78, %77 : vector<32x64xf32>
    %cst_39 = arith.constant 1.000000e+00 : f32
    %80 = vector.broadcast %cst_39 : f32 to vector<32x64xf32>
    %81 = arith.divf %80, %79 : vector<32x64xf32>
    %82 = arith.mulf %74, %81 : vector<32x64xf32>
    %83 = arith.addf %0, %82 : vector<32x64xf32>
    %c0_40 = arith.constant 0 : index
    %c0_41 = arith.constant 0 : index
    %84 = vector.load %arg17[%c0_40, %c0_41] : memref<32x64xf32, #tpu.memory_space<vmem>>, vector<32x64xf32>
    tpu.vector_store %arg17[%c0_40, %c0_41], %83 {strides = array<i32>} : memref<32x64xf32, #tpu.memory_space<vmem>>, vector<32x64xf32>,
    %cst_42 = arith.constant dense<0.000000e+00> : vector<64x64xf32>
    %85 = tpu.matmul %13, %0, %cst_42 {dimension_numbers = #tpu.dot_dimension_numbers<[1], [0], [0], [1], [0, 0, 1, 1], [], []>} : vector<64x32xf32>, vector<32x64xf32>, vector<64x64xf32> -> vector<64x64xf32>
    %c0_43 = arith.constant 0 : index
    %c0_44 = arith.constant 0 : index
    %86 = vector.load %arg11[%c0_43, %c0_44] : memref<192x64xf32, #tpu.memory_space<vmem>>, vector<192x64xf32>
    %87 = vector.extract_strided_slice %86 {offsets = [0, 0], sizes = [64, 64], strides = [1, 1]} : vector<192x64xf32> to vector<64x64xf32>
    %cst_45 = arith.constant dense<0.000000e+00> : vector<64x64xf32>
    %88 = tpu.matmul %37, %87, %cst_45 {dimension_numbers = #tpu.dot_dimension_numbers<[1], [0], [0], [1], [0, 0, 1, 1], [], []>} : vector<64x64xf32>, vector<64x64xf32>, vector<64x64xf32> -> vector<64x64xf32>
    %89 = vector.extract_strided_slice %86 {offsets = [64, 0], sizes = [64, 64], strides = [1, 1]} : vector<192x64xf32> to vector<64x64xf32>
    %cst_46 = arith.constant dense<0.000000e+00> : vector<64x64xf32>
    %90 = tpu.matmul %85, %89, %cst_46 {dimension_numbers = #tpu.dot_dimension_numbers<[1], [0], [0], [1], [0, 0, 1, 1], [], []>} : vector<64x64xf32>, vector<64x64xf32>, vector<64x64xf32> -> vector<64x64xf32>
    %91 = arith.addf %88, %90 : vector<64x64xf32>
    %92 = vector.extract_strided_slice %86 {offsets = [128, 0], sizes = [64, 64], strides = [1, 1]} : vector<192x64xf32> to vector<64x64xf32>
    %cst_47 = arith.constant dense<0.000000e+00> : vector<64x64xf32>
    %93 = tpu.matmul %1, %92, %cst_47 {dimension_numbers = #tpu.dot_dimension_numbers<[1], [0], [0], [1], [0, 0, 1, 1], [], []>} : vector<64x64xf32>, vector<64x64xf32>, vector<64x64xf32> -> vector<64x64xf32>
    %94 = arith.addf %91, %93 : vector<64x64xf32>
    %c0_48 = arith.constant 0 : index
    %c0_49 = arith.constant 0 : index
    %95 = vector.load %arg12[%c0_48, %c0_49] : memref<1x64xf32, #tpu.memory_space<vmem>>, vector<1x64xf32>
    %96 = vector.broadcast %95 : vector<1x64xf32> to vector<64x64xf32>
    %97 = arith.addf %94, %96 : vector<64x64xf32>
    %c0_50 = arith.constant 0 : index
    %c0_51 = arith.constant 0 : index
    %98 = vector.load %arg15[%c0_50, %c0_51] : memref<1x64xf32, #tpu.memory_space<vmem>>, vector<1x64xf32>
    %c0_52 = arith.constant 0 : index
    %c0_53 = arith.constant 0 : index
    %99 = vector.load %arg16[%c0_52, %c0_53] : memref<1x64xf32, #tpu.memory_space<vmem>>, vector<1x64xf32>
    %cst_54 = arith.constant dense<0.000000e+00> : vector<64xf32>
    %100 = vector.multi_reduction <add>, %97, %cst_54 [1] : vector<64x64xf32> to vector<64xf32>
    %101 = vector.shape_cast %100 : vector<64xf32> to vector<64x1xf32>
    %cst_55 = arith.constant 6.400000e+01 : f32
    %102 = vector.broadcast %cst_55 : f32 to vector<64x1xf32>
    %103 = arith.divf %101, %102 : vector<64x1xf32>
    %104 = vector.broadcast %103 : vector<64x1xf32> to vector<64x64xf32>
    %105 = arith.subf %97, %104 : vector<64x64xf32>
    %106 = arith.mulf %105, %105 : vector<64x64xf32>
    %cst_56 = arith.constant dense<0.000000e+00> : vector<64xf32>
    %107 = vector.multi_reduction <add>, %106, %cst_56 [1] : vector<64x64xf32> to vector<64xf32>
    %108 = vector.shape_cast %107 : vector<64xf32> to vector<64x1xf32>
    %cst_57 = arith.constant 6.400000e+01 : f32
    %109 = vector.broadcast %cst_57 : f32 to vector<64x1xf32>
    %110 = arith.divf %108, %109 : vector<64x1xf32>
    %111 = vector.broadcast %103 : vector<64x1xf32> to vector<64x64xf32>
    %112 = arith.subf %97, %111 : vector<64x64xf32>
    %cst_58 = arith.constant 9.99999974E-6 : f32
    %113 = vector.broadcast %cst_58 : f32 to vector<64x1xf32>
    %114 = arith.addf %110, %113 : vector<64x1xf32>
    %115 = math.rsqrt %114 : vector<64x1xf32>
    %116 = vector.broadcast %115 : vector<64x1xf32> to vector<64x64xf32>
    %117 = arith.mulf %112, %116 : vector<64x64xf32>
    %118 = vector.broadcast %98 : vector<1x64xf32> to vector<64x64xf32>
    %119 = arith.mulf %117, %118 : vector<64x64xf32>
    %120 = vector.broadcast %99 : vector<1x64xf32> to vector<64x64xf32>
    %121 = arith.addf %119, %120 : vector<64x64xf32>
    %cst_59 = arith.constant 0.000000e+00 : f32
    %122 = vector.broadcast %cst_59 : f32 to vector<64x64xf32>
    %123 = arith.subf %122, %121 : vector<64x64xf32>
    %124 = math.exp %123 : vector<64x64xf32>
    %cst_60 = arith.constant 1.000000e+00 : f32
    %125 = vector.broadcast %cst_60 : f32 to vector<64x64xf32>
    %126 = arith.addf %125, %124 : vector<64x64xf32>
    %cst_61 = arith.constant 1.000000e+00 : f32
    %127 = vector.broadcast %cst_61 : f32 to vector<64x64xf32>
    %128 = arith.divf %127, %126 : vector<64x64xf32>
    %129 = arith.mulf %121, %128 : vector<64x64xf32>
    %130 = arith.addf %1, %129 : vector<64x64xf32>
    %c0_62 = arith.constant 0 : index
    %c0_63 = arith.constant 0 : index
    %131 = vector.load %arg18[%c0_62, %c0_63] : memref<64x64xf32, #tpu.memory_space<vmem>>, vector<64x64xf32>
    tpu.vector_store %arg18[%c0_62, %c0_63], %130 {strides = array<i32>} : memref<64x64xf32, #tpu.memory_space<vmem>>, vector<64x64xf32>,
    return
  }
  func.func @transform_0(%arg0: i32) -> (i32, i32) {
    %c0_i32 = arith.constant 0 : i32
    %c0_i32_0 = arith.constant 0 : i32
    %c0_i32_1 = arith.constant 0 : i32
    return %c0_i32, %c0_i32_0 : i32, i32
  }
  func.func @transform_1(%arg0: i32) -> (i32, i32) {
    %c0_i32 = arith.constant 0 : i32
    %c0_i32_0 = arith.constant 0 : i32
    %c0_i32_1 = arith.constant 0 : i32
    return %c0_i32, %c0_i32_0 : i32, i32
  }
  func.func @transform_2(%arg0: i32) -> (i32, i32) {
    %c0_i32 = arith.constant 0 : i32
    %c0_i32_0 = arith.constant 0 : i32
    %c0_i32_1 = arith.constant 0 : i32
    return %c0_i32, %c0_i32_0 : i32, i32
  }
  func.func @transform_3(%arg0: i32) -> (i32, i32) {
    %c0_i32 = arith.constant 0 : i32
    %c0_i32_0 = arith.constant 0 : i32
    %c0_i32_1 = arith.constant 0 : i32
    return %c0_i32, %c0_i32_0 : i32, i32
  }
  func.func @transform_4(%arg0: i32) -> (i32, i32) {
    %c0_i32 = arith.constant 0 : i32
    %c0_i32_0 = arith.constant 0 : i32
    %c0_i32_1 = arith.constant 0 : i32
    return %c0_i32, %c0_i32_0 : i32, i32
  }
  func.func @transform_5(%arg0: i32) -> (i32, i32) {
    %c0_i32 = arith.constant 0 : i32
    %c0_i32_0 = arith.constant 0 : i32
    %c0_i32_1 = arith.constant 0 : i32
    return %c0_i32, %c0_i32_0 : i32, i32
  }
  func.func @transform_6(%arg0: i32) -> (i32, i32) {
    %c0_i32 = arith.constant 0 : i32
    %c0_i32_0 = arith.constant 0 : i32
    %c0_i32_1 = arith.constant 0 : i32
    return %c0_i32, %c0_i32_0 : i32, i32
  }
  func.func @transform_7(%arg0: i32) -> (i32, i32) {
    %c0_i32 = arith.constant 0 : i32
    %c0_i32_0 = arith.constant 0 : i32
    %c0_i32_1 = arith.constant 0 : i32
    return %c0_i32, %c0_i32_0 : i32, i32
  }
  func.func @transform_8(%arg0: i32) -> (i32, i32) {
    %c0_i32 = arith.constant 0 : i32
    %c0_i32_0 = arith.constant 0 : i32
    %c0_i32_1 = arith.constant 0 : i32
    return %c0_i32, %c0_i32_0 : i32, i32
  }
  func.func @transform_9(%arg0: i32) -> (i32, i32) {
    %c0_i32 = arith.constant 0 : i32
    %c0_i32_0 = arith.constant 0 : i32
    %c0_i32_1 = arith.constant 0 : i32
    return %c0_i32, %c0_i32_0 : i32, i32
  }
  func.func @transform_10(%arg0: i32) -> (i32, i32) {
    %c0_i32 = arith.constant 0 : i32
    %c0_i32_0 = arith.constant 0 : i32
    %c0_i32_1 = arith.constant 0 : i32
    return %c0_i32, %c0_i32_0 : i32, i32
  }
  func.func @transform_11(%arg0: i32) -> (i32, i32) {
    %c0_i32 = arith.constant 0 : i32
    %c0_i32_0 = arith.constant 0 : i32
    %c0_i32_1 = arith.constant 0 : i32
    return %c0_i32, %c0_i32_0 : i32, i32
  }
  func.func @transform_12(%arg0: i32) -> (i32, i32) {
    %c0_i32 = arith.constant 0 : i32
    %c0_i32_0 = arith.constant 0 : i32
    %c0_i32_1 = arith.constant 0 : i32
    return %c0_i32, %c0_i32_0 : i32, i32
  }
  func.func @transform_13(%arg0: i32) -> (i32, i32) {
    %c0_i32 = arith.constant 0 : i32
    %c0_i32_0 = arith.constant 0 : i32
    %c0_i32_1 = arith.constant 0 : i32
    return %c0_i32, %c0_i32_0 : i32, i32
  }
  func.func @transform_14(%arg0: i32) -> (i32, i32) {
    %c0_i32 = arith.constant 0 : i32
    %c0_i32_0 = arith.constant 0 : i32
    %c0_i32_1 = arith.constant 0 : i32
    return %c0_i32, %c0_i32_0 : i32, i32
  }
  func.func @transform_15(%arg0: i32) -> (i32, i32) {
    %c0_i32 = arith.constant 0 : i32
    %c0_i32_0 = arith.constant 0 : i32
    %c0_i32_1 = arith.constant 0 : i32
    return %c0_i32, %c0_i32_0 : i32, i32
  }
  func.func @transform_16(%arg0: i32) -> (i32, i32) {
    %c0_i32 = arith.constant 0 : i32
    %c0_i32_0 = arith.constant 0 : i32
    %c0_i32_1 = arith.constant 0 : i32
    return %c0_i32, %c0_i32_0 : i32, i32
  }
  func.func @transform_17(%arg0: i32) -> (i32, i32) {
    %c0_i32 = arith.constant 0 : i32
    %c0_i32_0 = arith.constant 0 : i32
    %c0_i32_1 = arith.constant 0 : i32
    return %c0_i32, %c0_i32_0 : i32, i32
  }
}

module attributes {stable_mosaic.version = 11 : i64} {
  func.func @gated_gcn_kernel(%arg0: i32, %arg1: memref<32x1xi32, #tpu.memory_space<vmem>>, %arg2: memref<1x32xi32, #tpu.memory_space<vmem>>, %arg3: memref<32x1xi32, #tpu.memory_space<vmem>>, %arg4: memref<1x32xi32, #tpu.memory_space<vmem>>, %arg5: memref<16x64xf32, #tpu.memory_space<vmem>>, %arg6: memref<32x64xf32, #tpu.memory_space<vmem>>, %arg7: memref<64x64xf32, #tpu.memory_space<vmem>>, %arg8: memref<1x64xf32, #tpu.memory_space<vmem>>, %arg9: memref<64x64xf32, #tpu.memory_space<vmem>>, %arg10: memref<1x64xf32, #tpu.memory_space<vmem>>, %arg11: memref<192x64xf32, #tpu.memory_space<vmem>>, %arg12: memref<1x64xf32, #tpu.memory_space<vmem>>, %arg13: memref<1x64xf32, #tpu.memory_space<vmem>>, %arg14: memref<1x64xf32, #tpu.memory_space<vmem>>, %arg15: memref<1x64xf32, #tpu.memory_space<vmem>>, %arg16: memref<1x64xf32, #tpu.memory_space<vmem>>, %arg17: memref<16x64xf32, #tpu.memory_space<vmem>>, %arg18: memref<32x64xf32, #tpu.memory_space<vmem>>) attributes {dimension_semantics = [#tpu.dimension_semantics<arbitrary>], iteration_bounds = array<i64: 1>, scalar_prefetch = 0 : i64, scratch_operands = 0 : i64, tpu.core_type = #tpu.core_type<tc>, window_params = [{pipeline_mode = #tpu.pipeline_mode<synchronous>, transform_indices = @transform_0, window_bounds = array<i64: 32, 1>}, {pipeline_mode = #tpu.pipeline_mode<synchronous>, transform_indices = @transform_1, window_bounds = array<i64: 1, 32>}, {pipeline_mode = #tpu.pipeline_mode<synchronous>, transform_indices = @transform_2, window_bounds = array<i64: 32, 1>}, {pipeline_mode = #tpu.pipeline_mode<synchronous>, transform_indices = @transform_3, window_bounds = array<i64: 1, 32>}, {pipeline_mode = #tpu.pipeline_mode<synchronous>, transform_indices = @transform_4, window_bounds = array<i64: 16, 64>}, {pipeline_mode = #tpu.pipeline_mode<synchronous>, transform_indices = @transform_5, window_bounds = array<i64: 32, 64>}, {pipeline_mode = #tpu.pipeline_mode<synchronous>, transform_indices = @transform_6, window_bounds = array<i64: 64, 64>}, {pipeline_mode = #tpu.pipeline_mode<synchronous>, transform_indices = @transform_7, window_bounds = array<i64: 1, 64>}, {pipeline_mode = #tpu.pipeline_mode<synchronous>, transform_indices = @transform_8, window_bounds = array<i64: 64, 64>}, {pipeline_mode = #tpu.pipeline_mode<synchronous>, transform_indices = @transform_9, window_bounds = array<i64: 1, 64>}, {pipeline_mode = #tpu.pipeline_mode<synchronous>, transform_indices = @transform_10, window_bounds = array<i64: 192, 64>}, {pipeline_mode = #tpu.pipeline_mode<synchronous>, transform_indices = @transform_11, window_bounds = array<i64: 1, 64>}, {pipeline_mode = #tpu.pipeline_mode<synchronous>, transform_indices = @transform_12, window_bounds = array<i64: 1, 64>}, {pipeline_mode = #tpu.pipeline_mode<synchronous>, transform_indices = @transform_13, window_bounds = array<i64: 1, 64>}, {pipeline_mode = #tpu.pipeline_mode<synchronous>, transform_indices = @transform_14, window_bounds = array<i64: 1, 64>}, {pipeline_mode = #tpu.pipeline_mode<synchronous>, transform_indices = @transform_15, window_bounds = array<i64: 1, 64>}, {pipeline_mode = #tpu.pipeline_mode<synchronous>, transform_indices = @transform_16, window_bounds = array<i64: 16, 64>}, {pipeline_mode = #tpu.pipeline_mode<synchronous>, transform_indices = @transform_17, window_bounds = array<i64: 32, 64>}]} {
    %c0 = arith.constant 0 : index
    %c0_0 = arith.constant 0 : index
    %0 = vector.load %arg5[%c0, %c0_0] : memref<16x64xf32, #tpu.memory_space<vmem>>, vector<16x64xf32>
    %c0_1 = arith.constant 0 : index
    %c0_2 = arith.constant 0 : index
    %1 = vector.load %arg6[%c0_1, %c0_2] : memref<32x64xf32, #tpu.memory_space<vmem>>, vector<32x64xf32>
    %2 = tpu.iota {dimensions = array<i32: 1>} : vector<32x16xi32>
    %3 = tpu.iota {dimensions = array<i32: 0>} : vector<16x32xi32>
    %c0_3 = arith.constant 0 : index
    %c0_4 = arith.constant 0 : index
    %4 = vector.load %arg1[%c0_3, %c0_4] : memref<32x1xi32, #tpu.memory_space<vmem>>, vector<32x1xi32>
    %5 = vector.broadcast %4 : vector<32x1xi32> to vector<32x16xi32>
    %6 = arith.cmpi eq, %2, %5 : vector<32x16xi32>
    %7 = arith.extui %6 : vector<32x16xi1> to vector<32x16xi32>
    %8 = arith.sitofp %7 : vector<32x16xi32> to vector<32x16xf32>
    %c0_5 = arith.constant 0 : index
    %c0_6 = arith.constant 0 : index
    %9 = vector.load %arg3[%c0_5, %c0_6] : memref<32x1xi32, #tpu.memory_space<vmem>>, vector<32x1xi32>
    %10 = vector.broadcast %9 : vector<32x1xi32> to vector<32x16xi32>
    %11 = arith.cmpi eq, %2, %10 : vector<32x16xi32>
    %12 = arith.extui %11 : vector<32x16xi1> to vector<32x16xi32>
    %13 = arith.sitofp %12 : vector<32x16xi32> to vector<32x16xf32>
    %c0_7 = arith.constant 0 : index
    %c0_8 = arith.constant 0 : index
    %14 = vector.load %arg2[%c0_7, %c0_8] : memref<1x32xi32, #tpu.memory_space<vmem>>, vector<1x32xi32>
    %15 = vector.broadcast %14 : vector<1x32xi32> to vector<16x32xi32>
    %16 = arith.cmpi eq, %3, %15 : vector<16x32xi32>
    %17 = arith.extui %16 : vector<16x32xi1> to vector<16x32xi32>
    %18 = arith.sitofp %17 : vector<16x32xi32> to vector<16x32xf32>
    %c0_9 = arith.constant 0 : index
    %c0_10 = arith.constant 0 : index
    %19 = vector.load %arg4[%c0_9, %c0_10] : memref<1x32xi32, #tpu.memory_space<vmem>>, vector<1x32xi32>
    %20 = vector.broadcast %19 : vector<1x32xi32> to vector<16x32xi32>
    %21 = arith.cmpi eq, %3, %20 : vector<16x32xi32>
    %22 = arith.extui %21 : vector<16x32xi1> to vector<16x32xi32>
    %23 = arith.sitofp %22 : vector<16x32xi32> to vector<16x32xf32>
    %cst = arith.constant 0.000000e+00 : f32
    %24 = vector.broadcast %cst : f32 to vector<32x64xf32>
    %25 = arith.subf %24, %1 : vector<32x64xf32>
    %26 = math.exp %25 : vector<32x64xf32>
    %cst_11 = arith.constant 1.000000e+00 : f32
    %27 = vector.broadcast %cst_11 : f32 to vector<32x64xf32>
    %28 = arith.addf %27, %26 : vector<32x64xf32>
    %cst_12 = arith.constant 1.000000e+00 : f32
    %29 = vector.broadcast %cst_12 : f32 to vector<32x64xf32>
    %30 = arith.divf %29, %28 : vector<32x64xf32>
    %cst_13 = arith.constant dense<0.000000e+00> : vector<16x64xf32>
    %31 = tpu.matmul %18, %30, %cst_13 {dimension_numbers = #tpu.dot_dimension_numbers<[1], [0], [0], [1], [0, 0, 1, 1], [], []>} : vector<16x32xf32>, vector<32x64xf32>, vector<16x64xf32> -> vector<16x64xf32>
    %cst_14 = arith.constant dense<0.000000e+00> : vector<32x64xf32>
    %32 = tpu.matmul %8, %31, %cst_14 {dimension_numbers = #tpu.dot_dimension_numbers<[1], [0], [0], [1], [0, 0, 1, 1], [], []>} : vector<32x16xf32>, vector<16x64xf32>, vector<32x64xf32> -> vector<32x64xf32>
    %cst_15 = arith.constant 9.99999974E-6 : f32
    %33 = vector.broadcast %cst_15 : f32 to vector<32x64xf32>
    %34 = arith.addf %32, %33 : vector<32x64xf32>
    %35 = tpu.reciprocal %34 {approx = true} : vector<32x64xf32> -> vector<32x64xf32>
    %36 = arith.mulf %30, %35 : vector<32x64xf32>
    %cst_16 = arith.constant dense<0.000000e+00> : vector<32x64xf32>
    %37 = tpu.matmul %8, %0, %cst_16 {dimension_numbers = #tpu.dot_dimension_numbers<[1], [0], [0], [1], [0, 0, 1, 1], [], []>} : vector<32x16xf32>, vector<16x64xf32>, vector<32x64xf32> -> vector<32x64xf32>
    %c0_17 = arith.constant 0 : index
    %c0_18 = arith.constant 0 : index
    %38 = vector.load %arg9[%c0_17, %c0_18] : memref<64x64xf32, #tpu.memory_space<vmem>>, vector<64x64xf32>
    %cst_19 = arith.constant dense<0.000000e+00> : vector<32x64xf32>
    %39 = tpu.matmul %37, %38, %cst_19 {dimension_numbers = #tpu.dot_dimension_numbers<[1], [0], [0], [1], [0, 0, 1, 1], [], []>} : vector<32x64xf32>, vector<64x64xf32>, vector<32x64xf32> -> vector<32x64xf32>
    %c0_20 = arith.constant 0 : index
    %c0_21 = arith.constant 0 : index
    %40 = vector.load %arg10[%c0_20, %c0_21] : memref<1x64xf32, #tpu.memory_space<vmem>>, vector<1x64xf32>
    %41 = vector.broadcast %40 : vector<1x64xf32> to vector<32x64xf32>
    %42 = arith.addf %39, %41 : vector<32x64xf32>
    %43 = arith.mulf %36, %42 : vector<32x64xf32>
    %cst_22 = arith.constant dense<0.000000e+00> : vector<16x64xf32>
    %44 = tpu.matmul %23, %43, %cst_22 {dimension_numbers = #tpu.dot_dimension_numbers<[1], [0], [0], [1], [0, 0, 1, 1], [], []>} : vector<16x32xf32>, vector<32x64xf32>, vector<16x64xf32> -> vector<16x64xf32>
    %c0_23 = arith.constant 0 : index
    %c0_24 = arith.constant 0 : index
    %45 = vector.load %arg7[%c0_23, %c0_24] : memref<64x64xf32, #tpu.memory_space<vmem>>, vector<64x64xf32>
    %cst_25 = arith.constant dense<0.000000e+00> : vector<16x64xf32>
    %46 = tpu.matmul %0, %45, %cst_25 {dimension_numbers = #tpu.dot_dimension_numbers<[1], [0], [0], [1], [0, 0, 1, 1], [], []>} : vector<16x64xf32>, vector<64x64xf32>, vector<16x64xf32> -> vector<16x64xf32>
    %c0_26 = arith.constant 0 : index
    %c0_27 = arith.constant 0 : index
    %47 = vector.load %arg8[%c0_26, %c0_27] : memref<1x64xf32, #tpu.memory_space<vmem>>, vector<1x64xf32>
    %48 = vector.broadcast %47 : vector<1x64xf32> to vector<16x64xf32>
    %49 = arith.addf %46, %48 : vector<16x64xf32>
    %50 = arith.addf %49, %44 : vector<16x64xf32>
    %c0_28 = arith.constant 0 : index
    %c0_29 = arith.constant 0 : index
    %51 = vector.load %arg13[%c0_28, %c0_29] : memref<1x64xf32, #tpu.memory_space<vmem>>, vector<1x64xf32>
    %c0_30 = arith.constant 0 : index
    %c0_31 = arith.constant 0 : index
    %52 = vector.load %arg14[%c0_30, %c0_31] : memref<1x64xf32, #tpu.memory_space<vmem>>, vector<1x64xf32>
    %cst_32 = arith.constant dense<0.000000e+00> : vector<16xf32>
    %53 = vector.multi_reduction <add>, %50, %cst_32 [1] : vector<16x64xf32> to vector<16xf32>
    %54 = vector.shape_cast %53 : vector<16xf32> to vector<16x1xf32>
    %cst_33 = arith.constant 6.400000e+01 : f32
    %55 = vector.broadcast %cst_33 : f32 to vector<16x1xf32>
    %56 = arith.divf %54, %55 : vector<16x1xf32>
    %57 = vector.broadcast %56 : vector<16x1xf32> to vector<16x64xf32>
    %58 = arith.subf %50, %57 : vector<16x64xf32>
    %59 = arith.mulf %58, %58 : vector<16x64xf32>
    %cst_34 = arith.constant dense<0.000000e+00> : vector<16xf32>
    %60 = vector.multi_reduction <add>, %59, %cst_34 [1] : vector<16x64xf32> to vector<16xf32>
    %61 = vector.shape_cast %60 : vector<16xf32> to vector<16x1xf32>
    %cst_35 = arith.constant 6.400000e+01 : f32
    %62 = vector.broadcast %cst_35 : f32 to vector<16x1xf32>
    %63 = arith.divf %61, %62 : vector<16x1xf32>
    %64 = vector.broadcast %56 : vector<16x1xf32> to vector<16x64xf32>
    %65 = arith.subf %50, %64 : vector<16x64xf32>
    %cst_36 = arith.constant 9.99999974E-6 : f32
    %66 = vector.broadcast %cst_36 : f32 to vector<16x1xf32>
    %67 = arith.addf %63, %66 : vector<16x1xf32>
    %68 = math.rsqrt %67 : vector<16x1xf32>
    %69 = vector.broadcast %68 : vector<16x1xf32> to vector<16x64xf32>
    %70 = arith.mulf %65, %69 : vector<16x64xf32>
    %71 = vector.broadcast %51 : vector<1x64xf32> to vector<16x64xf32>
    %72 = arith.mulf %70, %71 : vector<16x64xf32>
    %73 = vector.broadcast %52 : vector<1x64xf32> to vector<16x64xf32>
    %74 = arith.addf %72, %73 : vector<16x64xf32>
    %cst_37 = arith.constant 0.000000e+00 : f32
    %75 = vector.broadcast %cst_37 : f32 to vector<16x64xf32>
    %76 = arith.subf %75, %74 : vector<16x64xf32>
    %77 = math.exp %76 : vector<16x64xf32>
    %cst_38 = arith.constant 1.000000e+00 : f32
    %78 = vector.broadcast %cst_38 : f32 to vector<16x64xf32>
    %79 = arith.addf %78, %77 : vector<16x64xf32>
    %cst_39 = arith.constant 1.000000e+00 : f32
    %80 = vector.broadcast %cst_39 : f32 to vector<16x64xf32>
    %81 = arith.divf %80, %79 : vector<16x64xf32>
    %82 = arith.mulf %74, %81 : vector<16x64xf32>
    %83 = arith.addf %0, %82 : vector<16x64xf32>
    %c0_40 = arith.constant 0 : index
    %c0_41 = arith.constant 0 : index
    %84 = vector.load %arg17[%c0_40, %c0_41] : memref<16x64xf32, #tpu.memory_space<vmem>>, vector<16x64xf32>
    tpu.vector_store %arg17[%c0_40, %c0_41], %83 {strides = array<i32>} : memref<16x64xf32, #tpu.memory_space<vmem>>, vector<16x64xf32>,
    %cst_42 = arith.constant dense<0.000000e+00> : vector<32x64xf32>
    %85 = tpu.matmul %13, %0, %cst_42 {dimension_numbers = #tpu.dot_dimension_numbers<[1], [0], [0], [1], [0, 0, 1, 1], [], []>} : vector<32x16xf32>, vector<16x64xf32>, vector<32x64xf32> -> vector<32x64xf32>
    %c0_43 = arith.constant 0 : index
    %c0_44 = arith.constant 0 : index
    %86 = vector.load %arg11[%c0_43, %c0_44] : memref<192x64xf32, #tpu.memory_space<vmem>>, vector<192x64xf32>
    %87 = vector.extract_strided_slice %86 {offsets = [0, 0], sizes = [64, 64], strides = [1, 1]} : vector<192x64xf32> to vector<64x64xf32>
    %cst_45 = arith.constant dense<0.000000e+00> : vector<32x64xf32>
    %88 = tpu.matmul %37, %87, %cst_45 {dimension_numbers = #tpu.dot_dimension_numbers<[1], [0], [0], [1], [0, 0, 1, 1], [], []>} : vector<32x64xf32>, vector<64x64xf32>, vector<32x64xf32> -> vector<32x64xf32>
    %89 = vector.extract_strided_slice %86 {offsets = [64, 0], sizes = [64, 64], strides = [1, 1]} : vector<192x64xf32> to vector<64x64xf32>
    %cst_46 = arith.constant dense<0.000000e+00> : vector<32x64xf32>
    %90 = tpu.matmul %85, %89, %cst_46 {dimension_numbers = #tpu.dot_dimension_numbers<[1], [0], [0], [1], [0, 0, 1, 1], [], []>} : vector<32x64xf32>, vector<64x64xf32>, vector<32x64xf32> -> vector<32x64xf32>
    %91 = arith.addf %88, %90 : vector<32x64xf32>
    %92 = vector.extract_strided_slice %86 {offsets = [128, 0], sizes = [64, 64], strides = [1, 1]} : vector<192x64xf32> to vector<64x64xf32>
    %cst_47 = arith.constant dense<0.000000e+00> : vector<32x64xf32>
    %93 = tpu.matmul %1, %92, %cst_47 {dimension_numbers = #tpu.dot_dimension_numbers<[1], [0], [0], [1], [0, 0, 1, 1], [], []>} : vector<32x64xf32>, vector<64x64xf32>, vector<32x64xf32> -> vector<32x64xf32>
    %94 = arith.addf %91, %93 : vector<32x64xf32>
    %c0_48 = arith.constant 0 : index
    %c0_49 = arith.constant 0 : index
    %95 = vector.load %arg12[%c0_48, %c0_49] : memref<1x64xf32, #tpu.memory_space<vmem>>, vector<1x64xf32>
    %96 = vector.broadcast %95 : vector<1x64xf32> to vector<32x64xf32>
    %97 = arith.addf %94, %96 : vector<32x64xf32>
    %c0_50 = arith.constant 0 : index
    %c0_51 = arith.constant 0 : index
    %98 = vector.load %arg15[%c0_50, %c0_51] : memref<1x64xf32, #tpu.memory_space<vmem>>, vector<1x64xf32>
    %c0_52 = arith.constant 0 : index
    %c0_53 = arith.constant 0 : index
    %99 = vector.load %arg16[%c0_52, %c0_53] : memref<1x64xf32, #tpu.memory_space<vmem>>, vector<1x64xf32>
    %cst_54 = arith.constant dense<0.000000e+00> : vector<32xf32>
    %100 = vector.multi_reduction <add>, %97, %cst_54 [1] : vector<32x64xf32> to vector<32xf32>
    %101 = vector.shape_cast %100 : vector<32xf32> to vector<32x1xf32>
    %cst_55 = arith.constant 6.400000e+01 : f32
    %102 = vector.broadcast %cst_55 : f32 to vector<32x1xf32>
    %103 = arith.divf %101, %102 : vector<32x1xf32>
    %104 = vector.broadcast %103 : vector<32x1xf32> to vector<32x64xf32>
    %105 = arith.subf %97, %104 : vector<32x64xf32>
    %106 = arith.mulf %105, %105 : vector<32x64xf32>
    %cst_56 = arith.constant dense<0.000000e+00> : vector<32xf32>
    %107 = vector.multi_reduction <add>, %106, %cst_56 [1] : vector<32x64xf32> to vector<32xf32>
    %108 = vector.shape_cast %107 : vector<32xf32> to vector<32x1xf32>
    %cst_57 = arith.constant 6.400000e+01 : f32
    %109 = vector.broadcast %cst_57 : f32 to vector<32x1xf32>
    %110 = arith.divf %108, %109 : vector<32x1xf32>
    %111 = vector.broadcast %103 : vector<32x1xf32> to vector<32x64xf32>
    %112 = arith.subf %97, %111 : vector<32x64xf32>
    %cst_58 = arith.constant 9.99999974E-6 : f32
    %113 = vector.broadcast %cst_58 : f32 to vector<32x1xf32>
    %114 = arith.addf %110, %113 : vector<32x1xf32>
    %115 = math.rsqrt %114 : vector<32x1xf32>
    %116 = vector.broadcast %115 : vector<32x1xf32> to vector<32x64xf32>
    %117 = arith.mulf %112, %116 : vector<32x64xf32>
    %118 = vector.broadcast %98 : vector<1x64xf32> to vector<32x64xf32>
    %119 = arith.mulf %117, %118 : vector<32x64xf32>
    %120 = vector.broadcast %99 : vector<1x64xf32> to vector<32x64xf32>
    %121 = arith.addf %119, %120 : vector<32x64xf32>
    %cst_59 = arith.constant 0.000000e+00 : f32
    %122 = vector.broadcast %cst_59 : f32 to vector<32x64xf32>
    %123 = arith.subf %122, %121 : vector<32x64xf32>
    %124 = math.exp %123 : vector<32x64xf32>
    %cst_60 = arith.constant 1.000000e+00 : f32
    %125 = vector.broadcast %cst_60 : f32 to vector<32x64xf32>
    %126 = arith.addf %125, %124 : vector<32x64xf32>
    %cst_61 = arith.constant 1.000000e+00 : f32
    %127 = vector.broadcast %cst_61 : f32 to vector<32x64xf32>
    %128 = arith.divf %127, %126 : vector<32x64xf32>
    %129 = arith.mulf %121, %128 : vector<32x64xf32>
    %130 = arith.addf %1, %129 : vector<32x64xf32>
    %c0_62 = arith.constant 0 : index
    %c0_63 = arith.constant 0 : index
    %131 = vector.load %arg18[%c0_62, %c0_63] : memref<32x64xf32, #tpu.memory_space<vmem>>, vector<32x64xf32>
    tpu.vector_store %arg18[%c0_62, %c0_63], %130 {strides = array<i32>} : memref<32x64xf32, #tpu.memory_space<vmem>>, vector<32x64xf32>,
    return
  }
  func.func @transform_0(%arg0: i32) -> (i32, i32) {
    %c0_i32 = arith.constant 0 : i32
    %c0_i32_0 = arith.constant 0 : i32
    %c0_i32_1 = arith.constant 0 : i32
    return %c0_i32, %c0_i32_0 : i32, i32
  }
  func.func @transform_1(%arg0: i32) -> (i32, i32) {
    %c0_i32 = arith.constant 0 : i32
    %c0_i32_0 = arith.constant 0 : i32
    %c0_i32_1 = arith.constant 0 : i32
    return %c0_i32, %c0_i32_0 : i32, i32
  }
  func.func @transform_2(%arg0: i32) -> (i32, i32) {
    %c0_i32 = arith.constant 0 : i32
    %c0_i32_0 = arith.constant 0 : i32
    %c0_i32_1 = arith.constant 0 : i32
    return %c0_i32, %c0_i32_0 : i32, i32
  }
  func.func @transform_3(%arg0: i32) -> (i32, i32) {
    %c0_i32 = arith.constant 0 : i32
    %c0_i32_0 = arith.constant 0 : i32
    %c0_i32_1 = arith.constant 0 : i32
    return %c0_i32, %c0_i32_0 : i32, i32
  }
  func.func @transform_4(%arg0: i32) -> (i32, i32) {
    %c0_i32 = arith.constant 0 : i32
    %c0_i32_0 = arith.constant 0 : i32
    %c0_i32_1 = arith.constant 0 : i32
    return %c0_i32, %c0_i32_0 : i32, i32
  }
  func.func @transform_5(%arg0: i32) -> (i32, i32) {
    %c0_i32 = arith.constant 0 : i32
    %c0_i32_0 = arith.constant 0 : i32
    %c0_i32_1 = arith.constant 0 : i32
    return %c0_i32, %c0_i32_0 : i32, i32
  }
  func.func @transform_6(%arg0: i32) -> (i32, i32) {
    %c0_i32 = arith.constant 0 : i32
    %c0_i32_0 = arith.constant 0 : i32
    %c0_i32_1 = arith.constant 0 : i32
    return %c0_i32, %c0_i32_0 : i32, i32
  }
  func.func @transform_7(%arg0: i32) -> (i32, i32) {
    %c0_i32 = arith.constant 0 : i32
    %c0_i32_0 = arith.constant 0 : i32
    %c0_i32_1 = arith.constant 0 : i32
    return %c0_i32, %c0_i32_0 : i32, i32
  }
  func.func @transform_8(%arg0: i32) -> (i32, i32) {
    %c0_i32 = arith.constant 0 : i32
    %c0_i32_0 = arith.constant 0 : i32
    %c0_i32_1 = arith.constant 0 : i32
    return %c0_i32, %c0_i32_0 : i32, i32
  }
  func.func @transform_9(%arg0: i32) -> (i32, i32) {
    %c0_i32 = arith.constant 0 : i32
    %c0_i32_0 = arith.constant 0 : i32
    %c0_i32_1 = arith.constant 0 : i32
    return %c0_i32, %c0_i32_0 : i32, i32
  }
  func.func @transform_10(%arg0: i32) -> (i32, i32) {
    %c0_i32 = arith.constant 0 : i32
    %c0_i32_0 = arith.constant 0 : i32
    %c0_i32_1 = arith.constant 0 : i32
    return %c0_i32, %c0_i32_0 : i32, i32
  }
  func.func @transform_11(%arg0: i32) -> (i32, i32) {
    %c0_i32 = arith.constant 0 : i32
    %c0_i32_0 = arith.constant 0 : i32
    %c0_i32_1 = arith.constant 0 : i32
    return %c0_i32, %c0_i32_0 : i32, i32
  }
  func.func @transform_12(%arg0: i32) -> (i32, i32) {
    %c0_i32 = arith.constant 0 : i32
    %c0_i32_0 = arith.constant 0 : i32
    %c0_i32_1 = arith.constant 0 : i32
    return %c0_i32, %c0_i32_0 : i32, i32
  }
  func.func @transform_13(%arg0: i32) -> (i32, i32) {
    %c0_i32 = arith.constant 0 : i32
    %c0_i32_0 = arith.constant 0 : i32
    %c0_i32_1 = arith.constant 0 : i32
    return %c0_i32, %c0_i32_0 : i32, i32
  }
  func.func @transform_14(%arg0: i32) -> (i32, i32) {
    %c0_i32 = arith.constant 0 : i32
    %c0_i32_0 = arith.constant 0 : i32
    %c0_i32_1 = arith.constant 0 : i32
    return %c0_i32, %c0_i32_0 : i32, i32
  }
  func.func @transform_15(%arg0: i32) -> (i32, i32) {
    %c0_i32 = arith.constant 0 : i32
    %c0_i32_0 = arith.constant 0 : i32
    %c0_i32_1 = arith.constant 0 : i32
    return %c0_i32, %c0_i32_0 : i32, i32
  }
  func.func @transform_16(%arg0: i32) -> (i32, i32) {
    %c0_i32 = arith.constant 0 : i32
    %c0_i32_0 = arith.constant 0 : i32
    %c0_i32_1 = arith.constant 0 : i32
    return %c0_i32, %c0_i32_0 : i32, i32
  }
  func.func @transform_17(%arg0: i32) -> (i32, i32) {
    %c0_i32 = arith.constant 0 : i32
    %c0_i32_0 = arith.constant 0 : i32
    %c0_i32_1 = arith.constant 0 : i32
    return %c0_i32, %c0_i32_0 : i32, i32
  }
}

module attributes {stable_mosaic.version = 11 : i64} {
  func.func @tail_kernel(%arg0: i32, %arg1: memref<1x16xi32, #tpu.memory_space<vmem>>, %arg2: memref<16x64xf32, #tpu.memory_space<vmem>>, %arg3: memref<1x64xf32, #tpu.memory_space<vmem>>, %arg4: memref<1x64xf32, #tpu.memory_space<vmem>>, %arg5: memref<64x32xf32, #tpu.memory_space<vmem>>, %arg6: memref<1x32xf32, #tpu.memory_space<vmem>>, %arg7: memref<32x1xf32, #tpu.memory_space<vmem>>, %arg8: memref<1x1xf32, #tpu.memory_space<vmem>>, %arg9: memref<2x1xf32, #tpu.memory_space<vmem>>) attributes {dimension_semantics = [#tpu.dimension_semantics<arbitrary>], iteration_bounds = array<i64: 1>, scalar_prefetch = 0 : i64, scratch_operands = 0 : i64, tpu.core_type = #tpu.core_type<tc>, window_params = [{pipeline_mode = #tpu.pipeline_mode<synchronous>, transform_indices = @transform_0, window_bounds = array<i64: 1, 16>}, {pipeline_mode = #tpu.pipeline_mode<synchronous>, transform_indices = @transform_1, window_bounds = array<i64: 16, 64>}, {pipeline_mode = #tpu.pipeline_mode<synchronous>, transform_indices = @transform_2, window_bounds = array<i64: 1, 64>}, {pipeline_mode = #tpu.pipeline_mode<synchronous>, transform_indices = @transform_3, window_bounds = array<i64: 1, 64>}, {pipeline_mode = #tpu.pipeline_mode<synchronous>, transform_indices = @transform_4, window_bounds = array<i64: 64, 32>}, {pipeline_mode = #tpu.pipeline_mode<synchronous>, transform_indices = @transform_5, window_bounds = array<i64: 1, 32>}, {pipeline_mode = #tpu.pipeline_mode<synchronous>, transform_indices = @transform_6, window_bounds = array<i64: 32, 1>}, {pipeline_mode = #tpu.pipeline_mode<synchronous>, transform_indices = @transform_7, window_bounds = array<i64: 1, 1>}, {pipeline_mode = #tpu.pipeline_mode<synchronous>, transform_indices = @transform_8, window_bounds = array<i64: 2, 1>}]} {
    %c0 = arith.constant 0 : index
    %c0_0 = arith.constant 0 : index
    %0 = vector.load %arg2[%c0, %c0_0] : memref<16x64xf32, #tpu.memory_space<vmem>>, vector<16x64xf32>
    %cst = arith.constant dense<0.000000e+00> : vector<64xf32>
    %1 = vector.multi_reduction <add>, %0, %cst [0] : vector<16x64xf32> to vector<64xf32>
    %2 = vector.shape_cast %1 : vector<64xf32> to vector<1x64xf32>
    %cst_1 = arith.constant 1.600000e+01 : f32
    %3 = vector.broadcast %cst_1 : f32 to vector<1x64xf32>
    %4 = arith.divf %2, %3 : vector<1x64xf32>
    %5 = vector.broadcast %4 : vector<1x64xf32> to vector<16x64xf32>
    %6 = arith.subf %0, %5 : vector<16x64xf32>
    %7 = arith.mulf %6, %6 : vector<16x64xf32>
    %cst_2 = arith.constant dense<0.000000e+00> : vector<64xf32>
    %8 = vector.multi_reduction <add>, %7, %cst_2 [0] : vector<16x64xf32> to vector<64xf32>
    %9 = vector.shape_cast %8 : vector<64xf32> to vector<1x64xf32>
    %cst_3 = arith.constant 1.600000e+01 : f32
    %10 = vector.broadcast %cst_3 : f32 to vector<1x64xf32>
    %11 = arith.divf %9, %10 : vector<1x64xf32>
    %12 = vector.broadcast %4 : vector<1x64xf32> to vector<16x64xf32>
    %13 = arith.subf %0, %12 : vector<16x64xf32>
    %cst_4 = arith.constant 9.99999974E-6 : f32
    %14 = vector.broadcast %cst_4 : f32 to vector<1x64xf32>
    %15 = arith.addf %11, %14 : vector<1x64xf32>
    %16 = math.rsqrt %15 : vector<1x64xf32>
    %17 = vector.broadcast %16 : vector<1x64xf32> to vector<16x64xf32>
    %18 = arith.mulf %13, %17 : vector<16x64xf32>
    %c0_5 = arith.constant 0 : index
    %c0_6 = arith.constant 0 : index
    %19 = vector.load %arg3[%c0_5, %c0_6] : memref<1x64xf32, #tpu.memory_space<vmem>>, vector<1x64xf32>
    %20 = vector.broadcast %19 : vector<1x64xf32> to vector<16x64xf32>
    %21 = arith.mulf %18, %20 : vector<16x64xf32>
    %c0_7 = arith.constant 0 : index
    %c0_8 = arith.constant 0 : index
    %22 = vector.load %arg4[%c0_7, %c0_8] : memref<1x64xf32, #tpu.memory_space<vmem>>, vector<1x64xf32>
    %23 = vector.broadcast %22 : vector<1x64xf32> to vector<16x64xf32>
    %24 = arith.addf %21, %23 : vector<16x64xf32>
    %cst_9 = arith.constant 0.000000e+00 : f32
    %25 = vector.broadcast %cst_9 : f32 to vector<16x64xf32>
    %26 = arith.subf %25, %24 : vector<16x64xf32>
    %27 = math.exp %26 : vector<16x64xf32>
    %cst_10 = arith.constant 1.000000e+00 : f32
    %28 = vector.broadcast %cst_10 : f32 to vector<16x64xf32>
    %29 = arith.addf %28, %27 : vector<16x64xf32>
    %cst_11 = arith.constant 1.000000e+00 : f32
    %30 = vector.broadcast %cst_11 : f32 to vector<16x64xf32>
    %31 = arith.divf %30, %29 : vector<16x64xf32>
    %32 = arith.mulf %24, %31 : vector<16x64xf32>
    %c0_12 = arith.constant 0 : index
    %c0_13 = arith.constant 0 : index
    %33 = vector.load %arg5[%c0_12, %c0_13] : memref<64x32xf32, #tpu.memory_space<vmem>>, vector<64x32xf32>
    %cst_14 = arith.constant dense<0.000000e+00> : vector<16x32xf32>
    %34 = tpu.matmul %32, %33, %cst_14 {dimension_numbers = #tpu.dot_dimension_numbers<[1], [0], [0], [1], [0, 0, 1, 1], [], []>} : vector<16x64xf32>, vector<64x32xf32>, vector<16x32xf32> -> vector<16x32xf32>
    %c0_15 = arith.constant 0 : index
    %c0_16 = arith.constant 0 : index
    %35 = vector.load %arg6[%c0_15, %c0_16] : memref<1x32xf32, #tpu.memory_space<vmem>>, vector<1x32xf32>
    %36 = vector.broadcast %35 : vector<1x32xf32> to vector<16x32xf32>
    %37 = arith.addf %34, %36 : vector<16x32xf32>
    %cst_17 = arith.constant 0.000000e+00 : f32
    %38 = vector.broadcast %cst_17 : f32 to vector<16x32xf32>
    %39 = arith.subf %38, %37 : vector<16x32xf32>
    %40 = math.exp %39 : vector<16x32xf32>
    %cst_18 = arith.constant 1.000000e+00 : f32
    %41 = vector.broadcast %cst_18 : f32 to vector<16x32xf32>
    %42 = arith.addf %41, %40 : vector<16x32xf32>
    %cst_19 = arith.constant 1.000000e+00 : f32
    %43 = vector.broadcast %cst_19 : f32 to vector<16x32xf32>
    %44 = arith.divf %43, %42 : vector<16x32xf32>
    %45 = arith.mulf %37, %44 : vector<16x32xf32>
    %46 = tpu.iota {dimensions = array<i32: 0>} : vector<2x16xi32>
    %c0_20 = arith.constant 0 : index
    %c0_21 = arith.constant 0 : index
    %47 = vector.load %arg1[%c0_20, %c0_21] : memref<1x16xi32, #tpu.memory_space<vmem>>, vector<1x16xi32>
    %48 = vector.broadcast %47 : vector<1x16xi32> to vector<2x16xi32>
    %49 = arith.cmpi eq, %46, %48 : vector<2x16xi32>
    %50 = arith.extui %49 : vector<2x16xi1> to vector<2x16xi32>
    %51 = arith.sitofp %50 : vector<2x16xi32> to vector<2x16xf32>
    %cst_22 = arith.constant dense<0.000000e+00> : vector<2xf32>
    %52 = vector.multi_reduction <add>, %51, %cst_22 [1] : vector<2x16xf32> to vector<2xf32>
    %53 = vector.shape_cast %52 : vector<2xf32> to vector<2x1xf32>
    %cst_23 = arith.constant dense<0.000000e+00> : vector<2x32xf32>
    %54 = tpu.matmul %51, %45, %cst_23 {dimension_numbers = #tpu.dot_dimension_numbers<[1], [0], [0], [1], [0, 0, 1, 1], [], []>} : vector<2x16xf32>, vector<16x32xf32>, vector<2x32xf32> -> vector<2x32xf32>
    %55 = vector.broadcast %53 : vector<2x1xf32> to vector<2x32xf32>
    %56 = arith.divf %54, %55 : vector<2x32xf32>
    %c0_24 = arith.constant 0 : index
    %c0_25 = arith.constant 0 : index
    %57 = vector.load %arg7[%c0_24, %c0_25] : memref<32x1xf32, #tpu.memory_space<vmem>>, vector<32x1xf32>
    %cst_26 = arith.constant dense<0.000000e+00> : vector<2x1xf32>
    %58 = tpu.matmul %56, %57, %cst_26 {dimension_numbers = #tpu.dot_dimension_numbers<[1], [0], [0], [1], [0, 0, 1, 1], [], []>} : vector<2x32xf32>, vector<32x1xf32>, vector<2x1xf32> -> vector<2x1xf32>
    %c0_27 = arith.constant 0 : index
    %c0_28 = arith.constant 0 : index
    %59 = vector.load %arg8[%c0_27, %c0_28] : memref<1x1xf32, #tpu.memory_space<vmem>>, vector<1x1xf32>
    %60 = vector.broadcast %59 : vector<1x1xf32> to vector<2x1xf32>
    %61 = arith.addf %58, %60 : vector<2x1xf32>
    %c0_29 = arith.constant 0 : index
    %c0_30 = arith.constant 0 : index
    %62 = vector.load %arg9[%c0_29, %c0_30] : memref<2x1xf32, #tpu.memory_space<vmem>>, vector<2x1xf32>
    tpu.vector_store %arg9[%c0_29, %c0_30], %61 {strides = array<i32>} : memref<2x1xf32, #tpu.memory_space<vmem>>, vector<2x1xf32>,
    return
  }
  func.func @transform_0(%arg0: i32) -> (i32, i32) {
    %c0_i32 = arith.constant 0 : i32
    %c0_i32_0 = arith.constant 0 : i32
    %c0_i32_1 = arith.constant 0 : i32
    return %c0_i32, %c0_i32_0 : i32, i32
  }
  func.func @transform_1(%arg0: i32) -> (i32, i32) {
    %c0_i32 = arith.constant 0 : i32
    %c0_i32_0 = arith.constant 0 : i32
    %c0_i32_1 = arith.constant 0 : i32
    return %c0_i32, %c0_i32_0 : i32, i32
  }
  func.func @transform_2(%arg0: i32) -> (i32, i32) {
    %c0_i32 = arith.constant 0 : i32
    %c0_i32_0 = arith.constant 0 : i32
    %c0_i32_1 = arith.constant 0 : i32
    return %c0_i32, %c0_i32_0 : i32, i32
  }
  func.func @transform_3(%arg0: i32) -> (i32, i32) {
    %c0_i32 = arith.constant 0 : i32
    %c0_i32_0 = arith.constant 0 : i32
    %c0_i32_1 = arith.constant 0 : i32
    return %c0_i32, %c0_i32_0 : i32, i32
  }
  func.func @transform_4(%arg0: i32) -> (i32, i32) {
    %c0_i32 = arith.constant 0 : i32
    %c0_i32_0 = arith.constant 0 : i32
    %c0_i32_1 = arith.constant 0 : i32
    return %c0_i32, %c0_i32_0 : i32, i32
  }
  func.func @transform_5(%arg0: i32) -> (i32, i32) {
    %c0_i32 = arith.constant 0 : i32
    %c0_i32_0 = arith.constant 0 : i32
    %c0_i32_1 = arith.constant 0 : i32
    return %c0_i32, %c0_i32_0 : i32, i32
  }
  func.func @transform_6(%arg0: i32) -> (i32, i32) {
    %c0_i32 = arith.constant 0 : i32
    %c0_i32_0 = arith.constant 0 : i32
    %c0_i32_1 = arith.constant 0 : i32
    return %c0_i32, %c0_i32_0 : i32, i32
  }
  func.func @transform_7(%arg0: i32) -> (i32, i32) {
    %c0_i32 = arith.constant 0 : i32
    %c0_i32_0 = arith.constant 0 : i32
    %c0_i32_1 = arith.constant 0 : i32
    return %c0_i32, %c0_i32_0 : i32, i32
  }
  func.func @transform_8(%arg0: i32) -> (i32, i32) {
    %c0_i32 = arith.constant 0 : i32
    %c0_i32_0 = arith.constant 0 : i32
    %c0_i32_1 = arith.constant 0 : i32
    return %c0_i32, %c0_i32_0 : i32, i32
  }
}

</mosaic_0001>

<llo_original>
// kernel: algnn_forward.6
$region0: #{algnn_forward.6}
  #allocation0 [shape = 'u32[]', space=smem, size = 0x4, offset = 0x4, fixed_abs, tag = 'smem constant byte address 0x4 - core index']
  #allocation1 [shape = 'u32[144,128]{1,0:T(1,128)}', space=vmem, size = 0x12000, scoped, tag = 'internal scratch']
  %s0 = inlined_call_operand.vmem [shape: f32[16,11], index: 0, kind: input, shape index: {}]
  %s1 = inlined_call_operand.vmem [shape: f32[32,9], index: 1, kind: input, shape index: {}]
  %s2 = inlined_call_operand.vmem [shape: f32[64,7], index: 2, kind: input, shape index: {}]
  %s3 = inlined_call_operand.vmem [shape: f32[11,64], index: 3, kind: input, shape index: {}]
  %s4 = inlined_call_operand.vmem [shape: f32[1,64], index: 4, kind: input, shape index: {}]
  %s5 = inlined_call_operand.vmem [shape: f32[9,64], index: 5, kind: input, shape index: {}]
  %s6 = inlined_call_operand.vmem [shape: f32[1,64], index: 6, kind: input, shape index: {}]
  %s7 = inlined_call_operand.vmem [shape: f32[7,64], index: 7, kind: input, shape index: {}]
  %s8 = inlined_call_operand.vmem [shape: f32[1,64], index: 8, kind: input, shape index: {}]
  %s9 = inlined_call_operand.vmem [shape: f32[16,64], index: 9, kind: output, shape index: {0}]
  %s10 = inlined_call_operand.vmem [shape: f32[32,64], index: 10, kind: output, shape index: {1}]
  %s11 = inlined_call_operand.vmem [shape: f32[64,64], index: 11, kind: output, shape index: {2}]
  %12 = xla_tuple %s9, %s10, %s11
  %s13 = sld [smem:[#allocation0]]
  $region62: #{algnn_forward.6} parent=0
    _
  %s15 = ssub.s32 1, %s13
  %s16 = scalar_select 0, %s15, %s13
  // Predicated region
  $region2: #{algnn_forward.6} parent=0 // pred_check
    _
  $region3: #{algnn_forward.6} parent=0 // pred_check_branch
    %18 = sbr.rel (0) target = $region5
  $region4: #{algnn_forward.6} parent=0 // pred_region
    _
  $region5: #{algnn_forward.6} parent=0 // pred_fallthru
    _
  // Predicated region
  $region6: #{algnn_forward.6} parent=0 // pred_check
    _
  $region7: #{algnn_forward.6} parent=0 // pred_check_branch
    %20 = sbr.rel (0) target = $region9
  $region8: #{algnn_forward.6} parent=0 // pred_region
    _
  $region9: #{algnn_forward.6} parent=0 // pred_fallthru
    _
  // Predicated region
  $region10: #{algnn_forward.6} parent=0 // pred_check
    _
  $region11: #{algnn_forward.6} parent=0 // pred_check_branch
    %22 = sbr.rel (0) target = $region13
  $region12: #{algnn_forward.6} parent=0 // pred_region
    _
  $region13: #{algnn_forward.6} parent=0 // pred_fallthru
    _
  // Predicated region
  $region14: #{algnn_forward.6} parent=0 // pred_check
    _
  $region15: #{algnn_forward.6} parent=0 // pred_check_branch
    %24 = sbr.rel (0) target = $region17
  $region16: #{algnn_forward.6} parent=0 // pred_region
    _
  $region17: #{algnn_forward.6} parent=0 // pred_fallthru
    _
  // Predicated region
  $region18: #{algnn_forward.6} parent=0 // pred_check
    _
  $region19: #{algnn_forward.6} parent=0 // pred_check_branch
    %26 = sbr.rel (0) target = $region21
  $region20: #{algnn_forward.6} parent=0 // pred_region
    _
  $region21: #{algnn_forward.6} parent=0 // pred_fallthru
    _
  // Predicated region
  $region22: #{algnn_forward.6} parent=0 // pred_check
    _
  $region23: #{algnn_forward.6} parent=0 // pred_check_branch
    %28 = sbr.rel (0) target = $region25
  $region24: #{algnn_forward.6} parent=0 // pred_region
    _
  $region25: #{algnn_forward.6} parent=0 // pred_fallthru
    _
  // Predicated region
  $region26: #{algnn_forward.6} parent=0 // pred_check
    _
  $region27: #{algnn_forward.6} parent=0 // pred_check_branch
    %30 = sbr.rel (0) target = $region29
  $region28: #{algnn_forward.6} parent=0 // pred_region
    _
  $region29: #{algnn_forward.6} parent=0 // pred_fallthru
    _
  // Predicated region
  $region30: #{algnn_forward.6} parent=0 // pred_check
    _
  $region31: #{algnn_forward.6} parent=0 // pred_check_branch
    %32 = sbr.rel (0) target = $region33
  $region32: #{algnn_forward.6} parent=0 // pred_region
    _
  $region33: #{algnn_forward.6} parent=0 // pred_fallthru
    _
  // Predicated region
  $region34: #{algnn_forward.6} parent=0 // pred_check
    _
  $region35: #{algnn_forward.6} parent=0 // pred_check_branch
    %34 = sbr.rel (0) target = $region37
  $region36: #{algnn_forward.6} parent=0 // pred_region
    _
  $region37: #{algnn_forward.6} parent=0 // pred_fallthru
    _
  %v35 = vld [vmem:[%s0] sm:$0xff]
  %v36 = vld [vmem:[%s0 + $0x8] sm:$0xff]
  %v37 = vld [vmem:[%s3] sm:$0xff]
  %v38 = vld [vmem:[%s3 + $0x8] sm:$0x7]
  %v39 = vld [vmem:[%s4] sm:$0x1]
  %v41 = vlaneseq
  %v42 = vshrl.u32 %v41, 7
  %v43 = vsub.s32 0, %v42
  %v44 = vrot.slane %v39, %v43
  %vm46 = vcmask 89088
  %v48 = vsel %vm46, %v35, 0
  %v51 = vsel %vm46, %v36, 0
  %vm53 = vcmask 1042432
  %v55 = vsel %vm53, %v38, 0
  %57 = vmatprep.subr.mxu0 0.0
  %58 = vmatpush1.msra.mxu0 0.0
  %59 = vmatprep.subr.mxu0 0.0
  %60 = vmatpush1.msra.mxu0 0.0
  %61 = vmatprep.subr.mxu0 0.0
  %62 = vmatpush1.msra.mxu0 0.0
  %63 = vmatprep.subr.mxu0 0.0
  %64 = vmatpush1.msra.mxu0 0.0
  %65 = vmatprep.subr.mxu0 0.0
  %66 = vmatpush1.msra.mxu0 0.0
  %67 = vmatprep.subr.mxu0 0.0
  %68 = vmatpush1.msra.mxu0 0.0
  %69 = vmatprep.subr.mxu0 0.0
  %70 = vmatpush1.msra.mxu0 0.0
  %71 = vmatprep.subr.mxu0 0.0
  %72 = vmatpush1.msra.mxu0 0.0
  %73 = vmatprep.subr.mxu0 0.0
  %74 = vmatpush1.msra.mxu0 0.0
  %75 = vmatprep.subr.mxu0 0.0
  %76 = vmatpush1.msra.mxu0 0.0
  %77 = vmatprep.subr.mxu0 0.0
  %78 = vmatpush1.msra.mxu0 0.0
  %79 = vmatprep.subr.mxu0 0.0
  %80 = vmatpush1.msra.mxu0 0.0
  %81 = vmatprep.subr.mxu0 0.0
  %82 = vmatpush1.msra.mxu0 0.0
  %83 = vmatprep.subr.mxu0 0.0
  %84 = vmatpush1.msra.mxu0 0.0
  %85 = vmatprep.subr.mxu0 0.0
  %86 = vmatpush1.msra.mxu0 %v55
  %87 = vmatprep.subr.mxu0 0.0
  %88 = vmatpush1.msra.mxu0 %v37
  %89 = vmatprep.subr.mxu0 0.0
  %90 = vmatpush2.msra.mxu0 0.0
  %91 = vmatprep.subr.mxu0 0.0
  %92 = vmatpush2.msra.mxu0 0.0
  %93 = vmatprep.subr.mxu0 0.0
  %94 = vmatpush2.msra.mxu0 0.0
  %95 = vmatprep.subr.mxu0 0.0
  %96 = vmatpush2.msra.mxu0 0.0
  %97 = vmatprep.subr.mxu0 0.0
  %98 = vmatpush2.msra.mxu0 0.0
  %99 = vmatprep.subr.mxu0 0.0
  %100 = vmatpush2.msra.mxu0 0.0
  %101 = vmatprep.subr.mxu0 0.0
  %102 = vmatpush2.msra.mxu0 0.0
  %103 = vmatprep.subr.mxu0 0.0
  %104 = vmatpush2.msra.mxu0 0.0
  %105 = vmatprep.subr.mxu0 0.0
  %106 = vmatpush2.msra.mxu0 0.0
  %107 = vmatprep.subr.mxu0 0.0
  %108 = vmatpush2.msra.mxu0 0.0
  %109 = vmatprep.subr.mxu0 0.0
  %110 = vmatpush2.msra.mxu0 0.0
  %111 = vmatprep.subr.mxu0 0.0
  %112 = vmatpush2.msra.mxu0 0.0
  %113 = vmatprep.subr.mxu0 0.0
  %114 = vmatpush2.msra.mxu0 0.0
  %115 = vmatprep.subr.mxu0 0.0
  %116 = vmatpush2.msra.mxu0 0.0
  %117 = vmatprep.subr.mxu0 0.0
  %118 = vmatpush2.msra.mxu0 0.0
  %119 = vmatprep.subr.mxu0 0.0
  %120 = vmatpush2.msra.mxu0 0.0
  %121 = vmatprep.mubr.f32.mxu0 0.0
  %122 = vmatmul.mubr.f32.gmra.mxu0 %v48
  %v123 = vpop.f32.mrf.mxu0
  %v124 = vadd.f32 %v44, %v123
  %v125 = vpop.f32.mrf.mxu0
  %126 = vmatprep.mubr.f32.mxu0 0.0
  %127 = vmatmul.mubr.f32.gmra.mxu0 %v51
  %v128 = vpop.f32.mrf.mxu0
  %v129 = vadd.f32 %v44, %v128
  %v130 = vpop.f32.mrf.mxu0
  %131 = vdwg.mxu0
  %v132 = vsub.f32 0.0, %v124
  %v133 = vsub.f32 0.0, %v129
  %v134 = vmul.f32 %v132, 1.442695
  %v135 = vpow.pop %v134
  %v136 = vmul.f32 %v133, 1.442695
  %v137 = vpow.pop %v136
  %v138 = vadd.f32 %v135, 1.0
  %v139 = vadd.f32 %v137, 1.0
  %v140 = vrcp.pop %v138
  %v141 = vmul.f32 1.0, %v140
  %v142 = vrcp.pop %v139
  %v143 = vmul.f32 1.0, %v142
  %v144 = vmul.f32 %v124, %v141
  %v145 = vmul.f32 %v129, %v143
  %vm146 = vcmask 523264
  %147 = vst.msk [vmem:[%s9] sm:$0xff] %vm146, %v144
  %148 = vst.msk [vmem:[%s9 + $0x8] sm:$0xff] %vm146, %v145
  %v149 = vld [vmem:[%s1] sm:$0xff]
  %v150 = vld [vmem:[%s1 + $0x8] sm:$0xff]
  %v151 = vld [vmem:[%s1 + $0x10] sm:$0xff]
  %v152 = vld [vmem:[%s1 + $0x18] sm:$0xff]
  %v153 = vld [vmem:[%s5] sm:$0xff]
  %v154 = vld [vmem:[%s5 + $0x8] sm:$0x1]
  %v155 = vld [vmem:[%s6] sm:$0x1]
  %v157 = vlaneseq
  %v158 = vshrl.u32 %v157, 7
  %v159 = vsub.s32 0, %v158
  %v160 = vrot.slane %v155, %v159
  %vm162 = vcmask 72704
  %v164 = vsel %vm162, %v149, 0
  %v167 = vsel %vm162, %v150, 0
  %v170 = vsel %vm162, %v151, 0
  %v173 = vsel %vm162, %v152, 0
  %vm175 = vcmask 1040384
  %v177 = vsel %vm175, %v154, 0
  %179 = vmatprep.subr.mxu0 0.0
  %180 = vmatpush1.msra.mxu0 0.0
  %181 = vmatprep.subr.mxu0 0.0
  %182 = vmatpush1.msra.mxu0 0.0
  %183 = vmatprep.subr.mxu0 0.0
  %184 = vmatpush1.msra.mxu0 0.0
  %185 = vmatprep.subr.mxu0 0.0
  %186 = vmatpush1.msra.mxu0 0.0
  %187 = vmatprep.subr.mxu0 0.0
  %188 = vmatpush1.msra.mxu0 0.0
  %189 = vmatprep.subr.mxu0 0.0
  %190 = vmatpush1.msra.mxu0 0.0
  %191 = vmatprep.subr.mxu0 0.0
  %192 = vmatpush1.msra.mxu0 0.0
  %193 = vmatprep.subr.mxu0 0.0
  %194 = vmatpush1.msra.mxu0 0.0
  %195 = vmatprep.subr.mxu0 0.0
  %196 = vmatpush1.msra.mxu0 0.0
  %197 = vmatprep.subr.mxu0 0.0
  %198 = vmatpush1.msra.mxu0 0.0
  %199 = vmatprep.subr.mxu0 0.0
  %200 = vmatpush1.msra.mxu0 0.0
  %201 = vmatprep.subr.mxu0 0.0
  %202 = vmatpush1.msra.mxu0 0.0
  %203 = vmatprep.subr.mxu0 0.0
  %204 = vmatpush1.msra.mxu0 0.0
  %205 = vmatprep.subr.mxu0 0.0
  %206 = vmatpush1.msra.mxu0 0.0
  %207 = vmatprep.subr.mxu0 0.0
  %208 = vmatpush1.msra.mxu0 %v177
  %209 = vmatprep.subr.mxu0 0.0
  %210 = vmatpush1.msra.mxu0 %v153
  %211 = vmatprep.subr.mxu0 0.0
  %212 = vmatpush2.msra.mxu0 0.0
  %213 = vmatprep.subr.mxu0 0.0
  %214 = vmatpush2.msra.mxu0 0.0
  %215 = vmatprep.subr.mxu0 0.0
  %216 = vmatpush2.msra.mxu0 0.0
  %217 = vmatprep.subr.mxu0 0.0
  %218 = vmatpush2.msra.mxu0 0.0
  %219 = vmatprep.subr.mxu0 0.0
  %220 = vmatpush2.msra.mxu0 0.0
  %221 = vmatprep.subr.mxu0 0.0
  %222 = vmatpush2.msra.mxu0 0.0
  %223 = vmatprep.subr.mxu0 0.0
  %224 = vmatpush2.msra.mxu0 0.0
  %225 = vmatprep.subr.mxu0 0.0
  %226 = vmatpush2.msra.mxu0 0.0
  %227 = vmatprep.subr.mxu0 0.0
  %228 = vmatpush2.msra.mxu0 0.0
  %229 = vmatprep.subr.mxu0 0.0
  %230 = vmatpush2.msra.mxu0 0.0
  %231 = vmatprep.subr.mxu0 0.0
  %232 = vmatpush2.msra.mxu0 0.0
  %233 = vmatprep.subr.mxu0 0.0
  %234 = vmatpush2.msra.mxu0 0.0
  %235 = vmatprep.subr.mxu0 0.0
  %236 = vmatpush2.msra.mxu0 0.0
  %237 = vmatprep.subr.mxu0 0.0
  %238 = vmatpush2.msra.mxu0 0.0
  %239 = vmatprep.subr.mxu0 0.0
  %240 = vmatpush2.msra.mxu0 0.0
  %241 = vmatprep.subr.mxu0 0.0
  %242 = vmatpush2.msra.mxu0 0.0
  %243 = vmatprep.mubr.f32.mxu0 0.0
  %244 = vmatmul.mubr.f32.gmra.mxu0 %v164
  %v245 = vpop.f32.mrf.mxu0
  %v246 = vadd.f32 %v160, %v245
  %v247 = vpop.f32.mrf.mxu0
  %248 = vmatprep.mubr.f32.mxu0 0.0
  %249 = vmatmul.mubr.f32.gmra.mxu0 %v167
  %v250 = vpop.f32.mrf.mxu0
  %v251 = vadd.f32 %v160, %v250
  %v252 = vpop.f32.mrf.mxu0
  %253 = vmatprep.mubr.f32.mxu0 0.0
  %254 = vmatmul.mubr.f32.gmra.mxu0 %v170
  %v255 = vpop.f32.mrf.mxu0
  %v256 = vadd.f32 %v160, %v255
  %v257 = vpop.f32.mrf.mxu0
  %258 = vmatprep.mubr.f32.mxu0 0.0
  %259 = vmatmul.mubr.f32.gmra.mxu0 %v173
  %v260 = vpop.f32.mrf.mxu0
  %v261 = vadd.f32 %v160, %v260
  %v262 = vpop.f32.mrf.mxu0
  %263 = vdwg.mxu0
  %v264 = vsub.f32 0.0, %v246
  %v265 = vsub.f32 0.0, %v251
  %v266 = vsub.f32 0.0, %v256
  %v267 = vsub.f32 0.0, %v261
  %v268 = vmul.f32 %v264, 1.442695
  %v269 = vpow.pop %v268
  %v270 = vmul.f32 %v265, 1.442695
  %v271 = vpow.pop %v270
  %v272 = vmul.f32 %v266, 1.442695
  %v273 = vpow.pop %v272
  %v274 = vmul.f32 %v267, 1.442695
  %v275 = vpow.pop %v274
  %v276 = vadd.f32 %v269, 1.0
  %v277 = vadd.f32 %v271, 1.0
  %v278 = vadd.f32 %v273, 1.0
  %v279 = vadd.f32 %v275, 1.0
  %v280 = vrcp.pop %v276
  %v281 = vmul.f32 1.0, %v280
  %v282 = vrcp.pop %v277
  %v283 = vmul.f32 1.0, %v282
  %v284 = vrcp.pop %v278
  %v285 = vmul.f32 1.0, %v284
  %v286 = vrcp.pop %v279
  %v287 = vmul.f32 1.0, %v286
  %v288 = vmul.f32 %v246, %v281
  %v289 = vmul.f32 %v251, %v283
  %v290 = vmul.f32 %v256, %v285
  %v291 = vmul.f32 %v261, %v287
  %292 = vst.msk [vmem:[%s10] sm:$0xff] %vm146, %v288
  %293 = vst.msk [vmem:[%s10 + $0x8] sm:$0xff] %vm146, %v289
  %294 = vst.msk [vmem:[%s10 + $0x10] sm:$0xff] %vm146, %v290
  %295 = vst.msk [vmem:[%s10 + $0x18] sm:$0xff] %vm146, %v291
  %v296 = vld [vmem:[%s2] sm:$0xff]
  %v297 = vld [vmem:[%s2 + $0x8] sm:$0xff]
  %v298 = vld [vmem:[%s2 + $0x10] sm:$0xff]
  %v299 = vld [vmem:[%s2 + $0x18] sm:$0xff]
  %v300 = vld [vmem:[%s2 + $0x20] sm:$0xff]
  %v301 = vld [vmem:[%s2 + $0x28] sm:$0xff]
  %v302 = vld [vmem:[%s2 + $0x30] sm:$0xff]
  %v303 = vld [vmem:[%s2 + $0x38] sm:$0xff]
  %v304 = vld [vmem:[%s7] sm:$0x7f]
  %v305 = vld [vmem:[%s8] sm:$0x1]
  %v307 = vlaneseq
  %v308 = vshrl.u32 %v307, 7
  %v309 = vsub.s32 0, %v308
  %v310 = vrot.slane %v305, %v309
  %vm312 = vcmask 56320
  %v314 = vsel %vm312, %v296, 0
  %v317 = vsel %vm312, %v297, 0
  %v320 = vsel %vm312, %v298, 0
  %v323 = vsel %vm312, %v299, 0
  %v326 = vsel %vm312, %v300, 0
  %v329 = vsel %vm312, %v301, 0
  %v332 = vsel %vm312, %v302, 0
  %v335 = vsel %vm312, %v303, 0
  %vm337 = vcmask 1046528
  %v339 = vsel %vm337, %v304, 0
  %341 = vmatprep.subr.mxu0 0.0
  %342 = vmatpush1.msra.mxu0 0.0
  %343 = vmatprep.subr.mxu0 0.0
  %344 = vmatpush1.msra.mxu0 0.0
  %345 = vmatprep.subr.mxu0 0.0
  %346 = vmatpush1.msra.mxu0 0.0
  %347 = vmatprep.subr.mxu0 0.0
  %348 = vmatpush1.msra.mxu0 0.0
  %349 = vmatprep.subr.mxu0 0.0
  %350 = vmatpush1.msra.mxu0 0.0
  %351 = vmatprep.subr.mxu0 0.0
  %352 = vmatpush1.msra.mxu0 0.0
  %353 = vmatprep.subr.mxu0 0.0
  %354 = vmatpush1.msra.mxu0 0.0
  %355 = vmatprep.subr.mxu0 0.0
  %356 = vmatpush1.msra.mxu0 0.0
  %357 = vmatprep.subr.mxu0 0.0
  %358 = vmatpush1.msra.mxu0 0.0
  %359 = vmatprep.subr.mxu0 0.0
  %360 = vmatpush1.msra.mxu0 0.0
  %361 = vmatprep.subr.mxu0 0.0
  %362 = vmatpush1.msra.mxu0 0.0
  %363 = vmatprep.subr.mxu0 0.0
  %364 = vmatpush1.msra.mxu0 0.0
  %365 = vmatprep.subr.mxu0 0.0
  %366 = vmatpush1.msra.mxu0 0.0
  %367 = vmatprep.subr.mxu0 0.0
  %368 = vmatpush1.msra.mxu0 0.0
  %369 = vmatprep.subr.mxu0 0.0
  %370 = vmatpush1.msra.mxu0 0.0
  %371 = vmatprep.subr.mxu0 0.0
  %372 = vmatpush1.msra.mxu0 %v339
  %373 = vmatprep.subr.mxu0 0.0
  %374 = vmatpush2.msra.mxu0 0.0
  %375 = vmatprep.subr.mxu0 0.0
  %376 = vmatpush2.msra.mxu0 0.0
  %377 = vmatprep.subr.mxu0 0.0
  %378 = vmatpush2.msra.mxu0 0.0
  %379 = vmatprep.subr.mxu0 0.0
  %380 = vmatpush2.msra.mxu0 0.0
  %381 = vmatprep.subr.mxu0 0.0
  %382 = vmatpush2.msra.mxu0 0.0
  %383 = vmatprep.subr.mxu0 0.0
  %384 = vmatpush2.msra.mxu0 0.0
  %385 = vmatprep.subr.mxu0 0.0
  %386 = vmatpush2.msra.mxu0 0.0
  %387 = vmatprep.subr.mxu0 0.0
  %388 = vmatpush2.msra.mxu0 0.0
  %389 = vmatprep.subr.mxu0 0.0
  %390 = vmatpush2.msra.mxu0 0.0
  %391 = vmatprep.subr.mxu0 0.0
  %392 = vmatpush2.msra.mxu0 0.0
  %393 = vmatprep.subr.mxu0 0.0
  %394 = vmatpush2.msra.mxu0 0.0
  %395 = vmatprep.subr.mxu0 0.0
  %396 = vmatpush2.msra.mxu0 0.0
  %397 = vmatprep.subr.mxu0 0.0
  %398 = vmatpush2.msra.mxu0 0.0
  %399 = vmatprep.subr.mxu0 0.0
  %400 = vmatpush2.msra.mxu0 0.0
  %401 = vmatprep.subr.mxu0 0.0
  %402 = vmatpush2.msra.mxu0 0.0
  %403 = vmatprep.subr.mxu0 0.0
  %404 = vmatpush2.msra.mxu0 0.0
  %405 = vmatprep.mubr.f32.mxu0 0.0
  %406 = vmatmul.mubr.f32.gmra.mxu0 %v314
  %v407 = vpop.f32.mrf.mxu0
  %v408 = vadd.f32 %v310, %v407
  %v409 = vpop.f32.mrf.mxu0
  %410 = vmatprep.mubr.f32.mxu0 0.0
  %411 = vmatmul.mubr.f32.gmra.mxu0 %v317
  %v412 = vpop.f32.mrf.mxu0
  %v413 = vadd.f32 %v310, %v412
  %v414 = vpop.f32.mrf.mxu0
  %415 = vmatprep.mubr.f32.mxu0 0.0
  %416 = vmatmul.mubr.f32.gmra.mxu0 %v320
  %v417 = vpop.f32.mrf.mxu0
  %v418 = vadd.f32 %v310, %v417
  %v419 = vpop.f32.mrf.mxu0
  %420 = vmatprep.mubr.f32.mxu0 0.0
  %421 = vmatmul.mubr.f32.gmra.mxu0 %v323
  %v422 = vpop.f32.mrf.mxu0
  %v423 = vadd.f32 %v310, %v422
  %v424 = vpop.f32.mrf.mxu0
  %425 = vmatprep.mubr.f32.mxu0 0.0
  %426 = vmatmul.mubr.f32.gmra.mxu0 %v326
  %v427 = vpop.f32.mrf.mxu0
  %v428 = vadd.f32 %v310, %v427
  %v429 = vpop.f32.mrf.mxu0
  %430 = vmatprep.mubr.f32.mxu0 0.0
  %431 = vmatmul.mubr.f32.gmra.mxu0 %v329
  %v432 = vpop.f32.mrf.mxu0
  %v433 = vadd.f32 %v310, %v432
  %v434 = vpop.f32.mrf.mxu0
  %435 = vmatprep.mubr.f32.mxu0 0.0
  %436 = vmatmul.mubr.f32.gmra.mxu0 %v332
  %v437 = vpop.f32.mrf.mxu0
  %v438 = vadd.f32 %v310, %v437
  %v439 = vpop.f32.mrf.mxu0
  %440 = vmatprep.mubr.f32.mxu0 0.0
  %441 = vmatmul.mubr.f32.gmra.mxu0 %v335
  %v442 = vpop.f32.mrf.mxu0
  %v443 = vadd.f32 %v310, %v442
  %v444 = vpop.f32.mrf.mxu0
  %445 = vdwg.mxu0
  %v446 = vsub.f32 0.0, %v408
  %v447 = vsub.f32 0.0, %v413
  %v448 = vsub.f32 0.0, %v418
  %v449 = vsub.f32 0.0, %v423
  %v450 = vsub.f32 0.0, %v428
  %v451 = vsub.f32 0.0, %v433
  %v452 = vsub.f32 0.0, %v438
  %v453 = vsub.f32 0.0, %v443
  %v454 = vmul.f32 %v446, 1.442695
  %v455 = vpow.pop %v454
  %v456 = vmul.f32 %v447, 1.442695
  %v457 = vpow.pop %v456
  %v458 = vmul.f32 %v448, 1.442695
  %v459 = vpow.pop %v458
  %v460 = vmul.f32 %v449, 1.442695
  %v461 = vpow.pop %v460
  %v462 = vmul.f32 %v450, 1.442695
  %v463 = vpow.pop %v462
  %v464 = vmul.f32 %v451, 1.442695
  %v465 = vpow.pop %v464
  %v466 = vmul.f32 %v452, 1.442695
  %v467 = vpow.pop %v466
  %v468 = vmul.f32 %v453, 1.442695
  %v469 = vpow.pop %v468
  %v470 = vadd.f32 %v455, 1.0
  %v471 = vadd.f32 %v457, 1.0
  %v472 = vadd.f32 %v459, 1.0
  %v473 = vadd.f32 %v461, 1.0
  %v474 = vadd.f32 %v463, 1.0
  %v475 = vadd.f32 %v465, 1.0
  %v476 = vadd.f32 %v467, 1.0
  %v477 = vadd.f32 %v469, 1.0
  %v478 = vrcp.pop %v470
  %v479 = vmul.f32 1.0, %v478
  %v480 = vrcp.pop %v471
  %v481 = vmul.f32 1.0, %v480
  %v482 = vrcp.pop %v472
  %v483 = vmul.f32 1.0, %v482
  %v484 = vrcp.pop %v473
  %v485 = vmul.f32 1.0, %v484
  %v486 = vrcp.pop %v474
  %v487 = vmul.f32 1.0, %v486
  %v488 = vrcp.pop %v475
  %v489 = vmul.f32 1.0, %v488
  %v490 = vrcp.pop %v476
  %v491 = vmul.f32 1.0, %v490
  %v492 = vrcp.pop %v477
  %v493 = vmul.f32 1.0, %v492
  %v494 = vmul.f32 %v408, %v479
  %v495 = vmul.f32 %v413, %v481
  %v496 = vmul.f32 %v418, %v483
  %v497 = vmul.f32 %v423, %v485
  %v498 = vmul.f32 %v428, %v487
  %v499 = vmul.f32 %v433, %v489
  %v500 = vmul.f32 %v438, %v491
  %v501 = vmul.f32 %v443, %v493
  %502 = vst.msk [vmem:[%s11] sm:$0xff] %vm146, %v494
  %503 = vst.msk [vmem:[%s11 + $0x8] sm:$0xff] %vm146, %v495
  %504 = vst.msk [vmem:[%s11 + $0x10] sm:$0xff] %vm146, %v496
  %505 = vst.msk [vmem:[%s11 + $0x18] sm:$0xff] %vm146, %v497
  %506 = vst.msk [vmem:[%s11 + $0x20] sm:$0xff] %vm146, %v498
  %507 = vst.msk [vmem:[%s11 + $0x28] sm:$0xff] %vm146, %v499
  %508 = vst.msk [vmem:[%s11 + $0x30] sm:$0xff] %vm146, %v500
  %509 = vst.msk [vmem:[%s11 + $0x38] sm:$0xff] %vm146, %v501
  // Predicated region
  $region38: #{algnn_forward.6} parent=0 // pred_check
    _
  $region39: #{algnn_forward.6} parent=0 // pred_check_branch
    %511 = sbr.rel (0) target = $region41
  $region40: #{algnn_forward.6} parent=0 // pred_region
    _
  $region41: #{algnn_forward.6} parent=0 // pred_fallthru
    _
  // Predicated region
  $region42: #{algnn_forward.6} parent=0 // pred_check
    _
  $region43: #{algnn_forward.6} parent=0 // pred_check_branch
    %513 = sbr.rel (0) target = $region45
  $region44: #{algnn_forward.6} parent=0 // pred_region
    _
  $region45: #{algnn_forward.6} parent=0 // pred_fallthru
    _
  // Predicated region
  $region46: #{algnn_forward.6} parent=0 // pred_check
    _
  $region47: #{algnn_forward.6} parent=0 // pred_check_branch
    %515 = sbr.rel (0) target = $region49
  $region48: #{algnn_forward.6} parent=0 // pred_region
    _
  $region49: #{algnn_forward.6} parent=0 // pred_fallthru
    _
  // Predicated region
  $region50: #{algnn_forward.6} parent=0 // pred_check
    _
  $region51: #{algnn_forward.6} parent=0 // pred_check_branch
    %517 = sbr.rel (0) target = $region53
  $region52: #{algnn_forward.6} parent=0 // pred_region
    _
  $region53: #{algnn_forward.6} parent=0 // pred_fallthru
    _
  // Predicated region
  $region54: #{algnn_forward.6} parent=0 // pred_check
    _
  $region55: #{algnn_forward.6} parent=0 // pred_check_branch
    %519 = sbr.rel (0) target = $region57
  $region56: #{algnn_forward.6} parent=0 // pred_region
    _
  $region57: #{algnn_forward.6} parent=0 // pred_fallthru
    _
  // Predicated region
  $region58: #{algnn_forward.6} parent=0 // pred_check
    _
  $region59: #{algnn_forward.6} parent=0 // pred_check_branch
    %521 = sbr.rel (0) target = $region61
  $region60: #{algnn_forward.6} parent=0 // pred_region
    _
  $region61: #{algnn_forward.6} parent=0 // pred_fallthru
    _

// kernel: algnn_forward.8
$region0: #{algnn_forward.8}
  #allocation0 [shape = 'u32[]', space=smem, size = 0x4, offset = 0x4, fixed_abs, tag = 'smem constant byte address 0x4 - core index']
  #allocation1 [shape = 'u32[144,128]{1,0:T(1,128)}', space=vmem, size = 0x12000, scoped, tag = 'internal scratch']
  %s0 = inlined_call_operand.vmem [shape: s32[32,1], index: 0, kind: input, shape index: {}]
  %s1 = inlined_call_operand.vmem [shape: s32[1,32], index: 1, kind: input, shape index: {}]
  %s2 = inlined_call_operand.vmem [shape: s32[32,1], index: 2, kind: input, shape index: {}]
  %s3 = inlined_call_operand.vmem [shape: s32[1,32], index: 3, kind: input, shape index: {}]
  %s4 = inlined_call_operand.vmem [shape: f32[16,64], index: 4, kind: input, shape index: {}]
  %s5 = inlined_call_operand.vmem [shape: f32[32,64], index: 5, kind: input, shape index: {}]
  %s6 = inlined_call_operand.vmem [shape: f32[64,64], index: 6, kind: input, shape index: {}]
  %s7 = inlined_call_operand.vmem [shape: f32[1,64], index: 7, kind: input, shape index: {}]
  %s8 = inlined_call_operand.vmem [shape: f32[64,64], index: 8, kind: input, shape index: {}]
  %s9 = inlined_call_operand.vmem [shape: f32[1,64], index: 9, kind: input, shape index: {}]
  %s10 = inlined_call_operand.vmem [shape: f32[192,64], index: 10, kind: input, shape index: {}]
  %s11 = inlined_call_operand.vmem [shape: f32[1,64], index: 11, kind: input, shape index: {}]
  %s12 = inlined_call_operand.vmem [shape: f32[1,64], index: 12, kind: input, shape index: {}]
  %s13 = inlined_call_operand.vmem [shape: f32[1,64], index: 13, kind: input, shape index: {}]
  %s14 = inlined_call_operand.vmem [shape: f32[1,64], index: 14, kind: input, shape index: {}]
  %s15 = inlined_call_operand.vmem [shape: f32[1,64], index: 15, kind: input, shape index: {}]
  %s16 = inlined_call_operand.vmem [shape: f32[16,64], index: 16, kind: output, shape index: {0}]
  %s17 = inlined_call_operand.vmem [shape: f32[32,64], index: 17, kind: output, shape index: {1}]
  %18 = xla_tuple %s16, %s17
  %s19 = sld [smem:[#allocation0]]
  $region82: #{algnn_forward.8} parent=0
    _
  %s21 = ssub.s32 1, %s19
  %s22 = scalar_select 0, %s21, %s19
  // Predicated region
  $region2: #{algnn_forward.8} parent=0 // pred_check
    _
  $region3: #{algnn_forward.8} parent=0 // pred_check_branch
    %24 = sbr.rel (0) target = $region5
  $region4: #{algnn_forward.8} parent=0 // pred_region
    _
  $region5: #{algnn_forward.8} parent=0 // pred_fallthru
    _
  // Predicated region
  $region6: #{algnn_forward.8} parent=0 // pred_check
    _
  $region7: #{algnn_forward.8} parent=0 // pred_check_branch
    %26 = sbr.rel (0) target = $region9
  $region8: #{algnn_forward.8} parent=0 // pred_region
    _
  $region9: #{algnn_forward.8} parent=0 // pred_fallthru
    _
  // Predicated region
  $region10: #{algnn_forward.8} parent=0 // pred_check
    _
  $region11: #{algnn_forward.8} parent=0 // pred_check_branch
    %28 = sbr.rel (0) target = $region13
  $region12: #{algnn_forward.8} parent=0 // pred_region
    _
  $region13: #{algnn_forward.8} parent=0 // pred_fallthru
    _
  // Predicated region
  $region14: #{algnn_forward.8} parent=0 // pred_check
    _
  $region15: #{algnn_forward.8} parent=0 // pred_check_branch
    %30 = sbr.rel (0) target = $region17
  $region16: #{algnn_forward.8} parent=0 // pred_region
    _
  $region17: #{algnn_forward.8} parent=0 // pred_fallthru
    _
  // Predicated region
  $region18: #{algnn_forward.8} parent=0 // pred_check
    _
  $region19: #{algnn_forward.8} parent=0 // pred_check_branch
    %32 = sbr.rel (0) target = $region21
  $region20: #{algnn_forward.8} parent=0 // pred_region
    _
  $region21: #{algnn_forward.8} parent=0 // pred_fallthru
    _
  // Predicated region
  $region22: #{algnn_forward.8} parent=0 // pred_check
    _
  $region23: #{algnn_forward.8} parent=0 // pred_check_branch
    %34 = sbr.rel (0) target = $region25
  $region24: #{algnn_forward.8} parent=0 // pred_region
    _
  $region25: #{algnn_forward.8} parent=0 // pred_fallthru
    _
  // Predicated region
  $region26: #{algnn_forward.8} parent=0 // pred_check
    _
  $region27: #{algnn_forward.8} parent=0 // pred_check_branch
    %36 = sbr.rel (0) target = $region29
  $region28: #{algnn_forward.8} parent=0 // pred_region
    _
  $region29: #{algnn_forward.8} parent=0 // pred_fallthru
    _
  // Predicated region
  $region30: #{algnn_forward.8} parent=0 // pred_check
    _
  $region31: #{algnn_forward.8} parent=0 // pred_check_branch
    %38 = sbr.rel (0) target = $region33
  $region32: #{algnn_forward.8} parent=0 // pred_region
    _
  $region33: #{algnn_forward.8} parent=0 // pred_fallthru
    _
  // Predicated region
  $region34: #{algnn_forward.8} parent=0 // pred_check
    _
  $region35: #{algnn_forward.8} parent=0 // pred_check_branch
    %40 = sbr.rel (0) target = $region37
  $region36: #{algnn_forward.8} parent=0 // pred_region
    _
  $region37: #{algnn_forward.8} parent=0 // pred_fallthru
    _
  // Predicated region
  $region38: #{algnn_forward.8} parent=0 // pred_check
    _
  $region39: #{algnn_forward.8} parent=0 // pred_check_branch
    %42 = sbr.rel (0) target = $region41
  $region40: #{algnn_forward.8} parent=0 // pred_region
    _
  $region41: #{algnn_forward.8} parent=0 // pred_fallthru
    _
  // Predicated region
  $region42: #{algnn_forward.8} parent=0 // pred_check
    _
  $region43: #{algnn_forward.8} parent=0 // pred_check_branch
    %44 = sbr.rel (0) target = $region45
  $region44: #{algnn_forward.8} parent=0 // pred_region
    _
  $region45: #{algnn_forward.8} parent=0 // pred_fallthru
    _
  // Predicated region
  $region46: #{algnn_forward.8} parent=0 // pred_check
    _
  $region47: #{algnn_forward.8} parent=0 // pred_check_branch
    %46 = sbr.rel (0) target = $region49
  $region48: #{algnn_forward.8} parent=0 // pred_region
    _
  $region49: #{algnn_forward.8} parent=0 // pred_fallthru
    _
  // Predicated region
  $region50: #{algnn_forward.8} parent=0 // pred_check
    _
  $region51: #{algnn_forward.8} parent=0 // pred_check_branch
    %48 = sbr.rel (0) target = $region53
  $region52: #{algnn_forward.8} parent=0 // pred_region
    _
  $region53: #{algnn_forward.8} parent=0 // pred_fallthru
    _
  // Predicated region
  $region54: #{algnn_forward.8} parent=0 // pred_check
    _
  $region55: #{algnn_forward.8} parent=0 // pred_check_branch
    %50 = sbr.rel (0) target = $region57
  $region56: #{algnn_forward.8} parent=0 // pred_region
    _
  $region57: #{algnn_forward.8} parent=0 // pred_fallthru
    _
  // Predicated region
  $region58: #{algnn_forward.8} parent=0 // pred_check
    _
  $region59: #{algnn_forward.8} parent=0 // pred_check_branch
    %52 = sbr.rel (0) target = $region61
  $region60: #{algnn_forward.8} parent=0 // pred_region
    _
  $region61: #{algnn_forward.8} parent=0 // pred_fallthru
    _
  // Predicated region
  $region62: #{algnn_forward.8} parent=0 // pred_check
    _
  $region63: #{algnn_forward.8} parent=0 // pred_check_branch
    %54 = sbr.rel (0) target = $region65
  $region64: #{algnn_forward.8} parent=0 // pred_region
    _
  $region65: #{algnn_forward.8} parent=0 // pred_fallthru
    _
  %v55 = vld [vmem:[%s4] sm:$0xff]
  %v56 = vld [vmem:[%s4 + $0x8] sm:$0xff]
  %v57 = vld [vmem:[%s5] sm:$0xff]
  %v58 = vld [vmem:[%s5 + $0x8] sm:$0xff]
  %v59 = vld [vmem:[%s5 + $0x10] sm:$0xff]
  %v60 = vld [vmem:[%s5 + $0x18] sm:$0xff]
  %v61 = vlaneseq
  %v62 = vand.u32 %v61, 127
  %v63 = vlaneseq
  %v64 = vshrl.u32 %v63, 7
  %v65 = vadd.s32 %v64, 8
  %v66 = vld [vmem:[%s0] sm:$0xff]
  %v67 = vld [vmem:[%s0 + $0x8] sm:$0xff]
  %v68 = vld [vmem:[%s0 + $0x10] sm:$0xff]
  %v69 = vld [vmem:[%s0 + $0x18] sm:$0xff]
  %70 = vset.pattern.permute.xlu0 0
  %71 = vperm.xlu0 %70, %v66
  %v72 = vpop.permute.xlu0 %71
  %73 = vset.pattern.permute.xlu0 0
  %74 = vperm.xlu0 %73, %v67
  %v75 = vpop.permute.xlu0 %74
  %76 = vset.pattern.permute.xlu0 0
  %77 = vperm.xlu0 %76, %v68
  %v78 = vpop.permute.xlu0 %77
  %79 = vset.pattern.permute.xlu0 0
  %80 = vperm.xlu0 %79, %v69
  %v81 = vpop.permute.xlu0 %80
  %vm82 = vcmp.eq.s32.totalorder %v62, %v72
  %vm83 = vcmp.eq.s32.totalorder %v62, %v75
  %vm84 = vcmp.eq.s32.totalorder %v62, %v78
  %vm85 = vcmp.eq.s32.totalorder %v62, %v81
  %v86 = vsel %vm82, 1, 0
  %v87 = vsel %vm83, 1, 0
  %v88 = vsel %vm84, 1, 0
  %v89 = vsel %vm85, 1, 0
  %v90 = vcvt.s32.f32 %v86
  %v91 = vcvt.s32.f32 %v87
  %v92 = vcvt.s32.f32 %v88
  %v93 = vcvt.s32.f32 %v89
  %v94 = vld [vmem:[%s2] sm:$0xff]
  %v95 = vld [vmem:[%s2 + $0x8] sm:$0xff]
  %v96 = vld [vmem:[%s2 + $0x10] sm:$0xff]
  %v97 = vld [vmem:[%s2 + $0x18] sm:$0xff]
  %98 = vset.pattern.permute.xlu0 0
  %99 = vperm.xlu0 %98, %v94
  %v100 = vpop.permute.xlu0 %99
  %101 = vset.pattern.permute.xlu0 0
  %102 = vperm.xlu0 %101, %v95
  %v103 = vpop.permute.xlu0 %102
  %104 = vset.pattern.permute.xlu0 0
  %105 = vperm.xlu0 %104, %v96
  %v106 = vpop.permute.xlu0 %105
  %107 = vset.pattern.permute.xlu0 0
  %108 = vperm.xlu0 %107, %v97
  %v109 = vpop.permute.xlu0 %108
  %vm110 = vcmp.eq.s32.totalorder %v62, %v100
  %vm111 = vcmp.eq.s32.totalorder %v62, %v103
  %vm112 = vcmp.eq.s32.totalorder %v62, %v106
  %vm113 = vcmp.eq.s32.totalorder %v62, %v109
  %v114 = vsel %vm110, 1, 0
  %v115 = vsel %vm111, 1, 0
  %v116 = vsel %vm112, 1, 0
  %v117 = vsel %vm113, 1, 0
  %v118 = vcvt.s32.f32 %v114
  %v119 = vcvt.s32.f32 %v115
  %v120 = vcvt.s32.f32 %v116
  %v121 = vcvt.s32.f32 %v117
  %v122 = vld [vmem:[%s1] sm:$0x1]
  %v123 = vlaneseq
  %v124 = vshrl.u32 %v123, 7
  %v125 = vsub.s32 0, %v124
  %v126 = vrot.slane %v122, %v125
  %vm127 = vcmp.eq.s32.totalorder %v64, %v126
  %vm128 = vcmp.eq.s32.totalorder %v65, %v126
  %v129 = vsel %vm127, 1, 0
  %v130 = vsel %vm128, 1, 0
  %v131 = vcvt.s32.f32 %v129
  %v132 = vcvt.s32.f32 %v130
  %v133 = vld [vmem:[%s3] sm:$0x1]
  %v134 = vlaneseq
  %v135 = vshrl.u32 %v134, 7
  %v136 = vsub.s32 0, %v135
  %v137 = vrot.slane %v133, %v136
  %vm138 = vcmp.eq.s32.totalorder %v64, %v137
  %vm139 = vcmp.eq.s32.totalorder %v65, %v137
  %v140 = vsel %vm138, 1, 0
  %v141 = vsel %vm139, 1, 0
  %v142 = vcvt.s32.f32 %v140
  %v143 = vcvt.s32.f32 %v141
  %v144 = vsub.f32 0.0, %v57
  %v145 = vsub.f32 0.0, %v58
  %v146 = vsub.f32 0.0, %v59
  %v147 = vsub.f32 0.0, %v60
  %v148 = vmul.f32 %v144, 1.442695
  %v149 = vpow.pop %v148
  %v150 = vmul.f32 %v145, 1.442695
  %v151 = vpow.pop %v150
  %v152 = vmul.f32 %v146, 1.442695
  %v153 = vpow.pop %v152
  %v154 = vmul.f32 %v147, 1.442695
  %v155 = vpow.pop %v154
  %v156 = vadd.f32 %v149, 1.0
  %v157 = vadd.f32 %v151, 1.0
  %v158 = vadd.f32 %v153, 1.0
  %v159 = vadd.f32 %v155, 1.0
  %v160 = vrcp.pop %v156
  %v161 = vmul.f32 1.0, %v160
  %v162 = vrcp.pop %v157
  %v163 = vmul.f32 1.0, %v162
  %v164 = vrcp.pop %v158
  %v165 = vmul.f32 1.0, %v164
  %v166 = vrcp.pop %v159
  %v167 = vmul.f32 1.0, %v166
  %vm168 = vcmask 261120
  %v170 = vsel %vm168, %v131, 0
  %v173 = vsel %vm168, %v132, 0
  %175 = vmatprep.subr.mxu0 0.0
  %176 = vmatpush1.msra.mxu0 0.0
  %177 = vmatprep.subr.mxu0 0.0
  %178 = vmatpush1.msra.mxu0 0.0
  %179 = vmatprep.subr.mxu0 0.0
  %180 = vmatpush1.msra.mxu0 0.0
  %181 = vmatprep.subr.mxu0 0.0
  %182 = vmatpush1.msra.mxu0 0.0
  %183 = vmatprep.subr.mxu0 0.0
  %184 = vmatpush1.msra.mxu0 0.0
  %185 = vmatprep.subr.mxu0 0.0
  %186 = vmatpush1.msra.mxu0 0.0
  %187 = vmatprep.subr.mxu0 0.0
  %188 = vmatpush1.msra.mxu0 0.0
  %189 = vmatprep.subr.mxu0 0.0
  %190 = vmatpush1.msra.mxu0 0.0
  %191 = vmatprep.subr.mxu0 0.0
  %192 = vmatpush1.msra.mxu0 0.0
  %193 = vmatprep.subr.mxu0 0.0
  %194 = vmatpush1.msra.mxu0 0.0
  %195 = vmatprep.subr.mxu0 0.0
  %196 = vmatpush1.msra.mxu0 0.0
  %197 = vmatprep.subr.mxu0 0.0
  %198 = vmatpush1.msra.mxu0 0.0
  %199 = vmatprep.subr.mxu0 0.0
  %200 = vmatpush1.msra.mxu0 %v167
  %201 = vmatprep.subr.mxu0 0.0
  %202 = vmatpush1.msra.mxu0 %v165
  %203 = vmatprep.subr.mxu0 0.0
  %204 = vmatpush1.msra.mxu0 %v163
  %205 = vmatprep.subr.mxu0 0.0
  %206 = vmatpush1.msra.mxu0 %v161
  %207 = vmatprep.subr.mxu0 0.0
  %208 = vmatpush2.msra.mxu0 0.0
  %209 = vmatprep.subr.mxu0 0.0
  %210 = vmatpush2.msra.mxu0 0.0
  %211 = vmatprep.subr.mxu0 0.0
  %212 = vmatpush2.msra.mxu0 0.0
  %213 = vmatprep.subr.mxu0 0.0
  %214 = vmatpush2.msra.mxu0 0.0
  %215 = vmatprep.subr.mxu0 0.0
  %216 = vmatpush2.msra.mxu0 0.0
  %217 = vmatprep.subr.mxu0 0.0
  %218 = vmatpush2.msra.mxu0 0.0
  %219 = vmatprep.subr.mxu0 0.0
  %220 = vmatpush2.msra.mxu0 0.0
  %221 = vmatprep.subr.mxu0 0.0
  %222 = vmatpush2.msra.mxu0 0.0
  %223 = vmatprep.subr.mxu0 0.0
  %224 = vmatpush2.msra.mxu0 0.0
  %225 = vmatprep.subr.mxu0 0.0
  %226 = vmatpush2.msra.mxu0 0.0
  %227 = vmatprep.subr.mxu0 0.0
  %228 = vmatpush2.msra.mxu0 0.0
  %229 = vmatprep.subr.mxu0 0.0
  %230 = vmatpush2.msra.mxu0 0.0
  %231 = vmatprep.subr.mxu0 0.0
  %232 = vmatpush2.msra.mxu0 0.0
  %233 = vmatprep.subr.mxu0 0.0
  %234 = vmatpush2.msra.mxu0 0.0
  %235 = vmatprep.subr.mxu0 0.0
  %236 = vmatpush2.msra.mxu0 0.0
  %237 = vmatprep.subr.mxu0 0.0
  %238 = vmatpush2.msra.mxu0 0.0
  %239 = vmatprep.mubr.f32.mxu0 0.0
  %240 = vmatmul.mubr.f32.gmra.mxu0 %v170
  %v241 = vpop.f32.mrf.mxu0
  %v242 = vadd.f32 0.0, %v241
  %v243 = vpop.f32.mrf.mxu0
  %244 = vmatprep.mubr.f32.mxu0 0.0
  %245 = vmatmul.mubr.f32.gmra.mxu0 %v173
  %v246 = vpop.f32.mrf.mxu0
  %v247 = vadd.f32 0.0, %v246
  %v248 = vpop.f32.mrf.mxu0
  %249 = vdwg.mxu0
  %vm250 = vcmask 130048
  %v252 = vsel %vm250, %v90, 0
  %v255 = vsel %vm250, %v91, 0
  %v258 = vsel %vm250, %v92, 0
  %v261 = vsel %vm250, %v93, 0
  %263 = vmatprep.subr.mxu0 0.0
  %264 = vmatpush1.msra.mxu0 0.0
  %265 = vmatprep.subr.mxu0 0.0
  %266 = vmatpush1.msra.mxu0 0.0
  %267 = vmatprep.subr.mxu0 0.0
  %268 = vmatpush1.msra.mxu0 0.0
  %269 = vmatprep.subr.mxu0 0.0
  %270 = vmatpush1.msra.mxu0 0.0
  %271 = vmatprep.subr.mxu0 0.0
  %272 = vmatpush1.msra.mxu0 0.0
  %273 = vmatprep.subr.mxu0 0.0
  %274 = vmatpush1.msra.mxu0 0.0
  %275 = vmatprep.subr.mxu0 0.0
  %276 = vmatpush1.msra.mxu0 0.0
  %277 = vmatprep.subr.mxu0 0.0
  %278 = vmatpush1.msra.mxu0 0.0
  %279 = vmatprep.subr.mxu0 0.0
  %280 = vmatpush1.msra.mxu0 0.0
  %281 = vmatprep.subr.mxu0 0.0
  %282 = vmatpush1.msra.mxu0 0.0
  %283 = vmatprep.subr.mxu0 0.0
  %284 = vmatpush1.msra.mxu0 0.0
  %285 = vmatprep.subr.mxu0 0.0
  %286 = vmatpush1.msra.mxu0 0.0
  %287 = vmatprep.subr.mxu0 0.0
  %288 = vmatpush1.msra.mxu0 0.0
  %289 = vmatprep.subr.mxu0 0.0
  %290 = vmatpush1.msra.mxu0 0.0
  %291 = vmatprep.subr.mxu0 0.0
  %292 = vmatpush1.msra.mxu0 %v247
  %293 = vmatprep.subr.mxu0 0.0
  %294 = vmatpush1.msra.mxu0 %v242
  %295 = vmatprep.subr.mxu0 0.0
  %296 = vmatpush2.msra.mxu0 0.0
  %297 = vmatprep.subr.mxu0 0.0
  %298 = vmatpush2.msra.mxu0 0.0
  %299 = vmatprep.subr.mxu0 0.0
  %300 = vmatpush2.msra.mxu0 0.0
  %301 = vmatprep.subr.mxu0 0.0
  %302 = vmatpush2.msra.mxu0 0.0
  %303 = vmatprep.subr.mxu0 0.0
  %304 = vmatpush2.msra.mxu0 0.0
  %305 = vmatprep.subr.mxu0 0.0
  %306 = vmatpush2.msra.mxu0 0.0
  %307 = vmatprep.subr.mxu0 0.0
  %308 = vmatpush2.msra.mxu0 0.0
  %309 = vmatprep.subr.mxu0 0.0
  %310 = vmatpush2.msra.mxu0 0.0
  %311 = vmatprep.subr.mxu0 0.0
  %312 = vmatpush2.msra.mxu0 0.0
  %313 = vmatprep.subr.mxu0 0.0
  %314 = vmatpush2.msra.mxu0 0.0
  %315 = vmatprep.subr.mxu0 0.0
  %316 = vmatpush2.msra.mxu0 0.0
  %317 = vmatprep.subr.mxu0 0.0
  %318 = vmatpush2.msra.mxu0 0.0
  %319 = vmatprep.subr.mxu0 0.0
  %320 = vmatpush2.msra.mxu0 0.0
  %321 = vmatprep.subr.mxu0 0.0
  %322 = vmatpush2.msra.mxu0 0.0
  %323 = vmatprep.subr.mxu0 0.0
  %324 = vmatpush2.msra.mxu0 0.0
  %325 = vmatprep.subr.mxu0 0.0
  %326 = vmatpush2.msra.mxu0 0.0
  %327 = vmatprep.mubr.f32.mxu0 0.0
  %328 = vmatmul.mubr.f32.gmra.mxu0 %v252
  %v329 = vpop.f32.mrf.mxu0
  %v330 = vadd.f32 1e-05, %v329
  %v331 = vpop.f32.mrf.mxu0
  %332 = vmatprep.mubr.f32.mxu0 0.0
  %333 = vmatmul.mubr.f32.gmra.mxu0 %v255
  %v334 = vpop.f32.mrf.mxu0
  %v335 = vadd.f32 1e-05, %v334
  %v336 = vpop.f32.mrf.mxu0
  %337 = vmatprep.mubr.f32.mxu0 0.0
  %338 = vmatmul.mubr.f32.gmra.mxu0 %v258
  %v339 = vpop.f32.mrf.mxu0
  %v340 = vadd.f32 1e-05, %v339
  %v341 = vpop.f32.mrf.mxu0
  %342 = vmatprep.mubr.f32.mxu0 0.0
  %343 = vmatmul.mubr.f32.gmra.mxu0 %v261
  %v344 = vpop.f32.mrf.mxu0
  %v345 = vadd.f32 1e-05, %v344
  %v346 = vpop.f32.mrf.mxu0
  %347 = vdwg.mxu0
  %v348 = vrcp.pop %v330
  %v349 = vrcp.pop %v335
  %v350 = vrcp.pop %v340
  %v351 = vrcp.pop %v345
  %v352 = vmul.f32 %v161, %v348
  %v353 = vmul.f32 %v163, %v349
  %v354 = vmul.f32 %v165, %v350
  %v355 = vmul.f32 %v167, %v351
  %356 = vmatprep.subr.mxu0 0.0
  %357 = vmatpush1.msra.mxu0 0.0
  %358 = vmatprep.subr.mxu0 0.0
  %359 = vmatpush1.msra.mxu0 0.0
  %360 = vmatprep.subr.mxu0 0.0
  %361 = vmatpush1.msra.mxu0 0.0
  %362 = vmatprep.subr.mxu0 0.0
  %363 = vmatpush1.msra.mxu0 0.0
  %364 = vmatprep.subr.mxu0 0.0
  %365 = vmatpush1.msra.mxu0 0.0
  %366 = vmatprep.subr.mxu0 0.0
  %367 = vmatpush1.msra.mxu0 0.0
  %368 = vmatprep.subr.mxu0 0.0
  %369 = vmatpush1.msra.mxu0 0.0
  %370 = vmatprep.subr.mxu0 0.0
  %371 = vmatpush1.msra.mxu0 0.0
  %372 = vmatprep.subr.mxu0 0.0
  %373 = vmatpush1.msra.mxu0 0.0
  %374 = vmatprep.subr.mxu0 0.0
  %375 = vmatpush1.msra.mxu0 0.0
  %376 = vmatprep.subr.mxu0 0.0
  %377 = vmatpush1.msra.mxu0 0.0
  %378 = vmatprep.subr.mxu0 0.0
  %379 = vmatpush1.msra.mxu0 0.0
  %380 = vmatprep.subr.mxu0 0.0
  %381 = vmatpush1.msra.mxu0 0.0
  %382 = vmatprep.subr.mxu0 0.0
  %383 = vmatpush1.msra.mxu0 0.0
  %384 = vmatprep.subr.mxu0 0.0
  %385 = vmatpush1.msra.mxu0 %v56
  %386 = vmatprep.subr.mxu0 0.0
  %387 = vmatpush1.msra.mxu0 %v55
  %388 = vmatprep.subr.mxu0 0.0
  %389 = vmatpush2.msra.mxu0 0.0
  %390 = vmatprep.subr.mxu0 0.0
  %391 = vmatpush2.msra.mxu0 0.0
  %392 = vmatprep.subr.mxu0 0.0
  %393 = vmatpush2.msra.mxu0 0.0
  %394 = vmatprep.subr.mxu0 0.0
  %395 = vmatpush2.msra.mxu0 0.0
  %396 = vmatprep.subr.mxu0 0.0
  %397 = vmatpush2.msra.mxu0 0.0
  %398 = vmatprep.subr.mxu0 0.0
  %399 = vmatpush2.msra.mxu0 0.0
  %400 = vmatprep.subr.mxu0 0.0
  %401 = vmatpush2.msra.mxu0 0.0
  %402 = vmatprep.subr.mxu0 0.0
  %403 = vmatpush2.msra.mxu0 0.0
  %404 = vmatprep.subr.mxu0 0.0
  %405 = vmatpush2.msra.mxu0 0.0
  %406 = vmatprep.subr.mxu0 0.0
  %407 = vmatpush2.msra.mxu0 0.0
  %408 = vmatprep.subr.mxu0 0.0
  %409 = vmatpush2.msra.mxu0 0.0
  %410 = vmatprep.subr.mxu0 0.0
  %411 = vmatpush2.msra.mxu0 0.0
  %412 = vmatprep.subr.mxu0 0.0
  %413 = vmatpush2.msra.mxu0 0.0
  %414 = vmatprep.subr.mxu0 0.0
  %415 = vmatpush2.msra.mxu0 0.0
  %416 = vmatprep.subr.mxu0 0.0
  %417 = vmatpush2.msra.mxu0 0.0
  %418 = vmatprep.subr.mxu0 0.0
  %419 = vmatpush2.msra.mxu0 0.0
  %420 = vmatprep.mubr.f32.mxu0 0.0
  %421 = vmatmul.mubr.f32.gmra.mxu0 %v252
  %v422 = vpop.f32.mrf.mxu0
  %v423 = vadd.f32 0.0, %v422
  %v424 = vpop.f32.mrf.mxu0
  %425 = vmatprep.mubr.f32.mxu0 0.0
  %426 = vmatmul.mubr.f32.gmra.mxu0 %v255
  %v427 = vpop.f32.mrf.mxu0
  %v428 = vadd.f32 0.0, %v427
  %v429 = vpop.f32.mrf.mxu0
  %430 = vmatprep.mubr.f32.mxu0 0.0
  %431 = vmatmul.mubr.f32.gmra.mxu0 %v258
  %v432 = vpop.f32.mrf.mxu0
  %v433 = vadd.f32 0.0, %v432
  %v434 = vpop.f32.mrf.mxu0
  %435 = vmatprep.mubr.f32.mxu0 0.0
  %436 = vmatmul.mubr.f32.gmra.mxu0 %v261
  %v437 = vpop.f32.mrf.mxu0
  %v438 = vadd.f32 0.0, %v437
  %v439 = vpop.f32.mrf.mxu0
  %440 = vdwg.mxu0
  %v441 = vld [vmem:[%s8] sm:$0xff]
  %v442 = vld [vmem:[%s8 + $0x8] sm:$0xff]
  %v443 = vld [vmem:[%s8 + $0x10] sm:$0xff]
  %v444 = vld [vmem:[%s8 + $0x18] sm:$0xff]
  %v445 = vld [vmem:[%s8 + $0x20] sm:$0xff]
  %v446 = vld [vmem:[%s8 + $0x28] sm:$0xff]
  %v447 = vld [vmem:[%s8 + $0x30] sm:$0xff]
  %v448 = vld [vmem:[%s8 + $0x38] sm:$0xff]
  %v449 = vld [vmem:[%s9] sm:$0x1]
  %v451 = vlaneseq
  %v452 = vshrl.u32 %v451, 7
  %v453 = vsub.s32 0, %v452
  %v454 = vrot.slane %v449, %v453
  %vm456 = vcmask 523264
  %v458 = vsel %vm456, %v423, 0
  %v461 = vsel %vm456, %v428, 0
  %v464 = vsel %vm456, %v433, 0
  %v467 = vsel %vm456, %v438, 0
  %469 = vmatprep.subr.mxu0 0.0
  %470 = vmatpush1.msra.mxu0 0.0
  %471 = vmatprep.subr.mxu0 0.0
  %472 = vmatpush1.msra.mxu0 0.0
  %473 = vmatprep.subr.mxu0 0.0
  %474 = vmatpush1.msra.mxu0 0.0
  %475 = vmatprep.subr.mxu0 0.0
  %476 = vmatpush1.msra.mxu0 0.0
  %477 = vmatprep.subr.mxu0 0.0
  %478 = vmatpush1.msra.mxu0 0.0
  %479 = vmatprep.subr.mxu0 0.0
  %480 = vmatpush1.msra.mxu0 0.0
  %481 = vmatprep.subr.mxu0 0.0
  %482 = vmatpush1.msra.mxu0 0.0
  %483 = vmatprep.subr.mxu0 0.0
  %484 = vmatpush1.msra.mxu0 0.0
  %485 = vmatprep.subr.mxu0 0.0
  %486 = vmatpush1.msra.mxu0 %v448
  %487 = vmatprep.subr.mxu0 0.0
  %488 = vmatpush1.msra.mxu0 %v447
  %489 = vmatprep.subr.mxu0 0.0
  %490 = vmatpush1.msra.mxu0 %v446
  %491 = vmatprep.subr.mxu0 0.0
  %492 = vmatpush1.msra.mxu0 %v445
  %493 = vmatprep.subr.mxu0 0.0
  %494 = vmatpush1.msra.mxu0 %v444
  %495 = vmatprep.subr.mxu0 0.0
  %496 = vmatpush1.msra.mxu0 %v443
  %497 = vmatprep.subr.mxu0 0.0
  %498 = vmatpush1.msra.mxu0 %v442
  %499 = vmatprep.subr.mxu0 0.0
  %500 = vmatpush1.msra.mxu0 %v441
  %501 = vmatprep.subr.mxu0 0.0
  %502 = vmatpush2.msra.mxu0 0.0
  %503 = vmatprep.subr.mxu0 0.0
  %504 = vmatpush2.msra.mxu0 0.0
  %505 = vmatprep.subr.mxu0 0.0
  %506 = vmatpush2.msra.mxu0 0.0
  %507 = vmatprep.subr.mxu0 0.0
  %508 = vmatpush2.msra.mxu0 0.0
  %509 = vmatprep.subr.mxu0 0.0
  %510 = vmatpush2.msra.mxu0 0.0
  %511 = vmatprep.subr.mxu0 0.0
  %512 = vmatpush2.msra.mxu0 0.0
  %513 = vmatprep.subr.mxu0 0.0
  %514 = vmatpush2.msra.mxu0 0.0
  %515 = vmatprep.subr.mxu0 0.0
  %516 = vmatpush2.msra.mxu0 0.0
  %517 = vmatprep.subr.mxu0 0.0
  %518 = vmatpush2.msra.mxu0 0.0
  %519 = vmatprep.subr.mxu0 0.0
  %520 = vmatpush2.msra.mxu0 0.0
  %521 = vmatprep.subr.mxu0 0.0
  %522 = vmatpush2.msra.mxu0 0.0
  %523 = vmatprep.subr.mxu0 0.0
  %524 = vmatpush2.msra.mxu0 0.0
  %525 = vmatprep.subr.mxu0 0.0
  %526 = vmatpush2.msra.mxu0 0.0
  %527 = vmatprep.subr.mxu0 0.0
  %528 = vmatpush2.msra.mxu0 0.0
  %529 = vmatprep.subr.mxu0 0.0
  %530 = vmatpush2.msra.mxu0 0.0
  %531 = vmatprep.subr.mxu0 0.0
  %532 = vmatpush2.msra.mxu0 0.0
  %533 = vmatprep.mubr.f32.mxu0 0.0
  %534 = vmatmul.mubr.f32.gmra.mxu0 %v458
  %v535 = vpop.f32.mrf.mxu0
  %v536 = vadd.f32 %v454, %v535
  %v537 = vpop.f32.mrf.mxu0
  %538 = vmatprep.mubr.f32.mxu0 0.0
  %539 = vmatmul.mubr.f32.gmra.mxu0 %v461
  %v540 = vpop.f32.mrf.mxu0
  %v541 = vadd.f32 %v454, %v540
  %v542 = vpop.f32.mrf.mxu0
  %543 = vmatprep.mubr.f32.mxu0 0.0
  %544 = vmatmul.mubr.f32.gmra.mxu0 %v464
  %v545 = vpop.f32.mrf.mxu0
  %v546 = vadd.f32 %v454, %v545
  %v547 = vpop.f32.mrf.mxu0
  %548 = vmatprep.mubr.f32.mxu0 0.0
  %549 = vmatmul.mubr.f32.gmra.mxu0 %v467
  %v550 = vpop.f32.mrf.mxu0
  %v551 = vadd.f32 %v454, %v550
  %v552 = vpop.f32.mrf.mxu0
  %553 = vdwg.mxu0
  %v554 = vmul.f32 %v352, %v536
  %v555 = vmul.f32 %v353, %v541
  %v556 = vmul.f32 %v354, %v546
  %v557 = vmul.f32 %v355, %v551
  %v559 = vsel %vm168, %v142, 0
  %v562 = vsel %vm168, %v143, 0
  %564 = vmatprep.subr.mxu0 0.0
  %565 = vmatpush1.msra.mxu0 0.0
  %566 = vmatprep.subr.mxu0 0.0
  %567 = vmatpush1.msra.mxu0 0.0
  %568 = vmatprep.subr.mxu0 0.0
  %569 = vmatpush1.msra.mxu0 0.0
  %570 = vmatprep.subr.mxu0 0.0
  %571 = vmatpush1.msra.mxu0 0.0
  %572 = vmatprep.subr.mxu0 0.0
  %573 = vmatpush1.msra.mxu0 0.0
  %574 = vmatprep.subr.mxu0 0.0
  %575 = vmatpush1.msra.mxu0 0.0
  %576 = vmatprep.subr.mxu0 0.0
  %577 = vmatpush1.msra.mxu0 0.0
  %578 = vmatprep.subr.mxu0 0.0
  %579 = vmatpush1.msra.mxu0 0.0
  %580 = vmatprep.subr.mxu0 0.0
  %581 = vmatpush1.msra.mxu0 0.0
  %582 = vmatprep.subr.mxu0 0.0
  %583 = vmatpush1.msra.mxu0 0.0
  %584 = vmatprep.subr.mxu0 0.0
  %585 = vmatpush1.msra.mxu0 0.0
  %586 = vmatprep.subr.mxu0 0.0
  %587 = vmatpush1.msra.mxu0 0.0
  %588 = vmatprep.subr.mxu0 0.0
  %589 = vmatpush1.msra.mxu0 %v557
  %590 = vmatprep.subr.mxu0 0.0
  %591 = vmatpush1.msra.mxu0 %v556
  %592 = vmatprep.subr.mxu0 0.0
  %593 = vmatpush1.msra.mxu0 %v555
  %594 = vmatprep.subr.mxu0 0.0
  %595 = vmatpush1.msra.mxu0 %v554
  %596 = vmatprep.subr.mxu0 0.0
  %597 = vmatpush2.msra.mxu0 0.0
  %598 = vmatprep.subr.mxu0 0.0
  %599 = vmatpush2.msra.mxu0 0.0
  %600 = vmatprep.subr.mxu0 0.0
  %601 = vmatpush2.msra.mxu0 0.0
  %602 = vmatprep.subr.mxu0 0.0
  %603 = vmatpush2.msra.mxu0 0.0
  %604 = vmatprep.subr.mxu0 0.0
  %605 = vmatpush2.msra.mxu0 0.0
  %606 = vmatprep.subr.mxu0 0.0
  %607 = vmatpush2.msra.mxu0 0.0
  %608 = vmatprep.subr.mxu0 0.0
  %609 = vmatpush2.msra.mxu0 0.0
  %610 = vmatprep.subr.mxu0 0.0
  %611 = vmatpush2.msra.mxu0 0.0
  %612 = vmatprep.subr.mxu0 0.0
  %613 = vmatpush2.msra.mxu0 0.0
  %614 = vmatprep.subr.mxu0 0.0
  %615 = vmatpush2.msra.mxu0 0.0
  %616 = vmatprep.subr.mxu0 0.0
  %617 = vmatpush2.msra.mxu0 0.0
  %618 = vmatprep.subr.mxu0 0.0
  %619 = vmatpush2.msra.mxu0 0.0
  %620 = vmatprep.subr.mxu0 0.0
  %621 = vmatpush2.msra.mxu0 0.0
  %622 = vmatprep.subr.mxu0 0.0
  %623 = vmatpush2.msra.mxu0 0.0
  %624 = vmatprep.subr.mxu0 0.0
  %625 = vmatpush2.msra.mxu0 0.0
  %626 = vmatprep.subr.mxu0 0.0
  %627 = vmatpush2.msra.mxu0 0.0
  %628 = vmatprep.mubr.f32.mxu0 0.0
  %629 = vmatmul.mubr.f32.gmra.mxu0 %v559
  %v630 = vpop.f32.mrf.mxu0
  %v631 = vadd.f32 0.0, %v630
  %v632 = vpop.f32.mrf.mxu0
  %633 = vmatprep.mubr.f32.mxu0 0.0
  %634 = vmatmul.mubr.f32.gmra.mxu0 %v562
  %v635 = vpop.f32.mrf.mxu0
  %v636 = vadd.f32 0.0, %v635
  %v637 = vpop.f32.mrf.mxu0
  %638 = vdwg.mxu0
  %v639 = vld [vmem:[%s6] sm:$0xff]
  %v640 = vld [vmem:[%s6 + $0x8] sm:$0xff]
  %v641 = vld [vmem:[%s6 + $0x10] sm:$0xff]
  %v642 = vld [vmem:[%s6 + $0x18] sm:$0xff]
  %v643 = vld [vmem:[%s6 + $0x20] sm:$0xff]
  %v644 = vld [vmem:[%s6 + $0x28] sm:$0xff]
  %v645 = vld [vmem:[%s6 + $0x30] sm:$0xff]
  %v646 = vld [vmem:[%s6 + $0x38] sm:$0xff]
  %v647 = vld [vmem:[%s7] sm:$0x1]
  %v649 = vlaneseq
  %v650 = vshrl.u32 %v649, 7
  %v651 = vsub.s32 0, %v650
  %v652 = vrot.slane %v647, %v651
  %v655 = vsel %vm456, %v55, 0
  %v658 = vsel %vm456, %v56, 0
  %660 = vmatprep.subr.mxu0 0.0
  %661 = vmatpush1.msra.mxu0 0.0
  %662 = vmatprep.subr.mxu0 0.0
  %663 = vmatpush1.msra.mxu0 0.0
  %664 = vmatprep.subr.mxu0 0.0
  %665 = vmatpush1.msra.mxu0 0.0
  %666 = vmatprep.subr.mxu0 0.0
  %667 = vmatpush1.msra.mxu0 0.0
  %668 = vmatprep.subr.mxu0 0.0
  %669 = vmatpush1.msra.mxu0 0.0
  %670 = vmatprep.subr.mxu0 0.0
  %671 = vmatpush1.msra.mxu0 0.0
  %672 = vmatprep.subr.mxu0 0.0
  %673 = vmatpush1.msra.mxu0 0.0
  %674 = vmatprep.subr.mxu0 0.0
  %675 = vmatpush1.msra.mxu0 0.0
  %676 = vmatprep.subr.mxu0 0.0
  %677 = vmatpush1.msra.mxu0 %v646
  %678 = vmatprep.subr.mxu0 0.0
  %679 = vmatpush1.msra.mxu0 %v645
  %680 = vmatprep.subr.mxu0 0.0
  %681 = vmatpush1.msra.mxu0 %v644
  %682 = vmatprep.subr.mxu0 0.0
  %683 = vmatpush1.msra.mxu0 %v643
  %684 = vmatprep.subr.mxu0 0.0
  %685 = vmatpush1.msra.mxu0 %v642
  %686 = vmatprep.subr.mxu0 0.0
  %687 = vmatpush1.msra.mxu0 %v641
  %688 = vmatprep.subr.mxu0 0.0
  %689 = vmatpush1.msra.mxu0 %v640
  %690 = vmatprep.subr.mxu0 0.0
  %691 = vmatpush1.msra.mxu0 %v639
  %692 = vmatprep.subr.mxu0 0.0
  %693 = vmatpush2.msra.mxu0 0.0
  %694 = vmatprep.subr.mxu0 0.0
  %695 = vmatpush2.msra.mxu0 0.0
  %696 = vmatprep.subr.mxu0 0.0
  %697 = vmatpush2.msra.mxu0 0.0
  %698 = vmatprep.subr.mxu0 0.0
  %699 = vmatpush2.msra.mxu0 0.0
  %700 = vmatprep.subr.mxu0 0.0
  %701 = vmatpush2.msra.mxu0 0.0
  %702 = vmatprep.subr.mxu0 0.0
  %703 = vmatpush2.msra.mxu0 0.0
  %704 = vmatprep.subr.mxu0 0.0
  %705 = vmatpush2.msra.mxu0 0.0
  %706 = vmatprep.subr.mxu0 0.0
  %707 = vmatpush2.msra.mxu0 0.0
  %708 = vmatprep.subr.mxu0 0.0
  %709 = vmatpush2.msra.mxu0 0.0
  %710 = vmatprep.subr.mxu0 0.0
  %711 = vmatpush2.msra.mxu0 0.0
  %712 = vmatprep.subr.mxu0 0.0
  %713 = vmatpush2.msra.mxu0 0.0
  %714 = vmatprep.subr.mxu0 0.0
  %715 = vmatpush2.msra.mxu0 0.0
  %716 = vmatprep.subr.mxu0 0.0
  %717 = vmatpush2.msra.mxu0 0.0
  %718 = vmatprep.subr.mxu0 0.0
  %719 = vmatpush2.msra.mxu0 0.0
  %720 = vmatprep.subr.mxu0 0.0
  %721 = vmatpush2.msra.mxu0 0.0
  %722 = vmatprep.subr.mxu0 0.0
  %723 = vmatpush2.msra.mxu0 0.0
  %724 = vmatprep.mubr.f32.mxu0 0.0
  %725 = vmatmul.mubr.f32.gmra.mxu0 %v655
  %v726 = vpop.f32.mrf.mxu0
  %v727 = vadd.f32 %v652, %v726
  %v728 = vpop.f32.mrf.mxu0
  %729 = vmatprep.mubr.f32.mxu0 0.0
  %730 = vmatmul.mubr.f32.gmra.mxu0 %v658
  %v731 = vpop.f32.mrf.mxu0
  %v732 = vadd.f32 %v652, %v731
  %v733 = vpop.f32.mrf.mxu0
  %734 = vdwg.mxu0
  %v735 = vadd.f32 %v727, %v631
  %v736 = vadd.f32 %v732, %v636
  %v737 = vld [vmem:[%s12] sm:$0x1]
  %v738 = vld [vmem:[%s13] sm:$0x1]
  %v739 = vsel %vm456, %v735, 0.0
  %740 = vadd.xlane.f32.xlu0 %v739
  %v741 = vpop.xlane.xlu0 %740
  %v742 = vsel %vm456, %v736, 0.0
  %743 = vadd.xlane.f32.xlu0 %v742
  %v744 = vpop.xlane.xlu0 %743
  %v745 = vrcp.pop 64.0
  %v746 = vmul.f32 %v741, %v745
  %v747 = vmul.f32 %v744, %v745
  %v748 = vsub.f32 %v735, %v746
  %v749 = vsub.f32 %v736, %v747
  %v750 = vmul.f32 %v748, %v748
  %v751 = vmul.f32 %v749, %v749
  %v752 = vsel %vm456, %v750, 0.0
  %753 = vadd.xlane.f32.xlu0 %v752
  %v754 = vpop.xlane.xlu0 %753
  %v755 = vsel %vm456, %v751, 0.0
  %756 = vadd.xlane.f32.xlu0 %v755
  %v757 = vpop.xlane.xlu0 %756
  %v758 = vmul.f32 %v754, %v745
  %v759 = vmul.f32 %v757, %v745
  %v760 = vadd.f32 %v758, 1e-05
  %v761 = vadd.f32 %v759, 1e-05
  %v762 = vrsqrt.pop %v760
  %v763 = vrsqrt.pop %v761
  %v764 = vmul.f32 %v748, %v762
  %v765 = vmul.f32 %v749, %v763
  %v767 = vlaneseq
  %v768 = vshrl.u32 %v767, 7
  %v769 = vsub.s32 0, %v768
  %v770 = vrot.slane %v737, %v769
  %v772 = vmul.f32 %v764, %v770
  %v773 = vmul.f32 %v765, %v770
  %v775 = vlaneseq
  %v776 = vshrl.u32 %v775, 7
  %v777 = vsub.s32 0, %v776
  %v778 = vrot.slane %v738, %v777
  %v780 = vadd.f32 %v772, %v778
  %v781 = vadd.f32 %v773, %v778
  %v782 = vsub.f32 0.0, %v780
  %v783 = vsub.f32 0.0, %v781
  %v784 = vmul.f32 %v782, 1.442695
  %v785 = vpow.pop %v784
  %v786 = vmul.f32 %v783, 1.442695
  %v787 = vpow.pop %v786
  %v788 = vadd.f32 %v785, 1.0
  %v789 = vadd.f32 %v787, 1.0
  %v790 = vrcp.pop %v788
  %v791 = vmul.f32 1.0, %v790
  %v792 = vrcp.pop %v789
  %v793 = vmul.f32 1.0, %v792
  %v794 = vmul.f32 %v780, %v791
  %v795 = vmul.f32 %v781, %v793
  %v796 = vadd.f32 %v55, %v794
  %v797 = vadd.f32 %v56, %v795
  %798 = vst.msk [vmem:[%s16] sm:$0xff] %vm456, %v796
  %799 = vst.msk [vmem:[%s16 + $0x8] sm:$0xff] %vm456, %v797
  %v801 = vsel %vm250, %v118, 0
  %v804 = vsel %vm250, %v119, 0
  %v807 = vsel %vm250, %v120, 0
  %v810 = vsel %vm250, %v121, 0
  %812 = vmatprep.subr.mxu0 0.0
  %813 = vmatpush1.msra.mxu0 0.0
  %814 = vmatprep.subr.mxu0 0.0
  %815 = vmatpush1.msra.mxu0 0.0
  %816 = vmatprep.subr.mxu0 0.0
  %817 = vmatpush1.msra.mxu0 0.0
  %818 = vmatprep.subr.mxu0 0.0
  %819 = vmatpush1.msra.mxu0 0.0
  %820 = vmatprep.subr.mxu0 0.0
  %821 = vmatpush1.msra.mxu0 0.0
  %822 = vmatprep.subr.mxu0 0.0
  %823 = vmatpush1.msra.mxu0 0.0
  %824 = vmatprep.subr.mxu0 0.0
  %825 = vmatpush1.msra.mxu0 0.0
  %826 = vmatprep.subr.mxu0 0.0
  %827 = vmatpush1.msra.mxu0 0.0
  %828 = vmatprep.subr.mxu0 0.0
  %829 = vmatpush1.msra.mxu0 0.0
  %830 = vmatprep.subr.mxu0 0.0
  %831 = vmatpush1.msra.mxu0 0.0
  %832 = vmatprep.subr.mxu0 0.0
  %833 = vmatpush1.msra.mxu0 0.0
  %834 = vmatprep.subr.mxu0 0.0
  %835 = vmatpush1.msra.mxu0 0.0
  %836 = vmatprep.subr.mxu0 0.0
  %837 = vmatpush1.msra.mxu0 0.0
  %838 = vmatprep.subr.mxu0 0.0
  %839 = vmatpush1.msra.mxu0 0.0
  %840 = vmatprep.subr.mxu0 0.0
  %841 = vmatpush1.msra.mxu0 %v56
  %842 = vmatprep.subr.mxu0 0.0
  %843 = vmatpush1.msra.mxu0 %v55
  %844 = vmatprep.subr.mxu0 0.0
  %845 = vmatpush2.msra.mxu0 0.0
  %846 = vmatprep.subr.mxu0 0.0
  %847 = vmatpush2.msra.mxu0 0.0
  %848 = vmatprep.subr.mxu0 0.0
  %849 = vmatpush2.msra.mxu0 0.0
  %850 = vmatprep.subr.mxu0 0.0
  %851 = vmatpush2.msra.mxu0 0.0
  %852 = vmatprep.subr.mxu0 0.0
  %853 = vmatpush2.msra.mxu0 0.0
  %854 = vmatprep.subr.mxu0 0.0
  %855 = vmatpush2.msra.mxu0 0.0
  %856 = vmatprep.subr.mxu0 0.0
  %857 = vmatpush2.msra.mxu0 0.0
  %858 = vmatprep.subr.mxu0 0.0
  %859 = vmatpush2.msra.mxu0 0.0
  %860 = vmatprep.subr.mxu0 0.0
  %861 = vmatpush2.msra.mxu0 0.0
  %862 = vmatprep.subr.mxu0 0.0
  %863 = vmatpush2.msra.mxu0 0.0
  %864 = vmatprep.subr.mxu0 0.0
  %865 = vmatpush2.msra.mxu0 0.0
  %866 = vmatprep.subr.mxu0 0.0
  %867 = vmatpush2.msra.mxu0 0.0
  %868 = vmatprep.subr.mxu0 0.0
  %869 = vmatpush2.msra.mxu0 0.0
  %870 = vmatprep.subr.mxu0 0.0
  %871 = vmatpush2.msra.mxu0 0.0
  %872 = vmatprep.subr.mxu0 0.0
  %873 = vmatpush2.msra.mxu0 0.0
  %874 = vmatprep.subr.mxu0 0.0
  %875 = vmatpush2.msra.mxu0 0.0
  %876 = vmatprep.mubr.f32.mxu0 0.0
  %877 = vmatmul.mubr.f32.gmra.mxu0 %v801
  %v878 = vpop.f32.mrf.mxu0
  %v879 = vadd.f32 0.0, %v878
  %v880 = vpop.f32.mrf.mxu0
  %881 = vmatprep.mubr.f32.mxu0 0.0
  %882 = vmatmul.mubr.f32.gmra.mxu0 %v804
  %v883 = vpop.f32.mrf.mxu0
  %v884 = vadd.f32 0.0, %v883
  %v885 = vpop.f32.mrf.mxu0
  %886 = vmatprep.mubr.f32.mxu0 0.0
  %887 = vmatmul.mubr.f32.gmra.mxu0 %v807
  %v888 = vpop.f32.mrf.mxu0
  %v889 = vadd.f32 0.0, %v888
  %v890 = vpop.f32.mrf.mxu0
  %891 = vmatprep.mubr.f32.mxu0 0.0
  %892 = vmatmul.mubr.f32.gmra.mxu0 %v810
  %v893 = vpop.f32.mrf.mxu0
  %v894 = vadd.f32 0.0, %v893
  %v895 = vpop.f32.mrf.mxu0
  %896 = vdwg.mxu0
  %v897 = vld [vmem:[%s10] sm:$0xff]
  %v898 = vld [vmem:[%s10 + $0x8] sm:$0xff]
  %v899 = vld [vmem:[%s10 + $0x10] sm:$0xff]
  %v900 = vld [vmem:[%s10 + $0x18] sm:$0xff]
  %v901 = vld [vmem:[%s10 + $0x20] sm:$0xff]
  %v902 = vld [vmem:[%s10 + $0x28] sm:$0xff]
  %v903 = vld [vmem:[%s10 + $0x30] sm:$0xff]
  %v904 = vld [vmem:[%s10 + $0x38] sm:$0xff]
  %v905 = vld [vmem:[%s10 + $0x40] sm:$0xff]
  %v906 = vld [vmem:[%s10 + $0x48] sm:$0xff]
  %v907 = vld [vmem:[%s10 + $0x50] sm:$0xff]
  %v908 = vld [vmem:[%s10 + $0x58] sm:$0xff]
  %v909 = vld [vmem:[%s10 + $0x60] sm:$0xff]
  %v910 = vld [vmem:[%s10 + $0x68] sm:$0xff]
  %v911 = vld [vmem:[%s10 + $0x70] sm:$0xff]
  %v912 = vld [vmem:[%s10 + $0x78] sm:$0xff]
  %v913 = vld [vmem:[%s10 + $0x80] sm:$0xff]
  %v914 = vld [vmem:[%s10 + $0x88] sm:$0xff]
  %v915 = vld [vmem:[%s10 + $0x90] sm:$0xff]
  %v916 = vld [vmem:[%s10 + $0x98] sm:$0xff]
  %v917 = vld [vmem:[%s10 + $0xa0] sm:$0xff]
  %v918 = vld [vmem:[%s10 + $0xa8] sm:$0xff]
  %v919 = vld [vmem:[%s10 + $0xb0] sm:$0xff]
  %v920 = vld [vmem:[%s10 + $0xb8] sm:$0xff]
  %v922 = vsel %vm456, %v879, 0
  %v925 = vsel %vm456, %v884, 0
  %v928 = vsel %vm456, %v889, 0
  %v931 = vsel %vm456, %v894, 0
  %933 = vmatprep.subr.mxu0 0.0
  %934 = vmatpush1.msra.mxu0 0.0
  %935 = vmatprep.subr.mxu0 0.0
  %936 = vmatpush1.msra.mxu0 0.0
  %937 = vmatprep.subr.mxu0 0.0
  %938 = vmatpush1.msra.mxu0 0.0
  %939 = vmatprep.subr.mxu0 0.0
  %940 = vmatpush1.msra.mxu0 0.0
  %941 = vmatprep.subr.mxu0 0.0
  %942 = vmatpush1.msra.mxu0 0.0
  %943 = vmatprep.subr.mxu0 0.0
  %944 = vmatpush1.msra.mxu0 0.0
  %945 = vmatprep.subr.mxu0 0.0
  %946 = vmatpush1.msra.mxu0 0.0
  %947 = vmatprep.subr.mxu0 0.0
  %948 = vmatpush1.msra.mxu0 0.0
  %949 = vmatprep.subr.mxu0 0.0
  %950 = vmatpush1.msra.mxu0 %v912
  %951 = vmatprep.subr.mxu0 0.0
  %952 = vmatpush1.msra.mxu0 %v911
  %953 = vmatprep.subr.mxu0 0.0
  %954 = vmatpush1.msra.mxu0 %v910
  %955 = vmatprep.subr.mxu0 0.0
  %956 = vmatpush1.msra.mxu0 %v909
  %957 = vmatprep.subr.mxu0 0.0
  %958 = vmatpush1.msra.mxu0 %v908
  %959 = vmatprep.subr.mxu0 0.0
  %960 = vmatpush1.msra.mxu0 %v907
  %961 = vmatprep.subr.mxu0 0.0
  %962 = vmatpush1.msra.mxu0 %v906
  %963 = vmatprep.subr.mxu0 0.0
  %964 = vmatpush1.msra.mxu0 %v905
  %965 = vmatprep.subr.mxu0 0.0
  %966 = vmatpush2.msra.mxu0 0.0
  %967 = vmatprep.subr.mxu0 0.0
  %968 = vmatpush2.msra.mxu0 0.0
  %969 = vmatprep.subr.mxu0 0.0
  %970 = vmatpush2.msra.mxu0 0.0
  %971 = vmatprep.subr.mxu0 0.0
  %972 = vmatpush2.msra.mxu0 0.0
  %973 = vmatprep.subr.mxu0 0.0
  %974 = vmatpush2.msra.mxu0 0.0
  %975 = vmatprep.subr.mxu0 0.0
  %976 = vmatpush2.msra.mxu0 0.0
  %977 = vmatprep.subr.mxu0 0.0
  %978 = vmatpush2.msra.mxu0 0.0
  %979 = vmatprep.subr.mxu0 0.0
  %980 = vmatpush2.msra.mxu0 0.0
  %981 = vmatprep.subr.mxu0 0.0
  %982 = vmatpush2.msra.mxu0 0.0
  %983 = vmatprep.subr.mxu0 0.0
  %984 = vmatpush2.msra.mxu0 0.0
  %985 = vmatprep.subr.mxu0 0.0
  %986 = vmatpush2.msra.mxu0 0.0
  %987 = vmatprep.subr.mxu0 0.0
  %988 = vmatpush2.msra.mxu0 0.0
  %989 = vmatprep.subr.mxu0 0.0
  %990 = vmatpush2.msra.mxu0 0.0
  %991 = vmatprep.subr.mxu0 0.0
  %992 = vmatpush2.msra.mxu0 0.0
  %993 = vmatprep.subr.mxu0 0.0
  %994 = vmatpush2.msra.mxu0 0.0
  %995 = vmatprep.subr.mxu0 0.0
  %996 = vmatpush2.msra.mxu0 0.0
  %997 = vmatprep.mubr.f32.mxu0 0.0
  %998 = vmatmul.mubr.f32.gmra.mxu0 %v922
  %v999 = vpop.f32.mrf.mxu0
  %v1000 = vadd.f32 0.0, %v999
  %v1001 = vpop.f32.mrf.mxu0
  %1002 = vmatprep.mubr.f32.mxu0 0.0
  %1003 = vmatmul.mubr.f32.gmra.mxu0 %v925
  %v1004 = vpop.f32.mrf.mxu0
  %v1005 = vadd.f32 0.0, %v1004
  %v1006 = vpop.f32.mrf.mxu0
  %1007 = vmatprep.mubr.f32.mxu0 0.0
  %1008 = vmatmul.mubr.f32.gmra.mxu0 %v928
  %v1009 = vpop.f32.mrf.mxu0
  %v1010 = vadd.f32 0.0, %v1009
  %v1011 = vpop.f32.mrf.mxu0
  %1012 = vmatprep.mubr.f32.mxu0 0.0
  %1013 = vmatmul.mubr.f32.gmra.mxu0 %v931
  %v1014 = vpop.f32.mrf.mxu0
  %v1015 = vadd.f32 0.0, %v1014
  %v1016 = vpop.f32.mrf.mxu0
  %1017 = vdwg.mxu0
  %1018 = vmatprep.subr.mxu0 0.0
  %1019 = vmatpush1.msra.mxu0 0.0
  %1020 = vmatprep.subr.mxu0 0.0
  %1021 = vmatpush1.msra.mxu0 0.0
  %1022 = vmatprep.subr.mxu0 0.0
  %1023 = vmatpush1.msra.mxu0 0.0
  %1024 = vmatprep.subr.mxu0 0.0
  %1025 = vmatpush1.msra.mxu0 0.0
  %1026 = vmatprep.subr.mxu0 0.0
  %1027 = vmatpush1.msra.mxu0 0.0
  %1028 = vmatprep.subr.mxu0 0.0
  %1029 = vmatpush1.msra.mxu0 0.0
  %1030 = vmatprep.subr.mxu0 0.0
  %1031 = vmatpush1.msra.mxu0 0.0
  %1032 = vmatprep.subr.mxu0 0.0
  %1033 = vmatpush1.msra.mxu0 0.0
  %1034 = vmatprep.subr.mxu0 0.0
  %1035 = vmatpush1.msra.mxu0 %v904
  %1036 = vmatprep.subr.mxu0 0.0
  %1037 = vmatpush1.msra.mxu0 %v903
  %1038 = vmatprep.subr.mxu0 0.0
  %1039 = vmatpush1.msra.mxu0 %v902
  %1040 = vmatprep.subr.mxu0 0.0
  %1041 = vmatpush1.msra.mxu0 %v901
  %1042 = vmatprep.subr.mxu0 0.0
  %1043 = vmatpush1.msra.mxu0 %v900
  %1044 = vmatprep.subr.mxu0 0.0
  %1045 = vmatpush1.msra.mxu0 %v899
  %1046 = vmatprep.subr.mxu0 0.0
  %1047 = vmatpush1.msra.mxu0 %v898
  %1048 = vmatprep.subr.mxu0 0.0
  %1049 = vmatpush1.msra.mxu0 %v897
  %1050 = vmatprep.subr.mxu0 0.0
  %1051 = vmatpush2.msra.mxu0 0.0
  %1052 = vmatprep.subr.mxu0 0.0
  %1053 = vmatpush2.msra.mxu0 0.0
  %1054 = vmatprep.subr.mxu0 0.0
  %1055 = vmatpush2.msra.mxu0 0.0
  %1056 = vmatprep.subr.mxu0 0.0
  %1057 = vmatpush2.msra.mxu0 0.0
  %1058 = vmatprep.subr.mxu0 0.0
  %1059 = vmatpush2.msra.mxu0 0.0
  %1060 = vmatprep.subr.mxu0 0.0
  %1061 = vmatpush2.msra.mxu0 0.0
  %1062 = vmatprep.subr.mxu0 0.0
  %1063 = vmatpush2.msra.mxu0 0.0
  %1064 = vmatprep.subr.mxu0 0.0
  %1065 = vmatpush2.msra.mxu0 0.0
  %1066 = vmatprep.subr.mxu0 0.0
  %1067 = vmatpush2.msra.mxu0 0.0
  %1068 = vmatprep.subr.mxu0 0.0
  %1069 = vmatpush2.msra.mxu0 0.0
  %1070 = vmatprep.subr.mxu0 0.0
  %1071 = vmatpush2.msra.mxu0 0.0
  %1072 = vmatprep.subr.mxu0 0.0
  %1073 = vmatpush2.msra.mxu0 0.0
  %1074 = vmatprep.subr.mxu0 0.0
  %1075 = vmatpush2.msra.mxu0 0.0
  %1076 = vmatprep.subr.mxu0 0.0
  %1077 = vmatpush2.msra.mxu0 0.0
  %1078 = vmatprep.subr.mxu0 0.0
  %1079 = vmatpush2.msra.mxu0 0.0
  %1080 = vmatprep.subr.mxu0 0.0
  %1081 = vmatpush2.msra.mxu0 0.0
  %1082 = vmatprep.mubr.f32.mxu0 0.0
  %1083 = vmatmul.mubr.f32.gmra.mxu0 %v458
  %v1084 = vpop.f32.mrf.mxu0
  %v1085 = vadd.f32 %v1000, %v1084
  %v1086 = vpop.f32.mrf.mxu0
  %1087 = vmatprep.mubr.f32.mxu0 0.0
  %1088 = vmatmul.mubr.f32.gmra.mxu0 %v461
  %v1089 = vpop.f32.mrf.mxu0
  %v1090 = vadd.f32 %v1005, %v1089
  %v1091 = vpop.f32.mrf.mxu0
  %1092 = vmatprep.mubr.f32.mxu0 0.0
  %1093 = vmatmul.mubr.f32.gmra.mxu0 %v464
  %v1094 = vpop.f32.mrf.mxu0
  %v1095 = vadd.f32 %v1010, %v1094
  %v1096 = vpop.f32.mrf.mxu0
  %1097 = vmatprep.mubr.f32.mxu0 0.0
  %1098 = vmatmul.mubr.f32.gmra.mxu0 %v467
  %v1099 = vpop.f32.mrf.mxu0
  %v1100 = vadd.f32 %v1015, %v1099
  %v1101 = vpop.f32.mrf.mxu0
  %1102 = vdwg.mxu0
  %v1104 = vsel %vm456, %v57, 0
  %v1107 = vsel %vm456, %v58, 0
  %v1110 = vsel %vm456, %v59, 0
  %v1113 = vsel %vm456, %v60, 0
  %1115 = vmatprep.subr.mxu0 0.0
  %1116 = vmatpush1.msra.mxu0 0.0
  %1117 = vmatprep.subr.mxu0 0.0
  %1118 = vmatpush1.msra.mxu0 0.0
  %1119 = vmatprep.subr.mxu0 0.0
  %1120 = vmatpush1.msra.mxu0 0.0
  %1121 = vmatprep.subr.mxu0 0.0
  %1122 = vmatpush1.msra.mxu0 0.0
  %1123 = vmatprep.subr.mxu0 0.0
  %1124 = vmatpush1.msra.mxu0 0.0
  %1125 = vmatprep.subr.mxu0 0.0
  %1126 = vmatpush1.msra.mxu0 0.0
  %1127 = vmatprep.subr.mxu0 0.0
  %1128 = vmatpush1.msra.mxu0 0.0
  %1129 = vmatprep.subr.mxu0 0.0
  %1130 = vmatpush1.msra.mxu0 0.0
  %1131 = vmatprep.subr.mxu0 0.0
  %1132 = vmatpush1.msra.mxu0 %v920
  %1133 = vmatprep.subr.mxu0 0.0
  %1134 = vmatpush1.msra.mxu0 %v919
  %1135 = vmatprep.subr.mxu0 0.0
  %1136 = vmatpush1.msra.mxu0 %v918
  %1137 = vmatprep.subr.mxu0 0.0
  %1138 = vmatpush1.msra.mxu0 %v917
  %1139 = vmatprep.subr.mxu0 0.0
  %1140 = vmatpush1.msra.mxu0 %v916
  %1141 = vmatprep.subr.mxu0 0.0
  %1142 = vmatpush1.msra.mxu0 %v915
  %1143 = vmatprep.subr.mxu0 0.0
  %1144 = vmatpush1.msra.mxu0 %v914
  %1145 = vmatprep.subr.mxu0 0.0
  %1146 = vmatpush1.msra.mxu0 %v913
  %1147 = vmatprep.subr.mxu0 0.0
  %1148 = vmatpush2.msra.mxu0 0.0
  %1149 = vmatprep.subr.mxu0 0.0
  %1150 = vmatpush2.msra.mxu0 0.0
  %1151 = vmatprep.subr.mxu0 0.0
  %1152 = vmatpush2.msra.mxu0 0.0
  %1153 = vmatprep.subr.mxu0 0.0
  %1154 = vmatpush2.msra.mxu0 0.0
  %1155 = vmatprep.subr.mxu0 0.0
  %1156 = vmatpush2.msra.mxu0 0.0
  %1157 = vmatprep.subr.mxu0 0.0
  %1158 = vmatpush2.msra.mxu0 0.0
  %1159 = vmatprep.subr.mxu0 0.0
  %1160 = vmatpush2.msra.mxu0 0.0
  %1161 = vmatprep.subr.mxu0 0.0
  %1162 = vmatpush2.msra.mxu0 0.0
  %1163 = vmatprep.subr.mxu0 0.0
  %1164 = vmatpush2.msra.mxu0 0.0
  %1165 = vmatprep.subr.mxu0 0.0
  %1166 = vmatpush2.msra.mxu0 0.0
  %1167 = vmatprep.subr.mxu0 0.0
  %1168 = vmatpush2.msra.mxu0 0.0
  %1169 = vmatprep.subr.mxu0 0.0
  %1170 = vmatpush2.msra.mxu0 0.0
  %1171 = vmatprep.subr.mxu0 0.0
  %1172 = vmatpush2.msra.mxu0 0.0
  %1173 = vmatprep.subr.mxu0 0.0
  %1174 = vmatpush2.msra.mxu0 0.0
  %1175 = vmatprep.subr.mxu0 0.0
  %1176 = vmatpush2.msra.mxu0 0.0
  %1177 = vmatprep.subr.mxu0 0.0
  %1178 = vmatpush2.msra.mxu0 0.0
  %1179 = vmatprep.mubr.f32.mxu0 0.0
  %1180 = vmatmul.mubr.f32.gmra.mxu0 %v1104
  %v1181 = vpop.f32.mrf.mxu0
  %v1182 = vadd.f32 0.0, %v1181
  %v1183 = vpop.f32.mrf.mxu0
  %1184 = vmatprep.mubr.f32.mxu0 0.0
  %1185 = vmatmul.mubr.f32.gmra.mxu0 %v1107
  %v1186 = vpop.f32.mrf.mxu0
  %v1187 = vadd.f32 0.0, %v1186
  %v1188 = vpop.f32.mrf.mxu0
  %1189 = vmatprep.mubr.f32.mxu0 0.0
  %1190 = vmatmul.mubr.f32.gmra.mxu0 %v1110
  %v1191 = vpop.f32.mrf.mxu0
  %v1192 = vadd.f32 0.0, %v1191
  %v1193 = vpop.f32.mrf.mxu0
  %1194 = vmatprep.mubr.f32.mxu0 0.0
  %1195 = vmatmul.mubr.f32.gmra.mxu0 %v1113
  %v1196 = vpop.f32.mrf.mxu0
  %v1197 = vadd.f32 0.0, %v1196
  %v1198 = vpop.f32.mrf.mxu0
  %1199 = vdwg.mxu0
  %v1200 = vadd.f32 %v1085, %v1182
  %v1201 = vadd.f32 %v1090, %v1187
  %v1202 = vadd.f32 %v1095, %v1192
  %v1203 = vadd.f32 %v1100, %v1197
  %v1204 = vld [vmem:[%s11] sm:$0x1]
  %v1206 = vlaneseq
  %v1207 = vshrl.u32 %v1206, 7
  %v1208 = vsub.s32 0, %v1207
  %v1209 = vrot.slane %v1204, %v1208
  %v1211 = vadd.f32 %v1200, %v1209
  %v1212 = vadd.f32 %v1201, %v1209
  %v1213 = vadd.f32 %v1202, %v1209
  %v1214 = vadd.f32 %v1203, %v1209
  %v1215 = vld [vmem:[%s14] sm:$0x1]
  %v1216 = vld [vmem:[%s15] sm:$0x1]
  %v1217 = vsel %vm456, %v1211, 0.0
  %1218 = vadd.xlane.f32.xlu0 %v1217
  %v1219 = vpop.xlane.xlu0 %1218
  %v1220 = vsel %vm456, %v1212, 0.0
  %1221 = vadd.xlane.f32.xlu0 %v1220
  %v1222 = vpop.xlane.xlu0 %1221
  %v1223 = vsel %vm456, %v1213, 0.0
  %1224 = vadd.xlane.f32.xlu0 %v1223
  %v1225 = vpop.xlane.xlu0 %1224
  %v1226 = vsel %vm456, %v1214, 0.0
  %1227 = vadd.xlane.f32.xlu0 %v1226
  %v1228 = vpop.xlane.xlu0 %1227
  %v1229 = vmul.f32 %v1219, %v745
  %v1230 = vmul.f32 %v1222, %v745
  %v1231 = vmul.f32 %v1225, %v745
  %v1232 = vmul.f32 %v1228, %v745
  %v1233 = vsub.f32 %v1211, %v1229
  %v1234 = vsub.f32 %v1212, %v1230
  %v1235 = vsub.f32 %v1213, %v1231
  %v1236 = vsub.f32 %v1214, %v1232
  %v1237 = vmul.f32 %v1233, %v1233
  %v1238 = vmul.f32 %v1234, %v1234
  %v1239 = vmul.f32 %v1235, %v1235
  %v1240 = vmul.f32 %v1236, %v1236
  %v1241 = vsel %vm456, %v1237, 0.0
  %1242 = vadd.xlane.f32.xlu0 %v1241
  %v1243 = vpop.xlane.xlu0 %1242
  %v1244 = vsel %vm456, %v1238, 0.0
  %1245 = vadd.xlane.f32.xlu0 %v1244
  %v1246 = vpop.xlane.xlu0 %1245
  %v1247 = vsel %vm456, %v1239, 0.0
  %1248 = vadd.xlane.f32.xlu0 %v1247
  %v1249 = vpop.xlane.xlu0 %1248
  %v1250 = vsel %vm456, %v1240, 0.0
  %1251 = vadd.xlane.f32.xlu0 %v1250
  %v1252 = vpop.xlane.xlu0 %1251
  %v1253 = vmul.f32 %v1243, %v745
  %v1254 = vmul.f32 %v1246, %v745
  %v1255 = vmul.f32 %v1249, %v745
  %v1256 = vmul.f32 %v1252, %v745
  %v1257 = vadd.f32 %v1253, 1e-05
  %v1258 = vadd.f32 %v1254, 1e-05
  %v1259 = vadd.f32 %v1255, 1e-05
  %v1260 = vadd.f32 %v1256, 1e-05
  %v1261 = vrsqrt.pop %v1257
  %v1262 = vrsqrt.pop %v1258
  %v1263 = vrsqrt.pop %v1259
  %v1264 = vrsqrt.pop %v1260
  %v1265 = vmul.f32 %v1233, %v1261
  %v1266 = vmul.f32 %v1234, %v1262
  %v1267 = vmul.f32 %v1235, %v1263
  %v1268 = vmul.f32 %v1236, %v1264
  %v1270 = vlaneseq
  %v1271 = vshrl.u32 %v1270, 7
  %v1272 = vsub.s32 0, %v1271
  %v1273 = vrot.slane %v1215, %v1272
  %v1275 = vmul.f32 %v1265, %v1273
  %v1276 = vmul.f32 %v1266, %v1273
  %v1277 = vmul.f32 %v1267, %v1273
  %v1278 = vmul.f32 %v1268, %v1273
  %v1280 = vlaneseq
  %v1281 = vshrl.u32 %v1280, 7
  %v1282 = vsub.s32 0, %v1281
  %v1283 = vrot.slane %v1216, %v1282
  %v1285 = vadd.f32 %v1275, %v1283
  %v1286 = vadd.f32 %v1276, %v1283
  %v1287 = vadd.f32 %v1277, %v1283
  %v1288 = vadd.f32 %v1278, %v1283
  %v1289 = vsub.f32 0.0, %v1285
  %v1290 = vsub.f32 0.0, %v1286
  %v1291 = vsub.f32 0.0, %v1287
  %v1292 = vsub.f32 0.0, %v1288
  %v1293 = vmul.f32 %v1289, 1.442695
  %v1294 = vpow.pop %v1293
  %v1295 = vmul.f32 %v1290, 1.442695
  %v1296 = vpow.pop %v1295
  %v1297 = vmul.f32 %v1291, 1.442695
  %v1298 = vpow.pop %v1297
  %v1299 = vmul.f32 %v1292, 1.442695
  %v1300 = vpow.pop %v1299
  %v1301 = vadd.f32 %v1294, 1.0
  %v1302 = vadd.f32 %v1296, 1.0
  %v1303 = vadd.f32 %v1298, 1.0
  %v1304 = vadd.f32 %v1300, 1.0
  %v1305 = vrcp.pop %v1301
  %v1306 = vmul.f32 1.0, %v1305
  %v1307 = vrcp.pop %v1302
  %v1308 = vmul.f32 1.0, %v1307
  %v1309 = vrcp.pop %v1303
  %v1310 = vmul.f32 1.0, %v1309
  %v1311 = vrcp.pop %v1304
  %v1312 = vmul.f32 1.0, %v1311
  %v1313 = vmul.f32 %v1285, %v1306
  %v1314 = vmul.f32 %v1286, %v1308
  %v1315 = vmul.f32 %v1287, %v1310
  %v1316 = vmul.f32 %v1288, %v1312
  %v1317 = vadd.f32 %v57, %v1313
  %v1318 = vadd.f32 %v58, %v1314
  %v1319 = vadd.f32 %v59, %v1315
  %v1320 = vadd.f32 %v60, %v1316
  %1321 = vst.msk [vmem:[%s17] sm:$0xff] %vm456, %v1317
  %1322 = vst.msk [vmem:[%s17 + $0x8] sm:$0xff] %vm456, %v1318
  %1323 = vst.msk [vmem:[%s17 + $0x10] sm:$0xff] %vm456, %v1319
  %1324 = vst.msk [vmem:[%s17 + $0x18] sm:$0xff] %vm456, %v1320
  // Predicated region
  $region66: #{algnn_forward.8} parent=0 // pred_check
    _
  $region67: #{algnn_forward.8} parent=0 // pred_check_branch
    %1326 = sbr.rel (0) target = $region69
  $region68: #{algnn_forward.8} parent=0 // pred_region
    _
  $region69: #{algnn_forward.8} parent=0 // pred_fallthru
    _
  // Predicated region
  $region70: #{algnn_forward.8} parent=0 // pred_check
    _
  $region71: #{algnn_forward.8} parent=0 // pred_check_branch
    %1328 = sbr.rel (0) target = $region73
  $region72: #{algnn_forward.8} parent=0 // pred_region
    _
  $region73: #{algnn_forward.8} parent=0 // pred_fallthru
    _
  // Predicated region
  $region74: #{algnn_forward.8} parent=0 // pred_check
    _
  $region75: #{algnn_forward.8} parent=0 // pred_check_branch
    %1330 = sbr.rel (0) target = $region77
  $region76: #{algnn_forward.8} parent=0 // pred_region
    _
  $region77: #{algnn_forward.8} parent=0 // pred_fallthru
    _
  // Predicated region
  $region78: #{algnn_forward.8} parent=0 // pred_check
    _
  $region79: #{algnn_forward.8} parent=0 // pred_check_branch
    %1332 = sbr.rel (0) target = $region81
  $region80: #{algnn_forward.8} parent=0 // pred_region
    _
  $region81: #{algnn_forward.8} parent=0 // pred_fallthru
    _

// kernel: algnn_forward.7
$region0: #{algnn_forward.7}
  #allocation0 [shape = 'u32[]', space=smem, size = 0x4, offset = 0x4, fixed_abs, tag = 'smem constant byte address 0x4 - core index']
  #allocation1 [shape = 'u32[144,128]{1,0:T(1,128)}', space=vmem, size = 0x12000, scoped, tag = 'internal scratch']
  %s0 = inlined_call_operand.vmem [shape: s32[64,1], index: 0, kind: input, shape index: {}]
  %s1 = inlined_call_operand.vmem [shape: s32[1,64], index: 1, kind: input, shape index: {}]
  %s2 = inlined_call_operand.vmem [shape: s32[64,1], index: 2, kind: input, shape index: {}]
  %s3 = inlined_call_operand.vmem [shape: s32[1,64], index: 3, kind: input, shape index: {}]
  %s4 = inlined_call_operand.vmem [shape: f32[32,64], index: 4, kind: input, shape index: {}]
  %s5 = inlined_call_operand.vmem [shape: f32[64,64], index: 5, kind: input, shape index: {}]
  %s6 = inlined_call_operand.vmem [shape: f32[64,64], index: 6, kind: input, shape index: {}]
  %s7 = inlined_call_operand.vmem [shape: f32[1,64], index: 7, kind: input, shape index: {}]
  %s8 = inlined_call_operand.vmem [shape: f32[64,64], index: 8, kind: input, shape index: {}]
  %s9 = inlined_call_operand.vmem [shape: f32[1,64], index: 9, kind: input, shape index: {}]
  %s10 = inlined_call_operand.vmem [shape: f32[192,64], index: 10, kind: input, shape index: {}]
  %s11 = inlined_call_operand.vmem [shape: f32[1,64], index: 11, kind: input, shape index: {}]
  %s12 = inlined_call_operand.vmem [shape: f32[1,64], index: 12, kind: input, shape index: {}]
  %s13 = inlined_call_operand.vmem [shape: f32[1,64], index: 13, kind: input, shape index: {}]
  %s14 = inlined_call_operand.vmem [shape: f32[1,64], index: 14, kind: input, shape index: {}]
  %s15 = inlined_call_operand.vmem [shape: f32[1,64], index: 15, kind: input, shape index: {}]
  %s16 = inlined_call_operand.vmem [shape: f32[32,64], index: 16, kind: output, shape index: {0}]
  %s17 = inlined_call_operand.vmem [shape: f32[64,64], index: 17, kind: output, shape index: {1}]
  %18 = xla_tuple %s16, %s17
  %s19 = sld [smem:[#allocation0]]
  $region82: #{algnn_forward.7} parent=0
    _
  %s21 = ssub.s32 1, %s19
  %s22 = scalar_select 0, %s21, %s19
  // Predicated region
  $region2: #{algnn_forward.7} parent=0 // pred_check
    _
  $region3: #{algnn_forward.7} parent=0 // pred_check_branch
    %24 = sbr.rel (0) target = $region5
  $region4: #{algnn_forward.7} parent=0 // pred_region
    _
  $region5: #{algnn_forward.7} parent=0 // pred_fallthru
    _
  // Predicated region
  $region6: #{algnn_forward.7} parent=0 // pred_check
    _
  $region7: #{algnn_forward.7} parent=0 // pred_check_branch
    %26 = sbr.rel (0) target = $region9
  $region8: #{algnn_forward.7} parent=0 // pred_region
    _
  $region9: #{algnn_forward.7} parent=0 // pred_fallthru
    _
  // Predicated region
  $region10: #{algnn_forward.7} parent=0 // pred_check
    _
  $region11: #{algnn_forward.7} parent=0 // pred_check_branch
    %28 = sbr.rel (0) target = $region13
  $region12: #{algnn_forward.7} parent=0 // pred_region
    _
  $region13: #{algnn_forward.7} parent=0 // pred_fallthru
    _
  // Predicated region
  $region14: #{algnn_forward.7} parent=0 // pred_check
    _
  $region15: #{algnn_forward.7} parent=0 // pred_check_branch
    %30 = sbr.rel (0) target = $region17
  $region16: #{algnn_forward.7} parent=0 // pred_region
    _
  $region17: #{algnn_forward.7} parent=0 // pred_fallthru
    _
  // Predicated region
  $region18: #{algnn_forward.7} parent=0 // pred_check
    _
  $region19: #{algnn_forward.7} parent=0 // pred_check_branch
    %32 = sbr.rel (0) target = $region21
  $region20: #{algnn_forward.7} parent=0 // pred_region
    _
  $region21: #{algnn_forward.7} parent=0 // pred_fallthru
    _
  // Predicated region
  $region22: #{algnn_forward.7} parent=0 // pred_check
    _
  $region23: #{algnn_forward.7} parent=0 // pred_check_branch
    %34 = sbr.rel (0) target = $region25
  $region24: #{algnn_forward.7} parent=0 // pred_region
    _
  $region25: #{algnn_forward.7} parent=0 // pred_fallthru
    _
  // Predicated region
  $region26: #{algnn_forward.7} parent=0 // pred_check
    _
  $region27: #{algnn_forward.7} parent=0 // pred_check_branch
    %36 = sbr.rel (0) target = $region29
  $region28: #{algnn_forward.7} parent=0 // pred_region
    _
  $region29: #{algnn_forward.7} parent=0 // pred_fallthru
    _
  // Predicated region
  $region30: #{algnn_forward.7} parent=0 // pred_check
    _
  $region31: #{algnn_forward.7} parent=0 // pred_check_branch
    %38 = sbr.rel (0) target = $region33
  $region32: #{algnn_forward.7} parent=0 // pred_region
    _
  $region33: #{algnn_forward.7} parent=0 // pred_fallthru
    _
  // Predicated region
  $region34: #{algnn_forward.7} parent=0 // pred_check
    _
  $region35: #{algnn_forward.7} parent=0 // pred_check_branch
    %40 = sbr.rel (0) target = $region37
  $region36: #{algnn_forward.7} parent=0 // pred_region
    _
  $region37: #{algnn_forward.7} parent=0 // pred_fallthru
    _
  // Predicated region
  $region38: #{algnn_forward.7} parent=0 // pred_check
    _
  $region39: #{algnn_forward.7} parent=0 // pred_check_branch
    %42 = sbr.rel (0) target = $region41
  $region40: #{algnn_forward.7} parent=0 // pred_region
    _
  $region41: #{algnn_forward.7} parent=0 // pred_fallthru
    _
  // Predicated region
  $region42: #{algnn_forward.7} parent=0 // pred_check
    _
  $region43: #{algnn_forward.7} parent=0 // pred_check_branch
    %44 = sbr.rel (0) target = $region45
  $region44: #{algnn_forward.7} parent=0 // pred_region
    _
  $region45: #{algnn_forward.7} parent=0 // pred_fallthru
    _
  // Predicated region
  $region46: #{algnn_forward.7} parent=0 // pred_check
    _
  $region47: #{algnn_forward.7} parent=0 // pred_check_branch
    %46 = sbr.rel (0) target = $region49
  $region48: #{algnn_forward.7} parent=0 // pred_region
    _
  $region49: #{algnn_forward.7} parent=0 // pred_fallthru
    _
  // Predicated region
  $region50: #{algnn_forward.7} parent=0 // pred_check
    _
  $region51: #{algnn_forward.7} parent=0 // pred_check_branch
    %48 = sbr.rel (0) target = $region53
  $region52: #{algnn_forward.7} parent=0 // pred_region
    _
  $region53: #{algnn_forward.7} parent=0 // pred_fallthru
    _
  // Predicated region
  $region54: #{algnn_forward.7} parent=0 // pred_check
    _
  $region55: #{algnn_forward.7} parent=0 // pred_check_branch
    %50 = sbr.rel (0) target = $region57
  $region56: #{algnn_forward.7} parent=0 // pred_region
    _
  $region57: #{algnn_forward.7} parent=0 // pred_fallthru
    _
  // Predicated region
  $region58: #{algnn_forward.7} parent=0 // pred_check
    _
  $region59: #{algnn_forward.7} parent=0 // pred_check_branch
    %52 = sbr.rel (0) target = $region61
  $region60: #{algnn_forward.7} parent=0 // pred_region
    _
  $region61: #{algnn_forward.7} parent=0 // pred_fallthru
    _
  // Predicated region
  $region62: #{algnn_forward.7} parent=0 // pred_check
    _
  $region63: #{algnn_forward.7} parent=0 // pred_check_branch
    %54 = sbr.rel (0) target = $region65
  $region64: #{algnn_forward.7} parent=0 // pred_region
    _
  $region65: #{algnn_forward.7} parent=0 // pred_fallthru
    _
  %v55 = vld [vmem:[%s4] sm:$0xff]
  %v56 = vld [vmem:[%s4 + $0x8] sm:$0xff]
  %v57 = vld [vmem:[%s4 + $0x10] sm:$0xff]
  %v58 = vld [vmem:[%s4 + $0x18] sm:$0xff]
  %v59 = vld [vmem:[%s5] sm:$0xff]
  %v60 = vld [vmem:[%s5 + $0x8] sm:$0xff]
  %v61 = vld [vmem:[%s5 + $0x10] sm:$0xff]
  %v62 = vld [vmem:[%s5 + $0x18] sm:$0xff]
  %v63 = vld [vmem:[%s5 + $0x20] sm:$0xff]
  %v64 = vld [vmem:[%s5 + $0x28] sm:$0xff]
  %v65 = vld [vmem:[%s5 + $0x30] sm:$0xff]
  %v66 = vld [vmem:[%s5 + $0x38] sm:$0xff]
  %v67 = vlaneseq
  %v68 = vand.u32 %v67, 127
  %v69 = vlaneseq
  %v70 = vshrl.u32 %v69, 7
  %v71 = vadd.s32 %v70, 8
  %v72 = vadd.s32 %v70, 16
  %v73 = vadd.s32 %v70, 24
  %v74 = vld [vmem:[%s0] sm:$0xff]
  %v75 = vld [vmem:[%s0 + $0x8] sm:$0xff]
  %v76 = vld [vmem:[%s0 + $0x10] sm:$0xff]
  %v77 = vld [vmem:[%s0 + $0x18] sm:$0xff]
  %v78 = vld [vmem:[%s0 + $0x20] sm:$0xff]
  %v79 = vld [vmem:[%s0 + $0x28] sm:$0xff]
  %v80 = vld [vmem:[%s0 + $0x30] sm:$0xff]
  %v81 = vld [vmem:[%s0 + $0x38] sm:$0xff]
  %82 = vset.pattern.permute.xlu0 0
  %83 = vperm.xlu0 %82, %v74
  %v84 = vpop.permute.xlu0 %83
  %85 = vset.pattern.permute.xlu0 0
  %86 = vperm.xlu0 %85, %v75
  %v87 = vpop.permute.xlu0 %86
  %88 = vset.pattern.permute.xlu0 0
  %89 = vperm.xlu0 %88, %v76
  %v90 = vpop.permute.xlu0 %89
  %91 = vset.pattern.permute.xlu0 0
  %92 = vperm.xlu0 %91, %v77
  %v93 = vpop.permute.xlu0 %92
  %94 = vset.pattern.permute.xlu0 0
  %95 = vperm.xlu0 %94, %v78
  %v96 = vpop.permute.xlu0 %95
  %97 = vset.pattern.permute.xlu0 0
  %98 = vperm.xlu0 %97, %v79
  %v99 = vpop.permute.xlu0 %98
  %100 = vset.pattern.permute.xlu0 0
  %101 = vperm.xlu0 %100, %v80
  %v102 = vpop.permute.xlu0 %101
  %103 = vset.pattern.permute.xlu0 0
  %104 = vperm.xlu0 %103, %v81
  %v105 = vpop.permute.xlu0 %104
  %vm106 = vcmp.eq.s32.totalorder %v68, %v84
  %vm107 = vcmp.eq.s32.totalorder %v68, %v87
  %vm108 = vcmp.eq.s32.totalorder %v68, %v90
  %vm109 = vcmp.eq.s32.totalorder %v68, %v93
  %vm110 = vcmp.eq.s32.totalorder %v68, %v96
  %vm111 = vcmp.eq.s32.totalorder %v68, %v99
  %vm112 = vcmp.eq.s32.totalorder %v68, %v102
  %vm113 = vcmp.eq.s32.totalorder %v68, %v105
  %v114 = vsel %vm106, 1, 0
  %v115 = vsel %vm107, 1, 0
  %v116 = vsel %vm108, 1, 0
  %v117 = vsel %vm109, 1, 0
  %v118 = vsel %vm110, 1, 0
  %v119 = vsel %vm111, 1, 0
  %v120 = vsel %vm112, 1, 0
  %v121 = vsel %vm113, 1, 0
  %v122 = vcvt.s32.f32 %v114
  %v123 = vcvt.s32.f32 %v115
  %v124 = vcvt.s32.f32 %v116
  %v125 = vcvt.s32.f32 %v117
  %v126 = vcvt.s32.f32 %v118
  %v127 = vcvt.s32.f32 %v119
  %v128 = vcvt.s32.f32 %v120
  %v129 = vcvt.s32.f32 %v121
  %v130 = vld [vmem:[%s2] sm:$0xff]
  %v131 = vld [vmem:[%s2 + $0x8] sm:$0xff]
  %v132 = vld [vmem:[%s2 + $0x10] sm:$0xff]
  %v133 = vld [vmem:[%s2 + $0x18] sm:$0xff]
  %v134 = vld [vmem:[%s2 + $0x20] sm:$0xff]
  %v135 = vld [vmem:[%s2 + $0x28] sm:$0xff]
  %v136 = vld [vmem:[%s2 + $0x30] sm:$0xff]
  %v137 = vld [vmem:[%s2 + $0x38] sm:$0xff]
  %138 = vset.pattern.permute.xlu0 0
  %139 = vperm.xlu0 %138, %v130
  %v140 = vpop.permute.xlu0 %139
  %141 = vset.pattern.permute.xlu0 0
  %142 = vperm.xlu0 %141, %v131
  %v143 = vpop.permute.xlu0 %142
  %144 = vset.pattern.permute.xlu0 0
  %145 = vperm.xlu0 %144, %v132
  %v146 = vpop.permute.xlu0 %145
  %147 = vset.pattern.permute.xlu0 0
  %148 = vperm.xlu0 %147, %v133
  %v149 = vpop.permute.xlu0 %148
  %150 = vset.pattern.permute.xlu0 0
  %151 = vperm.xlu0 %150, %v134
  %v152 = vpop.permute.xlu0 %151
  %153 = vset.pattern.permute.xlu0 0
  %154 = vperm.xlu0 %153, %v135
  %v155 = vpop.permute.xlu0 %154
  %156 = vset.pattern.permute.xlu0 0
  %157 = vperm.xlu0 %156, %v136
  %v158 = vpop.permute.xlu0 %157
  %159 = vset.pattern.permute.xlu0 0
  %160 = vperm.xlu0 %159, %v137
  %v161 = vpop.permute.xlu0 %160
  %vm162 = vcmp.eq.s32.totalorder %v68, %v140
  %vm163 = vcmp.eq.s32.totalorder %v68, %v143
  %vm164 = vcmp.eq.s32.totalorder %v68, %v146
  %vm165 = vcmp.eq.s32.totalorder %v68, %v149
  %vm166 = vcmp.eq.s32.totalorder %v68, %v152
  %vm167 = vcmp.eq.s32.totalorder %v68, %v155
  %vm168 = vcmp.eq.s32.totalorder %v68, %v158
  %vm169 = vcmp.eq.s32.totalorder %v68, %v161
  %v170 = vsel %vm162, 1, 0
  %v171 = vsel %vm163, 1, 0
  %v172 = vsel %vm164, 1, 0
  %v173 = vsel %vm165, 1, 0
  %v174 = vsel %vm166, 1, 0
  %v175 = vsel %vm167, 1, 0
  %v176 = vsel %vm168, 1, 0
  %v177 = vsel %vm169, 1, 0
  %v178 = vcvt.s32.f32 %v170
  %v179 = vcvt.s32.f32 %v171
  %v180 = vcvt.s32.f32 %v172
  %v181 = vcvt.s32.f32 %v173
  %v182 = vcvt.s32.f32 %v174
  %v183 = vcvt.s32.f32 %v175
  %v184 = vcvt.s32.f32 %v176
  %v185 = vcvt.s32.f32 %v177
  %v186 = vld [vmem:[%s1] sm:$0x1]
  %v187 = vlaneseq
  %v188 = vshrl.u32 %v187, 7
  %v189 = vsub.s32 0, %v188
  %v190 = vrot.slane %v186, %v189
  %vm191 = vcmp.eq.s32.totalorder %v70, %v190
  %vm192 = vcmp.eq.s32.totalorder %v71, %v190
  %vm193 = vcmp.eq.s32.totalorder %v72, %v190
  %vm194 = vcmp.eq.s32.totalorder %v73, %v190
  %v195 = vsel %vm191, 1, 0
  %v196 = vsel %vm192, 1, 0
  %v197 = vsel %vm193, 1, 0
  %v198 = vsel %vm194, 1, 0
  %v199 = vcvt.s32.f32 %v195
  %v200 = vcvt.s32.f32 %v196
  %v201 = vcvt.s32.f32 %v197
  %v202 = vcvt.s32.f32 %v198
  %v203 = vld [vmem:[%s3] sm:$0x1]
  %v204 = vlaneseq
  %v205 = vshrl.u32 %v204, 7
  %v206 = vsub.s32 0, %v205
  %v207 = vrot.slane %v203, %v206
  %vm208 = vcmp.eq.s32.totalorder %v70, %v207
  %vm209 = vcmp.eq.s32.totalorder %v71, %v207
  %vm210 = vcmp.eq.s32.totalorder %v72, %v207
  %vm211 = vcmp.eq.s32.totalorder %v73, %v207
  %v212 = vsel %vm208, 1, 0
  %v213 = vsel %vm209, 1, 0
  %v214 = vsel %vm210, 1, 0
  %v215 = vsel %vm211, 1, 0
  %v216 = vcvt.s32.f32 %v212
  %v217 = vcvt.s32.f32 %v213
  %v218 = vcvt.s32.f32 %v214
  %v219 = vcvt.s32.f32 %v215
  %v220 = vsub.f32 0.0, %v59
  %v221 = vsub.f32 0.0, %v60
  %v222 = vsub.f32 0.0, %v61
  %v223 = vsub.f32 0.0, %v62
  %v224 = vsub.f32 0.0, %v63
  %v225 = vsub.f32 0.0, %v64
  %v226 = vsub.f32 0.0, %v65
  %v227 = vsub.f32 0.0, %v66
  %v228 = vmul.f32 %v220, 1.442695
  %v229 = vpow.pop %v228
  %v230 = vmul.f32 %v221, 1.442695
  %v231 = vpow.pop %v230
  %v232 = vmul.f32 %v222, 1.442695
  %v233 = vpow.pop %v232
  %v234 = vmul.f32 %v223, 1.442695
  %v235 = vpow.pop %v234
  %v236 = vmul.f32 %v224, 1.442695
  %v237 = vpow.pop %v236
  %v238 = vmul.f32 %v225, 1.442695
  %v239 = vpow.pop %v238
  %v240 = vmul.f32 %v226, 1.442695
  %v241 = vpow.pop %v240
  %v242 = vmul.f32 %v227, 1.442695
  %v243 = vpow.pop %v242
  %v244 = vadd.f32 %v229, 1.0
  %v245 = vadd.f32 %v231, 1.0
  %v246 = vadd.f32 %v233, 1.0
  %v247 = vadd.f32 %v235, 1.0
  %v248 = vadd.f32 %v237, 1.0
  %v249 = vadd.f32 %v239, 1.0
  %v250 = vadd.f32 %v241, 1.0
  %v251 = vadd.f32 %v243, 1.0
  %v252 = vrcp.pop %v244
  %v253 = vmul.f32 1.0, %v252
  %v254 = vrcp.pop %v245
  %v255 = vmul.f32 1.0, %v254
  %v256 = vrcp.pop %v246
  %v257 = vmul.f32 1.0, %v256
  %v258 = vrcp.pop %v247
  %v259 = vmul.f32 1.0, %v258
  %v260 = vrcp.pop %v248
  %v261 = vmul.f32 1.0, %v260
  %v262 = vrcp.pop %v249
  %v263 = vmul.f32 1.0, %v262
  %v264 = vrcp.pop %v250
  %v265 = vmul.f32 1.0, %v264
  %v266 = vrcp.pop %v251
  %v267 = vmul.f32 1.0, %v266
  %vm268 = vcmask 523264
  %v270 = vsel %vm268, %v199, 0
  %v273 = vsel %vm268, %v200, 0
  %v276 = vsel %vm268, %v201, 0
  %v279 = vsel %vm268, %v202, 0
  %281 = vmatprep.subr.mxu0 0.0
  %282 = vmatpush1.msra.mxu0 0.0
  %283 = vmatprep.subr.mxu0 0.0
  %284 = vmatpush1.msra.mxu0 0.0
  %285 = vmatprep.subr.mxu0 0.0
  %286 = vmatpush1.msra.mxu0 0.0
  %287 = vmatprep.subr.mxu0 0.0
  %288 = vmatpush1.msra.mxu0 0.0
  %289 = vmatprep.subr.mxu0 0.0
  %290 = vmatpush1.msra.mxu0 0.0
  %291 = vmatprep.subr.mxu0 0.0
  %292 = vmatpush1.msra.mxu0 0.0
  %293 = vmatprep.subr.mxu0 0.0
  %294 = vmatpush1.msra.mxu0 0.0
  %295 = vmatprep.subr.mxu0 0.0
  %296 = vmatpush1.msra.mxu0 0.0
  %297 = vmatprep.subr.mxu0 0.0
  %298 = vmatpush1.msra.mxu0 %v267
  %299 = vmatprep.subr.mxu0 0.0
  %300 = vmatpush1.msra.mxu0 %v265
  %301 = vmatprep.subr.mxu0 0.0
  %302 = vmatpush1.msra.mxu0 %v263
  %303 = vmatprep.subr.mxu0 0.0
  %304 = vmatpush1.msra.mxu0 %v261
  %305 = vmatprep.subr.mxu0 0.0
  %306 = vmatpush1.msra.mxu0 %v259
  %307 = vmatprep.subr.mxu0 0.0
  %308 = vmatpush1.msra.mxu0 %v257
  %309 = vmatprep.subr.mxu0 0.0
  %310 = vmatpush1.msra.mxu0 %v255
  %311 = vmatprep.subr.mxu0 0.0
  %312 = vmatpush1.msra.mxu0 %v253
  %313 = vmatprep.subr.mxu0 0.0
  %314 = vmatpush2.msra.mxu0 0.0
  %315 = vmatprep.subr.mxu0 0.0
  %316 = vmatpush2.msra.mxu0 0.0
  %317 = vmatprep.subr.mxu0 0.0
  %318 = vmatpush2.msra.mxu0 0.0
  %319 = vmatprep.subr.mxu0 0.0
  %320 = vmatpush2.msra.mxu0 0.0
  %321 = vmatprep.subr.mxu0 0.0
  %322 = vmatpush2.msra.mxu0 0.0
  %323 = vmatprep.subr.mxu0 0.0
  %324 = vmatpush2.msra.mxu0 0.0
  %325 = vmatprep.subr.mxu0 0.0
  %326 = vmatpush2.msra.mxu0 0.0
  %327 = vmatprep.subr.mxu0 0.0
  %328 = vmatpush2.msra.mxu0 0.0
  %329 = vmatprep.subr.mxu0 0.0
  %330 = vmatpush2.msra.mxu0 0.0
  %331 = vmatprep.subr.mxu0 0.0
  %332 = vmatpush2.msra.mxu0 0.0
  %333 = vmatprep.subr.mxu0 0.0
  %334 = vmatpush2.msra.mxu0 0.0
  %335 = vmatprep.subr.mxu0 0.0
  %336 = vmatpush2.msra.mxu0 0.0
  %337 = vmatprep.subr.mxu0 0.0
  %338 = vmatpush2.msra.mxu0 0.0
  %339 = vmatprep.subr.mxu0 0.0
  %340 = vmatpush2.msra.mxu0 0.0
  %341 = vmatprep.subr.mxu0 0.0
  %342 = vmatpush2.msra.mxu0 0.0
  %343 = vmatprep.subr.mxu0 0.0
  %344 = vmatpush2.msra.mxu0 0.0
  %345 = vmatprep.mubr.f32.mxu0 0.0
  %346 = vmatmul.mubr.f32.gmra.mxu0 %v270
  %v347 = vpop.f32.mrf.mxu0
  %v348 = vadd.f32 0.0, %v347
  %v349 = vpop.f32.mrf.mxu0
  %350 = vmatprep.mubr.f32.mxu0 0.0
  %351 = vmatmul.mubr.f32.gmra.mxu0 %v273
  %v352 = vpop.f32.mrf.mxu0
  %v353 = vadd.f32 0.0, %v352
  %v354 = vpop.f32.mrf.mxu0
  %355 = vmatprep.mubr.f32.mxu0 0.0
  %356 = vmatmul.mubr.f32.gmra.mxu0 %v276
  %v357 = vpop.f32.mrf.mxu0
  %v358 = vadd.f32 0.0, %v357
  %v359 = vpop.f32.mrf.mxu0
  %360 = vmatprep.mubr.f32.mxu0 0.0
  %361 = vmatmul.mubr.f32.gmra.mxu0 %v279
  %v362 = vpop.f32.mrf.mxu0
  %v363 = vadd.f32 0.0, %v362
  %v364 = vpop.f32.mrf.mxu0
  %365 = vdwg.mxu0
  %vm366 = vcmask 261120
  %v368 = vsel %vm366, %v122, 0
  %v371 = vsel %vm366, %v123, 0
  %v374 = vsel %vm366, %v124, 0
  %v377 = vsel %vm366, %v125, 0
  %v380 = vsel %vm366, %v126, 0
  %v383 = vsel %vm366, %v127, 0
  %v386 = vsel %vm366, %v128, 0
  %v389 = vsel %vm366, %v129, 0
  %391 = vmatprep.subr.mxu0 0.0
  %392 = vmatpush1.msra.mxu0 0.0
  %393 = vmatprep.subr.mxu0 0.0
  %394 = vmatpush1.msra.mxu0 0.0
  %395 = vmatprep.subr.mxu0 0.0
  %396 = vmatpush1.msra.mxu0 0.0
  %397 = vmatprep.subr.mxu0 0.0
  %398 = vmatpush1.msra.mxu0 0.0
  %399 = vmatprep.subr.mxu0 0.0
  %400 = vmatpush1.msra.mxu0 0.0
  %401 = vmatprep.subr.mxu0 0.0
  %402 = vmatpush1.msra.mxu0 0.0
  %403 = vmatprep.subr.mxu0 0.0
  %404 = vmatpush1.msra.mxu0 0.0
  %405 = vmatprep.subr.mxu0 0.0
  %406 = vmatpush1.msra.mxu0 0.0
  %407 = vmatprep.subr.mxu0 0.0
  %408 = vmatpush1.msra.mxu0 0.0
  %409 = vmatprep.subr.mxu0 0.0
  %410 = vmatpush1.msra.mxu0 0.0
  %411 = vmatprep.subr.mxu0 0.0
  %412 = vmatpush1.msra.mxu0 0.0
  %413 = vmatprep.subr.mxu0 0.0
  %414 = vmatpush1.msra.mxu0 0.0
  %415 = vmatprep.subr.mxu0 0.0
  %416 = vmatpush1.msra.mxu0 %v363
  %417 = vmatprep.subr.mxu0 0.0
  %418 = vmatpush1.msra.mxu0 %v358
  %419 = vmatprep.subr.mxu0 0.0
  %420 = vmatpush1.msra.mxu0 %v353
  %421 = vmatprep.subr.mxu0 0.0
  %422 = vmatpush1.msra.mxu0 %v348
  %423 = vmatprep.subr.mxu0 0.0
  %424 = vmatpush2.msra.mxu0 0.0
  %425 = vmatprep.subr.mxu0 0.0
  %426 = vmatpush2.msra.mxu0 0.0
  %427 = vmatprep.subr.mxu0 0.0
  %428 = vmatpush2.msra.mxu0 0.0
  %429 = vmatprep.subr.mxu0 0.0
  %430 = vmatpush2.msra.mxu0 0.0
  %431 = vmatprep.subr.mxu0 0.0
  %432 = vmatpush2.msra.mxu0 0.0
  %433 = vmatprep.subr.mxu0 0.0
  %434 = vmatpush2.msra.mxu0 0.0
  %435 = vmatprep.subr.mxu0 0.0
  %436 = vmatpush2.msra.mxu0 0.0
  %437 = vmatprep.subr.mxu0 0.0
  %438 = vmatpush2.msra.mxu0 0.0
  %439 = vmatprep.subr.mxu0 0.0
  %440 = vmatpush2.msra.mxu0 0.0
  %441 = vmatprep.subr.mxu0 0.0
  %442 = vmatpush2.msra.mxu0 0.0
  %443 = vmatprep.subr.mxu0 0.0
  %444 = vmatpush2.msra.mxu0 0.0
  %445 = vmatprep.subr.mxu0 0.0
  %446 = vmatpush2.msra.mxu0 0.0
  %447 = vmatprep.subr.mxu0 0.0
  %448 = vmatpush2.msra.mxu0 0.0
  %449 = vmatprep.subr.mxu0 0.0
  %450 = vmatpush2.msra.mxu0 0.0
  %451 = vmatprep.subr.mxu0 0.0
  %452 = vmatpush2.msra.mxu0 0.0
  %453 = vmatprep.subr.mxu0 0.0
  %454 = vmatpush2.msra.mxu0 0.0
  %455 = vmatprep.mubr.f32.mxu0 0.0
  %456 = vmatmul.mubr.f32.gmra.mxu0 %v368
  %v457 = vpop.f32.mrf.mxu0
  %v458 = vadd.f32 1e-05, %v457
  %v459 = vpop.f32.mrf.mxu0
  %460 = vmatprep.mubr.f32.mxu0 0.0
  %461 = vmatmul.mubr.f32.gmra.mxu0 %v371
  %v462 = vpop.f32.mrf.mxu0
  %v463 = vadd.f32 1e-05, %v462
  %v464 = vpop.f32.mrf.mxu0
  %465 = vmatprep.mubr.f32.mxu0 0.0
  %466 = vmatmul.mubr.f32.gmra.mxu0 %v374
  %v467 = vpop.f32.mrf.mxu0
  %v468 = vadd.f32 1e-05, %v467
  %v469 = vpop.f32.mrf.mxu0
  %470 = vmatprep.mubr.f32.mxu0 0.0
  %471 = vmatmul.mubr.f32.gmra.mxu0 %v377
  %v472 = vpop.f32.mrf.mxu0
  %v473 = vadd.f32 1e-05, %v472
  %v474 = vpop.f32.mrf.mxu0
  %475 = vmatprep.mubr.f32.mxu0 0.0
  %476 = vmatmul.mubr.f32.gmra.mxu0 %v380
  %v477 = vpop.f32.mrf.mxu0
  %v478 = vadd.f32 1e-05, %v477
  %v479 = vpop.f32.mrf.mxu0
  %480 = vmatprep.mubr.f32.mxu0 0.0
  %481 = vmatmul.mubr.f32.gmra.mxu0 %v383
  %v482 = vpop.f32.mrf.mxu0
  %v483 = vadd.f32 1e-05, %v482
  %v484 = vpop.f32.mrf.mxu0
  %485 = vmatprep.mubr.f32.mxu0 0.0
  %486 = vmatmul.mubr.f32.gmra.mxu0 %v386
  %v487 = vpop.f32.mrf.mxu0
  %v488 = vadd.f32 1e-05, %v487
  %v489 = vpop.f32.mrf.mxu0
  %490 = vmatprep.mubr.f32.mxu0 0.0
  %491 = vmatmul.mubr.f32.gmra.mxu0 %v389
  %v492 = vpop.f32.mrf.mxu0
  %v493 = vadd.f32 1e-05, %v492
  %v494 = vpop.f32.mrf.mxu0
  %495 = vdwg.mxu0
  %v496 = vrcp.pop %v458
  %v497 = vrcp.pop %v463
  %v498 = vrcp.pop %v468
  %v499 = vrcp.pop %v473
  %v500 = vrcp.pop %v478
  %v501 = vrcp.pop %v483
  %v502 = vrcp.pop %v488
  %v503 = vrcp.pop %v493
  %v504 = vmul.f32 %v253, %v496
  %v505 = vmul.f32 %v255, %v497
  %v506 = vmul.f32 %v257, %v498
  %v507 = vmul.f32 %v259, %v499
  %v508 = vmul.f32 %v261, %v500
  %v509 = vmul.f32 %v263, %v501
  %v510 = vmul.f32 %v265, %v502
  %v511 = vmul.f32 %v267, %v503
  %512 = vmatprep.subr.mxu0 0.0
  %513 = vmatpush1.msra.mxu0 0.0
  %514 = vmatprep.subr.mxu0 0.0
  %515 = vmatpush1.msra.mxu0 0.0
  %516 = vmatprep.subr.mxu0 0.0
  %517 = vmatpush1.msra.mxu0 0.0
  %518 = vmatprep.subr.mxu0 0.0
  %519 = vmatpush1.msra.mxu0 0.0
  %520 = vmatprep.subr.mxu0 0.0
  %521 = vmatpush1.msra.mxu0 0.0
  %522 = vmatprep.subr.mxu0 0.0
  %523 = vmatpush1.msra.mxu0 0.0
  %524 = vmatprep.subr.mxu0 0.0
  %525 = vmatpush1.msra.mxu0 0.0
  %526 = vmatprep.subr.mxu0 0.0
  %527 = vmatpush1.msra.mxu0 0.0
  %528 = vmatprep.subr.mxu0 0.0
  %529 = vmatpush1.msra.mxu0 0.0
  %530 = vmatprep.subr.mxu0 0.0
  %531 = vmatpush1.msra.mxu0 0.0
  %532 = vmatprep.subr.mxu0 0.0
  %533 = vmatpush1.msra.mxu0 0.0
  %534 = vmatprep.subr.mxu0 0.0
  %535 = vmatpush1.msra.mxu0 0.0
  %536 = vmatprep.subr.mxu0 0.0
  %537 = vmatpush1.msra.mxu0 %v58
  %538 = vmatprep.subr.mxu0 0.0
  %539 = vmatpush1.msra.mxu0 %v57
  %540 = vmatprep.subr.mxu0 0.0
  %541 = vmatpush1.msra.mxu0 %v56
  %542 = vmatprep.subr.mxu0 0.0
  %543 = vmatpush1.msra.mxu0 %v55
  %544 = vmatprep.subr.mxu0 0.0
  %545 = vmatpush2.msra.mxu0 0.0
  %546 = vmatprep.subr.mxu0 0.0
  %547 = vmatpush2.msra.mxu0 0.0
  %548 = vmatprep.subr.mxu0 0.0
  %549 = vmatpush2.msra.mxu0 0.0
  %550 = vmatprep.subr.mxu0 0.0
  %551 = vmatpush2.msra.mxu0 0.0
  %552 = vmatprep.subr.mxu0 0.0
  %553 = vmatpush2.msra.mxu0 0.0
  %554 = vmatprep.subr.mxu0 0.0
  %555 = vmatpush2.msra.mxu0 0.0
  %556 = vmatprep.subr.mxu0 0.0
  %557 = vmatpush2.msra.mxu0 0.0
  %558 = vmatprep.subr.mxu0 0.0
  %559 = vmatpush2.msra.mxu0 0.0
  %560 = vmatprep.subr.mxu0 0.0
  %561 = vmatpush2.msra.mxu0 0.0
  %562 = vmatprep.subr.mxu0 0.0
  %563 = vmatpush2.msra.mxu0 0.0
  %564 = vmatprep.subr.mxu0 0.0
  %565 = vmatpush2.msra.mxu0 0.0
  %566 = vmatprep.subr.mxu0 0.0
  %567 = vmatpush2.msra.mxu0 0.0
  %568 = vmatprep.subr.mxu0 0.0
  %569 = vmatpush2.msra.mxu0 0.0
  %570 = vmatprep.subr.mxu0 0.0
  %571 = vmatpush2.msra.mxu0 0.0
  %572 = vmatprep.subr.mxu0 0.0
  %573 = vmatpush2.msra.mxu0 0.0
  %574 = vmatprep.subr.mxu0 0.0
  %575 = vmatpush2.msra.mxu0 0.0
  %576 = vmatprep.mubr.f32.mxu0 0.0
  %577 = vmatmul.mubr.f32.gmra.mxu0 %v368
  %v578 = vpop.f32.mrf.mxu0
  %v579 = vadd.f32 0.0, %v578
  %v580 = vpop.f32.mrf.mxu0
  %581 = vmatprep.mubr.f32.mxu0 0.0
  %582 = vmatmul.mubr.f32.gmra.mxu0 %v371
  %v583 = vpop.f32.mrf.mxu0
  %v584 = vadd.f32 0.0, %v583
  %v585 = vpop.f32.mrf.mxu0
  %586 = vmatprep.mubr.f32.mxu0 0.0
  %587 = vmatmul.mubr.f32.gmra.mxu0 %v374
  %v588 = vpop.f32.mrf.mxu0
  %v589 = vadd.f32 0.0, %v588
  %v590 = vpop.f32.mrf.mxu0
  %591 = vmatprep.mubr.f32.mxu0 0.0
  %592 = vmatmul.mubr.f32.gmra.mxu0 %v377
  %v593 = vpop.f32.mrf.mxu0
  %v594 = vadd.f32 0.0, %v593
  %v595 = vpop.f32.mrf.mxu0
  %596 = vmatprep.mubr.f32.mxu0 0.0
  %597 = vmatmul.mubr.f32.gmra.mxu0 %v380
  %v598 = vpop.f32.mrf.mxu0
  %v599 = vadd.f32 0.0, %v598
  %v600 = vpop.f32.mrf.mxu0
  %601 = vmatprep.mubr.f32.mxu0 0.0
  %602 = vmatmul.mubr.f32.gmra.mxu0 %v383
  %v603 = vpop.f32.mrf.mxu0
  %v604 = vadd.f32 0.0, %v603
  %v605 = vpop.f32.mrf.mxu0
  %606 = vmatprep.mubr.f32.mxu0 0.0
  %607 = vmatmul.mubr.f32.gmra.mxu0 %v386
  %v608 = vpop.f32.mrf.mxu0
  %v609 = vadd.f32 0.0, %v608
  %v610 = vpop.f32.mrf.mxu0
  %611 = vmatprep.mubr.f32.mxu0 0.0
  %612 = vmatmul.mubr.f32.gmra.mxu0 %v389
  %v613 = vpop.f32.mrf.mxu0
  %v614 = vadd.f32 0.0, %v613
  %v615 = vpop.f32.mrf.mxu0
  %616 = vdwg.mxu0
  %v617 = vld [vmem:[%s8] sm:$0xff]
  %v618 = vld [vmem:[%s8 + $0x8] sm:$0xff]
  %v619 = vld [vmem:[%s8 + $0x10] sm:$0xff]
  %v620 = vld [vmem:[%s8 + $0x18] sm:$0xff]
  %v621 = vld [vmem:[%s8 + $0x20] sm:$0xff]
  %v622 = vld [vmem:[%s8 + $0x28] sm:$0xff]
  %v623 = vld [vmem:[%s8 + $0x30] sm:$0xff]
  %v624 = vld [vmem:[%s8 + $0x38] sm:$0xff]
  %v625 = vld [vmem:[%s9] sm:$0x1]
  %v627 = vlaneseq
  %v628 = vshrl.u32 %v627, 7
  %v629 = vsub.s32 0, %v628
  %v630 = vrot.slane %v625, %v629
  %v633 = vsel %vm268, %v579, 0
  %v636 = vsel %vm268, %v584, 0
  %v639 = vsel %vm268, %v589, 0
  %v642 = vsel %vm268, %v594, 0
  %v645 = vsel %vm268, %v599, 0
  %v648 = vsel %vm268, %v604, 0
  %v651 = vsel %vm268, %v609, 0
  %v654 = vsel %vm268, %v614, 0
  %656 = vmatprep.subr.mxu0 0.0
  %657 = vmatpush1.msra.mxu0 0.0
  %658 = vmatprep.subr.mxu0 0.0
  %659 = vmatpush1.msra.mxu0 0.0
  %660 = vmatprep.subr.mxu0 0.0
  %661 = vmatpush1.msra.mxu0 0.0
  %662 = vmatprep.subr.mxu0 0.0
  %663 = vmatpush1.msra.mxu0 0.0
  %664 = vmatprep.subr.mxu0 0.0
  %665 = vmatpush1.msra.mxu0 0.0
  %666 = vmatprep.subr.mxu0 0.0
  %667 = vmatpush1.msra.mxu0 0.0
  %668 = vmatprep.subr.mxu0 0.0
  %669 = vmatpush1.msra.mxu0 0.0
  %670 = vmatprep.subr.mxu0 0.0
  %671 = vmatpush1.msra.mxu0 0.0
  %672 = vmatprep.subr.mxu0 0.0
  %673 = vmatpush1.msra.mxu0 %v624
  %674 = vmatprep.subr.mxu0 0.0
  %675 = vmatpush1.msra.mxu0 %v623
  %676 = vmatprep.subr.mxu0 0.0
  %677 = vmatpush1.msra.mxu0 %v622
  %678 = vmatprep.subr.mxu0 0.0
  %679 = vmatpush1.msra.mxu0 %v621
  %680 = vmatprep.subr.mxu0 0.0
  %681 = vmatpush1.msra.mxu0 %v620
  %682 = vmatprep.subr.mxu0 0.0
  %683 = vmatpush1.msra.mxu0 %v619
  %684 = vmatprep.subr.mxu0 0.0
  %685 = vmatpush1.msra.mxu0 %v618
  %686 = vmatprep.subr.mxu0 0.0
  %687 = vmatpush1.msra.mxu0 %v617
  %688 = vmatprep.subr.mxu0 0.0
  %689 = vmatpush2.msra.mxu0 0.0
  %690 = vmatprep.subr.mxu0 0.0
  %691 = vmatpush2.msra.mxu0 0.0
  %692 = vmatprep.subr.mxu0 0.0
  %693 = vmatpush2.msra.mxu0 0.0
  %694 = vmatprep.subr.mxu0 0.0
  %695 = vmatpush2.msra.mxu0 0.0
  %696 = vmatprep.subr.mxu0 0.0
  %697 = vmatpush2.msra.mxu0 0.0
  %698 = vmatprep.subr.mxu0 0.0
  %699 = vmatpush2.msra.mxu0 0.0
  %700 = vmatprep.subr.mxu0 0.0
  %701 = vmatpush2.msra.mxu0 0.0
  %702 = vmatprep.subr.mxu0 0.0
  %703 = vmatpush2.msra.mxu0 0.0
  %704 = vmatprep.subr.mxu0 0.0
  %705 = vmatpush2.msra.mxu0 0.0
  %706 = vmatprep.subr.mxu0 0.0
  %707 = vmatpush2.msra.mxu0 0.0
  %708 = vmatprep.subr.mxu0 0.0
  %709 = vmatpush2.msra.mxu0 0.0
  %710 = vmatprep.subr.mxu0 0.0
  %711 = vmatpush2.msra.mxu0 0.0
  %712 = vmatprep.subr.mxu0 0.0
  %713 = vmatpush2.msra.mxu0 0.0
  %714 = vmatprep.subr.mxu0 0.0
  %715 = vmatpush2.msra.mxu0 0.0
  %716 = vmatprep.subr.mxu0 0.0
  %717 = vmatpush2.msra.mxu0 0.0
  %718 = vmatprep.subr.mxu0 0.0
  %719 = vmatpush2.msra.mxu0 0.0
  %720 = vmatprep.mubr.f32.mxu0 0.0
  %721 = vmatmul.mubr.f32.gmra.mxu0 %v633
  %v722 = vpop.f32.mrf.mxu0
  %v723 = vadd.f32 %v630, %v722
  %v724 = vpop.f32.mrf.mxu0
  %725 = vmatprep.mubr.f32.mxu0 0.0
  %726 = vmatmul.mubr.f32.gmra.mxu0 %v636
  %v727 = vpop.f32.mrf.mxu0
  %v728 = vadd.f32 %v630, %v727
  %v729 = vpop.f32.mrf.mxu0
  %730 = vmatprep.mubr.f32.mxu0 0.0
  %731 = vmatmul.mubr.f32.gmra.mxu0 %v639
  %v732 = vpop.f32.mrf.mxu0
  %v733 = vadd.f32 %v630, %v732
  %v734 = vpop.f32.mrf.mxu0
  %735 = vmatprep.mubr.f32.mxu0 0.0
  %736 = vmatmul.mubr.f32.gmra.mxu0 %v642
  %v737 = vpop.f32.mrf.mxu0
  %v738 = vadd.f32 %v630, %v737
  %v739 = vpop.f32.mrf.mxu0
  %740 = vmatprep.mubr.f32.mxu0 0.0
  %741 = vmatmul.mubr.f32.gmra.mxu0 %v645
  %v742 = vpop.f32.mrf.mxu0
  %v743 = vadd.f32 %v630, %v742
  %v744 = vpop.f32.mrf.mxu0
  %745 = vmatprep.mubr.f32.mxu0 0.0
  %746 = vmatmul.mubr.f32.gmra.mxu0 %v648
  %v747 = vpop.f32.mrf.mxu0
  %v748 = vadd.f32 %v630, %v747
  %v749 = vpop.f32.mrf.mxu0
  %750 = vmatprep.mubr.f32.mxu0 0.0
  %751 = vmatmul.mubr.f32.gmra.mxu0 %v651
  %v752 = vpop.f32.mrf.mxu0
  %v753 = vadd.f32 %v630, %v752
  %v754 = vpop.f32.mrf.mxu0
  %755 = vmatprep.mubr.f32.mxu0 0.0
  %756 = vmatmul.mubr.f32.gmra.mxu0 %v654
  %v757 = vpop.f32.mrf.mxu0
  %v758 = vadd.f32 %v630, %v757
  %v759 = vpop.f32.mrf.mxu0
  %760 = vdwg.mxu0
  %v761 = vmul.f32 %v504, %v723
  %v762 = vmul.f32 %v505, %v728
  %v763 = vmul.f32 %v506, %v733
  %v764 = vmul.f32 %v507, %v738
  %v765 = vmul.f32 %v508, %v743
  %v766 = vmul.f32 %v509, %v748
  %v767 = vmul.f32 %v510, %v753
  %v768 = vmul.f32 %v511, %v758
  %v770 = vsel %vm268, %v216, 0
  %v773 = vsel %vm268, %v217, 0
  %v776 = vsel %vm268, %v218, 0
  %v779 = vsel %vm268, %v219, 0
  %781 = vmatprep.subr.mxu0 0.0
  %782 = vmatpush1.msra.mxu0 0.0
  %783 = vmatprep.subr.mxu0 0.0
  %784 = vmatpush1.msra.mxu0 0.0
  %785 = vmatprep.subr.mxu0 0.0
  %786 = vmatpush1.msra.mxu0 0.0
  %787 = vmatprep.subr.mxu0 0.0
  %788 = vmatpush1.msra.mxu0 0.0
  %789 = vmatprep.subr.mxu0 0.0
  %790 = vmatpush1.msra.mxu0 0.0
  %791 = vmatprep.subr.mxu0 0.0
  %792 = vmatpush1.msra.mxu0 0.0
  %793 = vmatprep.subr.mxu0 0.0
  %794 = vmatpush1.msra.mxu0 0.0
  %795 = vmatprep.subr.mxu0 0.0
  %796 = vmatpush1.msra.mxu0 0.0
  %797 = vmatprep.subr.mxu0 0.0
  %798 = vmatpush1.msra.mxu0 %v768
  %799 = vmatprep.subr.mxu0 0.0
  %800 = vmatpush1.msra.mxu0 %v767
  %801 = vmatprep.subr.mxu0 0.0
  %802 = vmatpush1.msra.mxu0 %v766
  %803 = vmatprep.subr.mxu0 0.0
  %804 = vmatpush1.msra.mxu0 %v765
  %805 = vmatprep.subr.mxu0 0.0
  %806 = vmatpush1.msra.mxu0 %v764
  %807 = vmatprep.subr.mxu0 0.0
  %808 = vmatpush1.msra.mxu0 %v763
  %809 = vmatprep.subr.mxu0 0.0
  %810 = vmatpush1.msra.mxu0 %v762
  %811 = vmatprep.subr.mxu0 0.0
  %812 = vmatpush1.msra.mxu0 %v761
  %813 = vmatprep.subr.mxu0 0.0
  %814 = vmatpush2.msra.mxu0 0.0
  %815 = vmatprep.subr.mxu0 0.0
  %816 = vmatpush2.msra.mxu0 0.0
  %817 = vmatprep.subr.mxu0 0.0
  %818 = vmatpush2.msra.mxu0 0.0
  %819 = vmatprep.subr.mxu0 0.0
  %820 = vmatpush2.msra.mxu0 0.0
  %821 = vmatprep.subr.mxu0 0.0
  %822 = vmatpush2.msra.mxu0 0.0
  %823 = vmatprep.subr.mxu0 0.0
  %824 = vmatpush2.msra.mxu0 0.0
  %825 = vmatprep.subr.mxu0 0.0
  %826 = vmatpush2.msra.mxu0 0.0
  %827 = vmatprep.subr.mxu0 0.0
  %828 = vmatpush2.msra.mxu0 0.0
  %829 = vmatprep.subr.mxu0 0.0
  %830 = vmatpush2.msra.mxu0 0.0
  %831 = vmatprep.subr.mxu0 0.0
  %832 = vmatpush2.msra.mxu0 0.0
  %833 = vmatprep.subr.mxu0 0.0
  %834 = vmatpush2.msra.mxu0 0.0
  %835 = vmatprep.subr.mxu0 0.0
  %836 = vmatpush2.msra.mxu0 0.0
  %837 = vmatprep.subr.mxu0 0.0
  %838 = vmatpush2.msra.mxu0 0.0
  %839 = vmatprep.subr.mxu0 0.0
  %840 = vmatpush2.msra.mxu0 0.0
  %841 = vmatprep.subr.mxu0 0.0
  %842 = vmatpush2.msra.mxu0 0.0
  %843 = vmatprep.subr.mxu0 0.0
  %844 = vmatpush2.msra.mxu0 0.0
  %845 = vmatprep.mubr.f32.mxu0 0.0
  %846 = vmatmul.mubr.f32.gmra.mxu0 %v770
  %v847 = vpop.f32.mrf.mxu0
  %v848 = vadd.f32 0.0, %v847
  %v849 = vpop.f32.mrf.mxu0
  %850 = vmatprep.mubr.f32.mxu0 0.0
  %851 = vmatmul.mubr.f32.gmra.mxu0 %v773
  %v852 = vpop.f32.mrf.mxu0
  %v853 = vadd.f32 0.0, %v852
  %v854 = vpop.f32.mrf.mxu0
  %855 = vmatprep.mubr.f32.mxu0 0.0
  %856 = vmatmul.mubr.f32.gmra.mxu0 %v776
  %v857 = vpop.f32.mrf.mxu0
  %v858 = vadd.f32 0.0, %v857
  %v859 = vpop.f32.mrf.mxu0
  %860 = vmatprep.mubr.f32.mxu0 0.0
  %861 = vmatmul.mubr.f32.gmra.mxu0 %v779
  %v862 = vpop.f32.mrf.mxu0
  %v863 = vadd.f32 0.0, %v862
  %v864 = vpop.f32.mrf.mxu0
  %865 = vdwg.mxu0
  %v866 = vld [vmem:[%s6] sm:$0xff]
  %v867 = vld [vmem:[%s6 + $0x8] sm:$0xff]
  %v868 = vld [vmem:[%s6 + $0x10] sm:$0xff]
  %v869 = vld [vmem:[%s6 + $0x18] sm:$0xff]
  %v870 = vld [vmem:[%s6 + $0x20] sm:$0xff]
  %v871 = vld [vmem:[%s6 + $0x28] sm:$0xff]
  %v872 = vld [vmem:[%s6 + $0x30] sm:$0xff]
  %v873 = vld [vmem:[%s6 + $0x38] sm:$0xff]
  %v874 = vld [vmem:[%s7] sm:$0x1]
  %v876 = vlaneseq
  %v877 = vshrl.u32 %v876, 7
  %v878 = vsub.s32 0, %v877
  %v879 = vrot.slane %v874, %v878
  %v882 = vsel %vm268, %v55, 0
  %v885 = vsel %vm268, %v56, 0
  %v888 = vsel %vm268, %v57, 0
  %v891 = vsel %vm268, %v58, 0
  %893 = vmatprep.subr.mxu0 0.0
  %894 = vmatpush1.msra.mxu0 0.0
  %895 = vmatprep.subr.mxu0 0.0
  %896 = vmatpush1.msra.mxu0 0.0
  %897 = vmatprep.subr.mxu0 0.0
  %898 = vmatpush1.msra.mxu0 0.0
  %899 = vmatprep.subr.mxu0 0.0
  %900 = vmatpush1.msra.mxu0 0.0
  %901 = vmatprep.subr.mxu0 0.0
  %902 = vmatpush1.msra.mxu0 0.0
  %903 = vmatprep.subr.mxu0 0.0
  %904 = vmatpush1.msra.mxu0 0.0
  %905 = vmatprep.subr.mxu0 0.0
  %906 = vmatpush1.msra.mxu0 0.0
  %907 = vmatprep.subr.mxu0 0.0
  %908 = vmatpush1.msra.mxu0 0.0
  %909 = vmatprep.subr.mxu0 0.0
  %910 = vmatpush1.msra.mxu0 %v873
  %911 = vmatprep.subr.mxu0 0.0
  %912 = vmatpush1.msra.mxu0 %v872
  %913 = vmatprep.subr.mxu0 0.0
  %914 = vmatpush1.msra.mxu0 %v871
  %915 = vmatprep.subr.mxu0 0.0
  %916 = vmatpush1.msra.mxu0 %v870
  %917 = vmatprep.subr.mxu0 0.0
  %918 = vmatpush1.msra.mxu0 %v869
  %919 = vmatprep.subr.mxu0 0.0
  %920 = vmatpush1.msra.mxu0 %v868
  %921 = vmatprep.subr.mxu0 0.0
  %922 = vmatpush1.msra.mxu0 %v867
  %923 = vmatprep.subr.mxu0 0.0
  %924 = vmatpush1.msra.mxu0 %v866
  %925 = vmatprep.subr.mxu0 0.0
  %926 = vmatpush2.msra.mxu0 0.0
  %927 = vmatprep.subr.mxu0 0.0
  %928 = vmatpush2.msra.mxu0 0.0
  %929 = vmatprep.subr.mxu0 0.0
  %930 = vmatpush2.msra.mxu0 0.0
  %931 = vmatprep.subr.mxu0 0.0
  %932 = vmatpush2.msra.mxu0 0.0
  %933 = vmatprep.subr.mxu0 0.0
  %934 = vmatpush2.msra.mxu0 0.0
  %935 = vmatprep.subr.mxu0 0.0
  %936 = vmatpush2.msra.mxu0 0.0
  %937 = vmatprep.subr.mxu0 0.0
  %938 = vmatpush2.msra.mxu0 0.0
  %939 = vmatprep.subr.mxu0 0.0
  %940 = vmatpush2.msra.mxu0 0.0
  %941 = vmatprep.subr.mxu0 0.0
  %942 = vmatpush2.msra.mxu0 0.0
  %943 = vmatprep.subr.mxu0 0.0
  %944 = vmatpush2.msra.mxu0 0.0
  %945 = vmatprep.subr.mxu0 0.0
  %946 = vmatpush2.msra.mxu0 0.0
  %947 = vmatprep.subr.mxu0 0.0
  %948 = vmatpush2.msra.mxu0 0.0
  %949 = vmatprep.subr.mxu0 0.0
  %950 = vmatpush2.msra.mxu0 0.0
  %951 = vmatprep.subr.mxu0 0.0
  %952 = vmatpush2.msra.mxu0 0.0
  %953 = vmatprep.subr.mxu0 0.0
  %954 = vmatpush2.msra.mxu0 0.0
  %955 = vmatprep.subr.mxu0 0.0
  %956 = vmatpush2.msra.mxu0 0.0
  %957 = vmatprep.mubr.f32.mxu0 0.0
  %958 = vmatmul.mubr.f32.gmra.mxu0 %v882
  %v959 = vpop.f32.mrf.mxu0
  %v960 = vadd.f32 %v879, %v959
  %v961 = vpop.f32.mrf.mxu0
  %962 = vmatprep.mubr.f32.mxu0 0.0
  %963 = vmatmul.mubr.f32.gmra.mxu0 %v885
  %v964 = vpop.f32.mrf.mxu0
  %v965 = vadd.f32 %v879, %v964
  %v966 = vpop.f32.mrf.mxu0
  %967 = vmatprep.mubr.f32.mxu0 0.0
  %968 = vmatmul.mubr.f32.gmra.mxu0 %v888
  %v969 = vpop.f32.mrf.mxu0
  %v970 = vadd.f32 %v879, %v969
  %v971 = vpop.f32.mrf.mxu0
  %972 = vmatprep.mubr.f32.mxu0 0.0
  %973 = vmatmul.mubr.f32.gmra.mxu0 %v891
  %v974 = vpop.f32.mrf.mxu0
  %v975 = vadd.f32 %v879, %v974
  %v976 = vpop.f32.mrf.mxu0
  %977 = vdwg.mxu0
  %v978 = vadd.f32 %v960, %v848
  %v979 = vadd.f32 %v965, %v853
  %v980 = vadd.f32 %v970, %v858
  %v981 = vadd.f32 %v975, %v863
  %v982 = vld [vmem:[%s12] sm:$0x1]
  %v983 = vld [vmem:[%s13] sm:$0x1]
  %v984 = vsel %vm268, %v978, 0.0
  %985 = vadd.xlane.f32.xlu0 %v984
  %v986 = vpop.xlane.xlu0 %985
  %v987 = vsel %vm268, %v979, 0.0
  %988 = vadd.xlane.f32.xlu0 %v987
  %v989 = vpop.xlane.xlu0 %988
  %v990 = vsel %vm268, %v980, 0.0
  %991 = vadd.xlane.f32.xlu0 %v990
  %v992 = vpop.xlane.xlu0 %991
  %v993 = vsel %vm268, %v981, 0.0
  %994 = vadd.xlane.f32.xlu0 %v993
  %v995 = vpop.xlane.xlu0 %994
  %v996 = vrcp.pop 64.0
  %v997 = vmul.f32 %v986, %v996
  %v998 = vmul.f32 %v989, %v996
  %v999 = vmul.f32 %v992, %v996
  %v1000 = vmul.f32 %v995, %v996
  %v1001 = vsub.f32 %v978, %v997
  %v1002 = vsub.f32 %v979, %v998
  %v1003 = vsub.f32 %v980, %v999
  %v1004 = vsub.f32 %v981, %v1000
  %v1005 = vmul.f32 %v1001, %v1001
  %v1006 = vmul.f32 %v1002, %v1002
  %v1007 = vmul.f32 %v1003, %v1003
  %v1008 = vmul.f32 %v1004, %v1004
  %v1009 = vsel %vm268, %v1005, 0.0
  %1010 = vadd.xlane.f32.xlu0 %v1009
  %v1011 = vpop.xlane.xlu0 %1010
  %v1012 = vsel %vm268, %v1006, 0.0
  %1013 = vadd.xlane.f32.xlu0 %v1012
  %v1014 = vpop.xlane.xlu0 %1013
  %v1015 = vsel %vm268, %v1007, 0.0
  %1016 = vadd.xlane.f32.xlu0 %v1015
  %v1017 = vpop.xlane.xlu0 %1016
  %v1018 = vsel %vm268, %v1008, 0.0
  %1019 = vadd.xlane.f32.xlu0 %v1018
  %v1020 = vpop.xlane.xlu0 %1019
  %v1021 = vmul.f32 %v1011, %v996
  %v1022 = vmul.f32 %v1014, %v996
  %v1023 = vmul.f32 %v1017, %v996
  %v1024 = vmul.f32 %v1020, %v996
  %v1025 = vadd.f32 %v1021, 1e-05
  %v1026 = vadd.f32 %v1022, 1e-05
  %v1027 = vadd.f32 %v1023, 1e-05
  %v1028 = vadd.f32 %v1024, 1e-05
  %v1029 = vrsqrt.pop %v1025
  %v1030 = vrsqrt.pop %v1026
  %v1031 = vrsqrt.pop %v1027
  %v1032 = vrsqrt.pop %v1028
  %v1033 = vmul.f32 %v1001, %v1029
  %v1034 = vmul.f32 %v1002, %v1030
  %v1035 = vmul.f32 %v1003, %v1031
  %v1036 = vmul.f32 %v1004, %v1032
  %v1038 = vlaneseq
  %v1039 = vshrl.u32 %v1038, 7
  %v1040 = vsub.s32 0, %v1039
  %v1041 = vrot.slane %v982, %v1040
  %v1043 = vmul.f32 %v1033, %v1041
  %v1044 = vmul.f32 %v1034, %v1041
  %v1045 = vmul.f32 %v1035, %v1041
  %v1046 = vmul.f32 %v1036, %v1041
  %v1048 = vlaneseq
  %v1049 = vshrl.u32 %v1048, 7
  %v1050 = vsub.s32 0, %v1049
  %v1051 = vrot.slane %v983, %v1050
  %v1053 = vadd.f32 %v1043, %v1051
  %v1054 = vadd.f32 %v1044, %v1051
  %v1055 = vadd.f32 %v1045, %v1051
  %v1056 = vadd.f32 %v1046, %v1051
  %v1057 = vsub.f32 0.0, %v1053
  %v1058 = vsub.f32 0.0, %v1054
  %v1059 = vsub.f32 0.0, %v1055
  %v1060 = vsub.f32 0.0, %v1056
  %v1061 = vmul.f32 %v1057, 1.442695
  %v1062 = vpow.pop %v1061
  %v1063 = vmul.f32 %v1058, 1.442695
  %v1064 = vpow.pop %v1063
  %v1065 = vmul.f32 %v1059, 1.442695
  %v1066 = vpow.pop %v1065
  %v1067 = vmul.f32 %v1060, 1.442695
  %v1068 = vpow.pop %v1067
  %v1069 = vadd.f32 %v1062, 1.0
  %v1070 = vadd.f32 %v1064, 1.0
  %v1071 = vadd.f32 %v1066, 1.0
  %v1072 = vadd.f32 %v1068, 1.0
  %v1073 = vrcp.pop %v1069
  %v1074 = vmul.f32 1.0, %v1073
  %v1075 = vrcp.pop %v1070
  %v1076 = vmul.f32 1.0, %v1075
  %v1077 = vrcp.pop %v1071
  %v1078 = vmul.f32 1.0, %v1077
  %v1079 = vrcp.pop %v1072
  %v1080 = vmul.f32 1.0, %v1079
  %v1081 = vmul.f32 %v1053, %v1074
  %v1082 = vmul.f32 %v1054, %v1076
  %v1083 = vmul.f32 %v1055, %v1078
  %v1084 = vmul.f32 %v1056, %v1080
  %v1085 = vadd.f32 %v55, %v1081
  %v1086 = vadd.f32 %v56, %v1082
  %v1087 = vadd.f32 %v57, %v1083
  %v1088 = vadd.f32 %v58, %v1084
  %1089 = vst.msk [vmem:[%s16] sm:$0xff] %vm268, %v1085
  %1090 = vst.msk [vmem:[%s16 + $0x8] sm:$0xff] %vm268, %v1086
  %1091 = vst.msk [vmem:[%s16 + $0x10] sm:$0xff] %vm268, %v1087
  %1092 = vst.msk [vmem:[%s16 + $0x18] sm:$0xff] %vm268, %v1088
  %v1094 = vsel %vm366, %v178, 0
  %v1097 = vsel %vm366, %v179, 0
  %v1100 = vsel %vm366, %v180, 0
  %v1103 = vsel %vm366, %v181, 0
  %v1106 = vsel %vm366, %v182, 0
  %v1109 = vsel %vm366, %v183, 0
  %v1112 = vsel %vm366, %v184, 0
  %v1115 = vsel %vm366, %v185, 0
  %1117 = vmatprep.subr.mxu0 0.0
  %1118 = vmatpush1.msra.mxu0 0.0
  %1119 = vmatprep.subr.mxu0 0.0
  %1120 = vmatpush1.msra.mxu0 0.0
  %1121 = vmatprep.subr.mxu0 0.0
  %1122 = vmatpush1.msra.mxu0 0.0
  %1123 = vmatprep.subr.mxu0 0.0
  %1124 = vmatpush1.msra.mxu0 0.0
  %1125 = vmatprep.subr.mxu0 0.0
  %1126 = vmatpush1.msra.mxu0 0.0
  %1127 = vmatprep.subr.mxu0 0.0
  %1128 = vmatpush1.msra.mxu0 0.0
  %1129 = vmatprep.subr.mxu0 0.0
  %1130 = vmatpush1.msra.mxu0 0.0
  %1131 = vmatprep.subr.mxu0 0.0
  %1132 = vmatpush1.msra.mxu0 0.0
  %1133 = vmatprep.subr.mxu0 0.0
  %1134 = vmatpush1.msra.mxu0 0.0
  %1135 = vmatprep.subr.mxu0 0.0
  %1136 = vmatpush1.msra.mxu0 0.0
  %1137 = vmatprep.subr.mxu0 0.0
  %1138 = vmatpush1.msra.mxu0 0.0
  %1139 = vmatprep.subr.mxu0 0.0
  %1140 = vmatpush1.msra.mxu0 0.0
  %1141 = vmatprep.subr.mxu0 0.0
  %1142 = vmatpush1.msra.mxu0 %v58
  %1143 = vmatprep.subr.mxu0 0.0
  %1144 = vmatpush1.msra.mxu0 %v57
  %1145 = vmatprep.subr.mxu0 0.0
  %1146 = vmatpush1.msra.mxu0 %v56
  %1147 = vmatprep.subr.mxu0 0.0
  %1148 = vmatpush1.msra.mxu0 %v55
  %1149 = vmatprep.subr.mxu0 0.0
  %1150 = vmatpush2.msra.mxu0 0.0
  %1151 = vmatprep.subr.mxu0 0.0
  %1152 = vmatpush2.msra.mxu0 0.0
  %1153 = vmatprep.subr.mxu0 0.0
  %1154 = vmatpush2.msra.mxu0 0.0
  %1155 = vmatprep.subr.mxu0 0.0
  %1156 = vmatpush2.msra.mxu0 0.0
  %1157 = vmatprep.subr.mxu0 0.0
  %1158 = vmatpush2.msra.mxu0 0.0
  %1159 = vmatprep.subr.mxu0 0.0
  %1160 = vmatpush2.msra.mxu0 0.0
  %1161 = vmatprep.subr.mxu0 0.0
  %1162 = vmatpush2.msra.mxu0 0.0
  %1163 = vmatprep.subr.mxu0 0.0
  %1164 = vmatpush2.msra.mxu0 0.0
  %1165 = vmatprep.subr.mxu0 0.0
  %1166 = vmatpush2.msra.mxu0 0.0
  %1167 = vmatprep.subr.mxu0 0.0
  %1168 = vmatpush2.msra.mxu0 0.0
  %1169 = vmatprep.subr.mxu0 0.0
  %1170 = vmatpush2.msra.mxu0 0.0
  %1171 = vmatprep.subr.mxu0 0.0
  %1172 = vmatpush2.msra.mxu0 0.0
  %1173 = vmatprep.subr.mxu0 0.0
  %1174 = vmatpush2.msra.mxu0 0.0
  %1175 = vmatprep.subr.mxu0 0.0
  %1176 = vmatpush2.msra.mxu0 0.0
  %1177 = vmatprep.subr.mxu0 0.0
  %1178 = vmatpush2.msra.mxu0 0.0
  %1179 = vmatprep.subr.mxu0 0.0
  %1180 = vmatpush2.msra.mxu0 0.0
  %1181 = vmatprep.mubr.f32.mxu0 0.0
  %1182 = vmatmul.mubr.f32.gmra.mxu0 %v1094
  %v1183 = vpop.f32.mrf.mxu0
  %v1184 = vadd.f32 0.0, %v1183
  %v1185 = vpop.f32.mrf.mxu0
  %1186 = vmatprep.mubr.f32.mxu0 0.0
  %1187 = vmatmul.mubr.f32.gmra.mxu0 %v1097
  %v1188 = vpop.f32.mrf.mxu0
  %v1189 = vadd.f32 0.0, %v1188
  %v1190 = vpop.f32.mrf.mxu0
  %1191 = vmatprep.mubr.f32.mxu0 0.0
  %1192 = vmatmul.mubr.f32.gmra.mxu0 %v1100
  %v1193 = vpop.f32.mrf.mxu0
  %v1194 = vadd.f32 0.0, %v1193
  %v1195 = vpop.f32.mrf.mxu0
  %1196 = vmatprep.mubr.f32.mxu0 0.0
  %1197 = vmatmul.mubr.f32.gmra.mxu0 %v1103
  %v1198 = vpop.f32.mrf.mxu0
  %v1199 = vadd.f32 0.0, %v1198
  %v1200 = vpop.f32.mrf.mxu0
  %1201 = vmatprep.mubr.f32.mxu0 0.0
  %1202 = vmatmul.mubr.f32.gmra.mxu0 %v1106
  %v1203 = vpop.f32.mrf.mxu0
  %v1204 = vadd.f32 0.0, %v1203
  %v1205 = vpop.f32.mrf.mxu0
  %1206 = vmatprep.mubr.f32.mxu0 0.0
  %1207 = vmatmul.mubr.f32.gmra.mxu0 %v1109
  %v1208 = vpop.f32.mrf.mxu0
  %v1209 = vadd.f32 0.0, %v1208
  %v1210 = vpop.f32.mrf.mxu0
  %1211 = vmatprep.mubr.f32.mxu0 0.0
  %1212 = vmatmul.mubr.f32.gmra.mxu0 %v1112
  %v1213 = vpop.f32.mrf.mxu0
  %v1214 = vadd.f32 0.0, %v1213
  %v1215 = vpop.f32.mrf.mxu0
  %1216 = vmatprep.mubr.f32.mxu0 0.0
  %1217 = vmatmul.mubr.f32.gmra.mxu0 %v1115
  %v1218 = vpop.f32.mrf.mxu0
  %v1219 = vadd.f32 0.0, %v1218
  %v1220 = vpop.f32.mrf.mxu0
  %1221 = vdwg.mxu0
  %v1222 = vld [vmem:[%s10] sm:$0xff]
  %v1223 = vld [vmem:[%s10 + $0x8] sm:$0xff]
  %v1224 = vld [vmem:[%s10 + $0x10] sm:$0xff]
  %v1225 = vld [vmem:[%s10 + $0x18] sm:$0xff]
  %v1226 = vld [vmem:[%s10 + $0x20] sm:$0xff]
  %v1227 = vld [vmem:[%s10 + $0x28] sm:$0xff]
  %v1228 = vld [vmem:[%s10 + $0x30] sm:$0xff]
  %v1229 = vld [vmem:[%s10 + $0x38] sm:$0xff]
  %v1230 = vld [vmem:[%s10 + $0x40] sm:$0xff]
  %v1231 = vld [vmem:[%s10 + $0x48] sm:$0xff]
  %v1232 = vld [vmem:[%s10 + $0x50] sm:$0xff]
  %v1233 = vld [vmem:[%s10 + $0x58] sm:$0xff]
  %v1234 = vld [vmem:[%s10 + $0x60] sm:$0xff]
  %v1235 = vld [vmem:[%s10 + $0x68] sm:$0xff]
  %v1236 = vld [vmem:[%s10 + $0x70] sm:$0xff]
  %v1237 = vld [vmem:[%s10 + $0x78] sm:$0xff]
  %v1238 = vld [vmem:[%s10 + $0x80] sm:$0xff]
  %v1239 = vld [vmem:[%s10 + $0x88] sm:$0xff]
  %v1240 = vld [vmem:[%s10 + $0x90] sm:$0xff]
  %v1241 = vld [vmem:[%s10 + $0x98] sm:$0xff]
  %v1242 = vld [vmem:[%s10 + $0xa0] sm:$0xff]
  %v1243 = vld [vmem:[%s10 + $0xa8] sm:$0xff]
  %v1244 = vld [vmem:[%s10 + $0xb0] sm:$0xff]
  %v1245 = vld [vmem:[%s10 + $0xb8] sm:$0xff]
  %v1247 = vsel %vm268, %v1184, 0
  %v1250 = vsel %vm268, %v1189, 0
  %v1253 = vsel %vm268, %v1194, 0
  %v1256 = vsel %vm268, %v1199, 0
  %v1259 = vsel %vm268, %v1204, 0
  %v1262 = vsel %vm268, %v1209, 0
  %v1265 = vsel %vm268, %v1214, 0
  %v1268 = vsel %vm268, %v1219, 0
  %1270 = vmatprep.subr.mxu0 0.0
  %1271 = vmatpush1.msra.mxu0 0.0
  %1272 = vmatprep.subr.mxu0 0.0
  %1273 = vmatpush1.msra.mxu0 0.0
  %1274 = vmatprep.subr.mxu0 0.0
  %1275 = vmatpush1.msra.mxu0 0.0
  %1276 = vmatprep.subr.mxu0 0.0
  %1277 = vmatpush1.msra.mxu0 0.0
  %1278 = vmatprep.subr.mxu0 0.0
  %1279 = vmatpush1.msra.mxu0 0.0
  %1280 = vmatprep.subr.mxu0 0.0
  %1281 = vmatpush1.msra.mxu0 0.0
  %1282 = vmatprep.subr.mxu0 0.0
  %1283 = vmatpush1.msra.mxu0 0.0
  %1284 = vmatprep.subr.mxu0 0.0
  %1285 = vmatpush1.msra.mxu0 0.0
  %1286 = vmatprep.subr.mxu0 0.0
  %1287 = vmatpush1.msra.mxu0 %v1237
  %1288 = vmatprep.subr.mxu0 0.0
  %1289 = vmatpush1.msra.mxu0 %v1236
  %1290 = vmatprep.subr.mxu0 0.0
  %1291 = vmatpush1.msra.mxu0 %v1235
  %1292 = vmatprep.subr.mxu0 0.0
  %1293 = vmatpush1.msra.mxu0 %v1234
  %1294 = vmatprep.subr.mxu0 0.0
  %1295 = vmatpush1.msra.mxu0 %v1233
  %1296 = vmatprep.subr.mxu0 0.0
  %1297 = vmatpush1.msra.mxu0 %v1232
  %1298 = vmatprep.subr.mxu0 0.0
  %1299 = vmatpush1.msra.mxu0 %v1231
  %1300 = vmatprep.subr.mxu0 0.0
  %1301 = vmatpush1.msra.mxu0 %v1230
  %1302 = vmatprep.subr.mxu0 0.0
  %1303 = vmatpush2.msra.mxu0 0.0
  %1304 = vmatprep.subr.mxu0 0.0
  %1305 = vmatpush2.msra.mxu0 0.0
  %1306 = vmatprep.subr.mxu0 0.0
  %1307 = vmatpush2.msra.mxu0 0.0
  %1308 = vmatprep.subr.mxu0 0.0
  %1309 = vmatpush2.msra.mxu0 0.0
  %1310 = vmatprep.subr.mxu0 0.0
  %1311 = vmatpush2.msra.mxu0 0.0
  %1312 = vmatprep.subr.mxu0 0.0
  %1313 = vmatpush2.msra.mxu0 0.0
  %1314 = vmatprep.subr.mxu0 0.0
  %1315 = vmatpush2.msra.mxu0 0.0
  %1316 = vmatprep.subr.mxu0 0.0
  %1317 = vmatpush2.msra.mxu0 0.0
  %1318 = vmatprep.subr.mxu0 0.0
  %1319 = vmatpush2.msra.mxu0 0.0
  %1320 = vmatprep.subr.mxu0 0.0
  %1321 = vmatpush2.msra.mxu0 0.0
  %1322 = vmatprep.subr.mxu0 0.0
  %1323 = vmatpush2.msra.mxu0 0.0
  %1324 = vmatprep.subr.mxu0 0.0
  %1325 = vmatpush2.msra.mxu0 0.0
  %1326 = vmatprep.subr.mxu0 0.0
  %1327 = vmatpush2.msra.mxu0 0.0
  %1328 = vmatprep.subr.mxu0 0.0
  %1329 = vmatpush2.msra.mxu0 0.0
  %1330 = vmatprep.subr.mxu0 0.0
  %1331 = vmatpush2.msra.mxu0 0.0
  %1332 = vmatprep.subr.mxu0 0.0
  %1333 = vmatpush2.msra.mxu0 0.0
  %1334 = vmatprep.mubr.f32.mxu0 0.0
  %1335 = vmatmul.mubr.f32.gmra.mxu0 %v1247
  %v1336 = vpop.f32.mrf.mxu0
  %v1337 = vadd.f32 0.0, %v1336
  %v1338 = vpop.f32.mrf.mxu0
  %1339 = vmatprep.mubr.f32.mxu0 0.0
  %1340 = vmatmul.mubr.f32.gmra.mxu0 %v1250
  %v1341 = vpop.f32.mrf.mxu0
  %v1342 = vadd.f32 0.0, %v1341
  %v1343 = vpop.f32.mrf.mxu0
  %1344 = vmatprep.mubr.f32.mxu0 0.0
  %1345 = vmatmul.mubr.f32.gmra.mxu0 %v1253
  %v1346 = vpop.f32.mrf.mxu0
  %v1347 = vadd.f32 0.0, %v1346
  %v1348 = vpop.f32.mrf.mxu0
  %1349 = vmatprep.mubr.f32.mxu0 0.0
  %1350 = vmatmul.mubr.f32.gmra.mxu0 %v1256
  %v1351 = vpop.f32.mrf.mxu0
  %v1352 = vadd.f32 0.0, %v1351
  %v1353 = vpop.f32.mrf.mxu0
  %1354 = vmatprep.mubr.f32.mxu0 0.0
  %1355 = vmatmul.mubr.f32.gmra.mxu0 %v1259
  %v1356 = vpop.f32.mrf.mxu0
  %v1357 = vadd.f32 0.0, %v1356
  %v1358 = vpop.f32.mrf.mxu0
  %1359 = vmatprep.mubr.f32.mxu0 0.0
  %1360 = vmatmul.mubr.f32.gmra.mxu0 %v1262
  %v1361 = vpop.f32.mrf.mxu0
  %v1362 = vadd.f32 0.0, %v1361
  %v1363 = vpop.f32.mrf.mxu0
  %1364 = vmatprep.mubr.f32.mxu0 0.0
  %1365 = vmatmul.mubr.f32.gmra.mxu0 %v1265
  %v1366 = vpop.f32.mrf.mxu0
  %v1367 = vadd.f32 0.0, %v1366
  %v1368 = vpop.f32.mrf.mxu0
  %1369 = vmatprep.mubr.f32.mxu0 0.0
  %1370 = vmatmul.mubr.f32.gmra.mxu0 %v1268
  %v1371 = vpop.f32.mrf.mxu0
  %v1372 = vadd.f32 0.0, %v1371
  %v1373 = vpop.f32.mrf.mxu0
  %1374 = vdwg.mxu0
  %1375 = vmatprep.subr.mxu0 0.0
  %1376 = vmatpush1.msra.mxu0 0.0
  %1377 = vmatprep.subr.mxu0 0.0
  %1378 = vmatpush1.msra.mxu0 0.0
  %1379 = vmatprep.subr.mxu0 0.0
  %1380 = vmatpush1.msra.mxu0 0.0
  %1381 = vmatprep.subr.mxu0 0.0
  %1382 = vmatpush1.msra.mxu0 0.0
  %1383 = vmatprep.subr.mxu0 0.0
  %1384 = vmatpush1.msra.mxu0 0.0
  %1385 = vmatprep.subr.mxu0 0.0
  %1386 = vmatpush1.msra.mxu0 0.0
  %1387 = vmatprep.subr.mxu0 0.0
  %1388 = vmatpush1.msra.mxu0 0.0
  %1389 = vmatprep.subr.mxu0 0.0
  %1390 = vmatpush1.msra.mxu0 0.0
  %1391 = vmatprep.subr.mxu0 0.0
  %1392 = vmatpush1.msra.mxu0 %v1229
  %1393 = vmatprep.subr.mxu0 0.0
  %1394 = vmatpush1.msra.mxu0 %v1228
  %1395 = vmatprep.subr.mxu0 0.0
  %1396 = vmatpush1.msra.mxu0 %v1227
  %1397 = vmatprep.subr.mxu0 0.0
  %1398 = vmatpush1.msra.mxu0 %v1226
  %1399 = vmatprep.subr.mxu0 0.0
  %1400 = vmatpush1.msra.mxu0 %v1225
  %1401 = vmatprep.subr.mxu0 0.0
  %1402 = vmatpush1.msra.mxu0 %v1224
  %1403 = vmatprep.subr.mxu0 0.0
  %1404 = vmatpush1.msra.mxu0 %v1223
  %1405 = vmatprep.subr.mxu0 0.0
  %1406 = vmatpush1.msra.mxu0 %v1222
  %1407 = vmatprep.subr.mxu0 0.0
  %1408 = vmatpush2.msra.mxu0 0.0
  %1409 = vmatprep.subr.mxu0 0.0
  %1410 = vmatpush2.msra.mxu0 0.0
  %1411 = vmatprep.subr.mxu0 0.0
  %1412 = vmatpush2.msra.mxu0 0.0
  %1413 = vmatprep.subr.mxu0 0.0
  %1414 = vmatpush2.msra.mxu0 0.0
  %1415 = vmatprep.subr.mxu0 0.0
  %1416 = vmatpush2.msra.mxu0 0.0
  %1417 = vmatprep.subr.mxu0 0.0
  %1418 = vmatpush2.msra.mxu0 0.0
  %1419 = vmatprep.subr.mxu0 0.0
  %1420 = vmatpush2.msra.mxu0 0.0
  %1421 = vmatprep.subr.mxu0 0.0
  %1422 = vmatpush2.msra.mxu0 0.0
  %1423 = vmatprep.subr.mxu0 0.0
  %1424 = vmatpush2.msra.mxu0 0.0
  %1425 = vmatprep.subr.mxu0 0.0
  %1426 = vmatpush2.msra.mxu0 0.0
  %1427 = vmatprep.subr.mxu0 0.0
  %1428 = vmatpush2.msra.mxu0 0.0
  %1429 = vmatprep.subr.mxu0 0.0
  %1430 = vmatpush2.msra.mxu0 0.0
  %1431 = vmatprep.subr.mxu0 0.0
  %1432 = vmatpush2.msra.mxu0 0.0
  %1433 = vmatprep.subr.mxu0 0.0
  %1434 = vmatpush2.msra.mxu0 0.0
  %1435 = vmatprep.subr.mxu0 0.0
  %1436 = vmatpush2.msra.mxu0 0.0
  %1437 = vmatprep.subr.mxu0 0.0
  %1438 = vmatpush2.msra.mxu0 0.0
  %1439 = vmatprep.mubr.f32.mxu0 0.0
  %1440 = vmatmul.mubr.f32.gmra.mxu0 %v633
  %v1441 = vpop.f32.mrf.mxu0
  %v1442 = vadd.f32 %v1337, %v1441
  %v1443 = vpop.f32.mrf.mxu0
  %1444 = vmatprep.mubr.f32.mxu0 0.0
  %1445 = vmatmul.mubr.f32.gmra.mxu0 %v636
  %v1446 = vpop.f32.mrf.mxu0
  %v1447 = vadd.f32 %v1342, %v1446
  %v1448 = vpop.f32.mrf.mxu0
  %1449 = vmatprep.mubr.f32.mxu0 0.0
  %1450 = vmatmul.mubr.f32.gmra.mxu0 %v639
  %v1451 = vpop.f32.mrf.mxu0
  %v1452 = vadd.f32 %v1347, %v1451
  %v1453 = vpop.f32.mrf.mxu0
  %1454 = vmatprep.mubr.f32.mxu0 0.0
  %1455 = vmatmul.mubr.f32.gmra.mxu0 %v642
  %v1456 = vpop.f32.mrf.mxu0
  %v1457 = vadd.f32 %v1352, %v1456
  %v1458 = vpop.f32.mrf.mxu0
  %1459 = vmatprep.mubr.f32.mxu0 0.0
  %1460 = vmatmul.mubr.f32.gmra.mxu0 %v645
  %v1461 = vpop.f32.mrf.mxu0
  %v1462 = vadd.f32 %v1357, %v1461
  %v1463 = vpop.f32.mrf.mxu0
  %1464 = vmatprep.mubr.f32.mxu0 0.0
  %1465 = vmatmul.mubr.f32.gmra.mxu0 %v648
  %v1466 = vpop.f32.mrf.mxu0
  %v1467 = vadd.f32 %v1362, %v1466
  %v1468 = vpop.f32.mrf.mxu0
  %1469 = vmatprep.mubr.f32.mxu0 0.0
  %1470 = vmatmul.mubr.f32.gmra.mxu0 %v651
  %v1471 = vpop.f32.mrf.mxu0
  %v1472 = vadd.f32 %v1367, %v1471
  %v1473 = vpop.f32.mrf.mxu0
  %1474 = vmatprep.mubr.f32.mxu0 0.0
  %1475 = vmatmul.mubr.f32.gmra.mxu0 %v654
  %v1476 = vpop.f32.mrf.mxu0
  %v1477 = vadd.f32 %v1372, %v1476
  %v1478 = vpop.f32.mrf.mxu0
  %1479 = vdwg.mxu0
  %v1481 = vsel %vm268, %v59, 0
  %v1484 = vsel %vm268, %v60, 0
  %v1487 = vsel %vm268, %v61, 0
  %v1490 = vsel %vm268, %v62, 0
  %v1493 = vsel %vm268, %v63, 0
  %v1496 = vsel %vm268, %v64, 0
  %v1499 = vsel %vm268, %v65, 0
  %v1502 = vsel %vm268, %v66, 0
  %1504 = vmatprep.subr.mxu0 0.0
  %1505 = vmatpush1.msra.mxu0 0.0
  %1506 = vmatprep.subr.mxu0 0.0
  %1507 = vmatpush1.msra.mxu0 0.0
  %1508 = vmatprep.subr.mxu0 0.0
  %1509 = vmatpush1.msra.mxu0 0.0
  %1510 = vmatprep.subr.mxu0 0.0
  %1511 = vmatpush1.msra.mxu0 0.0
  %1512 = vmatprep.subr.mxu0 0.0
  %1513 = vmatpush1.msra.mxu0 0.0
  %1514 = vmatprep.subr.mxu0 0.0
  %1515 = vmatpush1.msra.mxu0 0.0
  %1516 = vmatprep.subr.mxu0 0.0
  %1517 = vmatpush1.msra.mxu0 0.0
  %1518 = vmatprep.subr.mxu0 0.0
  %1519 = vmatpush1.msra.mxu0 0.0
  %1520 = vmatprep.subr.mxu0 0.0
  %1521 = vmatpush1.msra.mxu0 %v1245
  %1522 = vmatprep.subr.mxu0 0.0
  %1523 = vmatpush1.msra.mxu0 %v1244
  %1524 = vmatprep.subr.mxu0 0.0
  %1525 = vmatpush1.msra.mxu0 %v1243
  %1526 = vmatprep.subr.mxu0 0.0
  %1527 = vmatpush1.msra.mxu0 %v1242
  %1528 = vmatprep.subr.mxu0 0.0
  %1529 = vmatpush1.msra.mxu0 %v1241
  %1530 = vmatprep.subr.mxu0 0.0
  %1531 = vmatpush1.msra.mxu0 %v1240
  %1532 = vmatprep.subr.mxu0 0.0
  %1533 = vmatpush1.msra.mxu0 %v1239
  %1534 = vmatprep.subr.mxu0 0.0
  %1535 = vmatpush1.msra.mxu0 %v1238
  %1536 = vmatprep.subr.mxu0 0.0
  %1537 = vmatpush2.msra.mxu0 0.0
  %1538 = vmatprep.subr.mxu0 0.0
  %1539 = vmatpush2.msra.mxu0 0.0
  %1540 = vmatprep.subr.mxu0 0.0
  %1541 = vmatpush2.msra.mxu0 0.0
  %1542 = vmatprep.subr.mxu0 0.0
  %1543 = vmatpush2.msra.mxu0 0.0
  %1544 = vmatprep.subr.mxu0 0.0
  %1545 = vmatpush2.msra.mxu0 0.0
  %1546 = vmatprep.subr.mxu0 0.0
  %1547 = vmatpush2.msra.mxu0 0.0
  %1548 = vmatprep.subr.mxu0 0.0
  %1549 = vmatpush2.msra.mxu0 0.0
  %1550 = vmatprep.subr.mxu0 0.0
  %1551 = vmatpush2.msra.mxu0 0.0
  %1552 = vmatprep.subr.mxu0 0.0
  %1553 = vmatpush2.msra.mxu0 0.0
  %1554 = vmatprep.subr.mxu0 0.0
  %1555 = vmatpush2.msra.mxu0 0.0
  %1556 = vmatprep.subr.mxu0 0.0
  %1557 = vmatpush2.msra.mxu0 0.0
  %1558 = vmatprep.subr.mxu0 0.0
  %1559 = vmatpush2.msra.mxu0 0.0
  %1560 = vmatprep.subr.mxu0 0.0
  %1561 = vmatpush2.msra.mxu0 0.0
  %1562 = vmatprep.subr.mxu0 0.0
  %1563 = vmatpush2.msra.mxu0 0.0
  %1564 = vmatprep.subr.mxu0 0.0
  %1565 = vmatpush2.msra.mxu0 0.0
  %1566 = vmatprep.subr.mxu0 0.0
  %1567 = vmatpush2.msra.mxu0 0.0
  %1568 = vmatprep.mubr.f32.mxu0 0.0
  %1569 = vmatmul.mubr.f32.gmra.mxu0 %v1481
  %v1570 = vpop.f32.mrf.mxu0
  %v1571 = vadd.f32 0.0, %v1570
  %v1572 = vpop.f32.mrf.mxu0
  %1573 = vmatprep.mubr.f32.mxu0 0.0
  %1574 = vmatmul.mubr.f32.gmra.mxu0 %v1484
  %v1575 = vpop.f32.mrf.mxu0
  %v1576 = vadd.f32 0.0, %v1575
  %v1577 = vpop.f32.mrf.mxu0
  %1578 = vmatprep.mubr.f32.mxu0 0.0
  %1579 = vmatmul.mubr.f32.gmra.mxu0 %v1487
  %v1580 = vpop.f32.mrf.mxu0
  %v1581 = vadd.f32 0.0, %v1580
  %v1582 = vpop.f32.mrf.mxu0
  %1583 = vmatprep.mubr.f32.mxu0 0.0
  %1584 = vmatmul.mubr.f32.gmra.mxu0 %v1490
  %v1585 = vpop.f32.mrf.mxu0
  %v1586 = vadd.f32 0.0, %v1585
  %v1587 = vpop.f32.mrf.mxu0
  %1588 = vmatprep.mubr.f32.mxu0 0.0
  %1589 = vmatmul.mubr.f32.gmra.mxu0 %v1493
  %v1590 = vpop.f32.mrf.mxu0
  %v1591 = vadd.f32 0.0, %v1590
  %v1592 = vpop.f32.mrf.mxu0
  %1593 = vmatprep.mubr.f32.mxu0 0.0
  %1594 = vmatmul.mubr.f32.gmra.mxu0 %v1496
  %v1595 = vpop.f32.mrf.mxu0
  %v1596 = vadd.f32 0.0, %v1595
  %v1597 = vpop.f32.mrf.mxu0
  %1598 = vmatprep.mubr.f32.mxu0 0.0
  %1599 = vmatmul.mubr.f32.gmra.mxu0 %v1499
  %v1600 = vpop.f32.mrf.mxu0
  %v1601 = vadd.f32 0.0, %v1600
  %v1602 = vpop.f32.mrf.mxu0
  %1603 = vmatprep.mubr.f32.mxu0 0.0
  %1604 = vmatmul.mubr.f32.gmra.mxu0 %v1502
  %v1605 = vpop.f32.mrf.mxu0
  %v1606 = vadd.f32 0.0, %v1605
  %v1607 = vpop.f32.mrf.mxu0
  %1608 = vdwg.mxu0
  %v1609 = vadd.f32 %v1442, %v1571
  %v1610 = vadd.f32 %v1447, %v1576
  %v1611 = vadd.f32 %v1452, %v1581
  %v1612 = vadd.f32 %v1457, %v1586
  %v1613 = vadd.f32 %v1462, %v1591
  %v1614 = vadd.f32 %v1467, %v1596
  %v1615 = vadd.f32 %v1472, %v1601
  %v1616 = vadd.f32 %v1477, %v1606
  %v1617 = vld [vmem:[%s11] sm:$0x1]
  %v1619 = vlaneseq
  %v1620 = vshrl.u32 %v1619, 7
  %v1621 = vsub.s32 0, %v1620
  %v1622 = vrot.slane %v1617, %v1621
  %v1624 = vadd.f32 %v1609, %v1622
  %v1625 = vadd.f32 %v1610, %v1622
  %v1626 = vadd.f32 %v1611, %v1622
  %v1627 = vadd.f32 %v1612, %v1622
  %v1628 = vadd.f32 %v1613, %v1622
  %v1629 = vadd.f32 %v1614, %v1622
  %v1630 = vadd.f32 %v1615, %v1622
  %v1631 = vadd.f32 %v1616, %v1622
  %v1632 = vld [vmem:[%s14] sm:$0x1]
  %v1633 = vld [vmem:[%s15] sm:$0x1]
  %v1634 = vsel %vm268, %v1624, 0.0
  %1635 = vadd.xlane.f32.xlu0 %v1634
  %v1636 = vpop.xlane.xlu0 %1635
  %v1637 = vsel %vm268, %v1625, 0.0
  %1638 = vadd.xlane.f32.xlu0 %v1637
  %v1639 = vpop.xlane.xlu0 %1638
  %v1640 = vsel %vm268, %v1626, 0.0
  %1641 = vadd.xlane.f32.xlu0 %v1640
  %v1642 = vpop.xlane.xlu0 %1641
  %v1643 = vsel %vm268, %v1627, 0.0
  %1644 = vadd.xlane.f32.xlu0 %v1643
  %v1645 = vpop.xlane.xlu0 %1644
  %v1646 = vsel %vm268, %v1628, 0.0
  %1647 = vadd.xlane.f32.xlu0 %v1646
  %v1648 = vpop.xlane.xlu0 %1647
  %v1649 = vsel %vm268, %v1629, 0.0
  %1650 = vadd.xlane.f32.xlu0 %v1649
  %v1651 = vpop.xlane.xlu0 %1650
  %v1652 = vsel %vm268, %v1630, 0.0
  %1653 = vadd.xlane.f32.xlu0 %v1652
  %v1654 = vpop.xlane.xlu0 %1653
  %v1655 = vsel %vm268, %v1631, 0.0
  %1656 = vadd.xlane.f32.xlu0 %v1655
  %v1657 = vpop.xlane.xlu0 %1656
  %v1658 = vmul.f32 %v1636, %v996
  %v1659 = vmul.f32 %v1639, %v996
  %v1660 = vmul.f32 %v1642, %v996
  %v1661 = vmul.f32 %v1645, %v996
  %v1662 = vmul.f32 %v1648, %v996
  %v1663 = vmul.f32 %v1651, %v996
  %v1664 = vmul.f32 %v1654, %v996
  %v1665 = vmul.f32 %v1657, %v996
  %v1666 = vsub.f32 %v1624, %v1658
  %v1667 = vsub.f32 %v1625, %v1659
  %v1668 = vsub.f32 %v1626, %v1660
  %v1669 = vsub.f32 %v1627, %v1661
  %v1670 = vsub.f32 %v1628, %v1662
  %v1671 = vsub.f32 %v1629, %v1663
  %v1672 = vsub.f32 %v1630, %v1664
  %v1673 = vsub.f32 %v1631, %v1665
  %v1674 = vmul.f32 %v1666, %v1666
  %v1675 = vmul.f32 %v1667, %v1667
  %v1676 = vmul.f32 %v1668, %v1668
  %v1677 = vmul.f32 %v1669, %v1669
  %v1678 = vmul.f32 %v1670, %v1670
  %v1679 = vmul.f32 %v1671, %v1671
  %v1680 = vmul.f32 %v1672, %v1672
  %v1681 = vmul.f32 %v1673, %v1673
  %v1682 = vsel %vm268, %v1674, 0.0
  %1683 = vadd.xlane.f32.xlu0 %v1682
  %v1684 = vpop.xlane.xlu0 %1683
  %v1685 = vsel %vm268, %v1675, 0.0
  %1686 = vadd.xlane.f32.xlu0 %v1685
  %v1687 = vpop.xlane.xlu0 %1686
  %v1688 = vsel %vm268, %v1676, 0.0
  %1689 = vadd.xlane.f32.xlu0 %v1688
  %v1690 = vpop.xlane.xlu0 %1689
  %v1691 = vsel %vm268, %v1677, 0.0
  %1692 = vadd.xlane.f32.xlu0 %v1691
  %v1693 = vpop.xlane.xlu0 %1692
  %v1694 = vsel %vm268, %v1678, 0.0
  %1695 = vadd.xlane.f32.xlu0 %v1694
  %v1696 = vpop.xlane.xlu0 %1695
  %v1697 = vsel %vm268, %v1679, 0.0
  %1698 = vadd.xlane.f32.xlu0 %v1697
  %v1699 = vpop.xlane.xlu0 %1698
  %v1700 = vsel %vm268, %v1680, 0.0
  %1701 = vadd.xlane.f32.xlu0 %v1700
  %v1702 = vpop.xlane.xlu0 %1701
  %v1703 = vsel %vm268, %v1681, 0.0
  %1704 = vadd.xlane.f32.xlu0 %v1703
  %v1705 = vpop.xlane.xlu0 %1704
  %v1706 = vmul.f32 %v1684, %v996
  %v1707 = vmul.f32 %v1687, %v996
  %v1708 = vmul.f32 %v1690, %v996
  %v1709 = vmul.f32 %v1693, %v996
  %v1710 = vmul.f32 %v1696, %v996
  %v1711 = vmul.f32 %v1699, %v996
  %v1712 = vmul.f32 %v1702, %v996
  %v1713 = vmul.f32 %v1705, %v996
  %v1714 = vadd.f32 %v1706, 1e-05
  %v1715 = vadd.f32 %v1707, 1e-05
  %v1716 = vadd.f32 %v1708, 1e-05
  %v1717 = vadd.f32 %v1709, 1e-05
  %v1718 = vadd.f32 %v1710, 1e-05
  %v1719 = vadd.f32 %v1711, 1e-05
  %v1720 = vadd.f32 %v1712, 1e-05
  %v1721 = vadd.f32 %v1713, 1e-05
  %v1722 = vrsqrt.pop %v1714
  %v1723 = vrsqrt.pop %v1715
  %v1724 = vrsqrt.pop %v1716
  %v1725 = vrsqrt.pop %v1717
  %v1726 = vrsqrt.pop %v1718
  %v1727 = vrsqrt.pop %v1719
  %v1728 = vrsqrt.pop %v1720
  %v1729 = vrsqrt.pop %v1721
  %v1730 = vmul.f32 %v1666, %v1722
  %v1731 = vmul.f32 %v1667, %v1723
  %v1732 = vmul.f32 %v1668, %v1724
  %v1733 = vmul.f32 %v1669, %v1725
  %v1734 = vmul.f32 %v1670, %v1726
  %v1735 = vmul.f32 %v1671, %v1727
  %v1736 = vmul.f32 %v1672, %v1728
  %v1737 = vmul.f32 %v1673, %v1729
  %v1739 = vlaneseq
  %v1740 = vshrl.u32 %v1739, 7
  %v1741 = vsub.s32 0, %v1740
  %v1742 = vrot.slane %v1632, %v1741
  %v1744 = vmul.f32 %v1730, %v1742
  %v1745 = vmul.f32 %v1731, %v1742
  %v1746 = vmul.f32 %v1732, %v1742
  %v1747 = vmul.f32 %v1733, %v1742
  %v1748 = vmul.f32 %v1734, %v1742
  %v1749 = vmul.f32 %v1735, %v1742
  %v1750 = vmul.f32 %v1736, %v1742
  %v1751 = vmul.f32 %v1737, %v1742
  %v1753 = vlaneseq
  %v1754 = vshrl.u32 %v1753, 7
  %v1755 = vsub.s32 0, %v1754
  %v1756 = vrot.slane %v1633, %v1755
  %v1758 = vadd.f32 %v1744, %v1756
  %v1759 = vadd.f32 %v1745, %v1756
  %v1760 = vadd.f32 %v1746, %v1756
  %v1761 = vadd.f32 %v1747, %v1756
  %v1762 = vadd.f32 %v1748, %v1756
  %v1763 = vadd.f32 %v1749, %v1756
  %v1764 = vadd.f32 %v1750, %v1756
  %v1765 = vadd.f32 %v1751, %v1756
  %v1766 = vsub.f32 0.0, %v1758
  %v1767 = vsub.f32 0.0, %v1759
  %v1768 = vsub.f32 0.0, %v1760
  %v1769 = vsub.f32 0.0, %v1761
  %v1770 = vsub.f32 0.0, %v1762
  %v1771 = vsub.f32 0.0, %v1763
  %v1772 = vsub.f32 0.0, %v1764
  %v1773 = vsub.f32 0.0, %v1765
  %v1774 = vmul.f32 %v1766, 1.442695
  %v1775 = vpow.pop %v1774
  %v1776 = vmul.f32 %v1767, 1.442695
  %v1777 = vpow.pop %v1776
  %v1778 = vmul.f32 %v1768, 1.442695
  %v1779 = vpow.pop %v1778
  %v1780 = vmul.f32 %v1769, 1.442695
  %v1781 = vpow.pop %v1780
  %v1782 = vmul.f32 %v1770, 1.442695
  %v1783 = vpow.pop %v1782
  %v1784 = vmul.f32 %v1771, 1.442695
  %v1785 = vpow.pop %v1784
  %v1786 = vmul.f32 %v1772, 1.442695
  %v1787 = vpow.pop %v1786
  %v1788 = vmul.f32 %v1773, 1.442695
  %v1789 = vpow.pop %v1788
  %v1790 = vadd.f32 %v1775, 1.0
  %v1791 = vadd.f32 %v1777, 1.0
  %v1792 = vadd.f32 %v1779, 1.0
  %v1793 = vadd.f32 %v1781, 1.0
  %v1794 = vadd.f32 %v1783, 1.0
  %v1795 = vadd.f32 %v1785, 1.0
  %v1796 = vadd.f32 %v1787, 1.0
  %v1797 = vadd.f32 %v1789, 1.0
  %v1798 = vrcp.pop %v1790
  %v1799 = vmul.f32 1.0, %v1798
  %v1800 = vrcp.pop %v1791
  %v1801 = vmul.f32 1.0, %v1800
  %v1802 = vrcp.pop %v1792
  %v1803 = vmul.f32 1.0, %v1802
  %v1804 = vrcp.pop %v1793
  %v1805 = vmul.f32 1.0, %v1804
  %v1806 = vrcp.pop %v1794
  %v1807 = vmul.f32 1.0, %v1806
  %v1808 = vrcp.pop %v1795
  %v1809 = vmul.f32 1.0, %v1808
  %v1810 = vrcp.pop %v1796
  %v1811 = vmul.f32 1.0, %v1810
  %v1812 = vrcp.pop %v1797
  %v1813 = vmul.f32 1.0, %v1812
  %v1814 = vmul.f32 %v1758, %v1799
  %v1815 = vmul.f32 %v1759, %v1801
  %v1816 = vmul.f32 %v1760, %v1803
  %v1817 = vmul.f32 %v1761, %v1805
  %v1818 = vmul.f32 %v1762, %v1807
  %v1819 = vmul.f32 %v1763, %v1809
  %v1820 = vmul.f32 %v1764, %v1811
  %v1821 = vmul.f32 %v1765, %v1813
  %v1822 = vadd.f32 %v59, %v1814
  %v1823 = vadd.f32 %v60, %v1815
  %v1824 = vadd.f32 %v61, %v1816
  %v1825 = vadd.f32 %v62, %v1817
  %v1826 = vadd.f32 %v63, %v1818
  %v1827 = vadd.f32 %v64, %v1819
  %v1828 = vadd.f32 %v65, %v1820
  %v1829 = vadd.f32 %v66, %v1821
  %1830 = vst.msk [vmem:[%s17] sm:$0xff] %vm268, %v1822
  %1831 = vst.msk [vmem:[%s17 + $0x8] sm:$0xff] %vm268, %v1823
  %1832 = vst.msk [vmem:[%s17 + $0x10] sm:$0xff] %vm268, %v1824
  %1833 = vst.msk [vmem:[%s17 + $0x18] sm:$0xff] %vm268, %v1825
  %1834 = vst.msk [vmem:[%s17 + $0x20] sm:$0xff] %vm268, %v1826
  %1835 = vst.msk [vmem:[%s17 + $0x28] sm:$0xff] %vm268, %v1827
  %1836 = vst.msk [vmem:[%s17 + $0x30] sm:$0xff] %vm268, %v1828
  %1837 = vst.msk [vmem:[%s17 + $0x38] sm:$0xff] %vm268, %v1829
  // Predicated region
  $region66: #{algnn_forward.7} parent=0 // pred_check
    _
  $region67: #{algnn_forward.7} parent=0 // pred_check_branch
    %1839 = sbr.rel (0) target = $region69
  $region68: #{algnn_forward.7} parent=0 // pred_region
    _
  $region69: #{algnn_forward.7} parent=0 // pred_fallthru
    _
  // Predicated region
  $region70: #{algnn_forward.7} parent=0 // pred_check
    _
  $region71: #{algnn_forward.7} parent=0 // pred_check_branch
    %1841 = sbr.rel (0) target = $region73
  $region72: #{algnn_forward.7} parent=0 // pred_region
    _
  $region73: #{algnn_forward.7} parent=0 // pred_fallthru
    _
  // Predicated region
  $region74: #{algnn_forward.7} parent=0 // pred_check
    _
  $region75: #{algnn_forward.7} parent=0 // pred_check_branch
    %1843 = sbr.rel (0) target = $region77
  $region76: #{algnn_forward.7} parent=0 // pred_region
    _
  $region77: #{algnn_forward.7} parent=0 // pred_fallthru
    _
  // Predicated region
  $region78: #{algnn_forward.7} parent=0 // pred_check
    _
  $region79: #{algnn_forward.7} parent=0 // pred_check_branch
    %1845 = sbr.rel (0) target = $region81
  $region80: #{algnn_forward.7} parent=0 // pred_region
    _
  $region81: #{algnn_forward.7} parent=0 // pred_fallthru
    _

// kernel: algnn_forward.9
$region0: #{algnn_forward.9}
  #allocation0 [shape = 'u32[]', space=smem, size = 0x4, offset = 0x4, fixed_abs, tag = 'smem constant byte address 0x4 - core index']
  #allocation1 [shape = 'u32[144,128]{1,0:T(1,128)}', space=vmem, size = 0x12000, scoped, tag = 'internal scratch']
  %s0 = inlined_call_operand.vmem [shape: s32[64,1], index: 0, kind: input, shape index: {}]
  %s1 = inlined_call_operand.vmem [shape: s32[1,64], index: 1, kind: input, shape index: {}]
  %s2 = inlined_call_operand.vmem [shape: s32[64,1], index: 2, kind: input, shape index: {}]
  %s3 = inlined_call_operand.vmem [shape: s32[1,64], index: 3, kind: input, shape index: {}]
  %s4 = inlined_call_operand.vmem [shape: f32[32,64], index: 4, kind: input, shape index: {}]
  %s5 = inlined_call_operand.vmem [shape: f32[64,64], index: 5, kind: input, shape index: {}]
  %s6 = inlined_call_operand.vmem [shape: f32[64,64], index: 6, kind: input, shape index: {}]
  %s7 = inlined_call_operand.vmem [shape: f32[1,64], index: 7, kind: input, shape index: {}]
  %s8 = inlined_call_operand.vmem [shape: f32[64,64], index: 8, kind: input, shape index: {}]
  %s9 = inlined_call_operand.vmem [shape: f32[1,64], index: 9, kind: input, shape index: {}]
  %s10 = inlined_call_operand.vmem [shape: f32[192,64], index: 10, kind: input, shape index: {}]
  %s11 = inlined_call_operand.vmem [shape: f32[1,64], index: 11, kind: input, shape index: {}]
  %s12 = inlined_call_operand.vmem [shape: f32[1,64], index: 12, kind: input, shape index: {}]
  %s13 = inlined_call_operand.vmem [shape: f32[1,64], index: 13, kind: input, shape index: {}]
  %s14 = inlined_call_operand.vmem [shape: f32[1,64], index: 14, kind: input, shape index: {}]
  %s15 = inlined_call_operand.vmem [shape: f32[1,64], index: 15, kind: input, shape index: {}]
  %s16 = inlined_call_operand.vmem [shape: f32[32,64], index: 16, kind: output, shape index: {0}]
  %s17 = inlined_call_operand.hbm [shape: f32[64,64], index: 17, kind: output, shape index: {1}]
  %18 = xla_tuple %s16, %s17
  %s19 = sld [smem:[#allocation0]]
  $region82: #{algnn_forward.9} parent=0
    _
  %s21 = ssub.s32 1, %s19
  %s22 = scalar_select 0, %s21, %s19
  $region1: #{algnn_forward.9} parent=0
    #allocation2 [shape = 'u8[32768]{0}', space=vmem, size = 0x8000, scoped, tag = 'output window, operand 1, single buffered']
    #allocation3 [shape = 's32[1]{0}', space=sflag, size = 0x4, scoped, tag = 'scoped memory for algnn_forward.9']
    %23 = vsyncpa [#allocation3], 0
    // Predicated region
    $region2: #{algnn_forward.9} parent=1 // pred_check
      _
    $region3: #{algnn_forward.9} parent=1 // pred_check_branch
      %25 = sbr.rel (0) target = $region5
    $region4: #{algnn_forward.9} parent=1 // pred_region
      _
    $region5: #{algnn_forward.9} parent=1 // pred_fallthru
      _
    // Predicated region
    $region6: #{algnn_forward.9} parent=1 // pred_check
      _
    $region7: #{algnn_forward.9} parent=1 // pred_check_branch
      %27 = sbr.rel (0) target = $region9
    $region8: #{algnn_forward.9} parent=1 // pred_region
      _
    $region9: #{algnn_forward.9} parent=1 // pred_fallthru
      _
    // Predicated region
    $region10: #{algnn_forward.9} parent=1 // pred_check
      _
    $region11: #{algnn_forward.9} parent=1 // pred_check_branch
      %29 = sbr.rel (0) target = $region13
    $region12: #{algnn_forward.9} parent=1 // pred_region
      _
    $region13: #{algnn_forward.9} parent=1 // pred_fallthru
      _
    // Predicated region
    $region14: #{algnn_forward.9} parent=1 // pred_check
      _
    $region15: #{algnn_forward.9} parent=1 // pred_check_branch
      %31 = sbr.rel (0) target = $region17
    $region16: #{algnn_forward.9} parent=1 // pred_region
      _
    $region17: #{algnn_forward.9} parent=1 // pred_fallthru
      _
    // Predicated region
    $region18: #{algnn_forward.9} parent=1 // pred_check
      _
    $region19: #{algnn_forward.9} parent=1 // pred_check_branch
      %33 = sbr.rel (0) target = $region21
    $region20: #{algnn_forward.9} parent=1 // pred_region
      _
    $region21: #{algnn_forward.9} parent=1 // pred_fallthru
      _
    // Predicated region
    $region22: #{algnn_forward.9} parent=1 // pred_check
      _
    $region23: #{algnn_forward.9} parent=1 // pred_check_branch
      %35 = sbr.rel (0) target = $region25
    $region24: #{algnn_forward.9} parent=1 // pred_region
      _
    $region25: #{algnn_forward.9} parent=1 // pred_fallthru
      _
    // Predicated region
    $region26: #{algnn_forward.9} parent=1 // pred_check
      _
    $region27: #{algnn_forward.9} parent=1 // pred_check_branch
      %37 = sbr.rel (0) target = $region29
    $region28: #{algnn_forward.9} parent=1 // pred_region
      _
    $region29: #{algnn_forward.9} parent=1 // pred_fallthru
      _
    // Predicated region
    $region30: #{algnn_forward.9} parent=1 // pred_check
      _
    $region31: #{algnn_forward.9} parent=1 // pred_check_branch
      %39 = sbr.rel (0) target = $region33
    $region32: #{algnn_forward.9} parent=1 // pred_region
      _
    $region33: #{algnn_forward.9} parent=1 // pred_fallthru
      _
    // Predicated region
    $region34: #{algnn_forward.9} parent=1 // pred_check
      _
    $region35: #{algnn_forward.9} parent=1 // pred_check_branch
      %41 = sbr.rel (0) target = $region37
    $region36: #{algnn_forward.9} parent=1 // pred_region
      _
    $region37: #{algnn_forward.9} parent=1 // pred_fallthru
      _
    // Predicated region
    $region38: #{algnn_forward.9} parent=1 // pred_check
      _
    $region39: #{algnn_forward.9} parent=1 // pred_check_branch
      %43 = sbr.rel (0) target = $region41
    $region40: #{algnn_forward.9} parent=1 // pred_region
      _
    $region41: #{algnn_forward.9} parent=1 // pred_fallthru
      _
    // Predicated region
    $region42: #{algnn_forward.9} parent=1 // pred_check
      _
    $region43: #{algnn_forward.9} parent=1 // pred_check_branch
      %45 = sbr.rel (0) target = $region45
    $region44: #{algnn_forward.9} parent=1 // pred_region
      _
    $region45: #{algnn_forward.9} parent=1 // pred_fallthru
      _
    // Predicated region
    $region46: #{algnn_forward.9} parent=1 // pred_check
      _
    $region47: #{algnn_forward.9} parent=1 // pred_check_branch
      %47 = sbr.rel (0) target = $region49
    $region48: #{algnn_forward.9} parent=1 // pred_region
      _
    $region49: #{algnn_forward.9} parent=1 // pred_fallthru
      _
    // Predicated region
    $region50: #{algnn_forward.9} parent=1 // pred_check
      _
    $region51: #{algnn_forward.9} parent=1 // pred_check_branch
      %49 = sbr.rel (0) target = $region53
    $region52: #{algnn_forward.9} parent=1 // pred_region
      _
    $region53: #{algnn_forward.9} parent=1 // pred_fallthru
      _
    // Predicated region
    $region54: #{algnn_forward.9} parent=1 // pred_check
      _
    $region55: #{algnn_forward.9} parent=1 // pred_check_branch
      %51 = sbr.rel (0) target = $region57
    $region56: #{algnn_forward.9} parent=1 // pred_region
      _
    $region57: #{algnn_forward.9} parent=1 // pred_fallthru
      _
    // Predicated region
    $region58: #{algnn_forward.9} parent=1 // pred_check
      _
    $region59: #{algnn_forward.9} parent=1 // pred_check_branch
      %53 = sbr.rel (0) target = $region61
    $region60: #{algnn_forward.9} parent=1 // pred_region
      _
    $region61: #{algnn_forward.9} parent=1 // pred_fallthru
      _
    // Predicated region
    $region62: #{algnn_forward.9} parent=1 // pred_check
      _
    $region63: #{algnn_forward.9} parent=1 // pred_check_branch
      %55 = sbr.rel (0) target = $region65
    $region64: #{algnn_forward.9} parent=1 // pred_region
      _
    $region65: #{algnn_forward.9} parent=1 // pred_fallthru
      _
    %v56 = vld [vmem:[%s4] sm:$0xff]
    %v57 = vld [vmem:[%s4 + $0x8] sm:$0xff]
    %v58 = vld [vmem:[%s4 + $0x10] sm:$0xff]
    %v59 = vld [vmem:[%s4 + $0x18] sm:$0xff]
    %v60 = vld [vmem:[%s5] sm:$0xff]
    %v61 = vld [vmem:[%s5 + $0x8] sm:$0xff]
    %v62 = vld [vmem:[%s5 + $0x10] sm:$0xff]
    %v63 = vld [vmem:[%s5 + $0x18] sm:$0xff]
    %v64 = vld [vmem:[%s5 + $0x20] sm:$0xff]
    %v65 = vld [vmem:[%s5 + $0x28] sm:$0xff]
    %v66 = vld [vmem:[%s5 + $0x30] sm:$0xff]
    %v67 = vld [vmem:[%s5 + $0x38] sm:$0xff]
    %v68 = vlaneseq
    %v69 = vand.u32 %v68, 127
    %v70 = vlaneseq
    %v71 = vshrl.u32 %v70, 7
    %v72 = vadd.s32 %v71, 8
    %v73 = vadd.s32 %v71, 16
    %v74 = vadd.s32 %v71, 24
    %v75 = vld [vmem:[%s0] sm:$0xff]
    %v76 = vld [vmem:[%s0 + $0x8] sm:$0xff]
    %v77 = vld [vmem:[%s0 + $0x10] sm:$0xff]
    %v78 = vld [vmem:[%s0 + $0x18] sm:$0xff]
    %v79 = vld [vmem:[%s0 + $0x20] sm:$0xff]
    %v80 = vld [vmem:[%s0 + $0x28] sm:$0xff]
    %v81 = vld [vmem:[%s0 + $0x30] sm:$0xff]
    %v82 = vld [vmem:[%s0 + $0x38] sm:$0xff]
    %83 = vset.pattern.permute.xlu0 0
    %84 = vperm.xlu0 %83, %v75
    %v85 = vpop.permute.xlu0 %84
    %86 = vset.pattern.permute.xlu0 0
    %87 = vperm.xlu0 %86, %v76
    %v88 = vpop.permute.xlu0 %87
    %89 = vset.pattern.permute.xlu0 0
    %90 = vperm.xlu0 %89, %v77
    %v91 = vpop.permute.xlu0 %90
    %92 = vset.pattern.permute.xlu0 0
    %93 = vperm.xlu0 %92, %v78
    %v94 = vpop.permute.xlu0 %93
    %95 = vset.pattern.permute.xlu0 0
    %96 = vperm.xlu0 %95, %v79
    %v97 = vpop.permute.xlu0 %96
    %98 = vset.pattern.permute.xlu0 0
    %99 = vperm.xlu0 %98, %v80
    %v100 = vpop.permute.xlu0 %99
    %101 = vset.pattern.permute.xlu0 0
    %102 = vperm.xlu0 %101, %v81
    %v103 = vpop.permute.xlu0 %102
    %104 = vset.pattern.permute.xlu0 0
    %105 = vperm.xlu0 %104, %v82
    %v106 = vpop.permute.xlu0 %105
    %vm107 = vcmp.eq.s32.totalorder %v69, %v85
    %vm108 = vcmp.eq.s32.totalorder %v69, %v88
    %vm109 = vcmp.eq.s32.totalorder %v69, %v91
    %vm110 = vcmp.eq.s32.totalorder %v69, %v94
    %vm111 = vcmp.eq.s32.totalorder %v69, %v97
    %vm112 = vcmp.eq.s32.totalorder %v69, %v100
    %vm113 = vcmp.eq.s32.totalorder %v69, %v103
    %vm114 = vcmp.eq.s32.totalorder %v69, %v106
    %v115 = vsel %vm107, 1, 0
    %v116 = vsel %vm108, 1, 0
    %v117 = vsel %vm109, 1, 0
    %v118 = vsel %vm110, 1, 0
    %v119 = vsel %vm111, 1, 0
    %v120 = vsel %vm112, 1, 0
    %v121 = vsel %vm113, 1, 0
    %v122 = vsel %vm114, 1, 0
    %v123 = vcvt.s32.f32 %v115
    %v124 = vcvt.s32.f32 %v116
    %v125 = vcvt.s32.f32 %v117
    %v126 = vcvt.s32.f32 %v118
    %v127 = vcvt.s32.f32 %v119
    %v128 = vcvt.s32.f32 %v120
    %v129 = vcvt.s32.f32 %v121
    %v130 = vcvt.s32.f32 %v122
    %v131 = vld [vmem:[%s2] sm:$0xff]
    %v132 = vld [vmem:[%s2 + $0x8] sm:$0xff]
    %v133 = vld [vmem:[%s2 + $0x10] sm:$0xff]
    %v134 = vld [vmem:[%s2 + $0x18] sm:$0xff]
    %v135 = vld [vmem:[%s2 + $0x20] sm:$0xff]
    %v136 = vld [vmem:[%s2 + $0x28] sm:$0xff]
    %v137 = vld [vmem:[%s2 + $0x30] sm:$0xff]
    %v138 = vld [vmem:[%s2 + $0x38] sm:$0xff]
    %139 = vset.pattern.permute.xlu0 0
    %140 = vperm.xlu0 %139, %v131
    %v141 = vpop.permute.xlu0 %140
    %142 = vset.pattern.permute.xlu0 0
    %143 = vperm.xlu0 %142, %v132
    %v144 = vpop.permute.xlu0 %143
    %145 = vset.pattern.permute.xlu0 0
    %146 = vperm.xlu0 %145, %v133
    %v147 = vpop.permute.xlu0 %146
    %148 = vset.pattern.permute.xlu0 0
    %149 = vperm.xlu0 %148, %v134
    %v150 = vpop.permute.xlu0 %149
    %151 = vset.pattern.permute.xlu0 0
    %152 = vperm.xlu0 %151, %v135
    %v153 = vpop.permute.xlu0 %152
    %154 = vset.pattern.permute.xlu0 0
    %155 = vperm.xlu0 %154, %v136
    %v156 = vpop.permute.xlu0 %155
    %157 = vset.pattern.permute.xlu0 0
    %158 = vperm.xlu0 %157, %v137
    %v159 = vpop.permute.xlu0 %158
    %160 = vset.pattern.permute.xlu0 0
    %161 = vperm.xlu0 %160, %v138
    %v162 = vpop.permute.xlu0 %161
    %vm163 = vcmp.eq.s32.totalorder %v69, %v141
    %vm164 = vcmp.eq.s32.totalorder %v69, %v144
    %vm165 = vcmp.eq.s32.totalorder %v69, %v147
    %vm166 = vcmp.eq.s32.totalorder %v69, %v150
    %vm167 = vcmp.eq.s32.totalorder %v69, %v153
    %vm168 = vcmp.eq.s32.totalorder %v69, %v156
    %vm169 = vcmp.eq.s32.totalorder %v69, %v159
    %vm170 = vcmp.eq.s32.totalorder %v69, %v162
    %v171 = vsel %vm163, 1, 0
    %v172 = vsel %vm164, 1, 0
    %v173 = vsel %vm165, 1, 0
    %v174 = vsel %vm166, 1, 0
    %v175 = vsel %vm167, 1, 0
    %v176 = vsel %vm168, 1, 0
    %v177 = vsel %vm169, 1, 0
    %v178 = vsel %vm170, 1, 0
    %v179 = vcvt.s32.f32 %v171
    %v180 = vcvt.s32.f32 %v172
    %v181 = vcvt.s32.f32 %v173
    %v182 = vcvt.s32.f32 %v174
    %v183 = vcvt.s32.f32 %v175
    %v184 = vcvt.s32.f32 %v176
    %v185 = vcvt.s32.f32 %v177
    %v186 = vcvt.s32.f32 %v178
    %v187 = vld [vmem:[%s1] sm:$0x1]
    %v188 = vlaneseq
    %v189 = vshrl.u32 %v188, 7
    %v190 = vsub.s32 0, %v189
    %v191 = vrot.slane %v187, %v190
    %vm192 = vcmp.eq.s32.totalorder %v71, %v191
    %vm193 = vcmp.eq.s32.totalorder %v72, %v191
    %vm194 = vcmp.eq.s32.totalorder %v73, %v191
    %vm195 = vcmp.eq.s32.totalorder %v74, %v191
    %v196 = vsel %vm192, 1, 0
    %v197 = vsel %vm193, 1, 0
    %v198 = vsel %vm194, 1, 0
    %v199 = vsel %vm195, 1, 0
    %v200 = vcvt.s32.f32 %v196
    %v201 = vcvt.s32.f32 %v197
    %v202 = vcvt.s32.f32 %v198
    %v203 = vcvt.s32.f32 %v199
    %v204 = vld [vmem:[%s3] sm:$0x1]
    %v205 = vlaneseq
    %v206 = vshrl.u32 %v205, 7
    %v207 = vsub.s32 0, %v206
    %v208 = vrot.slane %v204, %v207
    %vm209 = vcmp.eq.s32.totalorder %v71, %v208
    %vm210 = vcmp.eq.s32.totalorder %v72, %v208
    %vm211 = vcmp.eq.s32.totalorder %v73, %v208
    %vm212 = vcmp.eq.s32.totalorder %v74, %v208
    %v213 = vsel %vm209, 1, 0
    %v214 = vsel %vm210, 1, 0
    %v215 = vsel %vm211, 1, 0
    %v216 = vsel %vm212, 1, 0
    %v217 = vcvt.s32.f32 %v213
    %v218 = vcvt.s32.f32 %v214
    %v219 = vcvt.s32.f32 %v215
    %v220 = vcvt.s32.f32 %v216
    %v221 = vsub.f32 0.0, %v60
    %v222 = vsub.f32 0.0, %v61
    %v223 = vsub.f32 0.0, %v62
    %v224 = vsub.f32 0.0, %v63
    %v225 = vsub.f32 0.0, %v64
    %v226 = vsub.f32 0.0, %v65
    %v227 = vsub.f32 0.0, %v66
    %v228 = vsub.f32 0.0, %v67
    %v229 = vmul.f32 %v221, 1.442695
    %v230 = vpow.pop %v229
    %v231 = vmul.f32 %v222, 1.442695
    %v232 = vpow.pop %v231
    %v233 = vmul.f32 %v223, 1.442695
    %v234 = vpow.pop %v233
    %v235 = vmul.f32 %v224, 1.442695
    %v236 = vpow.pop %v235
    %v237 = vmul.f32 %v225, 1.442695
    %v238 = vpow.pop %v237
    %v239 = vmul.f32 %v226, 1.442695
    %v240 = vpow.pop %v239
    %v241 = vmul.f32 %v227, 1.442695
    %v242 = vpow.pop %v241
    %v243 = vmul.f32 %v228, 1.442695
    %v244 = vpow.pop %v243
    %v245 = vadd.f32 %v230, 1.0
    %v246 = vadd.f32 %v232, 1.0
    %v247 = vadd.f32 %v234, 1.0
    %v248 = vadd.f32 %v236, 1.0
    %v249 = vadd.f32 %v238, 1.0
    %v250 = vadd.f32 %v240, 1.0
    %v251 = vadd.f32 %v242, 1.0
    %v252 = vadd.f32 %v244, 1.0
    %v253 = vrcp.pop %v245
    %v254 = vmul.f32 1.0, %v253
    %v255 = vrcp.pop %v246
    %v256 = vmul.f32 1.0, %v255
    %v257 = vrcp.pop %v247
    %v258 = vmul.f32 1.0, %v257
    %v259 = vrcp.pop %v248
    %v260 = vmul.f32 1.0, %v259
    %v261 = vrcp.pop %v249
    %v262 = vmul.f32 1.0, %v261
    %v263 = vrcp.pop %v250
    %v264 = vmul.f32 1.0, %v263
    %v265 = vrcp.pop %v251
    %v266 = vmul.f32 1.0, %v265
    %v267 = vrcp.pop %v252
    %v268 = vmul.f32 1.0, %v267
    %vm269 = vcmask 523264
    %v271 = vsel %vm269, %v200, 0
    %v274 = vsel %vm269, %v201, 0
    %v277 = vsel %vm269, %v202, 0
    %v280 = vsel %vm269, %v203, 0
    %282 = vmatprep.subr.mxu0 0.0
    %283 = vmatpush1.msra.mxu0 0.0
    %284 = vmatprep.subr.mxu0 0.0
    %285 = vmatpush1.msra.mxu0 0.0
    %286 = vmatprep.subr.mxu0 0.0
    %287 = vmatpush1.msra.mxu0 0.0
    %288 = vmatprep.subr.mxu0 0.0
    %289 = vmatpush1.msra.mxu0 0.0
    %290 = vmatprep.subr.mxu0 0.0
    %291 = vmatpush1.msra.mxu0 0.0
    %292 = vmatprep.subr.mxu0 0.0
    %293 = vmatpush1.msra.mxu0 0.0
    %294 = vmatprep.subr.mxu0 0.0
    %295 = vmatpush1.msra.mxu0 0.0
    %296 = vmatprep.subr.mxu0 0.0
    %297 = vmatpush1.msra.mxu0 0.0
    %298 = vmatprep.subr.mxu0 0.0
    %299 = vmatpush1.msra.mxu0 %v268
    %300 = vmatprep.subr.mxu0 0.0
    %301 = vmatpush1.msra.mxu0 %v266
    %302 = vmatprep.subr.mxu0 0.0
    %303 = vmatpush1.msra.mxu0 %v264
    %304 = vmatprep.subr.mxu0 0.0
    %305 = vmatpush1.msra.mxu0 %v262
    %306 = vmatprep.subr.mxu0 0.0
    %307 = vmatpush1.msra.mxu0 %v260
    %308 = vmatprep.subr.mxu0 0.0
    %309 = vmatpush1.msra.mxu0 %v258
    %310 = vmatprep.subr.mxu0 0.0
    %311 = vmatpush1.msra.mxu0 %v256
    %312 = vmatprep.subr.mxu0 0.0
    %313 = vmatpush1.msra.mxu0 %v254
    %314 = vmatprep.subr.mxu0 0.0
    %315 = vmatpush2.msra.mxu0 0.0
    %316 = vmatprep.subr.mxu0 0.0
    %317 = vmatpush2.msra.mxu0 0.0
    %318 = vmatprep.subr.mxu0 0.0
    %319 = vmatpush2.msra.mxu0 0.0
    %320 = vmatprep.subr.mxu0 0.0
    %321 = vmatpush2.msra.mxu0 0.0
    %322 = vmatprep.subr.mxu0 0.0
    %323 = vmatpush2.msra.mxu0 0.0
    %324 = vmatprep.subr.mxu0 0.0
    %325 = vmatpush2.msra.mxu0 0.0
    %326 = vmatprep.subr.mxu0 0.0
    %327 = vmatpush2.msra.mxu0 0.0
    %328 = vmatprep.subr.mxu0 0.0
    %329 = vmatpush2.msra.mxu0 0.0
    %330 = vmatprep.subr.mxu0 0.0
    %331 = vmatpush2.msra.mxu0 0.0
    %332 = vmatprep.subr.mxu0 0.0
    %333 = vmatpush2.msra.mxu0 0.0
    %334 = vmatprep.subr.mxu0 0.0
    %335 = vmatpush2.msra.mxu0 0.0
    %336 = vmatprep.subr.mxu0 0.0
    %337 = vmatpush2.msra.mxu0 0.0
    %338 = vmatprep.subr.mxu0 0.0
    %339 = vmatpush2.msra.mxu0 0.0
    %340 = vmatprep.subr.mxu0 0.0
    %341 = vmatpush2.msra.mxu0 0.0
    %342 = vmatprep.subr.mxu0 0.0
    %343 = vmatpush2.msra.mxu0 0.0
    %344 = vmatprep.subr.mxu0 0.0
    %345 = vmatpush2.msra.mxu0 0.0
    %346 = vmatprep.mubr.f32.mxu0 0.0
    %347 = vmatmul.mubr.f32.gmra.mxu0 %v271
    %v348 = vpop.f32.mrf.mxu0
    %v349 = vadd.f32 0.0, %v348
    %v350 = vpop.f32.mrf.mxu0
    %351 = vmatprep.mubr.f32.mxu0 0.0
    %352 = vmatmul.mubr.f32.gmra.mxu0 %v274
    %v353 = vpop.f32.mrf.mxu0
    %v354 = vadd.f32 0.0, %v353
    %v355 = vpop.f32.mrf.mxu0
    %356 = vmatprep.mubr.f32.mxu0 0.0
    %357 = vmatmul.mubr.f32.gmra.mxu0 %v277
    %v358 = vpop.f32.mrf.mxu0
    %v359 = vadd.f32 0.0, %v358
    %v360 = vpop.f32.mrf.mxu0
    %361 = vmatprep.mubr.f32.mxu0 0.0
    %362 = vmatmul.mubr.f32.gmra.mxu0 %v280
    %v363 = vpop.f32.mrf.mxu0
    %v364 = vadd.f32 0.0, %v363
    %v365 = vpop.f32.mrf.mxu0
    %366 = vdwg.mxu0
    %vm367 = vcmask 261120
    %v369 = vsel %vm367, %v123, 0
    %v372 = vsel %vm367, %v124, 0
    %v375 = vsel %vm367, %v125, 0
    %v378 = vsel %vm367, %v126, 0
    %v381 = vsel %vm367, %v127, 0
    %v384 = vsel %vm367, %v128, 0
    %v387 = vsel %vm367, %v129, 0
    %v390 = vsel %vm367, %v130, 0
    %392 = vmatprep.subr.mxu0 0.0
    %393 = vmatpush1.msra.mxu0 0.0
    %394 = vmatprep.subr.mxu0 0.0
    %395 = vmatpush1.msra.mxu0 0.0
    %396 = vmatprep.subr.mxu0 0.0
    %397 = vmatpush1.msra.mxu0 0.0
    %398 = vmatprep.subr.mxu0 0.0
    %399 = vmatpush1.msra.mxu0 0.0
    %400 = vmatprep.subr.mxu0 0.0
    %401 = vmatpush1.msra.mxu0 0.0
    %402 = vmatprep.subr.mxu0 0.0
    %403 = vmatpush1.msra.mxu0 0.0
    %404 = vmatprep.subr.mxu0 0.0
    %405 = vmatpush1.msra.mxu0 0.0
    %406 = vmatprep.subr.mxu0 0.0
    %407 = vmatpush1.msra.mxu0 0.0
    %408 = vmatprep.subr.mxu0 0.0
    %409 = vmatpush1.msra.mxu0 0.0
    %410 = vmatprep.subr.mxu0 0.0
    %411 = vmatpush1.msra.mxu0 0.0
    %412 = vmatprep.subr.mxu0 0.0
    %413 = vmatpush1.msra.mxu0 0.0
    %414 = vmatprep.subr.mxu0 0.0
    %415 = vmatpush1.msra.mxu0 0.0
    %416 = vmatprep.subr.mxu0 0.0
    %417 = vmatpush1.msra.mxu0 %v364
    %418 = vmatprep.subr.mxu0 0.0
    %419 = vmatpush1.msra.mxu0 %v359
    %420 = vmatprep.subr.mxu0 0.0
    %421 = vmatpush1.msra.mxu0 %v354
    %422 = vmatprep.subr.mxu0 0.0
    %423 = vmatpush1.msra.mxu0 %v349
    %424 = vmatprep.subr.mxu0 0.0
    %425 = vmatpush2.msra.mxu0 0.0
    %426 = vmatprep.subr.mxu0 0.0
    %427 = vmatpush2.msra.mxu0 0.0
    %428 = vmatprep.subr.mxu0 0.0
    %429 = vmatpush2.msra.mxu0 0.0
    %430 = vmatprep.subr.mxu0 0.0
    %431 = vmatpush2.msra.mxu0 0.0
    %432 = vmatprep.subr.mxu0 0.0
    %433 = vmatpush2.msra.mxu0 0.0
    %434 = vmatprep.subr.mxu0 0.0
    %435 = vmatpush2.msra.mxu0 0.0
    %436 = vmatprep.subr.mxu0 0.0
    %437 = vmatpush2.msra.mxu0 0.0
    %438 = vmatprep.subr.mxu0 0.0
    %439 = vmatpush2.msra.mxu0 0.0
    %440 = vmatprep.subr.mxu0 0.0
    %441 = vmatpush2.msra.mxu0 0.0
    %442 = vmatprep.subr.mxu0 0.0
    %443 = vmatpush2.msra.mxu0 0.0
    %444 = vmatprep.subr.mxu0 0.0
    %445 = vmatpush2.msra.mxu0 0.0
    %446 = vmatprep.subr.mxu0 0.0
    %447 = vmatpush2.msra.mxu0 0.0
    %448 = vmatprep.subr.mxu0 0.0
    %449 = vmatpush2.msra.mxu0 0.0
    %450 = vmatprep.subr.mxu0 0.0
    %451 = vmatpush2.msra.mxu0 0.0
    %452 = vmatprep.subr.mxu0 0.0
    %453 = vmatpush2.msra.mxu0 0.0
    %454 = vmatprep.subr.mxu0 0.0
    %455 = vmatpush2.msra.mxu0 0.0
    %456 = vmatprep.mubr.f32.mxu0 0.0
    %457 = vmatmul.mubr.f32.gmra.mxu0 %v369
    %v458 = vpop.f32.mrf.mxu0
    %v459 = vadd.f32 1e-05, %v458
    %v460 = vpop.f32.mrf.mxu0
    %461 = vmatprep.mubr.f32.mxu0 0.0
    %462 = vmatmul.mubr.f32.gmra.mxu0 %v372
    %v463 = vpop.f32.mrf.mxu0
    %v464 = vadd.f32 1e-05, %v463
    %v465 = vpop.f32.mrf.mxu0
    %466 = vmatprep.mubr.f32.mxu0 0.0
    %467 = vmatmul.mubr.f32.gmra.mxu0 %v375
    %v468 = vpop.f32.mrf.mxu0
    %v469 = vadd.f32 1e-05, %v468
    %v470 = vpop.f32.mrf.mxu0
    %471 = vmatprep.mubr.f32.mxu0 0.0
    %472 = vmatmul.mubr.f32.gmra.mxu0 %v378
    %v473 = vpop.f32.mrf.mxu0
    %v474 = vadd.f32 1e-05, %v473
    %v475 = vpop.f32.mrf.mxu0
    %476 = vmatprep.mubr.f32.mxu0 0.0
    %477 = vmatmul.mubr.f32.gmra.mxu0 %v381
    %v478 = vpop.f32.mrf.mxu0
    %v479 = vadd.f32 1e-05, %v478
    %v480 = vpop.f32.mrf.mxu0
    %481 = vmatprep.mubr.f32.mxu0 0.0
    %482 = vmatmul.mubr.f32.gmra.mxu0 %v384
    %v483 = vpop.f32.mrf.mxu0
    %v484 = vadd.f32 1e-05, %v483
    %v485 = vpop.f32.mrf.mxu0
    %486 = vmatprep.mubr.f32.mxu0 0.0
    %487 = vmatmul.mubr.f32.gmra.mxu0 %v387
    %v488 = vpop.f32.mrf.mxu0
    %v489 = vadd.f32 1e-05, %v488
    %v490 = vpop.f32.mrf.mxu0
    %491 = vmatprep.mubr.f32.mxu0 0.0
    %492 = vmatmul.mubr.f32.gmra.mxu0 %v390
    %v493 = vpop.f32.mrf.mxu0
    %v494 = vadd.f32 1e-05, %v493
    %v495 = vpop.f32.mrf.mxu0
    %496 = vdwg.mxu0
    %v497 = vrcp.pop %v459
    %v498 = vrcp.pop %v464
    %v499 = vrcp.pop %v469
    %v500 = vrcp.pop %v474
    %v501 = vrcp.pop %v479
    %v502 = vrcp.pop %v484
    %v503 = vrcp.pop %v489
    %v504 = vrcp.pop %v494
    %v505 = vmul.f32 %v254, %v497
    %v506 = vmul.f32 %v256, %v498
    %v507 = vmul.f32 %v258, %v499
    %v508 = vmul.f32 %v260, %v500
    %v509 = vmul.f32 %v262, %v501
    %v510 = vmul.f32 %v264, %v502
    %v511 = vmul.f32 %v266, %v503
    %v512 = vmul.f32 %v268, %v504
    %513 = vmatprep.subr.mxu0 0.0
    %514 = vmatpush1.msra.mxu0 0.0
    %515 = vmatprep.subr.mxu0 0.0
    %516 = vmatpush1.msra.mxu0 0.0
    %517 = vmatprep.subr.mxu0 0.0
    %518 = vmatpush1.msra.mxu0 0.0
    %519 = vmatprep.subr.mxu0 0.0
    %520 = vmatpush1.msra.mxu0 0.0
    %521 = vmatprep.subr.mxu0 0.0
    %522 = vmatpush1.msra.mxu0 0.0
    %523 = vmatprep.subr.mxu0 0.0
    %524 = vmatpush1.msra.mxu0 0.0
    %525 = vmatprep.subr.mxu0 0.0
    %526 = vmatpush1.msra.mxu0 0.0
    %527 = vmatprep.subr.mxu0 0.0
    %528 = vmatpush1.msra.mxu0 0.0
    %529 = vmatprep.subr.mxu0 0.0
    %530 = vmatpush1.msra.mxu0 0.0
    %531 = vmatprep.subr.mxu0 0.0
    %532 = vmatpush1.msra.mxu0 0.0
    %533 = vmatprep.subr.mxu0 0.0
    %534 = vmatpush1.msra.mxu0 0.0
    %535 = vmatprep.subr.mxu0 0.0
    %536 = vmatpush1.msra.mxu0 0.0
    %537 = vmatprep.subr.mxu0 0.0
    %538 = vmatpush1.msra.mxu0 %v59
    %539 = vmatprep.subr.mxu0 0.0
    %540 = vmatpush1.msra.mxu0 %v58
    %541 = vmatprep.subr.mxu0 0.0
    %542 = vmatpush1.msra.mxu0 %v57
    %543 = vmatprep.subr.mxu0 0.0
    %544 = vmatpush1.msra.mxu0 %v56
    %545 = vmatprep.subr.mxu0 0.0
    %546 = vmatpush2.msra.mxu0 0.0
    %547 = vmatprep.subr.mxu0 0.0
    %548 = vmatpush2.msra.mxu0 0.0
    %549 = vmatprep.subr.mxu0 0.0
    %550 = vmatpush2.msra.mxu0 0.0
    %551 = vmatprep.subr.mxu0 0.0
    %552 = vmatpush2.msra.mxu0 0.0
    %553 = vmatprep.subr.mxu0 0.0
    %554 = vmatpush2.msra.mxu0 0.0
    %555 = vmatprep.subr.mxu0 0.0
    %556 = vmatpush2.msra.mxu0 0.0
    %557 = vmatprep.subr.mxu0 0.0
    %558 = vmatpush2.msra.mxu0 0.0
    %559 = vmatprep.subr.mxu0 0.0
    %560 = vmatpush2.msra.mxu0 0.0
    %561 = vmatprep.subr.mxu0 0.0
    %562 = vmatpush2.msra.mxu0 0.0
    %563 = vmatprep.subr.mxu0 0.0
    %564 = vmatpush2.msra.mxu0 0.0
    %565 = vmatprep.subr.mxu0 0.0
    %566 = vmatpush2.msra.mxu0 0.0
    %567 = vmatprep.subr.mxu0 0.0
    %568 = vmatpush2.msra.mxu0 0.0
    %569 = vmatprep.subr.mxu0 0.0
    %570 = vmatpush2.msra.mxu0 0.0
    %571 = vmatprep.subr.mxu0 0.0
    %572 = vmatpush2.msra.mxu0 0.0
    %573 = vmatprep.subr.mxu0 0.0
    %574 = vmatpush2.msra.mxu0 0.0
    %575 = vmatprep.subr.mxu0 0.0
    %576 = vmatpush2.msra.mxu0 0.0
    %577 = vmatprep.mubr.f32.mxu0 0.0
    %578 = vmatmul.mubr.f32.gmra.mxu0 %v369
    %v579 = vpop.f32.mrf.mxu0
    %v580 = vadd.f32 0.0, %v579
    %v581 = vpop.f32.mrf.mxu0
    %582 = vmatprep.mubr.f32.mxu0 0.0
    %583 = vmatmul.mubr.f32.gmra.mxu0 %v372
    %v584 = vpop.f32.mrf.mxu0
    %v585 = vadd.f32 0.0, %v584
    %v586 = vpop.f32.mrf.mxu0
    %587 = vmatprep.mubr.f32.mxu0 0.0
    %588 = vmatmul.mubr.f32.gmra.mxu0 %v375
    %v589 = vpop.f32.mrf.mxu0
    %v590 = vadd.f32 0.0, %v589
    %v591 = vpop.f32.mrf.mxu0
    %592 = vmatprep.mubr.f32.mxu0 0.0
    %593 = vmatmul.mubr.f32.gmra.mxu0 %v378
    %v594 = vpop.f32.mrf.mxu0
    %v595 = vadd.f32 0.0, %v594
    %v596 = vpop.f32.mrf.mxu0
    %597 = vmatprep.mubr.f32.mxu0 0.0
    %598 = vmatmul.mubr.f32.gmra.mxu0 %v381
    %v599 = vpop.f32.mrf.mxu0
    %v600 = vadd.f32 0.0, %v599
    %v601 = vpop.f32.mrf.mxu0
    %602 = vmatprep.mubr.f32.mxu0 0.0
    %603 = vmatmul.mubr.f32.gmra.mxu0 %v384
    %v604 = vpop.f32.mrf.mxu0
    %v605 = vadd.f32 0.0, %v604
    %v606 = vpop.f32.mrf.mxu0
    %607 = vmatprep.mubr.f32.mxu0 0.0
    %608 = vmatmul.mubr.f32.gmra.mxu0 %v387
    %v609 = vpop.f32.mrf.mxu0
    %v610 = vadd.f32 0.0, %v609
    %v611 = vpop.f32.mrf.mxu0
    %612 = vmatprep.mubr.f32.mxu0 0.0
    %613 = vmatmul.mubr.f32.gmra.mxu0 %v390
    %v614 = vpop.f32.mrf.mxu0
    %v615 = vadd.f32 0.0, %v614
    %v616 = vpop.f32.mrf.mxu0
    %617 = vdwg.mxu0
    %v618 = vld [vmem:[%s8] sm:$0xff]
    %v619 = vld [vmem:[%s8 + $0x8] sm:$0xff]
    %v620 = vld [vmem:[%s8 + $0x10] sm:$0xff]
    %v621 = vld [vmem:[%s8 + $0x18] sm:$0xff]
    %v622 = vld [vmem:[%s8 + $0x20] sm:$0xff]
    %v623 = vld [vmem:[%s8 + $0x28] sm:$0xff]
    %v624 = vld [vmem:[%s8 + $0x30] sm:$0xff]
    %v625 = vld [vmem:[%s8 + $0x38] sm:$0xff]
    %v626 = vld [vmem:[%s9] sm:$0x1]
    %v628 = vlaneseq
    %v629 = vshrl.u32 %v628, 7
    %v630 = vsub.s32 0, %v629
    %v631 = vrot.slane %v626, %v630
    %v634 = vsel %vm269, %v580, 0
    %v637 = vsel %vm269, %v585, 0
    %v640 = vsel %vm269, %v590, 0
    %v643 = vsel %vm269, %v595, 0
    %v646 = vsel %vm269, %v600, 0
    %v649 = vsel %vm269, %v605, 0
    %v652 = vsel %vm269, %v610, 0
    %v655 = vsel %vm269, %v615, 0
    %657 = vmatprep.subr.mxu0 0.0
    %658 = vmatpush1.msra.mxu0 0.0
    %659 = vmatprep.subr.mxu0 0.0
    %660 = vmatpush1.msra.mxu0 0.0
    %661 = vmatprep.subr.mxu0 0.0
    %662 = vmatpush1.msra.mxu0 0.0
    %663 = vmatprep.subr.mxu0 0.0
    %664 = vmatpush1.msra.mxu0 0.0
    %665 = vmatprep.subr.mxu0 0.0
    %666 = vmatpush1.msra.mxu0 0.0
    %667 = vmatprep.subr.mxu0 0.0
    %668 = vmatpush1.msra.mxu0 0.0
    %669 = vmatprep.subr.mxu0 0.0
    %670 = vmatpush1.msra.mxu0 0.0
    %671 = vmatprep.subr.mxu0 0.0
    %672 = vmatpush1.msra.mxu0 0.0
    %673 = vmatprep.subr.mxu0 0.0
    %674 = vmatpush1.msra.mxu0 %v625
    %675 = vmatprep.subr.mxu0 0.0
    %676 = vmatpush1.msra.mxu0 %v624
    %677 = vmatprep.subr.mxu0 0.0
    %678 = vmatpush1.msra.mxu0 %v623
    %679 = vmatprep.subr.mxu0 0.0
    %680 = vmatpush1.msra.mxu0 %v622
    %681 = vmatprep.subr.mxu0 0.0
    %682 = vmatpush1.msra.mxu0 %v621
    %683 = vmatprep.subr.mxu0 0.0
    %684 = vmatpush1.msra.mxu0 %v620
    %685 = vmatprep.subr.mxu0 0.0
    %686 = vmatpush1.msra.mxu0 %v619
    %687 = vmatprep.subr.mxu0 0.0
    %688 = vmatpush1.msra.mxu0 %v618
    %689 = vmatprep.subr.mxu0 0.0
    %690 = vmatpush2.msra.mxu0 0.0
    %691 = vmatprep.subr.mxu0 0.0
    %692 = vmatpush2.msra.mxu0 0.0
    %693 = vmatprep.subr.mxu0 0.0
    %694 = vmatpush2.msra.mxu0 0.0
    %695 = vmatprep.subr.mxu0 0.0
    %696 = vmatpush2.msra.mxu0 0.0
    %697 = vmatprep.subr.mxu0 0.0
    %698 = vmatpush2.msra.mxu0 0.0
    %699 = vmatprep.subr.mxu0 0.0
    %700 = vmatpush2.msra.mxu0 0.0
    %701 = vmatprep.subr.mxu0 0.0
    %702 = vmatpush2.msra.mxu0 0.0
    %703 = vmatprep.subr.mxu0 0.0
    %704 = vmatpush2.msra.mxu0 0.0
    %705 = vmatprep.subr.mxu0 0.0
    %706 = vmatpush2.msra.mxu0 0.0
    %707 = vmatprep.subr.mxu0 0.0
    %708 = vmatpush2.msra.mxu0 0.0
    %709 = vmatprep.subr.mxu0 0.0
    %710 = vmatpush2.msra.mxu0 0.0
    %711 = vmatprep.subr.mxu0 0.0
    %712 = vmatpush2.msra.mxu0 0.0
    %713 = vmatprep.subr.mxu0 0.0
    %714 = vmatpush2.msra.mxu0 0.0
    %715 = vmatprep.subr.mxu0 0.0
    %716 = vmatpush2.msra.mxu0 0.0
    %717 = vmatprep.subr.mxu0 0.0
    %718 = vmatpush2.msra.mxu0 0.0
    %719 = vmatprep.subr.mxu0 0.0
    %720 = vmatpush2.msra.mxu0 0.0
    %721 = vmatprep.mubr.f32.mxu0 0.0
    %722 = vmatmul.mubr.f32.gmra.mxu0 %v634
    %v723 = vpop.f32.mrf.mxu0
    %v724 = vadd.f32 %v631, %v723
    %v725 = vpop.f32.mrf.mxu0
    %726 = vmatprep.mubr.f32.mxu0 0.0
    %727 = vmatmul.mubr.f32.gmra.mxu0 %v637
    %v728 = vpop.f32.mrf.mxu0
    %v729 = vadd.f32 %v631, %v728
    %v730 = vpop.f32.mrf.mxu0
    %731 = vmatprep.mubr.f32.mxu0 0.0
    %732 = vmatmul.mubr.f32.gmra.mxu0 %v640
    %v733 = vpop.f32.mrf.mxu0
    %v734 = vadd.f32 %v631, %v733
    %v735 = vpop.f32.mrf.mxu0
    %736 = vmatprep.mubr.f32.mxu0 0.0
    %737 = vmatmul.mubr.f32.gmra.mxu0 %v643
    %v738 = vpop.f32.mrf.mxu0
    %v739 = vadd.f32 %v631, %v738
    %v740 = vpop.f32.mrf.mxu0
    %741 = vmatprep.mubr.f32.mxu0 0.0
    %742 = vmatmul.mubr.f32.gmra.mxu0 %v646
    %v743 = vpop.f32.mrf.mxu0
    %v744 = vadd.f32 %v631, %v743
    %v745 = vpop.f32.mrf.mxu0
    %746 = vmatprep.mubr.f32.mxu0 0.0
    %747 = vmatmul.mubr.f32.gmra.mxu0 %v649
    %v748 = vpop.f32.mrf.mxu0
    %v749 = vadd.f32 %v631, %v748
    %v750 = vpop.f32.mrf.mxu0
    %751 = vmatprep.mubr.f32.mxu0 0.0
    %752 = vmatmul.mubr.f32.gmra.mxu0 %v652
    %v753 = vpop.f32.mrf.mxu0
    %v754 = vadd.f32 %v631, %v753
    %v755 = vpop.f32.mrf.mxu0
    %756 = vmatprep.mubr.f32.mxu0 0.0
    %757 = vmatmul.mubr.f32.gmra.mxu0 %v655
    %v758 = vpop.f32.mrf.mxu0
    %v759 = vadd.f32 %v631, %v758
    %v760 = vpop.f32.mrf.mxu0
    %761 = vdwg.mxu0
    %v762 = vmul.f32 %v505, %v724
    %v763 = vmul.f32 %v506, %v729
    %v764 = vmul.f32 %v507, %v734
    %v765 = vmul.f32 %v508, %v739
    %v766 = vmul.f32 %v509, %v744
    %v767 = vmul.f32 %v510, %v749
    %v768 = vmul.f32 %v511, %v754
    %v769 = vmul.f32 %v512, %v759
    %v771 = vsel %vm269, %v217, 0
    %v774 = vsel %vm269, %v218, 0
    %v777 = vsel %vm269, %v219, 0
    %v780 = vsel %vm269, %v220, 0
    %782 = vmatprep.subr.mxu0 0.0
    %783 = vmatpush1.msra.mxu0 0.0
    %784 = vmatprep.subr.mxu0 0.0
    %785 = vmatpush1.msra.mxu0 0.0
    %786 = vmatprep.subr.mxu0 0.0
    %787 = vmatpush1.msra.mxu0 0.0
    %788 = vmatprep.subr.mxu0 0.0
    %789 = vmatpush1.msra.mxu0 0.0
    %790 = vmatprep.subr.mxu0 0.0
    %791 = vmatpush1.msra.mxu0 0.0
    %792 = vmatprep.subr.mxu0 0.0
    %793 = vmatpush1.msra.mxu0 0.0
    %794 = vmatprep.subr.mxu0 0.0
    %795 = vmatpush1.msra.mxu0 0.0
    %796 = vmatprep.subr.mxu0 0.0
    %797 = vmatpush1.msra.mxu0 0.0
    %798 = vmatprep.subr.mxu0 0.0
    %799 = vmatpush1.msra.mxu0 %v769
    %800 = vmatprep.subr.mxu0 0.0
    %801 = vmatpush1.msra.mxu0 %v768
    %802 = vmatprep.subr.mxu0 0.0
    %803 = vmatpush1.msra.mxu0 %v767
    %804 = vmatprep.subr.mxu0 0.0
    %805 = vmatpush1.msra.mxu0 %v766
    %806 = vmatprep.subr.mxu0 0.0
    %807 = vmatpush1.msra.mxu0 %v765
    %808 = vmatprep.subr.mxu0 0.0
    %809 = vmatpush1.msra.mxu0 %v764
    %810 = vmatprep.subr.mxu0 0.0
    %811 = vmatpush1.msra.mxu0 %v763
    %812 = vmatprep.subr.mxu0 0.0
    %813 = vmatpush1.msra.mxu0 %v762
    %814 = vmatprep.subr.mxu0 0.0
    %815 = vmatpush2.msra.mxu0 0.0
    %816 = vmatprep.subr.mxu0 0.0
    %817 = vmatpush2.msra.mxu0 0.0
    %818 = vmatprep.subr.mxu0 0.0
    %819 = vmatpush2.msra.mxu0 0.0
    %820 = vmatprep.subr.mxu0 0.0
    %821 = vmatpush2.msra.mxu0 0.0
    %822 = vmatprep.subr.mxu0 0.0
    %823 = vmatpush2.msra.mxu0 0.0
    %824 = vmatprep.subr.mxu0 0.0
    %825 = vmatpush2.msra.mxu0 0.0
    %826 = vmatprep.subr.mxu0 0.0
    %827 = vmatpush2.msra.mxu0 0.0
    %828 = vmatprep.subr.mxu0 0.0
    %829 = vmatpush2.msra.mxu0 0.0
    %830 = vmatprep.subr.mxu0 0.0
    %831 = vmatpush2.msra.mxu0 0.0
    %832 = vmatprep.subr.mxu0 0.0
    %833 = vmatpush2.msra.mxu0 0.0
    %834 = vmatprep.subr.mxu0 0.0
    %835 = vmatpush2.msra.mxu0 0.0
    %836 = vmatprep.subr.mxu0 0.0
    %837 = vmatpush2.msra.mxu0 0.0
    %838 = vmatprep.subr.mxu0 0.0
    %839 = vmatpush2.msra.mxu0 0.0
    %840 = vmatprep.subr.mxu0 0.0
    %841 = vmatpush2.msra.mxu0 0.0
    %842 = vmatprep.subr.mxu0 0.0
    %843 = vmatpush2.msra.mxu0 0.0
    %844 = vmatprep.subr.mxu0 0.0
    %845 = vmatpush2.msra.mxu0 0.0
    %846 = vmatprep.mubr.f32.mxu0 0.0
    %847 = vmatmul.mubr.f32.gmra.mxu0 %v771
    %v848 = vpop.f32.mrf.mxu0
    %v849 = vadd.f32 0.0, %v848
    %v850 = vpop.f32.mrf.mxu0
    %851 = vmatprep.mubr.f32.mxu0 0.0
    %852 = vmatmul.mubr.f32.gmra.mxu0 %v774
    %v853 = vpop.f32.mrf.mxu0
    %v854 = vadd.f32 0.0, %v853
    %v855 = vpop.f32.mrf.mxu0
    %856 = vmatprep.mubr.f32.mxu0 0.0
    %857 = vmatmul.mubr.f32.gmra.mxu0 %v777
    %v858 = vpop.f32.mrf.mxu0
    %v859 = vadd.f32 0.0, %v858
    %v860 = vpop.f32.mrf.mxu0
    %861 = vmatprep.mubr.f32.mxu0 0.0
    %862 = vmatmul.mubr.f32.gmra.mxu0 %v780
    %v863 = vpop.f32.mrf.mxu0
    %v864 = vadd.f32 0.0, %v863
    %v865 = vpop.f32.mrf.mxu0
    %866 = vdwg.mxu0
    %v867 = vld [vmem:[%s6] sm:$0xff]
    %v868 = vld [vmem:[%s6 + $0x8] sm:$0xff]
    %v869 = vld [vmem:[%s6 + $0x10] sm:$0xff]
    %v870 = vld [vmem:[%s6 + $0x18] sm:$0xff]
    %v871 = vld [vmem:[%s6 + $0x20] sm:$0xff]
    %v872 = vld [vmem:[%s6 + $0x28] sm:$0xff]
    %v873 = vld [vmem:[%s6 + $0x30] sm:$0xff]
    %v874 = vld [vmem:[%s6 + $0x38] sm:$0xff]
    %v875 = vld [vmem:[%s7] sm:$0x1]
    %v877 = vlaneseq
    %v878 = vshrl.u32 %v877, 7
    %v879 = vsub.s32 0, %v878
    %v880 = vrot.slane %v875, %v879
    %v883 = vsel %vm269, %v56, 0
    %v886 = vsel %vm269, %v57, 0
    %v889 = vsel %vm269, %v58, 0
    %v892 = vsel %vm269, %v59, 0
    %894 = vmatprep.subr.mxu0 0.0
    %895 = vmatpush1.msra.mxu0 0.0
    %896 = vmatprep.subr.mxu0 0.0
    %897 = vmatpush1.msra.mxu0 0.0
    %898 = vmatprep.subr.mxu0 0.0
    %899 = vmatpush1.msra.mxu0 0.0
    %900 = vmatprep.subr.mxu0 0.0
    %901 = vmatpush1.msra.mxu0 0.0
    %902 = vmatprep.subr.mxu0 0.0
    %903 = vmatpush1.msra.mxu0 0.0
    %904 = vmatprep.subr.mxu0 0.0
    %905 = vmatpush1.msra.mxu0 0.0
    %906 = vmatprep.subr.mxu0 0.0
    %907 = vmatpush1.msra.mxu0 0.0
    %908 = vmatprep.subr.mxu0 0.0
    %909 = vmatpush1.msra.mxu0 0.0
    %910 = vmatprep.subr.mxu0 0.0
    %911 = vmatpush1.msra.mxu0 %v874
    %912 = vmatprep.subr.mxu0 0.0
    %913 = vmatpush1.msra.mxu0 %v873
    %914 = vmatprep.subr.mxu0 0.0
    %915 = vmatpush1.msra.mxu0 %v872
    %916 = vmatprep.subr.mxu0 0.0
    %917 = vmatpush1.msra.mxu0 %v871
    %918 = vmatprep.subr.mxu0 0.0
    %919 = vmatpush1.msra.mxu0 %v870
    %920 = vmatprep.subr.mxu0 0.0
    %921 = vmatpush1.msra.mxu0 %v869
    %922 = vmatprep.subr.mxu0 0.0
    %923 = vmatpush1.msra.mxu0 %v868
    %924 = vmatprep.subr.mxu0 0.0
    %925 = vmatpush1.msra.mxu0 %v867
    %926 = vmatprep.subr.mxu0 0.0
    %927 = vmatpush2.msra.mxu0 0.0
    %928 = vmatprep.subr.mxu0 0.0
    %929 = vmatpush2.msra.mxu0 0.0
    %930 = vmatprep.subr.mxu0 0.0
    %931 = vmatpush2.msra.mxu0 0.0
    %932 = vmatprep.subr.mxu0 0.0
    %933 = vmatpush2.msra.mxu0 0.0
    %934 = vmatprep.subr.mxu0 0.0
    %935 = vmatpush2.msra.mxu0 0.0
    %936 = vmatprep.subr.mxu0 0.0
    %937 = vmatpush2.msra.mxu0 0.0
    %938 = vmatprep.subr.mxu0 0.0
    %939 = vmatpush2.msra.mxu0 0.0
    %940 = vmatprep.subr.mxu0 0.0
    %941 = vmatpush2.msra.mxu0 0.0
    %942 = vmatprep.subr.mxu0 0.0
    %943 = vmatpush2.msra.mxu0 0.0
    %944 = vmatprep.subr.mxu0 0.0
    %945 = vmatpush2.msra.mxu0 0.0
    %946 = vmatprep.subr.mxu0 0.0
    %947 = vmatpush2.msra.mxu0 0.0
    %948 = vmatprep.subr.mxu0 0.0
    %949 = vmatpush2.msra.mxu0 0.0
    %950 = vmatprep.subr.mxu0 0.0
    %951 = vmatpush2.msra.mxu0 0.0
    %952 = vmatprep.subr.mxu0 0.0
    %953 = vmatpush2.msra.mxu0 0.0
    %954 = vmatprep.subr.mxu0 0.0
    %955 = vmatpush2.msra.mxu0 0.0
    %956 = vmatprep.subr.mxu0 0.0
    %957 = vmatpush2.msra.mxu0 0.0
    %958 = vmatprep.mubr.f32.mxu0 0.0
    %959 = vmatmul.mubr.f32.gmra.mxu0 %v883
    %v960 = vpop.f32.mrf.mxu0
    %v961 = vadd.f32 %v880, %v960
    %v962 = vpop.f32.mrf.mxu0
    %963 = vmatprep.mubr.f32.mxu0 0.0
    %964 = vmatmul.mubr.f32.gmra.mxu0 %v886
    %v965 = vpop.f32.mrf.mxu0
    %v966 = vadd.f32 %v880, %v965
    %v967 = vpop.f32.mrf.mxu0
    %968 = vmatprep.mubr.f32.mxu0 0.0
    %969 = vmatmul.mubr.f32.gmra.mxu0 %v889
    %v970 = vpop.f32.mrf.mxu0
    %v971 = vadd.f32 %v880, %v970
    %v972 = vpop.f32.mrf.mxu0
    %973 = vmatprep.mubr.f32.mxu0 0.0
    %974 = vmatmul.mubr.f32.gmra.mxu0 %v892
    %v975 = vpop.f32.mrf.mxu0
    %v976 = vadd.f32 %v880, %v975
    %v977 = vpop.f32.mrf.mxu0
    %978 = vdwg.mxu0
    %v979 = vadd.f32 %v961, %v849
    %v980 = vadd.f32 %v966, %v854
    %v981 = vadd.f32 %v971, %v859
    %v982 = vadd.f32 %v976, %v864
    %v983 = vld [vmem:[%s12] sm:$0x1]
    %v984 = vld [vmem:[%s13] sm:$0x1]
    %v985 = vsel %vm269, %v979, 0.0
    %986 = vadd.xlane.f32.xlu0 %v985
    %v987 = vpop.xlane.xlu0 %986
    %v988 = vsel %vm269, %v980, 0.0
    %989 = vadd.xlane.f32.xlu0 %v988
    %v990 = vpop.xlane.xlu0 %989
    %v991 = vsel %vm269, %v981, 0.0
    %992 = vadd.xlane.f32.xlu0 %v991
    %v993 = vpop.xlane.xlu0 %992
    %v994 = vsel %vm269, %v982, 0.0
    %995 = vadd.xlane.f32.xlu0 %v994
    %v996 = vpop.xlane.xlu0 %995
    %v997 = vrcp.pop 64.0
    %v998 = vmul.f32 %v987, %v997
    %v999 = vmul.f32 %v990, %v997
    %v1000 = vmul.f32 %v993, %v997
    %v1001 = vmul.f32 %v996, %v997
    %v1002 = vsub.f32 %v979, %v998
    %v1003 = vsub.f32 %v980, %v999
    %v1004 = vsub.f32 %v981, %v1000
    %v1005 = vsub.f32 %v982, %v1001
    %v1006 = vmul.f32 %v1002, %v1002
    %v1007 = vmul.f32 %v1003, %v1003
    %v1008 = vmul.f32 %v1004, %v1004
    %v1009 = vmul.f32 %v1005, %v1005
    %v1010 = vsel %vm269, %v1006, 0.0
    %1011 = vadd.xlane.f32.xlu0 %v1010
    %v1012 = vpop.xlane.xlu0 %1011
    %v1013 = vsel %vm269, %v1007, 0.0
    %1014 = vadd.xlane.f32.xlu0 %v1013
    %v1015 = vpop.xlane.xlu0 %1014
    %v1016 = vsel %vm269, %v1008, 0.0
    %1017 = vadd.xlane.f32.xlu0 %v1016
    %v1018 = vpop.xlane.xlu0 %1017
    %v1019 = vsel %vm269, %v1009, 0.0
    %1020 = vadd.xlane.f32.xlu0 %v1019
    %v1021 = vpop.xlane.xlu0 %1020
    %v1022 = vmul.f32 %v1012, %v997
    %v1023 = vmul.f32 %v1015, %v997
    %v1024 = vmul.f32 %v1018, %v997
    %v1025 = vmul.f32 %v1021, %v997
    %v1026 = vadd.f32 %v1022, 1e-05
    %v1027 = vadd.f32 %v1023, 1e-05
    %v1028 = vadd.f32 %v1024, 1e-05
    %v1029 = vadd.f32 %v1025, 1e-05
    %v1030 = vrsqrt.pop %v1026
    %v1031 = vrsqrt.pop %v1027
    %v1032 = vrsqrt.pop %v1028
    %v1033 = vrsqrt.pop %v1029
    %v1034 = vmul.f32 %v1002, %v1030
    %v1035 = vmul.f32 %v1003, %v1031
    %v1036 = vmul.f32 %v1004, %v1032
    %v1037 = vmul.f32 %v1005, %v1033
    %v1039 = vlaneseq
    %v1040 = vshrl.u32 %v1039, 7
    %v1041 = vsub.s32 0, %v1040
    %v1042 = vrot.slane %v983, %v1041
    %v1044 = vmul.f32 %v1034, %v1042
    %v1045 = vmul.f32 %v1035, %v1042
    %v1046 = vmul.f32 %v1036, %v1042
    %v1047 = vmul.f32 %v1037, %v1042
    %v1049 = vlaneseq
    %v1050 = vshrl.u32 %v1049, 7
    %v1051 = vsub.s32 0, %v1050
    %v1052 = vrot.slane %v984, %v1051
    %v1054 = vadd.f32 %v1044, %v1052
    %v1055 = vadd.f32 %v1045, %v1052
    %v1056 = vadd.f32 %v1046, %v1052
    %v1057 = vadd.f32 %v1047, %v1052
    %v1058 = vsub.f32 0.0, %v1054
    %v1059 = vsub.f32 0.0, %v1055
    %v1060 = vsub.f32 0.0, %v1056
    %v1061 = vsub.f32 0.0, %v1057
    %v1062 = vmul.f32 %v1058, 1.442695
    %v1063 = vpow.pop %v1062
    %v1064 = vmul.f32 %v1059, 1.442695
    %v1065 = vpow.pop %v1064
    %v1066 = vmul.f32 %v1060, 1.442695
    %v1067 = vpow.pop %v1066
    %v1068 = vmul.f32 %v1061, 1.442695
    %v1069 = vpow.pop %v1068
    %v1070 = vadd.f32 %v1063, 1.0
    %v1071 = vadd.f32 %v1065, 1.0
    %v1072 = vadd.f32 %v1067, 1.0
    %v1073 = vadd.f32 %v1069, 1.0
    %v1074 = vrcp.pop %v1070
    %v1075 = vmul.f32 1.0, %v1074
    %v1076 = vrcp.pop %v1071
    %v1077 = vmul.f32 1.0, %v1076
    %v1078 = vrcp.pop %v1072
    %v1079 = vmul.f32 1.0, %v1078
    %v1080 = vrcp.pop %v1073
    %v1081 = vmul.f32 1.0, %v1080
    %v1082 = vmul.f32 %v1054, %v1075
    %v1083 = vmul.f32 %v1055, %v1077
    %v1084 = vmul.f32 %v1056, %v1079
    %v1085 = vmul.f32 %v1057, %v1081
    %v1086 = vadd.f32 %v56, %v1082
    %v1087 = vadd.f32 %v57, %v1083
    %v1088 = vadd.f32 %v58, %v1084
    %v1089 = vadd.f32 %v59, %v1085
    %1090 = vst.msk [vmem:[%s16] sm:$0xff] %vm269, %v1086
    %1091 = vst.msk [vmem:[%s16 + $0x8] sm:$0xff] %vm269, %v1087
    %1092 = vst.msk [vmem:[%s16 + $0x10] sm:$0xff] %vm269, %v1088
    %1093 = vst.msk [vmem:[%s16 + $0x18] sm:$0xff] %vm269, %v1089
    %v1095 = vsel %vm367, %v179, 0
    %v1098 = vsel %vm367, %v180, 0
    %v1101 = vsel %vm367, %v181, 0
    %v1104 = vsel %vm367, %v182, 0
    %v1107 = vsel %vm367, %v183, 0
    %v1110 = vsel %vm367, %v184, 0
    %v1113 = vsel %vm367, %v185, 0
    %v1116 = vsel %vm367, %v186, 0
    %1118 = vmatprep.subr.mxu0 0.0
    %1119 = vmatpush1.msra.mxu0 0.0
    %1120 = vmatprep.subr.mxu0 0.0
    %1121 = vmatpush1.msra.mxu0 0.0
    %1122 = vmatprep.subr.mxu0 0.0
    %1123 = vmatpush1.msra.mxu0 0.0
    %1124 = vmatprep.subr.mxu0 0.0
    %1125 = vmatpush1.msra.mxu0 0.0
    %1126 = vmatprep.subr.mxu0 0.0
    %1127 = vmatpush1.msra.mxu0 0.0
    %1128 = vmatprep.subr.mxu0 0.0
    %1129 = vmatpush1.msra.mxu0 0.0
    %1130 = vmatprep.subr.mxu0 0.0
    %1131 = vmatpush1.msra.mxu0 0.0
    %1132 = vmatprep.subr.mxu0 0.0
    %1133 = vmatpush1.msra.mxu0 0.0
    %1134 = vmatprep.subr.mxu0 0.0
    %1135 = vmatpush1.msra.mxu0 0.0
    %1136 = vmatprep.subr.mxu0 0.0
    %1137 = vmatpush1.msra.mxu0 0.0
    %1138 = vmatprep.subr.mxu0 0.0
    %1139 = vmatpush1.msra.mxu0 0.0
    %1140 = vmatprep.subr.mxu0 0.0
    %1141 = vmatpush1.msra.mxu0 0.0
    %1142 = vmatprep.subr.mxu0 0.0
    %1143 = vmatpush1.msra.mxu0 %v59
    %1144 = vmatprep.subr.mxu0 0.0
    %1145 = vmatpush1.msra.mxu0 %v58
    %1146 = vmatprep.subr.mxu0 0.0
    %1147 = vmatpush1.msra.mxu0 %v57
    %1148 = vmatprep.subr.mxu0 0.0
    %1149 = vmatpush1.msra.mxu0 %v56
    %1150 = vmatprep.subr.mxu0 0.0
    %1151 = vmatpush2.msra.mxu0 0.0
    %1152 = vmatprep.subr.mxu0 0.0
    %1153 = vmatpush2.msra.mxu0 0.0
    %1154 = vmatprep.subr.mxu0 0.0
    %1155 = vmatpush2.msra.mxu0 0.0
    %1156 = vmatprep.subr.mxu0 0.0
    %1157 = vmatpush2.msra.mxu0 0.0
    %1158 = vmatprep.subr.mxu0 0.0
    %1159 = vmatpush2.msra.mxu0 0.0
    %1160 = vmatprep.subr.mxu0 0.0
    %1161 = vmatpush2.msra.mxu0 0.0
    %1162 = vmatprep.subr.mxu0 0.0
    %1163 = vmatpush2.msra.mxu0 0.0
    %1164 = vmatprep.subr.mxu0 0.0
    %1165 = vmatpush2.msra.mxu0 0.0
    %1166 = vmatprep.subr.mxu0 0.0
    %1167 = vmatpush2.msra.mxu0 0.0
    %1168 = vmatprep.subr.mxu0 0.0
    %1169 = vmatpush2.msra.mxu0 0.0
    %1170 = vmatprep.subr.mxu0 0.0
    %1171 = vmatpush2.msra.mxu0 0.0
    %1172 = vmatprep.subr.mxu0 0.0
    %1173 = vmatpush2.msra.mxu0 0.0
    %1174 = vmatprep.subr.mxu0 0.0
    %1175 = vmatpush2.msra.mxu0 0.0
    %1176 = vmatprep.subr.mxu0 0.0
    %1177 = vmatpush2.msra.mxu0 0.0
    %1178 = vmatprep.subr.mxu0 0.0
    %1179 = vmatpush2.msra.mxu0 0.0
    %1180 = vmatprep.subr.mxu0 0.0
    %1181 = vmatpush2.msra.mxu0 0.0
    %1182 = vmatprep.mubr.f32.mxu0 0.0
    %1183 = vmatmul.mubr.f32.gmra.mxu0 %v1095
    %v1184 = vpop.f32.mrf.mxu0
    %v1185 = vadd.f32 0.0, %v1184
    %v1186 = vpop.f32.mrf.mxu0
    %1187 = vmatprep.mubr.f32.mxu0 0.0
    %1188 = vmatmul.mubr.f32.gmra.mxu0 %v1098
    %v1189 = vpop.f32.mrf.mxu0
    %v1190 = vadd.f32 0.0, %v1189
    %v1191 = vpop.f32.mrf.mxu0
    %1192 = vmatprep.mubr.f32.mxu0 0.0
    %1193 = vmatmul.mubr.f32.gmra.mxu0 %v1101
    %v1194 = vpop.f32.mrf.mxu0
    %v1195 = vadd.f32 0.0, %v1194
    %v1196 = vpop.f32.mrf.mxu0
    %1197 = vmatprep.mubr.f32.mxu0 0.0
    %1198 = vmatmul.mubr.f32.gmra.mxu0 %v1104
    %v1199 = vpop.f32.mrf.mxu0
    %v1200 = vadd.f32 0.0, %v1199
    %v1201 = vpop.f32.mrf.mxu0
    %1202 = vmatprep.mubr.f32.mxu0 0.0
    %1203 = vmatmul.mubr.f32.gmra.mxu0 %v1107
    %v1204 = vpop.f32.mrf.mxu0
    %v1205 = vadd.f32 0.0, %v1204
    %v1206 = vpop.f32.mrf.mxu0
    %1207 = vmatprep.mubr.f32.mxu0 0.0
    %1208 = vmatmul.mubr.f32.gmra.mxu0 %v1110
    %v1209 = vpop.f32.mrf.mxu0
    %v1210 = vadd.f32 0.0, %v1209
    %v1211 = vpop.f32.mrf.mxu0
    %1212 = vmatprep.mubr.f32.mxu0 0.0
    %1213 = vmatmul.mubr.f32.gmra.mxu0 %v1113
    %v1214 = vpop.f32.mrf.mxu0
    %v1215 = vadd.f32 0.0, %v1214
    %v1216 = vpop.f32.mrf.mxu0
    %1217 = vmatprep.mubr.f32.mxu0 0.0
    %1218 = vmatmul.mubr.f32.gmra.mxu0 %v1116
    %v1219 = vpop.f32.mrf.mxu0
    %v1220 = vadd.f32 0.0, %v1219
    %v1221 = vpop.f32.mrf.mxu0
    %1222 = vdwg.mxu0
    %v1223 = vld [vmem:[%s10] sm:$0xff]
    %v1224 = vld [vmem:[%s10 + $0x8] sm:$0xff]
    %v1225 = vld [vmem:[%s10 + $0x10] sm:$0xff]
    %v1226 = vld [vmem:[%s10 + $0x18] sm:$0xff]
    %v1227 = vld [vmem:[%s10 + $0x20] sm:$0xff]
    %v1228 = vld [vmem:[%s10 + $0x28] sm:$0xff]
    %v1229 = vld [vmem:[%s10 + $0x30] sm:$0xff]
    %v1230 = vld [vmem:[%s10 + $0x38] sm:$0xff]
    %v1231 = vld [vmem:[%s10 + $0x40] sm:$0xff]
    %v1232 = vld [vmem:[%s10 + $0x48] sm:$0xff]
    %v1233 = vld [vmem:[%s10 + $0x50] sm:$0xff]
    %v1234 = vld [vmem:[%s10 + $0x58] sm:$0xff]
    %v1235 = vld [vmem:[%s10 + $0x60] sm:$0xff]
    %v1236 = vld [vmem:[%s10 + $0x68] sm:$0xff]
    %v1237 = vld [vmem:[%s10 + $0x70] sm:$0xff]
    %v1238 = vld [vmem:[%s10 + $0x78] sm:$0xff]
    %v1239 = vld [vmem:[%s10 + $0x80] sm:$0xff]
    %v1240 = vld [vmem:[%s10 + $0x88] sm:$0xff]
    %v1241 = vld [vmem:[%s10 + $0x90] sm:$0xff]
    %v1242 = vld [vmem:[%s10 + $0x98] sm:$0xff]
    %v1243 = vld [vmem:[%s10 + $0xa0] sm:$0xff]
    %v1244 = vld [vmem:[%s10 + $0xa8] sm:$0xff]
    %v1245 = vld [vmem:[%s10 + $0xb0] sm:$0xff]
    %v1246 = vld [vmem:[%s10 + $0xb8] sm:$0xff]
    %v1248 = vsel %vm269, %v1185, 0
    %v1251 = vsel %vm269, %v1190, 0
    %v1254 = vsel %vm269, %v1195, 0
    %v1257 = vsel %vm269, %v1200, 0
    %v1260 = vsel %vm269, %v1205, 0
    %v1263 = vsel %vm269, %v1210, 0
    %v1266 = vsel %vm269, %v1215, 0
    %v1269 = vsel %vm269, %v1220, 0
    %1271 = vmatprep.subr.mxu0 0.0
    %1272 = vmatpush1.msra.mxu0 0.0
    %1273 = vmatprep.subr.mxu0 0.0
    %1274 = vmatpush1.msra.mxu0 0.0
    %1275 = vmatprep.subr.mxu0 0.0
    %1276 = vmatpush1.msra.mxu0 0.0
    %1277 = vmatprep.subr.mxu0 0.0
    %1278 = vmatpush1.msra.mxu0 0.0
    %1279 = vmatprep.subr.mxu0 0.0
    %1280 = vmatpush1.msra.mxu0 0.0
    %1281 = vmatprep.subr.mxu0 0.0
    %1282 = vmatpush1.msra.mxu0 0.0
    %1283 = vmatprep.subr.mxu0 0.0
    %1284 = vmatpush1.msra.mxu0 0.0
    %1285 = vmatprep.subr.mxu0 0.0
    %1286 = vmatpush1.msra.mxu0 0.0
    %1287 = vmatprep.subr.mxu0 0.0
    %1288 = vmatpush1.msra.mxu0 %v1238
    %1289 = vmatprep.subr.mxu0 0.0
    %1290 = vmatpush1.msra.mxu0 %v1237
    %1291 = vmatprep.subr.mxu0 0.0
    %1292 = vmatpush1.msra.mxu0 %v1236
    %1293 = vmatprep.subr.mxu0 0.0
    %1294 = vmatpush1.msra.mxu0 %v1235
    %1295 = vmatprep.subr.mxu0 0.0
    %1296 = vmatpush1.msra.mxu0 %v1234
    %1297 = vmatprep.subr.mxu0 0.0
    %1298 = vmatpush1.msra.mxu0 %v1233
    %1299 = vmatprep.subr.mxu0 0.0
    %1300 = vmatpush1.msra.mxu0 %v1232
    %1301 = vmatprep.subr.mxu0 0.0
    %1302 = vmatpush1.msra.mxu0 %v1231
    %1303 = vmatprep.subr.mxu0 0.0
    %1304 = vmatpush2.msra.mxu0 0.0
    %1305 = vmatprep.subr.mxu0 0.0
    %1306 = vmatpush2.msra.mxu0 0.0
    %1307 = vmatprep.subr.mxu0 0.0
    %1308 = vmatpush2.msra.mxu0 0.0
    %1309 = vmatprep.subr.mxu0 0.0
    %1310 = vmatpush2.msra.mxu0 0.0
    %1311 = vmatprep.subr.mxu0 0.0
    %1312 = vmatpush2.msra.mxu0 0.0
    %1313 = vmatprep.subr.mxu0 0.0
    %1314 = vmatpush2.msra.mxu0 0.0
    %1315 = vmatprep.subr.mxu0 0.0
    %1316 = vmatpush2.msra.mxu0 0.0
    %1317 = vmatprep.subr.mxu0 0.0
    %1318 = vmatpush2.msra.mxu0 0.0
    %1319 = vmatprep.subr.mxu0 0.0
    %1320 = vmatpush2.msra.mxu0 0.0
    %1321 = vmatprep.subr.mxu0 0.0
    %1322 = vmatpush2.msra.mxu0 0.0
    %1323 = vmatprep.subr.mxu0 0.0
    %1324 = vmatpush2.msra.mxu0 0.0
    %1325 = vmatprep.subr.mxu0 0.0
    %1326 = vmatpush2.msra.mxu0 0.0
    %1327 = vmatprep.subr.mxu0 0.0
    %1328 = vmatpush2.msra.mxu0 0.0
    %1329 = vmatprep.subr.mxu0 0.0
    %1330 = vmatpush2.msra.mxu0 0.0
    %1331 = vmatprep.subr.mxu0 0.0
    %1332 = vmatpush2.msra.mxu0 0.0
    %1333 = vmatprep.subr.mxu0 0.0
    %1334 = vmatpush2.msra.mxu0 0.0
    %1335 = vmatprep.mubr.f32.mxu0 0.0
    %1336 = vmatmul.mubr.f32.gmra.mxu0 %v1248
    %v1337 = vpop.f32.mrf.mxu0
    %v1338 = vadd.f32 0.0, %v1337
    %v1339 = vpop.f32.mrf.mxu0
    %1340 = vmatprep.mubr.f32.mxu0 0.0
    %1341 = vmatmul.mubr.f32.gmra.mxu0 %v1251
    %v1342 = vpop.f32.mrf.mxu0
    %v1343 = vadd.f32 0.0, %v1342
    %v1344 = vpop.f32.mrf.mxu0
    %1345 = vmatprep.mubr.f32.mxu0 0.0
    %1346 = vmatmul.mubr.f32.gmra.mxu0 %v1254
    %v1347 = vpop.f32.mrf.mxu0
    %v1348 = vadd.f32 0.0, %v1347
    %v1349 = vpop.f32.mrf.mxu0
    %1350 = vmatprep.mubr.f32.mxu0 0.0
    %1351 = vmatmul.mubr.f32.gmra.mxu0 %v1257
    %v1352 = vpop.f32.mrf.mxu0
    %v1353 = vadd.f32 0.0, %v1352
    %v1354 = vpop.f32.mrf.mxu0
    %1355 = vmatprep.mubr.f32.mxu0 0.0
    %1356 = vmatmul.mubr.f32.gmra.mxu0 %v1260
    %v1357 = vpop.f32.mrf.mxu0
    %v1358 = vadd.f32 0.0, %v1357
    %v1359 = vpop.f32.mrf.mxu0
    %1360 = vmatprep.mubr.f32.mxu0 0.0
    %1361 = vmatmul.mubr.f32.gmra.mxu0 %v1263
    %v1362 = vpop.f32.mrf.mxu0
    %v1363 = vadd.f32 0.0, %v1362
    %v1364 = vpop.f32.mrf.mxu0
    %1365 = vmatprep.mubr.f32.mxu0 0.0
    %1366 = vmatmul.mubr.f32.gmra.mxu0 %v1266
    %v1367 = vpop.f32.mrf.mxu0
    %v1368 = vadd.f32 0.0, %v1367
    %v1369 = vpop.f32.mrf.mxu0
    %1370 = vmatprep.mubr.f32.mxu0 0.0
    %1371 = vmatmul.mubr.f32.gmra.mxu0 %v1269
    %v1372 = vpop.f32.mrf.mxu0
    %v1373 = vadd.f32 0.0, %v1372
    %v1374 = vpop.f32.mrf.mxu0
    %1375 = vdwg.mxu0
    %1376 = vmatprep.subr.mxu0 0.0
    %1377 = vmatpush1.msra.mxu0 0.0
    %1378 = vmatprep.subr.mxu0 0.0
    %1379 = vmatpush1.msra.mxu0 0.0
    %1380 = vmatprep.subr.mxu0 0.0
    %1381 = vmatpush1.msra.mxu0 0.0
    %1382 = vmatprep.subr.mxu0 0.0
    %1383 = vmatpush1.msra.mxu0 0.0
    %1384 = vmatprep.subr.mxu0 0.0
    %1385 = vmatpush1.msra.mxu0 0.0
    %1386 = vmatprep.subr.mxu0 0.0
    %1387 = vmatpush1.msra.mxu0 0.0
    %1388 = vmatprep.subr.mxu0 0.0
    %1389 = vmatpush1.msra.mxu0 0.0
    %1390 = vmatprep.subr.mxu0 0.0
    %1391 = vmatpush1.msra.mxu0 0.0
    %1392 = vmatprep.subr.mxu0 0.0
    %1393 = vmatpush1.msra.mxu0 %v1230
    %1394 = vmatprep.subr.mxu0 0.0
    %1395 = vmatpush1.msra.mxu0 %v1229
    %1396 = vmatprep.subr.mxu0 0.0
    %1397 = vmatpush1.msra.mxu0 %v1228
    %1398 = vmatprep.subr.mxu0 0.0
    %1399 = vmatpush1.msra.mxu0 %v1227
    %1400 = vmatprep.subr.mxu0 0.0
    %1401 = vmatpush1.msra.mxu0 %v1226
    %1402 = vmatprep.subr.mxu0 0.0
    %1403 = vmatpush1.msra.mxu0 %v1225
    %1404 = vmatprep.subr.mxu0 0.0
    %1405 = vmatpush1.msra.mxu0 %v1224
    %1406 = vmatprep.subr.mxu0 0.0
    %1407 = vmatpush1.msra.mxu0 %v1223
    %1408 = vmatprep.subr.mxu0 0.0
    %1409 = vmatpush2.msra.mxu0 0.0
    %1410 = vmatprep.subr.mxu0 0.0
    %1411 = vmatpush2.msra.mxu0 0.0
    %1412 = vmatprep.subr.mxu0 0.0
    %1413 = vmatpush2.msra.mxu0 0.0
    %1414 = vmatprep.subr.mxu0 0.0
    %1415 = vmatpush2.msra.mxu0 0.0
    %1416 = vmatprep.subr.mxu0 0.0
    %1417 = vmatpush2.msra.mxu0 0.0
    %1418 = vmatprep.subr.mxu0 0.0
    %1419 = vmatpush2.msra.mxu0 0.0
    %1420 = vmatprep.subr.mxu0 0.0
    %1421 = vmatpush2.msra.mxu0 0.0
    %1422 = vmatprep.subr.mxu0 0.0
    %1423 = vmatpush2.msra.mxu0 0.0
    %1424 = vmatprep.subr.mxu0 0.0
    %1425 = vmatpush2.msra.mxu0 0.0
    %1426 = vmatprep.subr.mxu0 0.0
    %1427 = vmatpush2.msra.mxu0 0.0
    %1428 = vmatprep.subr.mxu0 0.0
    %1429 = vmatpush2.msra.mxu0 0.0
    %1430 = vmatprep.subr.mxu0 0.0
    %1431 = vmatpush2.msra.mxu0 0.0
    %1432 = vmatprep.subr.mxu0 0.0
    %1433 = vmatpush2.msra.mxu0 0.0
    %1434 = vmatprep.subr.mxu0 0.0
    %1435 = vmatpush2.msra.mxu0 0.0
    %1436 = vmatprep.subr.mxu0 0.0
    %1437 = vmatpush2.msra.mxu0 0.0
    %1438 = vmatprep.subr.mxu0 0.0
    %1439 = vmatpush2.msra.mxu0 0.0
    %1440 = vmatprep.mubr.f32.mxu0 0.0
    %1441 = vmatmul.mubr.f32.gmra.mxu0 %v634
    %v1442 = vpop.f32.mrf.mxu0
    %v1443 = vadd.f32 %v1338, %v1442
    %v1444 = vpop.f32.mrf.mxu0
    %1445 = vmatprep.mubr.f32.mxu0 0.0
    %1446 = vmatmul.mubr.f32.gmra.mxu0 %v637
    %v1447 = vpop.f32.mrf.mxu0
    %v1448 = vadd.f32 %v1343, %v1447
    %v1449 = vpop.f32.mrf.mxu0
    %1450 = vmatprep.mubr.f32.mxu0 0.0
    %1451 = vmatmul.mubr.f32.gmra.mxu0 %v640
    %v1452 = vpop.f32.mrf.mxu0
    %v1453 = vadd.f32 %v1348, %v1452
    %v1454 = vpop.f32.mrf.mxu0
    %1455 = vmatprep.mubr.f32.mxu0 0.0
    %1456 = vmatmul.mubr.f32.gmra.mxu0 %v643
    %v1457 = vpop.f32.mrf.mxu0
    %v1458 = vadd.f32 %v1353, %v1457
    %v1459 = vpop.f32.mrf.mxu0
    %1460 = vmatprep.mubr.f32.mxu0 0.0
    %1461 = vmatmul.mubr.f32.gmra.mxu0 %v646
    %v1462 = vpop.f32.mrf.mxu0
    %v1463 = vadd.f32 %v1358, %v1462
    %v1464 = vpop.f32.mrf.mxu0
    %1465 = vmatprep.mubr.f32.mxu0 0.0
    %1466 = vmatmul.mubr.f32.gmra.mxu0 %v649
    %v1467 = vpop.f32.mrf.mxu0
    %v1468 = vadd.f32 %v1363, %v1467
    %v1469 = vpop.f32.mrf.mxu0
    %1470 = vmatprep.mubr.f32.mxu0 0.0
    %1471 = vmatmul.mubr.f32.gmra.mxu0 %v652
    %v1472 = vpop.f32.mrf.mxu0
    %v1473 = vadd.f32 %v1368, %v1472
    %v1474 = vpop.f32.mrf.mxu0
    %1475 = vmatprep.mubr.f32.mxu0 0.0
    %1476 = vmatmul.mubr.f32.gmra.mxu0 %v655
    %v1477 = vpop.f32.mrf.mxu0
    %v1478 = vadd.f32 %v1373, %v1477
    %v1479 = vpop.f32.mrf.mxu0
    %1480 = vdwg.mxu0
    %v1482 = vsel %vm269, %v60, 0
    %v1485 = vsel %vm269, %v61, 0
    %v1488 = vsel %vm269, %v62, 0
    %v1491 = vsel %vm269, %v63, 0
    %v1494 = vsel %vm269, %v64, 0
    %v1497 = vsel %vm269, %v65, 0
    %v1500 = vsel %vm269, %v66, 0
    %v1503 = vsel %vm269, %v67, 0
    %1505 = vmatprep.subr.mxu0 0.0
    %1506 = vmatpush1.msra.mxu0 0.0
    %1507 = vmatprep.subr.mxu0 0.0
    %1508 = vmatpush1.msra.mxu0 0.0
    %1509 = vmatprep.subr.mxu0 0.0
    %1510 = vmatpush1.msra.mxu0 0.0
    %1511 = vmatprep.subr.mxu0 0.0
    %1512 = vmatpush1.msra.mxu0 0.0
    %1513 = vmatprep.subr.mxu0 0.0
    %1514 = vmatpush1.msra.mxu0 0.0
    %1515 = vmatprep.subr.mxu0 0.0
    %1516 = vmatpush1.msra.mxu0 0.0
    %1517 = vmatprep.subr.mxu0 0.0
    %1518 = vmatpush1.msra.mxu0 0.0
    %1519 = vmatprep.subr.mxu0 0.0
    %1520 = vmatpush1.msra.mxu0 0.0
    %1521 = vmatprep.subr.mxu0 0.0
    %1522 = vmatpush1.msra.mxu0 %v1246
    %1523 = vmatprep.subr.mxu0 0.0
    %1524 = vmatpush1.msra.mxu0 %v1245
    %1525 = vmatprep.subr.mxu0 0.0
    %1526 = vmatpush1.msra.mxu0 %v1244
    %1527 = vmatprep.subr.mxu0 0.0
    %1528 = vmatpush1.msra.mxu0 %v1243
    %1529 = vmatprep.subr.mxu0 0.0
    %1530 = vmatpush1.msra.mxu0 %v1242
    %1531 = vmatprep.subr.mxu0 0.0
    %1532 = vmatpush1.msra.mxu0 %v1241
    %1533 = vmatprep.subr.mxu0 0.0
    %1534 = vmatpush1.msra.mxu0 %v1240
    %1535 = vmatprep.subr.mxu0 0.0
    %1536 = vmatpush1.msra.mxu0 %v1239
    %1537 = vmatprep.subr.mxu0 0.0
    %1538 = vmatpush2.msra.mxu0 0.0
    %1539 = vmatprep.subr.mxu0 0.0
    %1540 = vmatpush2.msra.mxu0 0.0
    %1541 = vmatprep.subr.mxu0 0.0
    %1542 = vmatpush2.msra.mxu0 0.0
    %1543 = vmatprep.subr.mxu0 0.0
    %1544 = vmatpush2.msra.mxu0 0.0
    %1545 = vmatprep.subr.mxu0 0.0
    %1546 = vmatpush2.msra.mxu0 0.0
    %1547 = vmatprep.subr.mxu0 0.0
    %1548 = vmatpush2.msra.mxu0 0.0
    %1549 = vmatprep.subr.mxu0 0.0
    %1550 = vmatpush2.msra.mxu0 0.0
    %1551 = vmatprep.subr.mxu0 0.0
    %1552 = vmatpush2.msra.mxu0 0.0
    %1553 = vmatprep.subr.mxu0 0.0
    %1554 = vmatpush2.msra.mxu0 0.0
    %1555 = vmatprep.subr.mxu0 0.0
    %1556 = vmatpush2.msra.mxu0 0.0
    %1557 = vmatprep.subr.mxu0 0.0
    %1558 = vmatpush2.msra.mxu0 0.0
    %1559 = vmatprep.subr.mxu0 0.0
    %1560 = vmatpush2.msra.mxu0 0.0
    %1561 = vmatprep.subr.mxu0 0.0
    %1562 = vmatpush2.msra.mxu0 0.0
    %1563 = vmatprep.subr.mxu0 0.0
    %1564 = vmatpush2.msra.mxu0 0.0
    %1565 = vmatprep.subr.mxu0 0.0
    %1566 = vmatpush2.msra.mxu0 0.0
    %1567 = vmatprep.subr.mxu0 0.0
    %1568 = vmatpush2.msra.mxu0 0.0
    %1569 = vmatprep.mubr.f32.mxu0 0.0
    %1570 = vmatmul.mubr.f32.gmra.mxu0 %v1482
    %v1571 = vpop.f32.mrf.mxu0
    %v1572 = vadd.f32 0.0, %v1571
    %v1573 = vpop.f32.mrf.mxu0
    %1574 = vmatprep.mubr.f32.mxu0 0.0
    %1575 = vmatmul.mubr.f32.gmra.mxu0 %v1485
    %v1576 = vpop.f32.mrf.mxu0
    %v1577 = vadd.f32 0.0, %v1576
    %v1578 = vpop.f32.mrf.mxu0
    %1579 = vmatprep.mubr.f32.mxu0 0.0
    %1580 = vmatmul.mubr.f32.gmra.mxu0 %v1488
    %v1581 = vpop.f32.mrf.mxu0
    %v1582 = vadd.f32 0.0, %v1581
    %v1583 = vpop.f32.mrf.mxu0
    %1584 = vmatprep.mubr.f32.mxu0 0.0
    %1585 = vmatmul.mubr.f32.gmra.mxu0 %v1491
    %v1586 = vpop.f32.mrf.mxu0
    %v1587 = vadd.f32 0.0, %v1586
    %v1588 = vpop.f32.mrf.mxu0
    %1589 = vmatprep.mubr.f32.mxu0 0.0
    %1590 = vmatmul.mubr.f32.gmra.mxu0 %v1494
    %v1591 = vpop.f32.mrf.mxu0
    %v1592 = vadd.f32 0.0, %v1591
    %v1593 = vpop.f32.mrf.mxu0
    %1594 = vmatprep.mubr.f32.mxu0 0.0
    %1595 = vmatmul.mubr.f32.gmra.mxu0 %v1497
    %v1596 = vpop.f32.mrf.mxu0
    %v1597 = vadd.f32 0.0, %v1596
    %v1598 = vpop.f32.mrf.mxu0
    %1599 = vmatprep.mubr.f32.mxu0 0.0
    %1600 = vmatmul.mubr.f32.gmra.mxu0 %v1500
    %v1601 = vpop.f32.mrf.mxu0
    %v1602 = vadd.f32 0.0, %v1601
    %v1603 = vpop.f32.mrf.mxu0
    %1604 = vmatprep.mubr.f32.mxu0 0.0
    %1605 = vmatmul.mubr.f32.gmra.mxu0 %v1503
    %v1606 = vpop.f32.mrf.mxu0
    %v1607 = vadd.f32 0.0, %v1606
    %v1608 = vpop.f32.mrf.mxu0
    %1609 = vdwg.mxu0
    %v1610 = vadd.f32 %v1443, %v1572
    %v1611 = vadd.f32 %v1448, %v1577
    %v1612 = vadd.f32 %v1453, %v1582
    %v1613 = vadd.f32 %v1458, %v1587
    %v1614 = vadd.f32 %v1463, %v1592
    %v1615 = vadd.f32 %v1468, %v1597
    %v1616 = vadd.f32 %v1473, %v1602
    %v1617 = vadd.f32 %v1478, %v1607
    %v1618 = vld [vmem:[%s11] sm:$0x1]
    %v1620 = vlaneseq
    %v1621 = vshrl.u32 %v1620, 7
    %v1622 = vsub.s32 0, %v1621
    %v1623 = vrot.slane %v1618, %v1622
    %v1625 = vadd.f32 %v1610, %v1623
    %v1626 = vadd.f32 %v1611, %v1623
    %v1627 = vadd.f32 %v1612, %v1623
    %v1628 = vadd.f32 %v1613, %v1623
    %v1629 = vadd.f32 %v1614, %v1623
    %v1630 = vadd.f32 %v1615, %v1623
    %v1631 = vadd.f32 %v1616, %v1623
    %v1632 = vadd.f32 %v1617, %v1623
    %v1633 = vld [vmem:[%s14] sm:$0x1]
    %v1634 = vld [vmem:[%s15] sm:$0x1]
    %v1635 = vsel %vm269, %v1625, 0.0
    %1636 = vadd.xlane.f32.xlu0 %v1635
    %v1637 = vpop.xlane.xlu0 %1636
    %v1638 = vsel %vm269, %v1626, 0.0
    %1639 = vadd.xlane.f32.xlu0 %v1638
    %v1640 = vpop.xlane.xlu0 %1639
    %v1641 = vsel %vm269, %v1627, 0.0
    %1642 = vadd.xlane.f32.xlu0 %v1641
    %v1643 = vpop.xlane.xlu0 %1642
    %v1644 = vsel %vm269, %v1628, 0.0
    %1645 = vadd.xlane.f32.xlu0 %v1644
    %v1646 = vpop.xlane.xlu0 %1645
    %v1647 = vsel %vm269, %v1629, 0.0
    %1648 = vadd.xlane.f32.xlu0 %v1647
    %v1649 = vpop.xlane.xlu0 %1648
    %v1650 = vsel %vm269, %v1630, 0.0
    %1651 = vadd.xlane.f32.xlu0 %v1650
    %v1652 = vpop.xlane.xlu0 %1651
    %v1653 = vsel %vm269, %v1631, 0.0
    %1654 = vadd.xlane.f32.xlu0 %v1653
    %v1655 = vpop.xlane.xlu0 %1654
    %v1656 = vsel %vm269, %v1632, 0.0
    %1657 = vadd.xlane.f32.xlu0 %v1656
    %v1658 = vpop.xlane.xlu0 %1657
    %v1659 = vmul.f32 %v1637, %v997
    %v1660 = vmul.f32 %v1640, %v997
    %v1661 = vmul.f32 %v1643, %v997
    %v1662 = vmul.f32 %v1646, %v997
    %v1663 = vmul.f32 %v1649, %v997
    %v1664 = vmul.f32 %v1652, %v997
    %v1665 = vmul.f32 %v1655, %v997
    %v1666 = vmul.f32 %v1658, %v997
    %v1667 = vsub.f32 %v1625, %v1659
    %v1668 = vsub.f32 %v1626, %v1660
    %v1669 = vsub.f32 %v1627, %v1661
    %v1670 = vsub.f32 %v1628, %v1662
    %v1671 = vsub.f32 %v1629, %v1663
    %v1672 = vsub.f32 %v1630, %v1664
    %v1673 = vsub.f32 %v1631, %v1665
    %v1674 = vsub.f32 %v1632, %v1666
    %v1675 = vmul.f32 %v1667, %v1667
    %v1676 = vmul.f32 %v1668, %v1668
    %v1677 = vmul.f32 %v1669, %v1669
    %v1678 = vmul.f32 %v1670, %v1670
    %v1679 = vmul.f32 %v1671, %v1671
    %v1680 = vmul.f32 %v1672, %v1672
    %v1681 = vmul.f32 %v1673, %v1673
    %v1682 = vmul.f32 %v1674, %v1674
    %v1683 = vsel %vm269, %v1675, 0.0
    %1684 = vadd.xlane.f32.xlu0 %v1683
    %v1685 = vpop.xlane.xlu0 %1684
    %v1686 = vsel %vm269, %v1676, 0.0
    %1687 = vadd.xlane.f32.xlu0 %v1686
    %v1688 = vpop.xlane.xlu0 %1687
    %v1689 = vsel %vm269, %v1677, 0.0
    %1690 = vadd.xlane.f32.xlu0 %v1689
    %v1691 = vpop.xlane.xlu0 %1690
    %v1692 = vsel %vm269, %v1678, 0.0
    %1693 = vadd.xlane.f32.xlu0 %v1692
    %v1694 = vpop.xlane.xlu0 %1693
    %v1695 = vsel %vm269, %v1679, 0.0
    %1696 = vadd.xlane.f32.xlu0 %v1695
    %v1697 = vpop.xlane.xlu0 %1696
    %v1698 = vsel %vm269, %v1680, 0.0
    %1699 = vadd.xlane.f32.xlu0 %v1698
    %v1700 = vpop.xlane.xlu0 %1699
    %v1701 = vsel %vm269, %v1681, 0.0
    %1702 = vadd.xlane.f32.xlu0 %v1701
    %v1703 = vpop.xlane.xlu0 %1702
    %v1704 = vsel %vm269, %v1682, 0.0
    %1705 = vadd.xlane.f32.xlu0 %v1704
    %v1706 = vpop.xlane.xlu0 %1705
    %v1707 = vmul.f32 %v1685, %v997
    %v1708 = vmul.f32 %v1688, %v997
    %v1709 = vmul.f32 %v1691, %v997
    %v1710 = vmul.f32 %v1694, %v997
    %v1711 = vmul.f32 %v1697, %v997
    %v1712 = vmul.f32 %v1700, %v997
    %v1713 = vmul.f32 %v1703, %v997
    %v1714 = vmul.f32 %v1706, %v997
    %v1715 = vadd.f32 %v1707, 1e-05
    %v1716 = vadd.f32 %v1708, 1e-05
    %v1717 = vadd.f32 %v1709, 1e-05
    %v1718 = vadd.f32 %v1710, 1e-05
    %v1719 = vadd.f32 %v1711, 1e-05
    %v1720 = vadd.f32 %v1712, 1e-05
    %v1721 = vadd.f32 %v1713, 1e-05
    %v1722 = vadd.f32 %v1714, 1e-05
    %v1723 = vrsqrt.pop %v1715
    %v1724 = vrsqrt.pop %v1716
    %v1725 = vrsqrt.pop %v1717
    %v1726 = vrsqrt.pop %v1718
    %v1727 = vrsqrt.pop %v1719
    %v1728 = vrsqrt.pop %v1720
    %v1729 = vrsqrt.pop %v1721
    %v1730 = vrsqrt.pop %v1722
    %v1731 = vmul.f32 %v1667, %v1723
    %v1732 = vmul.f32 %v1668, %v1724
    %v1733 = vmul.f32 %v1669, %v1725
    %v1734 = vmul.f32 %v1670, %v1726
    %v1735 = vmul.f32 %v1671, %v1727
    %v1736 = vmul.f32 %v1672, %v1728
    %v1737 = vmul.f32 %v1673, %v1729
    %v1738 = vmul.f32 %v1674, %v1730
    %v1740 = vlaneseq
    %v1741 = vshrl.u32 %v1740, 7
    %v1742 = vsub.s32 0, %v1741
    %v1743 = vrot.slane %v1633, %v1742
    %v1745 = vmul.f32 %v1731, %v1743
    %v1746 = vmul.f32 %v1732, %v1743
    %v1747 = vmul.f32 %v1733, %v1743
    %v1748 = vmul.f32 %v1734, %v1743
    %v1749 = vmul.f32 %v1735, %v1743
    %v1750 = vmul.f32 %v1736, %v1743
    %v1751 = vmul.f32 %v1737, %v1743
    %v1752 = vmul.f32 %v1738, %v1743
    %v1754 = vlaneseq
    %v1755 = vshrl.u32 %v1754, 7
    %v1756 = vsub.s32 0, %v1755
    %v1757 = vrot.slane %v1634, %v1756
    %v1759 = vadd.f32 %v1745, %v1757
    %v1760 = vadd.f32 %v1746, %v1757
    %v1761 = vadd.f32 %v1747, %v1757
    %v1762 = vadd.f32 %v1748, %v1757
    %v1763 = vadd.f32 %v1749, %v1757
    %v1764 = vadd.f32 %v1750, %v1757
    %v1765 = vadd.f32 %v1751, %v1757
    %v1766 = vadd.f32 %v1752, %v1757
    %v1767 = vsub.f32 0.0, %v1759
    %v1768 = vsub.f32 0.0, %v1760
    %v1769 = vsub.f32 0.0, %v1761
    %v1770 = vsub.f32 0.0, %v1762
    %v1771 = vsub.f32 0.0, %v1763
    %v1772 = vsub.f32 0.0, %v1764
    %v1773 = vsub.f32 0.0, %v1765
    %v1774 = vsub.f32 0.0, %v1766
    %v1775 = vmul.f32 %v1767, 1.442695
    %v1776 = vpow.pop %v1775
    %v1777 = vmul.f32 %v1768, 1.442695
    %v1778 = vpow.pop %v1777
    %v1779 = vmul.f32 %v1769, 1.442695
    %v1780 = vpow.pop %v1779
    %v1781 = vmul.f32 %v1770, 1.442695
    %v1782 = vpow.pop %v1781
    %v1783 = vmul.f32 %v1771, 1.442695
    %v1784 = vpow.pop %v1783
    %v1785 = vmul.f32 %v1772, 1.442695
    %v1786 = vpow.pop %v1785
    %v1787 = vmul.f32 %v1773, 1.442695
    %v1788 = vpow.pop %v1787
    %v1789 = vmul.f32 %v1774, 1.442695
    %v1790 = vpow.pop %v1789
    %v1791 = vadd.f32 %v1776, 1.0
    %v1792 = vadd.f32 %v1778, 1.0
    %v1793 = vadd.f32 %v1780, 1.0
    %v1794 = vadd.f32 %v1782, 1.0
    %v1795 = vadd.f32 %v1784, 1.0
    %v1796 = vadd.f32 %v1786, 1.0
    %v1797 = vadd.f32 %v1788, 1.0
    %v1798 = vadd.f32 %v1790, 1.0
    %v1799 = vrcp.pop %v1791
    %v1800 = vmul.f32 1.0, %v1799
    %v1801 = vrcp.pop %v1792
    %v1802 = vmul.f32 1.0, %v1801
    %v1803 = vrcp.pop %v1793
    %v1804 = vmul.f32 1.0, %v1803
    %v1805 = vrcp.pop %v1794
    %v1806 = vmul.f32 1.0, %v1805
    %v1807 = vrcp.pop %v1795
    %v1808 = vmul.f32 1.0, %v1807
    %v1809 = vrcp.pop %v1796
    %v1810 = vmul.f32 1.0, %v1809
    %v1811 = vrcp.pop %v1797
    %v1812 = vmul.f32 1.0, %v1811
    %v1813 = vrcp.pop %v1798
    %v1814 = vmul.f32 1.0, %v1813
    %v1815 = vmul.f32 %v1759, %v1800
    %v1816 = vmul.f32 %v1760, %v1802
    %v1817 = vmul.f32 %v1761, %v1804
    %v1818 = vmul.f32 %v1762, %v1806
    %v1819 = vmul.f32 %v1763, %v1808
    %v1820 = vmul.f32 %v1764, %v1810
    %v1821 = vmul.f32 %v1765, %v1812
    %v1822 = vmul.f32 %v1766, %v1814
    %v1823 = vadd.f32 %v60, %v1815
    %v1824 = vadd.f32 %v61, %v1816
    %v1825 = vadd.f32 %v62, %v1817
    %v1826 = vadd.f32 %v63, %v1818
    %v1827 = vadd.f32 %v64, %v1819
    %v1828 = vadd.f32 %v65, %v1820
    %v1829 = vadd.f32 %v66, %v1821
    %v1830 = vadd.f32 %v67, %v1822
    %1831 = vst.msk [vmem:[#allocation2] sm:$0xff] %vm269, %v1823
    %1832 = vst.msk [vmem:[#allocation2 + $0x8] sm:$0xff] %vm269, %v1824
    %1833 = vst.msk [vmem:[#allocation2 + $0x10] sm:$0xff] %vm269, %v1825
    %1834 = vst.msk [vmem:[#allocation2 + $0x18] sm:$0xff] %vm269, %v1826
    %1835 = vst.msk [vmem:[#allocation2 + $0x20] sm:$0xff] %vm269, %v1827
    %1836 = vst.msk [vmem:[#allocation2 + $0x28] sm:$0xff] %vm269, %v1828
    %1837 = vst.msk [vmem:[#allocation2 + $0x30] sm:$0xff] %vm269, %v1829
    %1838 = vst.msk [vmem:[#allocation2 + $0x38] sm:$0xff] %vm269, %v1830
    // Predicated region
    $region66: #{algnn_forward.9} parent=1 // pred_check
      _
    $region67: #{algnn_forward.9} parent=1 // pred_check_branch
      %1840 = sbr.rel (0) target = $region69
    $region68: #{algnn_forward.9} parent=1 // pred_region
      _
    $region69: #{algnn_forward.9} parent=1 // pred_fallthru
      _
    // Predicated region
    $region70: #{algnn_forward.9} parent=1 // pred_check
      _
    $region71: #{algnn_forward.9} parent=1 // pred_check_branch
      %1842 = sbr.rel (0) target = $region73
    $region72: #{algnn_forward.9} parent=1 // pred_region
      %s1844 = ssub.s32 1024, 1024
      %1845 = vsyncadd [#allocation3], %s1844
      %s1846 = sshll.u32 [#allocation2], 4
      %s1847 = int_to_ptr.vmem [resolvable:$true] %s1846
      %1852 = dma.vmem_to_hbm [thread:$0]  %s1847, 1024, %s17, [#allocation3], 128, 128, 8
    $region73: #{algnn_forward.9} parent=1 // pred_fallthru
      _
    // Predicated region
    $region74: #{algnn_forward.9} parent=1 // pred_check
      _
    $region75: #{algnn_forward.9} parent=1 // pred_check_branch
      %1854 = sbr.rel (0) target = $region77
    $region76: #{algnn_forward.9} parent=1 // pred_region
      _
    $region77: #{algnn_forward.9} parent=1 // pred_fallthru
      _
    // Predicated region
    $region78: #{algnn_forward.9} parent=1 // pred_check
      _
    $region79: #{algnn_forward.9} parent=1 // pred_check_branch
      %1856 = sbr.rel (0) target = $region81
    $region80: #{algnn_forward.9} parent=1 // pred_region
      %1857 = dma.done [#allocation3], 1024
    $region81: #{algnn_forward.9} parent=1 // pred_fallthru
      _
    %1858 = vsyncpa [#allocation3], 1

// kernel: algnn_forward.10
$region0: #{algnn_forward.10}
  #allocation0 [shape = 'u32[]', space=smem, size = 0x4, offset = 0x4, fixed_abs, tag = 'smem constant byte address 0x4 - core index']
  #allocation1 [shape = 'u32[144,128]{1,0:T(1,128)}', space=vmem, size = 0x12000, scoped, tag = 'internal scratch']
  %s0 = inlined_call_operand.vmem [shape: s32[32,1], index: 0, kind: input, shape index: {}]
  %s1 = inlined_call_operand.vmem [shape: s32[1,32], index: 1, kind: input, shape index: {}]
  %s2 = inlined_call_operand.vmem [shape: s32[32,1], index: 2, kind: input, shape index: {}]
  %s3 = inlined_call_operand.vmem [shape: s32[1,32], index: 3, kind: input, shape index: {}]
  %s4 = inlined_call_operand.vmem [shape: f32[16,64], index: 4, kind: input, shape index: {}]
  %s5 = inlined_call_operand.vmem [shape: f32[32,64], index: 5, kind: input, shape index: {}]
  %s6 = inlined_call_operand.vmem [shape: f32[64,64], index: 6, kind: input, shape index: {}]
  %s7 = inlined_call_operand.vmem [shape: f32[1,64], index: 7, kind: input, shape index: {}]
  %s8 = inlined_call_operand.vmem [shape: f32[64,64], index: 8, kind: input, shape index: {}]
  %s9 = inlined_call_operand.vmem [shape: f32[1,64], index: 9, kind: input, shape index: {}]
  %s10 = inlined_call_operand.vmem [shape: f32[192,64], index: 10, kind: input, shape index: {}]
  %s11 = inlined_call_operand.vmem [shape: f32[1,64], index: 11, kind: input, shape index: {}]
  %s12 = inlined_call_operand.vmem [shape: f32[1,64], index: 12, kind: input, shape index: {}]
  %s13 = inlined_call_operand.vmem [shape: f32[1,64], index: 13, kind: input, shape index: {}]
  %s14 = inlined_call_operand.vmem [shape: f32[1,64], index: 14, kind: input, shape index: {}]
  %s15 = inlined_call_operand.vmem [shape: f32[1,64], index: 15, kind: input, shape index: {}]
  %s16 = inlined_call_operand.vmem [shape: f32[16,64], index: 16, kind: output, shape index: {0}]
  %s17 = inlined_call_operand.hbm [shape: f32[32,64], index: 17, kind: output, shape index: {1}]
  %18 = xla_tuple %s16, %s17
  %s19 = sld [smem:[#allocation0]]
  $region82: #{algnn_forward.10} parent=0
    _
  %s21 = ssub.s32 1, %s19
  %s22 = scalar_select 0, %s21, %s19
  $region1: #{algnn_forward.10} parent=0
    #allocation2 [shape = 'u8[16384]{0}', space=vmem, size = 0x4000, scoped, tag = 'output window, operand 1, single buffered']
    #allocation3 [shape = 's32[1]{0}', space=sflag, size = 0x4, scoped, tag = 'scoped memory for algnn_forward.10']
    %23 = vsyncpa [#allocation3], 0
    // Predicated region
    $region2: #{algnn_forward.10} parent=1 // pred_check
      _
    $region3: #{algnn_forward.10} parent=1 // pred_check_branch
      %25 = sbr.rel (0) target = $region5
    $region4: #{algnn_forward.10} parent=1 // pred_region
      _
    $region5: #{algnn_forward.10} parent=1 // pred_fallthru
      _
    // Predicated region
    $region6: #{algnn_forward.10} parent=1 // pred_check
      _
    $region7: #{algnn_forward.10} parent=1 // pred_check_branch
      %27 = sbr.rel (0) target = $region9
    $region8: #{algnn_forward.10} parent=1 // pred_region
      _
    $region9: #{algnn_forward.10} parent=1 // pred_fallthru
      _
    // Predicated region
    $region10: #{algnn_forward.10} parent=1 // pred_check
      _
    $region11: #{algnn_forward.10} parent=1 // pred_check_branch
      %29 = sbr.rel (0) target = $region13
    $region12: #{algnn_forward.10} parent=1 // pred_region
      _
    $region13: #{algnn_forward.10} parent=1 // pred_fallthru
      _
    // Predicated region
    $region14: #{algnn_forward.10} parent=1 // pred_check
      _
    $region15: #{algnn_forward.10} parent=1 // pred_check_branch
      %31 = sbr.rel (0) target = $region17
    $region16: #{algnn_forward.10} parent=1 // pred_region
      _
    $region17: #{algnn_forward.10} parent=1 // pred_fallthru
      _
    // Predicated region
    $region18: #{algnn_forward.10} parent=1 // pred_check
      _
    $region19: #{algnn_forward.10} parent=1 // pred_check_branch
      %33 = sbr.rel (0) target = $region21
    $region20: #{algnn_forward.10} parent=1 // pred_region
      _
    $region21: #{algnn_forward.10} parent=1 // pred_fallthru
      _
    // Predicated region
    $region22: #{algnn_forward.10} parent=1 // pred_check
      _
    $region23: #{algnn_forward.10} parent=1 // pred_check_branch
      %35 = sbr.rel (0) target = $region25
    $region24: #{algnn_forward.10} parent=1 // pred_region
      _
    $region25: #{algnn_forward.10} parent=1 // pred_fallthru
      _
    // Predicated region
    $region26: #{algnn_forward.10} parent=1 // pred_check
      _
    $region27: #{algnn_forward.10} parent=1 // pred_check_branch
      %37 = sbr.rel (0) target = $region29
    $region28: #{algnn_forward.10} parent=1 // pred_region
      _
    $region29: #{algnn_forward.10} parent=1 // pred_fallthru
      _
    // Predicated region
    $region30: #{algnn_forward.10} parent=1 // pred_check
      _
    $region31: #{algnn_forward.10} parent=1 // pred_check_branch
      %39 = sbr.rel (0) target = $region33
    $region32: #{algnn_forward.10} parent=1 // pred_region
      _
    $region33: #{algnn_forward.10} parent=1 // pred_fallthru
      _
    // Predicated region
    $region34: #{algnn_forward.10} parent=1 // pred_check
      _
    $region35: #{algnn_forward.10} parent=1 // pred_check_branch
      %41 = sbr.rel (0) target = $region37
    $region36: #{algnn_forward.10} parent=1 // pred_region
      _
    $region37: #{algnn_forward.10} parent=1 // pred_fallthru
      _
    // Predicated region
    $region38: #{algnn_forward.10} parent=1 // pred_check
      _
    $region39: #{algnn_forward.10} parent=1 // pred_check_branch
      %43 = sbr.rel (0) target = $region41
    $region40: #{algnn_forward.10} parent=1 // pred_region
      _
    $region41: #{algnn_forward.10} parent=1 // pred_fallthru
      _
    // Predicated region
    $region42: #{algnn_forward.10} parent=1 // pred_check
      _
    $region43: #{algnn_forward.10} parent=1 // pred_check_branch
      %45 = sbr.rel (0) target = $region45
    $region44: #{algnn_forward.10} parent=1 // pred_region
      _
    $region45: #{algnn_forward.10} parent=1 // pred_fallthru
      _
    // Predicated region
    $region46: #{algnn_forward.10} parent=1 // pred_check
      _
    $region47: #{algnn_forward.10} parent=1 // pred_check_branch
      %47 = sbr.rel (0) target = $region49
    $region48: #{algnn_forward.10} parent=1 // pred_region
      _
    $region49: #{algnn_forward.10} parent=1 // pred_fallthru
      _
    // Predicated region
    $region50: #{algnn_forward.10} parent=1 // pred_check
      _
    $region51: #{algnn_forward.10} parent=1 // pred_check_branch
      %49 = sbr.rel (0) target = $region53
    $region52: #{algnn_forward.10} parent=1 // pred_region
      _
    $region53: #{algnn_forward.10} parent=1 // pred_fallthru
      _
    // Predicated region
    $region54: #{algnn_forward.10} parent=1 // pred_check
      _
    $region55: #{algnn_forward.10} parent=1 // pred_check_branch
      %51 = sbr.rel (0) target = $region57
    $region56: #{algnn_forward.10} parent=1 // pred_region
      _
    $region57: #{algnn_forward.10} parent=1 // pred_fallthru
      _
    // Predicated region
    $region58: #{algnn_forward.10} parent=1 // pred_check
      _
    $region59: #{algnn_forward.10} parent=1 // pred_check_branch
      %53 = sbr.rel (0) target = $region61
    $region60: #{algnn_forward.10} parent=1 // pred_region
      _
    $region61: #{algnn_forward.10} parent=1 // pred_fallthru
      _
    // Predicated region
    $region62: #{algnn_forward.10} parent=1 // pred_check
      _
    $region63: #{algnn_forward.10} parent=1 // pred_check_branch
      %55 = sbr.rel (0) target = $region65
    $region64: #{algnn_forward.10} parent=1 // pred_region
      _
    $region65: #{algnn_forward.10} parent=1 // pred_fallthru
      _
    %v56 = vld [vmem:[%s4] sm:$0xff]
    %v57 = vld [vmem:[%s4 + $0x8] sm:$0xff]
    %v58 = vld [vmem:[%s5] sm:$0xff]
    %v59 = vld [vmem:[%s5 + $0x8] sm:$0xff]
    %v60 = vld [vmem:[%s5 + $0x10] sm:$0xff]
    %v61 = vld [vmem:[%s5 + $0x18] sm:$0xff]
    %v62 = vlaneseq
    %v63 = vand.u32 %v62, 127
    %v64 = vlaneseq
    %v65 = vshrl.u32 %v64, 7
    %v66 = vadd.s32 %v65, 8
    %v67 = vld [vmem:[%s0] sm:$0xff]
    %v68 = vld [vmem:[%s0 + $0x8] sm:$0xff]
    %v69 = vld [vmem:[%s0 + $0x10] sm:$0xff]
    %v70 = vld [vmem:[%s0 + $0x18] sm:$0xff]
    %71 = vset.pattern.permute.xlu0 0
    %72 = vperm.xlu0 %71, %v67
    %v73 = vpop.permute.xlu0 %72
    %74 = vset.pattern.permute.xlu0 0
    %75 = vperm.xlu0 %74, %v68
    %v76 = vpop.permute.xlu0 %75
    %77 = vset.pattern.permute.xlu0 0
    %78 = vperm.xlu0 %77, %v69
    %v79 = vpop.permute.xlu0 %78
    %80 = vset.pattern.permute.xlu0 0
    %81 = vperm.xlu0 %80, %v70
    %v82 = vpop.permute.xlu0 %81
    %vm83 = vcmp.eq.s32.totalorder %v63, %v73
    %vm84 = vcmp.eq.s32.totalorder %v63, %v76
    %vm85 = vcmp.eq.s32.totalorder %v63, %v79
    %vm86 = vcmp.eq.s32.totalorder %v63, %v82
    %v87 = vsel %vm83, 1, 0
    %v88 = vsel %vm84, 1, 0
    %v89 = vsel %vm85, 1, 0
    %v90 = vsel %vm86, 1, 0
    %v91 = vcvt.s32.f32 %v87
    %v92 = vcvt.s32.f32 %v88
    %v93 = vcvt.s32.f32 %v89
    %v94 = vcvt.s32.f32 %v90
    %v95 = vld [vmem:[%s2] sm:$0xff]
    %v96 = vld [vmem:[%s2 + $0x8] sm:$0xff]
    %v97 = vld [vmem:[%s2 + $0x10] sm:$0xff]
    %v98 = vld [vmem:[%s2 + $0x18] sm:$0xff]
    %99 = vset.pattern.permute.xlu0 0
    %100 = vperm.xlu0 %99, %v95
    %v101 = vpop.permute.xlu0 %100
    %102 = vset.pattern.permute.xlu0 0
    %103 = vperm.xlu0 %102, %v96
    %v104 = vpop.permute.xlu0 %103
    %105 = vset.pattern.permute.xlu0 0
    %106 = vperm.xlu0 %105, %v97
    %v107 = vpop.permute.xlu0 %106
    %108 = vset.pattern.permute.xlu0 0
    %109 = vperm.xlu0 %108, %v98
    %v110 = vpop.permute.xlu0 %109
    %vm111 = vcmp.eq.s32.totalorder %v63, %v101
    %vm112 = vcmp.eq.s32.totalorder %v63, %v104
    %vm113 = vcmp.eq.s32.totalorder %v63, %v107
    %vm114 = vcmp.eq.s32.totalorder %v63, %v110
    %v115 = vsel %vm111, 1, 0
    %v116 = vsel %vm112, 1, 0
    %v117 = vsel %vm113, 1, 0
    %v118 = vsel %vm114, 1, 0
    %v119 = vcvt.s32.f32 %v115
    %v120 = vcvt.s32.f32 %v116
    %v121 = vcvt.s32.f32 %v117
    %v122 = vcvt.s32.f32 %v118
    %v123 = vld [vmem:[%s1] sm:$0x1]
    %v124 = vlaneseq
    %v125 = vshrl.u32 %v124, 7
    %v126 = vsub.s32 0, %v125
    %v127 = vrot.slane %v123, %v126
    %vm128 = vcmp.eq.s32.totalorder %v65, %v127
    %vm129 = vcmp.eq.s32.totalorder %v66, %v127
    %v130 = vsel %vm128, 1, 0
    %v131 = vsel %vm129, 1, 0
    %v132 = vcvt.s32.f32 %v130
    %v133 = vcvt.s32.f32 %v131
    %v134 = vld [vmem:[%s3] sm:$0x1]
    %v135 = vlaneseq
    %v136 = vshrl.u32 %v135, 7
    %v137 = vsub.s32 0, %v136
    %v138 = vrot.slane %v134, %v137
    %vm139 = vcmp.eq.s32.totalorder %v65, %v138
    %vm140 = vcmp.eq.s32.totalorder %v66, %v138
    %v141 = vsel %vm139, 1, 0
    %v142 = vsel %vm140, 1, 0
    %v143 = vcvt.s32.f32 %v141
    %v144 = vcvt.s32.f32 %v142
    %v145 = vsub.f32 0.0, %v58
    %v146 = vsub.f32 0.0, %v59
    %v147 = vsub.f32 0.0, %v60
    %v148 = vsub.f32 0.0, %v61
    %v149 = vmul.f32 %v145, 1.442695
    %v150 = vpow.pop %v149
    %v151 = vmul.f32 %v146, 1.442695
    %v152 = vpow.pop %v151
    %v153 = vmul.f32 %v147, 1.442695
    %v154 = vpow.pop %v153
    %v155 = vmul.f32 %v148, 1.442695
    %v156 = vpow.pop %v155
    %v157 = vadd.f32 %v150, 1.0
    %v158 = vadd.f32 %v152, 1.0
    %v159 = vadd.f32 %v154, 1.0
    %v160 = vadd.f32 %v156, 1.0
    %v161 = vrcp.pop %v157
    %v162 = vmul.f32 1.0, %v161
    %v163 = vrcp.pop %v158
    %v164 = vmul.f32 1.0, %v163
    %v165 = vrcp.pop %v159
    %v166 = vmul.f32 1.0, %v165
    %v167 = vrcp.pop %v160
    %v168 = vmul.f32 1.0, %v167
    %vm169 = vcmask 261120
    %v171 = vsel %vm169, %v132, 0
    %v174 = vsel %vm169, %v133, 0
    %176 = vmatprep.subr.mxu0 0.0
    %177 = vmatpush1.msra.mxu0 0.0
    %178 = vmatprep.subr.mxu0 0.0
    %179 = vmatpush1.msra.mxu0 0.0
    %180 = vmatprep.subr.mxu0 0.0
    %181 = vmatpush1.msra.mxu0 0.0
    %182 = vmatprep.subr.mxu0 0.0
    %183 = vmatpush1.msra.mxu0 0.0
    %184 = vmatprep.subr.mxu0 0.0
    %185 = vmatpush1.msra.mxu0 0.0
    %186 = vmatprep.subr.mxu0 0.0
    %187 = vmatpush1.msra.mxu0 0.0
    %188 = vmatprep.subr.mxu0 0.0
    %189 = vmatpush1.msra.mxu0 0.0
    %190 = vmatprep.subr.mxu0 0.0
    %191 = vmatpush1.msra.mxu0 0.0
    %192 = vmatprep.subr.mxu0 0.0
    %193 = vmatpush1.msra.mxu0 0.0
    %194 = vmatprep.subr.mxu0 0.0
    %195 = vmatpush1.msra.mxu0 0.0
    %196 = vmatprep.subr.mxu0 0.0
    %197 = vmatpush1.msra.mxu0 0.0
    %198 = vmatprep.subr.mxu0 0.0
    %199 = vmatpush1.msra.mxu0 0.0
    %200 = vmatprep.subr.mxu0 0.0
    %201 = vmatpush1.msra.mxu0 %v168
    %202 = vmatprep.subr.mxu0 0.0
    %203 = vmatpush1.msra.mxu0 %v166
    %204 = vmatprep.subr.mxu0 0.0
    %205 = vmatpush1.msra.mxu0 %v164
    %206 = vmatprep.subr.mxu0 0.0
    %207 = vmatpush1.msra.mxu0 %v162
    %208 = vmatprep.subr.mxu0 0.0
    %209 = vmatpush2.msra.mxu0 0.0
    %210 = vmatprep.subr.mxu0 0.0
    %211 = vmatpush2.msra.mxu0 0.0
    %212 = vmatprep.subr.mxu0 0.0
    %213 = vmatpush2.msra.mxu0 0.0
    %214 = vmatprep.subr.mxu0 0.0
    %215 = vmatpush2.msra.mxu0 0.0
    %216 = vmatprep.subr.mxu0 0.0
    %217 = vmatpush2.msra.mxu0 0.0
    %218 = vmatprep.subr.mxu0 0.0
    %219 = vmatpush2.msra.mxu0 0.0
    %220 = vmatprep.subr.mxu0 0.0
    %221 = vmatpush2.msra.mxu0 0.0
    %222 = vmatprep.subr.mxu0 0.0
    %223 = vmatpush2.msra.mxu0 0.0
    %224 = vmatprep.subr.mxu0 0.0
    %225 = vmatpush2.msra.mxu0 0.0
    %226 = vmatprep.subr.mxu0 0.0
    %227 = vmatpush2.msra.mxu0 0.0
    %228 = vmatprep.subr.mxu0 0.0
    %229 = vmatpush2.msra.mxu0 0.0
    %230 = vmatprep.subr.mxu0 0.0
    %231 = vmatpush2.msra.mxu0 0.0
    %232 = vmatprep.subr.mxu0 0.0
    %233 = vmatpush2.msra.mxu0 0.0
    %234 = vmatprep.subr.mxu0 0.0
    %235 = vmatpush2.msra.mxu0 0.0
    %236 = vmatprep.subr.mxu0 0.0
    %237 = vmatpush2.msra.mxu0 0.0
    %238 = vmatprep.subr.mxu0 0.0
    %239 = vmatpush2.msra.mxu0 0.0
    %240 = vmatprep.mubr.f32.mxu0 0.0
    %241 = vmatmul.mubr.f32.gmra.mxu0 %v171
    %v242 = vpop.f32.mrf.mxu0
    %v243 = vadd.f32 0.0, %v242
    %v244 = vpop.f32.mrf.mxu0
    %245 = vmatprep.mubr.f32.mxu0 0.0
    %246 = vmatmul.mubr.f32.gmra.mxu0 %v174
    %v247 = vpop.f32.mrf.mxu0
    %v248 = vadd.f32 0.0, %v247
    %v249 = vpop.f32.mrf.mxu0
    %250 = vdwg.mxu0
    %vm251 = vcmask 130048
    %v253 = vsel %vm251, %v91, 0
    %v256 = vsel %vm251, %v92, 0
    %v259 = vsel %vm251, %v93, 0
    %v262 = vsel %vm251, %v94, 0
    %264 = vmatprep.subr.mxu0 0.0
    %265 = vmatpush1.msra.mxu0 0.0
    %266 = vmatprep.subr.mxu0 0.0
    %267 = vmatpush1.msra.mxu0 0.0
    %268 = vmatprep.subr.mxu0 0.0
    %269 = vmatpush1.msra.mxu0 0.0
    %270 = vmatprep.subr.mxu0 0.0
    %271 = vmatpush1.msra.mxu0 0.0
    %272 = vmatprep.subr.mxu0 0.0
    %273 = vmatpush1.msra.mxu0 0.0
    %274 = vmatprep.subr.mxu0 0.0
    %275 = vmatpush1.msra.mxu0 0.0
    %276 = vmatprep.subr.mxu0 0.0
    %277 = vmatpush1.msra.mxu0 0.0
    %278 = vmatprep.subr.mxu0 0.0
    %279 = vmatpush1.msra.mxu0 0.0
    %280 = vmatprep.subr.mxu0 0.0
    %281 = vmatpush1.msra.mxu0 0.0
    %282 = vmatprep.subr.mxu0 0.0
    %283 = vmatpush1.msra.mxu0 0.0
    %284 = vmatprep.subr.mxu0 0.0
    %285 = vmatpush1.msra.mxu0 0.0
    %286 = vmatprep.subr.mxu0 0.0
    %287 = vmatpush1.msra.mxu0 0.0
    %288 = vmatprep.subr.mxu0 0.0
    %289 = vmatpush1.msra.mxu0 0.0
    %290 = vmatprep.subr.mxu0 0.0
    %291 = vmatpush1.msra.mxu0 0.0
    %292 = vmatprep.subr.mxu0 0.0
    %293 = vmatpush1.msra.mxu0 %v248
    %294 = vmatprep.subr.mxu0 0.0
    %295 = vmatpush1.msra.mxu0 %v243
    %296 = vmatprep.subr.mxu0 0.0
    %297 = vmatpush2.msra.mxu0 0.0
    %298 = vmatprep.subr.mxu0 0.0
    %299 = vmatpush2.msra.mxu0 0.0
    %300 = vmatprep.subr.mxu0 0.0
    %301 = vmatpush2.msra.mxu0 0.0
    %302 = vmatprep.subr.mxu0 0.0
    %303 = vmatpush2.msra.mxu0 0.0
    %304 = vmatprep.subr.mxu0 0.0
    %305 = vmatpush2.msra.mxu0 0.0
    %306 = vmatprep.subr.mxu0 0.0
    %307 = vmatpush2.msra.mxu0 0.0
    %308 = vmatprep.subr.mxu0 0.0
    %309 = vmatpush2.msra.mxu0 0.0
    %310 = vmatprep.subr.mxu0 0.0
    %311 = vmatpush2.msra.mxu0 0.0
    %312 = vmatprep.subr.mxu0 0.0
    %313 = vmatpush2.msra.mxu0 0.0
    %314 = vmatprep.subr.mxu0 0.0
    %315 = vmatpush2.msra.mxu0 0.0
    %316 = vmatprep.subr.mxu0 0.0
    %317 = vmatpush2.msra.mxu0 0.0
    %318 = vmatprep.subr.mxu0 0.0
    %319 = vmatpush2.msra.mxu0 0.0
    %320 = vmatprep.subr.mxu0 0.0
    %321 = vmatpush2.msra.mxu0 0.0
    %322 = vmatprep.subr.mxu0 0.0
    %323 = vmatpush2.msra.mxu0 0.0
    %324 = vmatprep.subr.mxu0 0.0
    %325 = vmatpush2.msra.mxu0 0.0
    %326 = vmatprep.subr.mxu0 0.0
    %327 = vmatpush2.msra.mxu0 0.0
    %328 = vmatprep.mubr.f32.mxu0 0.0
    %329 = vmatmul.mubr.f32.gmra.mxu0 %v253
    %v330 = vpop.f32.mrf.mxu0
    %v331 = vadd.f32 1e-05, %v330
    %v332 = vpop.f32.mrf.mxu0
    %333 = vmatprep.mubr.f32.mxu0 0.0
    %334 = vmatmul.mubr.f32.gmra.mxu0 %v256
    %v335 = vpop.f32.mrf.mxu0
    %v336 = vadd.f32 1e-05, %v335
    %v337 = vpop.f32.mrf.mxu0
    %338 = vmatprep.mubr.f32.mxu0 0.0
    %339 = vmatmul.mubr.f32.gmra.mxu0 %v259
    %v340 = vpop.f32.mrf.mxu0
    %v341 = vadd.f32 1e-05, %v340
    %v342 = vpop.f32.mrf.mxu0
    %343 = vmatprep.mubr.f32.mxu0 0.0
    %344 = vmatmul.mubr.f32.gmra.mxu0 %v262
    %v345 = vpop.f32.mrf.mxu0
    %v346 = vadd.f32 1e-05, %v345
    %v347 = vpop.f32.mrf.mxu0
    %348 = vdwg.mxu0
    %v349 = vrcp.pop %v331
    %v350 = vrcp.pop %v336
    %v351 = vrcp.pop %v341
    %v352 = vrcp.pop %v346
    %v353 = vmul.f32 %v162, %v349
    %v354 = vmul.f32 %v164, %v350
    %v355 = vmul.f32 %v166, %v351
    %v356 = vmul.f32 %v168, %v352
    %357 = vmatprep.subr.mxu0 0.0
    %358 = vmatpush1.msra.mxu0 0.0
    %359 = vmatprep.subr.mxu0 0.0
    %360 = vmatpush1.msra.mxu0 0.0
    %361 = vmatprep.subr.mxu0 0.0
    %362 = vmatpush1.msra.mxu0 0.0
    %363 = vmatprep.subr.mxu0 0.0
    %364 = vmatpush1.msra.mxu0 0.0
    %365 = vmatprep.subr.mxu0 0.0
    %366 = vmatpush1.msra.mxu0 0.0
    %367 = vmatprep.subr.mxu0 0.0
    %368 = vmatpush1.msra.mxu0 0.0
    %369 = vmatprep.subr.mxu0 0.0
    %370 = vmatpush1.msra.mxu0 0.0
    %371 = vmatprep.subr.mxu0 0.0
    %372 = vmatpush1.msra.mxu0 0.0
    %373 = vmatprep.subr.mxu0 0.0
    %374 = vmatpush1.msra.mxu0 0.0
    %375 = vmatprep.subr.mxu0 0.0
    %376 = vmatpush1.msra.mxu0 0.0
    %377 = vmatprep.subr.mxu0 0.0
    %378 = vmatpush1.msra.mxu0 0.0
    %379 = vmatprep.subr.mxu0 0.0
    %380 = vmatpush1.msra.mxu0 0.0
    %381 = vmatprep.subr.mxu0 0.0
    %382 = vmatpush1.msra.mxu0 0.0
    %383 = vmatprep.subr.mxu0 0.0
    %384 = vmatpush1.msra.mxu0 0.0
    %385 = vmatprep.subr.mxu0 0.0
    %386 = vmatpush1.msra.mxu0 %v57
    %387 = vmatprep.subr.mxu0 0.0
    %388 = vmatpush1.msra.mxu0 %v56
    %389 = vmatprep.subr.mxu0 0.0
    %390 = vmatpush2.msra.mxu0 0.0
    %391 = vmatprep.subr.mxu0 0.0
    %392 = vmatpush2.msra.mxu0 0.0
    %393 = vmatprep.subr.mxu0 0.0
    %394 = vmatpush2.msra.mxu0 0.0
    %395 = vmatprep.subr.mxu0 0.0
    %396 = vmatpush2.msra.mxu0 0.0
    %397 = vmatprep.subr.mxu0 0.0
    %398 = vmatpush2.msra.mxu0 0.0
    %399 = vmatprep.subr.mxu0 0.0
    %400 = vmatpush2.msra.mxu0 0.0
    %401 = vmatprep.subr.mxu0 0.0
    %402 = vmatpush2.msra.mxu0 0.0
    %403 = vmatprep.subr.mxu0 0.0
    %404 = vmatpush2.msra.mxu0 0.0
    %405 = vmatprep.subr.mxu0 0.0
    %406 = vmatpush2.msra.mxu0 0.0
    %407 = vmatprep.subr.mxu0 0.0
    %408 = vmatpush2.msra.mxu0 0.0
    %409 = vmatprep.subr.mxu0 0.0
    %410 = vmatpush2.msra.mxu0 0.0
    %411 = vmatprep.subr.mxu0 0.0
    %412 = vmatpush2.msra.mxu0 0.0
    %413 = vmatprep.subr.mxu0 0.0
    %414 = vmatpush2.msra.mxu0 0.0
    %415 = vmatprep.subr.mxu0 0.0
    %416 = vmatpush2.msra.mxu0 0.0
    %417 = vmatprep.subr.mxu0 0.0
    %418 = vmatpush2.msra.mxu0 0.0
    %419 = vmatprep.subr.mxu0 0.0
    %420 = vmatpush2.msra.mxu0 0.0
    %421 = vmatprep.mubr.f32.mxu0 0.0
    %422 = vmatmul.mubr.f32.gmra.mxu0 %v253
    %v423 = vpop.f32.mrf.mxu0
    %v424 = vadd.f32 0.0, %v423
    %v425 = vpop.f32.mrf.mxu0
    %426 = vmatprep.mubr.f32.mxu0 0.0
    %427 = vmatmul.mubr.f32.gmra.mxu0 %v256
    %v428 = vpop.f32.mrf.mxu0
    %v429 = vadd.f32 0.0, %v428
    %v430 = vpop.f32.mrf.mxu0
    %431 = vmatprep.mubr.f32.mxu0 0.0
    %432 = vmatmul.mubr.f32.gmra.mxu0 %v259
    %v433 = vpop.f32.mrf.mxu0
    %v434 = vadd.f32 0.0, %v433
    %v435 = vpop.f32.mrf.mxu0
    %436 = vmatprep.mubr.f32.mxu0 0.0
    %437 = vmatmul.mubr.f32.gmra.mxu0 %v262
    %v438 = vpop.f32.mrf.mxu0
    %v439 = vadd.f32 0.0, %v438
    %v440 = vpop.f32.mrf.mxu0
    %441 = vdwg.mxu0
    %v442 = vld [vmem:[%s8] sm:$0xff]
    %v443 = vld [vmem:[%s8 + $0x8] sm:$0xff]
    %v444 = vld [vmem:[%s8 + $0x10] sm:$0xff]
    %v445 = vld [vmem:[%s8 + $0x18] sm:$0xff]
    %v446 = vld [vmem:[%s8 + $0x20] sm:$0xff]
    %v447 = vld [vmem:[%s8 + $0x28] sm:$0xff]
    %v448 = vld [vmem:[%s8 + $0x30] sm:$0xff]
    %v449 = vld [vmem:[%s8 + $0x38] sm:$0xff]
    %v450 = vld [vmem:[%s9] sm:$0x1]
    %v452 = vlaneseq
    %v453 = vshrl.u32 %v452, 7
    %v454 = vsub.s32 0, %v453
    %v455 = vrot.slane %v450, %v454
    %vm457 = vcmask 523264
    %v459 = vsel %vm457, %v424, 0
    %v462 = vsel %vm457, %v429, 0
    %v465 = vsel %vm457, %v434, 0
    %v468 = vsel %vm457, %v439, 0
    %470 = vmatprep.subr.mxu0 0.0
    %471 = vmatpush1.msra.mxu0 0.0
    %472 = vmatprep.subr.mxu0 0.0
    %473 = vmatpush1.msra.mxu0 0.0
    %474 = vmatprep.subr.mxu0 0.0
    %475 = vmatpush1.msra.mxu0 0.0
    %476 = vmatprep.subr.mxu0 0.0
    %477 = vmatpush1.msra.mxu0 0.0
    %478 = vmatprep.subr.mxu0 0.0
    %479 = vmatpush1.msra.mxu0 0.0
    %480 = vmatprep.subr.mxu0 0.0
    %481 = vmatpush1.msra.mxu0 0.0
    %482 = vmatprep.subr.mxu0 0.0
    %483 = vmatpush1.msra.mxu0 0.0
    %484 = vmatprep.subr.mxu0 0.0
    %485 = vmatpush1.msra.mxu0 0.0
    %486 = vmatprep.subr.mxu0 0.0
    %487 = vmatpush1.msra.mxu0 %v449
    %488 = vmatprep.subr.mxu0 0.0
    %489 = vmatpush1.msra.mxu0 %v448
    %490 = vmatprep.subr.mxu0 0.0
    %491 = vmatpush1.msra.mxu0 %v447
    %492 = vmatprep.subr.mxu0 0.0
    %493 = vmatpush1.msra.mxu0 %v446
    %494 = vmatprep.subr.mxu0 0.0
    %495 = vmatpush1.msra.mxu0 %v445
    %496 = vmatprep.subr.mxu0 0.0
    %497 = vmatpush1.msra.mxu0 %v444
    %498 = vmatprep.subr.mxu0 0.0
    %499 = vmatpush1.msra.mxu0 %v443
    %500 = vmatprep.subr.mxu0 0.0
    %501 = vmatpush1.msra.mxu0 %v442
    %502 = vmatprep.subr.mxu0 0.0
    %503 = vmatpush2.msra.mxu0 0.0
    %504 = vmatprep.subr.mxu0 0.0
    %505 = vmatpush2.msra.mxu0 0.0
    %506 = vmatprep.subr.mxu0 0.0
    %507 = vmatpush2.msra.mxu0 0.0
    %508 = vmatprep.subr.mxu0 0.0
    %509 = vmatpush2.msra.mxu0 0.0
    %510 = vmatprep.subr.mxu0 0.0
    %511 = vmatpush2.msra.mxu0 0.0
    %512 = vmatprep.subr.mxu0 0.0
    %513 = vmatpush2.msra.mxu0 0.0
    %514 = vmatprep.subr.mxu0 0.0
    %515 = vmatpush2.msra.mxu0 0.0
    %516 = vmatprep.subr.mxu0 0.0
    %517 = vmatpush2.msra.mxu0 0.0
    %518 = vmatprep.subr.mxu0 0.0
    %519 = vmatpush2.msra.mxu0 0.0
    %520 = vmatprep.subr.mxu0 0.0
    %521 = vmatpush2.msra.mxu0 0.0
    %522 = vmatprep.subr.mxu0 0.0
    %523 = vmatpush2.msra.mxu0 0.0
    %524 = vmatprep.subr.mxu0 0.0
    %525 = vmatpush2.msra.mxu0 0.0
    %526 = vmatprep.subr.mxu0 0.0
    %527 = vmatpush2.msra.mxu0 0.0
    %528 = vmatprep.subr.mxu0 0.0
    %529 = vmatpush2.msra.mxu0 0.0
    %530 = vmatprep.subr.mxu0 0.0
    %531 = vmatpush2.msra.mxu0 0.0
    %532 = vmatprep.subr.mxu0 0.0
    %533 = vmatpush2.msra.mxu0 0.0
    %534 = vmatprep.mubr.f32.mxu0 0.0
    %535 = vmatmul.mubr.f32.gmra.mxu0 %v459
    %v536 = vpop.f32.mrf.mxu0
    %v537 = vadd.f32 %v455, %v536
    %v538 = vpop.f32.mrf.mxu0
    %539 = vmatprep.mubr.f32.mxu0 0.0
    %540 = vmatmul.mubr.f32.gmra.mxu0 %v462
    %v541 = vpop.f32.mrf.mxu0
    %v542 = vadd.f32 %v455, %v541
    %v543 = vpop.f32.mrf.mxu0
    %544 = vmatprep.mubr.f32.mxu0 0.0
    %545 = vmatmul.mubr.f32.gmra.mxu0 %v465
    %v546 = vpop.f32.mrf.mxu0
    %v547 = vadd.f32 %v455, %v546
    %v548 = vpop.f32.mrf.mxu0
    %549 = vmatprep.mubr.f32.mxu0 0.0
    %550 = vmatmul.mubr.f32.gmra.mxu0 %v468
    %v551 = vpop.f32.mrf.mxu0
    %v552 = vadd.f32 %v455, %v551
    %v553 = vpop.f32.mrf.mxu0
    %554 = vdwg.mxu0
    %v555 = vmul.f32 %v353, %v537
    %v556 = vmul.f32 %v354, %v542
    %v557 = vmul.f32 %v355, %v547
    %v558 = vmul.f32 %v356, %v552
    %v560 = vsel %vm169, %v143, 0
    %v563 = vsel %vm169, %v144, 0
    %565 = vmatprep.subr.mxu0 0.0
    %566 = vmatpush1.msra.mxu0 0.0
    %567 = vmatprep.subr.mxu0 0.0
    %568 = vmatpush1.msra.mxu0 0.0
    %569 = vmatprep.subr.mxu0 0.0
    %570 = vmatpush1.msra.mxu0 0.0
    %571 = vmatprep.subr.mxu0 0.0
    %572 = vmatpush1.msra.mxu0 0.0
    %573 = vmatprep.subr.mxu0 0.0
    %574 = vmatpush1.msra.mxu0 0.0
    %575 = vmatprep.subr.mxu0 0.0
    %576 = vmatpush1.msra.mxu0 0.0
    %577 = vmatprep.subr.mxu0 0.0
    %578 = vmatpush1.msra.mxu0 0.0
    %579 = vmatprep.subr.mxu0 0.0
    %580 = vmatpush1.msra.mxu0 0.0
    %581 = vmatprep.subr.mxu0 0.0
    %582 = vmatpush1.msra.mxu0 0.0
    %583 = vmatprep.subr.mxu0 0.0
    %584 = vmatpush1.msra.mxu0 0.0
    %585 = vmatprep.subr.mxu0 0.0
    %586 = vmatpush1.msra.mxu0 0.0
    %587 = vmatprep.subr.mxu0 0.0
    %588 = vmatpush1.msra.mxu0 0.0
    %589 = vmatprep.subr.mxu0 0.0
    %590 = vmatpush1.msra.mxu0 %v558
    %591 = vmatprep.subr.mxu0 0.0
    %592 = vmatpush1.msra.mxu0 %v557
    %593 = vmatprep.subr.mxu0 0.0
    %594 = vmatpush1.msra.mxu0 %v556
    %595 = vmatprep.subr.mxu0 0.0
    %596 = vmatpush1.msra.mxu0 %v555
    %597 = vmatprep.subr.mxu0 0.0
    %598 = vmatpush2.msra.mxu0 0.0
    %599 = vmatprep.subr.mxu0 0.0
    %600 = vmatpush2.msra.mxu0 0.0
    %601 = vmatprep.subr.mxu0 0.0
    %602 = vmatpush2.msra.mxu0 0.0
    %603 = vmatprep.subr.mxu0 0.0
    %604 = vmatpush2.msra.mxu0 0.0
    %605 = vmatprep.subr.mxu0 0.0
    %606 = vmatpush2.msra.mxu0 0.0
    %607 = vmatprep.subr.mxu0 0.0
    %608 = vmatpush2.msra.mxu0 0.0
    %609 = vmatprep.subr.mxu0 0.0
    %610 = vmatpush2.msra.mxu0 0.0
    %611 = vmatprep.subr.mxu0 0.0
    %612 = vmatpush2.msra.mxu0 0.0
    %613 = vmatprep.subr.mxu0 0.0
    %614 = vmatpush2.msra.mxu0 0.0
    %615 = vmatprep.subr.mxu0 0.0
    %616 = vmatpush2.msra.mxu0 0.0
    %617 = vmatprep.subr.mxu0 0.0
    %618 = vmatpush2.msra.mxu0 0.0
    %619 = vmatprep.subr.mxu0 0.0
    %620 = vmatpush2.msra.mxu0 0.0
    %621 = vmatprep.subr.mxu0 0.0
    %622 = vmatpush2.msra.mxu0 0.0
    %623 = vmatprep.subr.mxu0 0.0
    %624 = vmatpush2.msra.mxu0 0.0
    %625 = vmatprep.subr.mxu0 0.0
    %626 = vmatpush2.msra.mxu0 0.0
    %627 = vmatprep.subr.mxu0 0.0
    %628 = vmatpush2.msra.mxu0 0.0
    %629 = vmatprep.mubr.f32.mxu0 0.0
    %630 = vmatmul.mubr.f32.gmra.mxu0 %v560
    %v631 = vpop.f32.mrf.mxu0
    %v632 = vadd.f32 0.0, %v631
    %v633 = vpop.f32.mrf.mxu0
    %634 = vmatprep.mubr.f32.mxu0 0.0
    %635 = vmatmul.mubr.f32.gmra.mxu0 %v563
    %v636 = vpop.f32.mrf.mxu0
    %v637 = vadd.f32 0.0, %v636
    %v638 = vpop.f32.mrf.mxu0
    %639 = vdwg.mxu0
    %v640 = vld [vmem:[%s6] sm:$0xff]
    %v641 = vld [vmem:[%s6 + $0x8] sm:$0xff]
    %v642 = vld [vmem:[%s6 + $0x10] sm:$0xff]
    %v643 = vld [vmem:[%s6 + $0x18] sm:$0xff]
    %v644 = vld [vmem:[%s6 + $0x20] sm:$0xff]
    %v645 = vld [vmem:[%s6 + $0x28] sm:$0xff]
    %v646 = vld [vmem:[%s6 + $0x30] sm:$0xff]
    %v647 = vld [vmem:[%s6 + $0x38] sm:$0xff]
    %v648 = vld [vmem:[%s7] sm:$0x1]
    %v650 = vlaneseq
    %v651 = vshrl.u32 %v650, 7
    %v652 = vsub.s32 0, %v651
    %v653 = vrot.slane %v648, %v652
    %v656 = vsel %vm457, %v56, 0
    %v659 = vsel %vm457, %v57, 0
    %661 = vmatprep.subr.mxu0 0.0
    %662 = vmatpush1.msra.mxu0 0.0
    %663 = vmatprep.subr.mxu0 0.0
    %664 = vmatpush1.msra.mxu0 0.0
    %665 = vmatprep.subr.mxu0 0.0
    %666 = vmatpush1.msra.mxu0 0.0
    %667 = vmatprep.subr.mxu0 0.0
    %668 = vmatpush1.msra.mxu0 0.0
    %669 = vmatprep.subr.mxu0 0.0
    %670 = vmatpush1.msra.mxu0 0.0
    %671 = vmatprep.subr.mxu0 0.0
    %672 = vmatpush1.msra.mxu0 0.0
    %673 = vmatprep.subr.mxu0 0.0
    %674 = vmatpush1.msra.mxu0 0.0
    %675 = vmatprep.subr.mxu0 0.0
    %676 = vmatpush1.msra.mxu0 0.0
    %677 = vmatprep.subr.mxu0 0.0
    %678 = vmatpush1.msra.mxu0 %v647
    %679 = vmatprep.subr.mxu0 0.0
    %680 = vmatpush1.msra.mxu0 %v646
    %681 = vmatprep.subr.mxu0 0.0
    %682 = vmatpush1.msra.mxu0 %v645
    %683 = vmatprep.subr.mxu0 0.0
    %684 = vmatpush1.msra.mxu0 %v644
    %685 = vmatprep.subr.mxu0 0.0
    %686 = vmatpush1.msra.mxu0 %v643
    %687 = vmatprep.subr.mxu0 0.0
    %688 = vmatpush1.msra.mxu0 %v642
    %689 = vmatprep.subr.mxu0 0.0
    %690 = vmatpush1.msra.mxu0 %v641
    %691 = vmatprep.subr.mxu0 0.0
    %692 = vmatpush1.msra.mxu0 %v640
    %693 = vmatprep.subr.mxu0 0.0
    %694 = vmatpush2.msra.mxu0 0.0
    %695 = vmatprep.subr.mxu0 0.0
    %696 = vmatpush2.msra.mxu0 0.0
    %697 = vmatprep.subr.mxu0 0.0
    %698 = vmatpush2.msra.mxu0 0.0
    %699 = vmatprep.subr.mxu0 0.0
    %700 = vmatpush2.msra.mxu0 0.0
    %701 = vmatprep.subr.mxu0 0.0
    %702 = vmatpush2.msra.mxu0 0.0
    %703 = vmatprep.subr.mxu0 0.0
    %704 = vmatpush2.msra.mxu0 0.0
    %705 = vmatprep.subr.mxu0 0.0
    %706 = vmatpush2.msra.mxu0 0.0
    %707 = vmatprep.subr.mxu0 0.0
    %708 = vmatpush2.msra.mxu0 0.0
    %709 = vmatprep.subr.mxu0 0.0
    %710 = vmatpush2.msra.mxu0 0.0
    %711 = vmatprep.subr.mxu0 0.0
    %712 = vmatpush2.msra.mxu0 0.0
    %713 = vmatprep.subr.mxu0 0.0
    %714 = vmatpush2.msra.mxu0 0.0
    %715 = vmatprep.subr.mxu0 0.0
    %716 = vmatpush2.msra.mxu0 0.0
    %717 = vmatprep.subr.mxu0 0.0
    %718 = vmatpush2.msra.mxu0 0.0
    %719 = vmatprep.subr.mxu0 0.0
    %720 = vmatpush2.msra.mxu0 0.0
    %721 = vmatprep.subr.mxu0 0.0
    %722 = vmatpush2.msra.mxu0 0.0
    %723 = vmatprep.subr.mxu0 0.0
    %724 = vmatpush2.msra.mxu0 0.0
    %725 = vmatprep.mubr.f32.mxu0 0.0
    %726 = vmatmul.mubr.f32.gmra.mxu0 %v656
    %v727 = vpop.f32.mrf.mxu0
    %v728 = vadd.f32 %v653, %v727
    %v729 = vpop.f32.mrf.mxu0
    %730 = vmatprep.mubr.f32.mxu0 0.0
    %731 = vmatmul.mubr.f32.gmra.mxu0 %v659
    %v732 = vpop.f32.mrf.mxu0
    %v733 = vadd.f32 %v653, %v732
    %v734 = vpop.f32.mrf.mxu0
    %735 = vdwg.mxu0
    %v736 = vadd.f32 %v728, %v632
    %v737 = vadd.f32 %v733, %v637
    %v738 = vld [vmem:[%s12] sm:$0x1]
    %v739 = vld [vmem:[%s13] sm:$0x1]
    %v740 = vsel %vm457, %v736, 0.0
    %741 = vadd.xlane.f32.xlu0 %v740
    %v742 = vpop.xlane.xlu0 %741
    %v743 = vsel %vm457, %v737, 0.0
    %744 = vadd.xlane.f32.xlu0 %v743
    %v745 = vpop.xlane.xlu0 %744
    %v746 = vrcp.pop 64.0
    %v747 = vmul.f32 %v742, %v746
    %v748 = vmul.f32 %v745, %v746
    %v749 = vsub.f32 %v736, %v747
    %v750 = vsub.f32 %v737, %v748
    %v751 = vmul.f32 %v749, %v749
    %v752 = vmul.f32 %v750, %v750
    %v753 = vsel %vm457, %v751, 0.0
    %754 = vadd.xlane.f32.xlu0 %v753
    %v755 = vpop.xlane.xlu0 %754
    %v756 = vsel %vm457, %v752, 0.0
    %757 = vadd.xlane.f32.xlu0 %v756
    %v758 = vpop.xlane.xlu0 %757
    %v759 = vmul.f32 %v755, %v746
    %v760 = vmul.f32 %v758, %v746
    %v761 = vadd.f32 %v759, 1e-05
    %v762 = vadd.f32 %v760, 1e-05
    %v763 = vrsqrt.pop %v761
    %v764 = vrsqrt.pop %v762
    %v765 = vmul.f32 %v749, %v763
    %v766 = vmul.f32 %v750, %v764
    %v768 = vlaneseq
    %v769 = vshrl.u32 %v768, 7
    %v770 = vsub.s32 0, %v769
    %v771 = vrot.slane %v738, %v770
    %v773 = vmul.f32 %v765, %v771
    %v774 = vmul.f32 %v766, %v771
    %v776 = vlaneseq
    %v777 = vshrl.u32 %v776, 7
    %v778 = vsub.s32 0, %v777
    %v779 = vrot.slane %v739, %v778
    %v781 = vadd.f32 %v773, %v779
    %v782 = vadd.f32 %v774, %v779
    %v783 = vsub.f32 0.0, %v781
    %v784 = vsub.f32 0.0, %v782
    %v785 = vmul.f32 %v783, 1.442695
    %v786 = vpow.pop %v785
    %v787 = vmul.f32 %v784, 1.442695
    %v788 = vpow.pop %v787
    %v789 = vadd.f32 %v786, 1.0
    %v790 = vadd.f32 %v788, 1.0
    %v791 = vrcp.pop %v789
    %v792 = vmul.f32 1.0, %v791
    %v793 = vrcp.pop %v790
    %v794 = vmul.f32 1.0, %v793
    %v795 = vmul.f32 %v781, %v792
    %v796 = vmul.f32 %v782, %v794
    %v797 = vadd.f32 %v56, %v795
    %v798 = vadd.f32 %v57, %v796
    %799 = vst.msk [vmem:[%s16] sm:$0xff] %vm457, %v797
    %800 = vst.msk [vmem:[%s16 + $0x8] sm:$0xff] %vm457, %v798
    %v802 = vsel %vm251, %v119, 0
    %v805 = vsel %vm251, %v120, 0
    %v808 = vsel %vm251, %v121, 0
    %v811 = vsel %vm251, %v122, 0
    %813 = vmatprep.subr.mxu0 0.0
    %814 = vmatpush1.msra.mxu0 0.0
    %815 = vmatprep.subr.mxu0 0.0
    %816 = vmatpush1.msra.mxu0 0.0
    %817 = vmatprep.subr.mxu0 0.0
    %818 = vmatpush1.msra.mxu0 0.0
    %819 = vmatprep.subr.mxu0 0.0
    %820 = vmatpush1.msra.mxu0 0.0
    %821 = vmatprep.subr.mxu0 0.0
    %822 = vmatpush1.msra.mxu0 0.0
    %823 = vmatprep.subr.mxu0 0.0
    %824 = vmatpush1.msra.mxu0 0.0
    %825 = vmatprep.subr.mxu0 0.0
    %826 = vmatpush1.msra.mxu0 0.0
    %827 = vmatprep.subr.mxu0 0.0
    %828 = vmatpush1.msra.mxu0 0.0
    %829 = vmatprep.subr.mxu0 0.0
    %830 = vmatpush1.msra.mxu0 0.0
    %831 = vmatprep.subr.mxu0 0.0
    %832 = vmatpush1.msra.mxu0 0.0
    %833 = vmatprep.subr.mxu0 0.0
    %834 = vmatpush1.msra.mxu0 0.0
    %835 = vmatprep.subr.mxu0 0.0
    %836 = vmatpush1.msra.mxu0 0.0
    %837 = vmatprep.subr.mxu0 0.0
    %838 = vmatpush1.msra.mxu0 0.0
    %839 = vmatprep.subr.mxu0 0.0
    %840 = vmatpush1.msra.mxu0 0.0
    %841 = vmatprep.subr.mxu0 0.0
    %842 = vmatpush1.msra.mxu0 %v57
    %843 = vmatprep.subr.mxu0 0.0
    %844 = vmatpush1.msra.mxu0 %v56
    %845 = vmatprep.subr.mxu0 0.0
    %846 = vmatpush2.msra.mxu0 0.0
    %847 = vmatprep.subr.mxu0 0.0
    %848 = vmatpush2.msra.mxu0 0.0
    %849 = vmatprep.subr.mxu0 0.0
    %850 = vmatpush2.msra.mxu0 0.0
    %851 = vmatprep.subr.mxu0 0.0
    %852 = vmatpush2.msra.mxu0 0.0
    %853 = vmatprep.subr.mxu0 0.0
    %854 = vmatpush2.msra.mxu0 0.0
    %855 = vmatprep.subr.mxu0 0.0
    %856 = vmatpush2.msra.mxu0 0.0
    %857 = vmatprep.subr.mxu0 0.0
    %858 = vmatpush2.msra.mxu0 0.0
    %859 = vmatprep.subr.mxu0 0.0
    %860 = vmatpush2.msra.mxu0 0.0
    %861 = vmatprep.subr.mxu0 0.0
    %862 = vmatpush2.msra.mxu0 0.0
    %863 = vmatprep.subr.mxu0 0.0
    %864 = vmatpush2.msra.mxu0 0.0
    %865 = vmatprep.subr.mxu0 0.0
    %866 = vmatpush2.msra.mxu0 0.0
    %867 = vmatprep.subr.mxu0 0.0
    %868 = vmatpush2.msra.mxu0 0.0
    %869 = vmatprep.subr.mxu0 0.0
    %870 = vmatpush2.msra.mxu0 0.0
    %871 = vmatprep.subr.mxu0 0.0
    %872 = vmatpush2.msra.mxu0 0.0
    %873 = vmatprep.subr.mxu0 0.0
    %874 = vmatpush2.msra.mxu0 0.0
    %875 = vmatprep.subr.mxu0 0.0
    %876 = vmatpush2.msra.mxu0 0.0
    %877 = vmatprep.mubr.f32.mxu0 0.0
    %878 = vmatmul.mubr.f32.gmra.mxu0 %v802
    %v879 = vpop.f32.mrf.mxu0
    %v880 = vadd.f32 0.0, %v879
    %v881 = vpop.f32.mrf.mxu0
    %882 = vmatprep.mubr.f32.mxu0 0.0
    %883 = vmatmul.mubr.f32.gmra.mxu0 %v805
    %v884 = vpop.f32.mrf.mxu0
    %v885 = vadd.f32 0.0, %v884
    %v886 = vpop.f32.mrf.mxu0
    %887 = vmatprep.mubr.f32.mxu0 0.0
    %888 = vmatmul.mubr.f32.gmra.mxu0 %v808
    %v889 = vpop.f32.mrf.mxu0
    %v890 = vadd.f32 0.0, %v889
    %v891 = vpop.f32.mrf.mxu0
    %892 = vmatprep.mubr.f32.mxu0 0.0
    %893 = vmatmul.mubr.f32.gmra.mxu0 %v811
    %v894 = vpop.f32.mrf.mxu0
    %v895 = vadd.f32 0.0, %v894
    %v896 = vpop.f32.mrf.mxu0
    %897 = vdwg.mxu0
    %v898 = vld [vmem:[%s10] sm:$0xff]
    %v899 = vld [vmem:[%s10 + $0x8] sm:$0xff]
    %v900 = vld [vmem:[%s10 + $0x10] sm:$0xff]
    %v901 = vld [vmem:[%s10 + $0x18] sm:$0xff]
    %v902 = vld [vmem:[%s10 + $0x20] sm:$0xff]
    %v903 = vld [vmem:[%s10 + $0x28] sm:$0xff]
    %v904 = vld [vmem:[%s10 + $0x30] sm:$0xff]
    %v905 = vld [vmem:[%s10 + $0x38] sm:$0xff]
    %v906 = vld [vmem:[%s10 + $0x40] sm:$0xff]
    %v907 = vld [vmem:[%s10 + $0x48] sm:$0xff]
    %v908 = vld [vmem:[%s10 + $0x50] sm:$0xff]
    %v909 = vld [vmem:[%s10 + $0x58] sm:$0xff]
    %v910 = vld [vmem:[%s10 + $0x60] sm:$0xff]
    %v911 = vld [vmem:[%s10 + $0x68] sm:$0xff]
    %v912 = vld [vmem:[%s10 + $0x70] sm:$0xff]
    %v913 = vld [vmem:[%s10 + $0x78] sm:$0xff]
    %v914 = vld [vmem:[%s10 + $0x80] sm:$0xff]
    %v915 = vld [vmem:[%s10 + $0x88] sm:$0xff]
    %v916 = vld [vmem:[%s10 + $0x90] sm:$0xff]
    %v917 = vld [vmem:[%s10 + $0x98] sm:$0xff]
    %v918 = vld [vmem:[%s10 + $0xa0] sm:$0xff]
    %v919 = vld [vmem:[%s10 + $0xa8] sm:$0xff]
    %v920 = vld [vmem:[%s10 + $0xb0] sm:$0xff]
    %v921 = vld [vmem:[%s10 + $0xb8] sm:$0xff]
    %v923 = vsel %vm457, %v880, 0
    %v926 = vsel %vm457, %v885, 0
    %v929 = vsel %vm457, %v890, 0
    %v932 = vsel %vm457, %v895, 0
    %934 = vmatprep.subr.mxu0 0.0
    %935 = vmatpush1.msra.mxu0 0.0
    %936 = vmatprep.subr.mxu0 0.0
    %937 = vmatpush1.msra.mxu0 0.0
    %938 = vmatprep.subr.mxu0 0.0
    %939 = vmatpush1.msra.mxu0 0.0
    %940 = vmatprep.subr.mxu0 0.0
    %941 = vmatpush1.msra.mxu0 0.0
    %942 = vmatprep.subr.mxu0 0.0
    %943 = vmatpush1.msra.mxu0 0.0
    %944 = vmatprep.subr.mxu0 0.0
    %945 = vmatpush1.msra.mxu0 0.0
    %946 = vmatprep.subr.mxu0 0.0
    %947 = vmatpush1.msra.mxu0 0.0
    %948 = vmatprep.subr.mxu0 0.0
    %949 = vmatpush1.msra.mxu0 0.0
    %950 = vmatprep.subr.mxu0 0.0
    %951 = vmatpush1.msra.mxu0 %v913
    %952 = vmatprep.subr.mxu0 0.0
    %953 = vmatpush1.msra.mxu0 %v912
    %954 = vmatprep.subr.mxu0 0.0
    %955 = vmatpush1.msra.mxu0 %v911
    %956 = vmatprep.subr.mxu0 0.0
    %957 = vmatpush1.msra.mxu0 %v910
    %958 = vmatprep.subr.mxu0 0.0
    %959 = vmatpush1.msra.mxu0 %v909
    %960 = vmatprep.subr.mxu0 0.0
    %961 = vmatpush1.msra.mxu0 %v908
    %962 = vmatprep.subr.mxu0 0.0
    %963 = vmatpush1.msra.mxu0 %v907
    %964 = vmatprep.subr.mxu0 0.0
    %965 = vmatpush1.msra.mxu0 %v906
    %966 = vmatprep.subr.mxu0 0.0
    %967 = vmatpush2.msra.mxu0 0.0
    %968 = vmatprep.subr.mxu0 0.0
    %969 = vmatpush2.msra.mxu0 0.0
    %970 = vmatprep.subr.mxu0 0.0
    %971 = vmatpush2.msra.mxu0 0.0
    %972 = vmatprep.subr.mxu0 0.0
    %973 = vmatpush2.msra.mxu0 0.0
    %974 = vmatprep.subr.mxu0 0.0
    %975 = vmatpush2.msra.mxu0 0.0
    %976 = vmatprep.subr.mxu0 0.0
    %977 = vmatpush2.msra.mxu0 0.0
    %978 = vmatprep.subr.mxu0 0.0
    %979 = vmatpush2.msra.mxu0 0.0
    %980 = vmatprep.subr.mxu0 0.0
    %981 = vmatpush2.msra.mxu0 0.0
    %982 = vmatprep.subr.mxu0 0.0
    %983 = vmatpush2.msra.mxu0 0.0
    %984 = vmatprep.subr.mxu0 0.0
    %985 = vmatpush2.msra.mxu0 0.0
    %986 = vmatprep.subr.mxu0 0.0
    %987 = vmatpush2.msra.mxu0 0.0
    %988 = vmatprep.subr.mxu0 0.0
    %989 = vmatpush2.msra.mxu0 0.0
    %990 = vmatprep.subr.mxu0 0.0
    %991 = vmatpush2.msra.mxu0 0.0
    %992 = vmatprep.subr.mxu0 0.0
    %993 = vmatpush2.msra.mxu0 0.0
    %994 = vmatprep.subr.mxu0 0.0
    %995 = vmatpush2.msra.mxu0 0.0
    %996 = vmatprep.subr.mxu0 0.0
    %997 = vmatpush2.msra.mxu0 0.0
    %998 = vmatprep.mubr.f32.mxu0 0.0
    %999 = vmatmul.mubr.f32.gmra.mxu0 %v923
    %v1000 = vpop.f32.mrf.mxu0
    %v1001 = vadd.f32 0.0, %v1000
    %v1002 = vpop.f32.mrf.mxu0
    %1003 = vmatprep.mubr.f32.mxu0 0.0
    %1004 = vmatmul.mubr.f32.gmra.mxu0 %v926
    %v1005 = vpop.f32.mrf.mxu0
    %v1006 = vadd.f32 0.0, %v1005
    %v1007 = vpop.f32.mrf.mxu0
    %1008 = vmatprep.mubr.f32.mxu0 0.0
    %1009 = vmatmul.mubr.f32.gmra.mxu0 %v929
    %v1010 = vpop.f32.mrf.mxu0
    %v1011 = vadd.f32 0.0, %v1010
    %v1012 = vpop.f32.mrf.mxu0
    %1013 = vmatprep.mubr.f32.mxu0 0.0
    %1014 = vmatmul.mubr.f32.gmra.mxu0 %v932
    %v1015 = vpop.f32.mrf.mxu0
    %v1016 = vadd.f32 0.0, %v1015
    %v1017 = vpop.f32.mrf.mxu0
    %1018 = vdwg.mxu0
    %1019 = vmatprep.subr.mxu0 0.0
    %1020 = vmatpush1.msra.mxu0 0.0
    %1021 = vmatprep.subr.mxu0 0.0
    %1022 = vmatpush1.msra.mxu0 0.0
    %1023 = vmatprep.subr.mxu0 0.0
    %1024 = vmatpush1.msra.mxu0 0.0
    %1025 = vmatprep.subr.mxu0 0.0
    %1026 = vmatpush1.msra.mxu0 0.0
    %1027 = vmatprep.subr.mxu0 0.0
    %1028 = vmatpush1.msra.mxu0 0.0
    %1029 = vmatprep.subr.mxu0 0.0
    %1030 = vmatpush1.msra.mxu0 0.0
    %1031 = vmatprep.subr.mxu0 0.0
    %1032 = vmatpush1.msra.mxu0 0.0
    %1033 = vmatprep.subr.mxu0 0.0
    %1034 = vmatpush1.msra.mxu0 0.0
    %1035 = vmatprep.subr.mxu0 0.0
    %1036 = vmatpush1.msra.mxu0 %v905
    %1037 = vmatprep.subr.mxu0 0.0
    %1038 = vmatpush1.msra.mxu0 %v904
    %1039 = vmatprep.subr.mxu0 0.0
    %1040 = vmatpush1.msra.mxu0 %v903
    %1041 = vmatprep.subr.mxu0 0.0
    %1042 = vmatpush1.msra.mxu0 %v902
    %1043 = vmatprep.subr.mxu0 0.0
    %1044 = vmatpush1.msra.mxu0 %v901
    %1045 = vmatprep.subr.mxu0 0.0
    %1046 = vmatpush1.msra.mxu0 %v900
    %1047 = vmatprep.subr.mxu0 0.0
    %1048 = vmatpush1.msra.mxu0 %v899
    %1049 = vmatprep.subr.mxu0 0.0
    %1050 = vmatpush1.msra.mxu0 %v898
    %1051 = vmatprep.subr.mxu0 0.0
    %1052 = vmatpush2.msra.mxu0 0.0
    %1053 = vmatprep.subr.mxu0 0.0
    %1054 = vmatpush2.msra.mxu0 0.0
    %1055 = vmatprep.subr.mxu0 0.0
    %1056 = vmatpush2.msra.mxu0 0.0
    %1057 = vmatprep.subr.mxu0 0.0
    %1058 = vmatpush2.msra.mxu0 0.0
    %1059 = vmatprep.subr.mxu0 0.0
    %1060 = vmatpush2.msra.mxu0 0.0
    %1061 = vmatprep.subr.mxu0 0.0
    %1062 = vmatpush2.msra.mxu0 0.0
    %1063 = vmatprep.subr.mxu0 0.0
    %1064 = vmatpush2.msra.mxu0 0.0
    %1065 = vmatprep.subr.mxu0 0.0
    %1066 = vmatpush2.msra.mxu0 0.0
    %1067 = vmatprep.subr.mxu0 0.0
    %1068 = vmatpush2.msra.mxu0 0.0
    %1069 = vmatprep.subr.mxu0 0.0
    %1070 = vmatpush2.msra.mxu0 0.0
    %1071 = vmatprep.subr.mxu0 0.0
    %1072 = vmatpush2.msra.mxu0 0.0
    %1073 = vmatprep.subr.mxu0 0.0
    %1074 = vmatpush2.msra.mxu0 0.0
    %1075 = vmatprep.subr.mxu0 0.0
    %1076 = vmatpush2.msra.mxu0 0.0
    %1077 = vmatprep.subr.mxu0 0.0
    %1078 = vmatpush2.msra.mxu0 0.0
    %1079 = vmatprep.subr.mxu0 0.0
    %1080 = vmatpush2.msra.mxu0 0.0
    %1081 = vmatprep.subr.mxu0 0.0
    %1082 = vmatpush2.msra.mxu0 0.0
    %1083 = vmatprep.mubr.f32.mxu0 0.0
    %1084 = vmatmul.mubr.f32.gmra.mxu0 %v459
    %v1085 = vpop.f32.mrf.mxu0
    %v1086 = vadd.f32 %v1001, %v1085
    %v1087 = vpop.f32.mrf.mxu0
    %1088 = vmatprep.mubr.f32.mxu0 0.0
    %1089 = vmatmul.mubr.f32.gmra.mxu0 %v462
    %v1090 = vpop.f32.mrf.mxu0
    %v1091 = vadd.f32 %v1006, %v1090
    %v1092 = vpop.f32.mrf.mxu0
    %1093 = vmatprep.mubr.f32.mxu0 0.0
    %1094 = vmatmul.mubr.f32.gmra.mxu0 %v465
    %v1095 = vpop.f32.mrf.mxu0
    %v1096 = vadd.f32 %v1011, %v1095
    %v1097 = vpop.f32.mrf.mxu0
    %1098 = vmatprep.mubr.f32.mxu0 0.0
    %1099 = vmatmul.mubr.f32.gmra.mxu0 %v468
    %v1100 = vpop.f32.mrf.mxu0
    %v1101 = vadd.f32 %v1016, %v1100
    %v1102 = vpop.f32.mrf.mxu0
    %1103 = vdwg.mxu0
    %v1105 = vsel %vm457, %v58, 0
    %v1108 = vsel %vm457, %v59, 0
    %v1111 = vsel %vm457, %v60, 0
    %v1114 = vsel %vm457, %v61, 0
    %1116 = vmatprep.subr.mxu0 0.0
    %1117 = vmatpush1.msra.mxu0 0.0
    %1118 = vmatprep.subr.mxu0 0.0
    %1119 = vmatpush1.msra.mxu0 0.0
    %1120 = vmatprep.subr.mxu0 0.0
    %1121 = vmatpush1.msra.mxu0 0.0
    %1122 = vmatprep.subr.mxu0 0.0
    %1123 = vmatpush1.msra.mxu0 0.0
    %1124 = vmatprep.subr.mxu0 0.0
    %1125 = vmatpush1.msra.mxu0 0.0
    %1126 = vmatprep.subr.mxu0 0.0
    %1127 = vmatpush1.msra.mxu0 0.0
    %1128 = vmatprep.subr.mxu0 0.0
    %1129 = vmatpush1.msra.mxu0 0.0
    %1130 = vmatprep.subr.mxu0 0.0
    %1131 = vmatpush1.msra.mxu0 0.0
    %1132 = vmatprep.subr.mxu0 0.0
    %1133 = vmatpush1.msra.mxu0 %v921
    %1134 = vmatprep.subr.mxu0 0.0
    %1135 = vmatpush1.msra.mxu0 %v920
    %1136 = vmatprep.subr.mxu0 0.0
    %1137 = vmatpush1.msra.mxu0 %v919
    %1138 = vmatprep.subr.mxu0 0.0
    %1139 = vmatpush1.msra.mxu0 %v918
    %1140 = vmatprep.subr.mxu0 0.0
    %1141 = vmatpush1.msra.mxu0 %v917
    %1142 = vmatprep.subr.mxu0 0.0
    %1143 = vmatpush1.msra.mxu0 %v916
    %1144 = vmatprep.subr.mxu0 0.0
    %1145 = vmatpush1.msra.mxu0 %v915
    %1146 = vmatprep.subr.mxu0 0.0
    %1147 = vmatpush1.msra.mxu0 %v914
    %1148 = vmatprep.subr.mxu0 0.0
    %1149 = vmatpush2.msra.mxu0 0.0
    %1150 = vmatprep.subr.mxu0 0.0
    %1151 = vmatpush2.msra.mxu0 0.0
    %1152 = vmatprep.subr.mxu0 0.0
    %1153 = vmatpush2.msra.mxu0 0.0
    %1154 = vmatprep.subr.mxu0 0.0
    %1155 = vmatpush2.msra.mxu0 0.0
    %1156 = vmatprep.subr.mxu0 0.0
    %1157 = vmatpush2.msra.mxu0 0.0
    %1158 = vmatprep.subr.mxu0 0.0
    %1159 = vmatpush2.msra.mxu0 0.0
    %1160 = vmatprep.subr.mxu0 0.0
    %1161 = vmatpush2.msra.mxu0 0.0
    %1162 = vmatprep.subr.mxu0 0.0
    %1163 = vmatpush2.msra.mxu0 0.0
    %1164 = vmatprep.subr.mxu0 0.0
    %1165 = vmatpush2.msra.mxu0 0.0
    %1166 = vmatprep.subr.mxu0 0.0
    %1167 = vmatpush2.msra.mxu0 0.0
    %1168 = vmatprep.subr.mxu0 0.0
    %1169 = vmatpush2.msra.mxu0 0.0
    %1170 = vmatprep.subr.mxu0 0.0
    %1171 = vmatpush2.msra.mxu0 0.0
    %1172 = vmatprep.subr.mxu0 0.0
    %1173 = vmatpush2.msra.mxu0 0.0
    %1174 = vmatprep.subr.mxu0 0.0
    %1175 = vmatpush2.msra.mxu0 0.0
    %1176 = vmatprep.subr.mxu0 0.0
    %1177 = vmatpush2.msra.mxu0 0.0
    %1178 = vmatprep.subr.mxu0 0.0
    %1179 = vmatpush2.msra.mxu0 0.0
    %1180 = vmatprep.mubr.f32.mxu0 0.0
    %1181 = vmatmul.mubr.f32.gmra.mxu0 %v1105
    %v1182 = vpop.f32.mrf.mxu0
    %v1183 = vadd.f32 0.0, %v1182
    %v1184 = vpop.f32.mrf.mxu0
    %1185 = vmatprep.mubr.f32.mxu0 0.0
    %1186 = vmatmul.mubr.f32.gmra.mxu0 %v1108
    %v1187 = vpop.f32.mrf.mxu0
    %v1188 = vadd.f32 0.0, %v1187
    %v1189 = vpop.f32.mrf.mxu0
    %1190 = vmatprep.mubr.f32.mxu0 0.0
    %1191 = vmatmul.mubr.f32.gmra.mxu0 %v1111
    %v1192 = vpop.f32.mrf.mxu0
    %v1193 = vadd.f32 0.0, %v1192
    %v1194 = vpop.f32.mrf.mxu0
    %1195 = vmatprep.mubr.f32.mxu0 0.0
    %1196 = vmatmul.mubr.f32.gmra.mxu0 %v1114
    %v1197 = vpop.f32.mrf.mxu0
    %v1198 = vadd.f32 0.0, %v1197
    %v1199 = vpop.f32.mrf.mxu0
    %1200 = vdwg.mxu0
    %v1201 = vadd.f32 %v1086, %v1183
    %v1202 = vadd.f32 %v1091, %v1188
    %v1203 = vadd.f32 %v1096, %v1193
    %v1204 = vadd.f32 %v1101, %v1198
    %v1205 = vld [vmem:[%s11] sm:$0x1]
    %v1207 = vlaneseq
    %v1208 = vshrl.u32 %v1207, 7
    %v1209 = vsub.s32 0, %v1208
    %v1210 = vrot.slane %v1205, %v1209
    %v1212 = vadd.f32 %v1201, %v1210
    %v1213 = vadd.f32 %v1202, %v1210
    %v1214 = vadd.f32 %v1203, %v1210
    %v1215 = vadd.f32 %v1204, %v1210
    %v1216 = vld [vmem:[%s14] sm:$0x1]
    %v1217 = vld [vmem:[%s15] sm:$0x1]
    %v1218 = vsel %vm457, %v1212, 0.0
    %1219 = vadd.xlane.f32.xlu0 %v1218
    %v1220 = vpop.xlane.xlu0 %1219
    %v1221 = vsel %vm457, %v1213, 0.0
    %1222 = vadd.xlane.f32.xlu0 %v1221
    %v1223 = vpop.xlane.xlu0 %1222
    %v1224 = vsel %vm457, %v1214, 0.0
    %1225 = vadd.xlane.f32.xlu0 %v1224
    %v1226 = vpop.xlane.xlu0 %1225
    %v1227 = vsel %vm457, %v1215, 0.0
    %1228 = vadd.xlane.f32.xlu0 %v1227
    %v1229 = vpop.xlane.xlu0 %1228
    %v1230 = vmul.f32 %v1220, %v746
    %v1231 = vmul.f32 %v1223, %v746
    %v1232 = vmul.f32 %v1226, %v746
    %v1233 = vmul.f32 %v1229, %v746
    %v1234 = vsub.f32 %v1212, %v1230
    %v1235 = vsub.f32 %v1213, %v1231
    %v1236 = vsub.f32 %v1214, %v1232
    %v1237 = vsub.f32 %v1215, %v1233
    %v1238 = vmul.f32 %v1234, %v1234
    %v1239 = vmul.f32 %v1235, %v1235
    %v1240 = vmul.f32 %v1236, %v1236
    %v1241 = vmul.f32 %v1237, %v1237
    %v1242 = vsel %vm457, %v1238, 0.0
    %1243 = vadd.xlane.f32.xlu0 %v1242
    %v1244 = vpop.xlane.xlu0 %1243
    %v1245 = vsel %vm457, %v1239, 0.0
    %1246 = vadd.xlane.f32.xlu0 %v1245
    %v1247 = vpop.xlane.xlu0 %1246
    %v1248 = vsel %vm457, %v1240, 0.0
    %1249 = vadd.xlane.f32.xlu0 %v1248
    %v1250 = vpop.xlane.xlu0 %1249
    %v1251 = vsel %vm457, %v1241, 0.0
    %1252 = vadd.xlane.f32.xlu0 %v1251
    %v1253 = vpop.xlane.xlu0 %1252
    %v1254 = vmul.f32 %v1244, %v746
    %v1255 = vmul.f32 %v1247, %v746
    %v1256 = vmul.f32 %v1250, %v746
    %v1257 = vmul.f32 %v1253, %v746
    %v1258 = vadd.f32 %v1254, 1e-05
    %v1259 = vadd.f32 %v1255, 1e-05
    %v1260 = vadd.f32 %v1256, 1e-05
    %v1261 = vadd.f32 %v1257, 1e-05
    %v1262 = vrsqrt.pop %v1258
    %v1263 = vrsqrt.pop %v1259
    %v1264 = vrsqrt.pop %v1260
    %v1265 = vrsqrt.pop %v1261
    %v1266 = vmul.f32 %v1234, %v1262
    %v1267 = vmul.f32 %v1235, %v1263
    %v1268 = vmul.f32 %v1236, %v1264
    %v1269 = vmul.f32 %v1237, %v1265
    %v1271 = vlaneseq
    %v1272 = vshrl.u32 %v1271, 7
    %v1273 = vsub.s32 0, %v1272
    %v1274 = vrot.slane %v1216, %v1273
    %v1276 = vmul.f32 %v1266, %v1274
    %v1277 = vmul.f32 %v1267, %v1274
    %v1278 = vmul.f32 %v1268, %v1274
    %v1279 = vmul.f32 %v1269, %v1274
    %v1281 = vlaneseq
    %v1282 = vshrl.u32 %v1281, 7
    %v1283 = vsub.s32 0, %v1282
    %v1284 = vrot.slane %v1217, %v1283
    %v1286 = vadd.f32 %v1276, %v1284
    %v1287 = vadd.f32 %v1277, %v1284
    %v1288 = vadd.f32 %v1278, %v1284
    %v1289 = vadd.f32 %v1279, %v1284
    %v1290 = vsub.f32 0.0, %v1286
    %v1291 = vsub.f32 0.0, %v1287
    %v1292 = vsub.f32 0.0, %v1288
    %v1293 = vsub.f32 0.0, %v1289
    %v1294 = vmul.f32 %v1290, 1.442695
    %v1295 = vpow.pop %v1294
    %v1296 = vmul.f32 %v1291, 1.442695
    %v1297 = vpow.pop %v1296
    %v1298 = vmul.f32 %v1292, 1.442695
    %v1299 = vpow.pop %v1298
    %v1300 = vmul.f32 %v1293, 1.442695
    %v1301 = vpow.pop %v1300
    %v1302 = vadd.f32 %v1295, 1.0
    %v1303 = vadd.f32 %v1297, 1.0
    %v1304 = vadd.f32 %v1299, 1.0
    %v1305 = vadd.f32 %v1301, 1.0
    %v1306 = vrcp.pop %v1302
    %v1307 = vmul.f32 1.0, %v1306
    %v1308 = vrcp.pop %v1303
    %v1309 = vmul.f32 1.0, %v1308
    %v1310 = vrcp.pop %v1304
    %v1311 = vmul.f32 1.0, %v1310
    %v1312 = vrcp.pop %v1305
    %v1313 = vmul.f32 1.0, %v1312
    %v1314 = vmul.f32 %v1286, %v1307
    %v1315 = vmul.f32 %v1287, %v1309
    %v1316 = vmul.f32 %v1288, %v1311
    %v1317 = vmul.f32 %v1289, %v1313
    %v1318 = vadd.f32 %v58, %v1314
    %v1319 = vadd.f32 %v59, %v1315
    %v1320 = vadd.f32 %v60, %v1316
    %v1321 = vadd.f32 %v61, %v1317
    %1322 = vst.msk [vmem:[#allocation2] sm:$0xff] %vm457, %v1318
    %1323 = vst.msk [vmem:[#allocation2 + $0x8] sm:$0xff] %vm457, %v1319
    %1324 = vst.msk [vmem:[#allocation2 + $0x10] sm:$0xff] %vm457, %v1320
    %1325 = vst.msk [vmem:[#allocation2 + $0x18] sm:$0xff] %vm457, %v1321
    // Predicated region
    $region66: #{algnn_forward.10} parent=1 // pred_check
      _
    $region67: #{algnn_forward.10} parent=1 // pred_check_branch
      %1327 = sbr.rel (0) target = $region69
    $region68: #{algnn_forward.10} parent=1 // pred_region
      _
    $region69: #{algnn_forward.10} parent=1 // pred_fallthru
      _
    // Predicated region
    $region70: #{algnn_forward.10} parent=1 // pred_check
      _
    $region71: #{algnn_forward.10} parent=1 // pred_check_branch
      %1329 = sbr.rel (0) target = $region73
    $region72: #{algnn_forward.10} parent=1 // pred_region
      %s1331 = ssub.s32 512, 512
      %1332 = vsyncadd [#allocation3], %s1331
      %s1333 = sshll.u32 [#allocation2], 4
      %s1334 = int_to_ptr.vmem [resolvable:$true] %s1333
      %1339 = dma.vmem_to_hbm [thread:$0]  %s1334, 512, %s17, [#allocation3], 128, 128, 8
    $region73: #{algnn_forward.10} parent=1 // pred_fallthru
      _
    // Predicated region
    $region74: #{algnn_forward.10} parent=1 // pred_check
      _
    $region75: #{algnn_forward.10} parent=1 // pred_check_branch
      %1341 = sbr.rel (0) target = $region77
    $region76: #{algnn_forward.10} parent=1 // pred_region
      _
    $region77: #{algnn_forward.10} parent=1 // pred_fallthru
      _
    // Predicated region
    $region78: #{algnn_forward.10} parent=1 // pred_check
      _
    $region79: #{algnn_forward.10} parent=1 // pred_check_branch
      %1343 = sbr.rel (0) target = $region81
    $region80: #{algnn_forward.10} parent=1 // pred_region
      %1344 = dma.done [#allocation3], 512
    $region81: #{algnn_forward.10} parent=1 // pred_fallthru
      _
    %1345 = vsyncpa [#allocation3], 1

// kernel: algnn_forward.11
$region0: #{algnn_forward.11}
  #allocation0 [shape = 'u32[]', space=smem, size = 0x4, offset = 0x4, fixed_abs, tag = 'smem constant byte address 0x4 - core index']
  #allocation1 [shape = 'u32[144,128]{1,0:T(1,128)}', space=vmem, size = 0x12000, scoped, tag = 'internal scratch']
  #allocation2 [shape = 'f32[1,1]{1,0:T(1,128)S(1)}', space=vmem, size = 0x200, scoped, tag = 'scoped memory for algnn_forward.11']
  %s0 = inlined_call_operand.vmem [shape: s32[1,16], index: 0, kind: input, shape index: {}]
  %s1 = inlined_call_operand.vmem [shape: f32[16,64], index: 1, kind: input, shape index: {}]
  %s2 = inlined_call_operand.vmem [shape: f32[1,64], index: 2, kind: input, shape index: {}]
  %s3 = inlined_call_operand.vmem [shape: f32[1,64], index: 3, kind: input, shape index: {}]
  %s4 = inlined_call_operand.vmem [shape: f32[64,32], index: 4, kind: input, shape index: {}]
  %s5 = inlined_call_operand.vmem [shape: f32[1,32], index: 5, kind: input, shape index: {}]
  %s6 = inlined_call_operand.vmem [shape: f32[32,1], index: 6, kind: input, shape index: {}]
  %s7 = inlined_call_operand.<no memory space> [shape: f32[1,1], index: 7, kind: input, shape index: {}]
  %s8 = inlined_call_operand.vmem [shape: f32[2,1], index: 8, kind: output, shape index: {}]
  %s9 = sld [smem:[#allocation0]]
  $region42: #{algnn_forward.11} parent=0
    _
  %s11 = ssub.s32 1, %s9
  %s12 = scalar_select 0, %s11, %s9
  %v13 = vstv %s7
  %14 = vst [vmem:[#allocation2] sm:$0x1] %v13
  // Predicated region
  $region2: #{algnn_forward.11} parent=0 // pred_check
    _
  $region3: #{algnn_forward.11} parent=0 // pred_check_branch
    %16 = sbr.rel (0) target = $region5
  $region4: #{algnn_forward.11} parent=0 // pred_region
    _
  $region5: #{algnn_forward.11} parent=0 // pred_fallthru
    _
  // Predicated region
  $region6: #{algnn_forward.11} parent=0 // pred_check
    _
  $region7: #{algnn_forward.11} parent=0 // pred_check_branch
    %18 = sbr.rel (0) target = $region9
  $region8: #{algnn_forward.11} parent=0 // pred_region
    _
  $region9: #{algnn_forward.11} parent=0 // pred_fallthru
    _
  // Predicated region
  $region10: #{algnn_forward.11} parent=0 // pred_check
    _
  $region11: #{algnn_forward.11} parent=0 // pred_check_branch
    %20 = sbr.rel (0) target = $region13
  $region12: #{algnn_forward.11} parent=0 // pred_region
    _
  $region13: #{algnn_forward.11} parent=0 // pred_fallthru
    _
  // Predicated region
  $region14: #{algnn_forward.11} parent=0 // pred_check
    _
  $region15: #{algnn_forward.11} parent=0 // pred_check_branch
    %22 = sbr.rel (0) target = $region17
  $region16: #{algnn_forward.11} parent=0 // pred_region
    _
  $region17: #{algnn_forward.11} parent=0 // pred_fallthru
    _
  // Predicated region
  $region18: #{algnn_forward.11} parent=0 // pred_check
    _
  $region19: #{algnn_forward.11} parent=0 // pred_check_branch
    %24 = sbr.rel (0) target = $region21
  $region20: #{algnn_forward.11} parent=0 // pred_region
    _
  $region21: #{algnn_forward.11} parent=0 // pred_fallthru
    _
  // Predicated region
  $region22: #{algnn_forward.11} parent=0 // pred_check
    _
  $region23: #{algnn_forward.11} parent=0 // pred_check_branch
    %26 = sbr.rel (0) target = $region25
  $region24: #{algnn_forward.11} parent=0 // pred_region
    _
  $region25: #{algnn_forward.11} parent=0 // pred_fallthru
    _
  // Predicated region
  $region26: #{algnn_forward.11} parent=0 // pred_check
    _
  $region27: #{algnn_forward.11} parent=0 // pred_check_branch
    %28 = sbr.rel (0) target = $region29
  $region28: #{algnn_forward.11} parent=0 // pred_region
    _
  $region29: #{algnn_forward.11} parent=0 // pred_fallthru
    _
  // Predicated region
  $region30: #{algnn_forward.11} parent=0 // pred_check
    _
  $region31: #{algnn_forward.11} parent=0 // pred_check_branch
    %30 = sbr.rel (0) target = $region33
  $region32: #{algnn_forward.11} parent=0 // pred_region
    _
  $region33: #{algnn_forward.11} parent=0 // pred_fallthru
    _
  %v31 = vld [vmem:[%s1] sm:$0xff]
  %v32 = vld [vmem:[%s1 + $0x8] sm:$0xff]
  %vm33 = vcmask 523264
  %v34 = vsel %vm33, %v31, 0.0
  %v35 = vsel %vm33, %v32, 0.0
  %v36 = vadd.f32 %v34, %v35
  %v37 = vrot.slane %v36, 4
  %v38 = vadd.f32 %v36, %v37
  %v39 = vrot.slane %v38, 2
  %v40 = vadd.f32 %v38, %v39
  %v41 = vrot.slane %v40, 1
  %v42 = vadd.f32 %v40, %v41
  %v43 = vrcp.pop 16.0
  %v44 = vmul.f32 %v42, %v43
  %v45 = vsub.f32 %v31, %v44
  %v46 = vsub.f32 %v32, %v44
  %v47 = vmul.f32 %v45, %v45
  %v48 = vmul.f32 %v46, %v46
  %v49 = vsel %vm33, %v47, 0.0
  %v50 = vsel %vm33, %v48, 0.0
  %v51 = vadd.f32 %v49, %v50
  %v52 = vrot.slane %v51, 4
  %v53 = vadd.f32 %v51, %v52
  %v54 = vrot.slane %v53, 2
  %v55 = vadd.f32 %v53, %v54
  %v56 = vrot.slane %v55, 1
  %v57 = vadd.f32 %v55, %v56
  %v58 = vmul.f32 %v57, %v43
  %v59 = vadd.f32 %v58, 1e-05
  %v60 = vrsqrt.pop %v59
  %v61 = vmul.f32 %v45, %v60
  %v62 = vmul.f32 %v46, %v60
  %v63 = vld [vmem:[%s2] sm:$0x1]
  %v65 = vlaneseq
  %v66 = vshrl.u32 %v65, 7
  %v67 = vsub.s32 0, %v66
  %v68 = vrot.slane %v63, %v67
  %v70 = vmul.f32 %v61, %v68
  %v71 = vmul.f32 %v62, %v68
  %v72 = vld [vmem:[%s3] sm:$0x1]
  %v74 = vlaneseq
  %v75 = vshrl.u32 %v74, 7
  %v76 = vsub.s32 0, %v75
  %v77 = vrot.slane %v72, %v76
  %v79 = vadd.f32 %v70, %v77
  %v80 = vadd.f32 %v71, %v77
  %v81 = vsub.f32 0.0, %v79
  %v82 = vsub.f32 0.0, %v80
  %v83 = vmul.f32 %v81, 1.442695
  %v84 = vpow.pop %v83
  %v85 = vmul.f32 %v82, 1.442695
  %v86 = vpow.pop %v85
  %v87 = vadd.f32 %v84, 1.0
  %v88 = vadd.f32 %v86, 1.0
  %v89 = vrcp.pop %v87
  %v90 = vmul.f32 1.0, %v89
  %v91 = vrcp.pop %v88
  %v92 = vmul.f32 1.0, %v91
  %v93 = vmul.f32 %v79, %v90
  %v94 = vmul.f32 %v80, %v92
  %v95 = vld [vmem:[%s4] sm:$0xff]
  %v96 = vld [vmem:[%s4 + $0x8] sm:$0xff]
  %v97 = vld [vmem:[%s4 + $0x10] sm:$0xff]
  %v98 = vld [vmem:[%s4 + $0x18] sm:$0xff]
  %v99 = vld [vmem:[%s4 + $0x20] sm:$0xff]
  %v100 = vld [vmem:[%s4 + $0x28] sm:$0xff]
  %v101 = vld [vmem:[%s4 + $0x30] sm:$0xff]
  %v102 = vld [vmem:[%s4 + $0x38] sm:$0xff]
  %v103 = vld [vmem:[%s5] sm:$0x1]
  %v105 = vlaneseq
  %v106 = vshrl.u32 %v105, 7
  %v107 = vsub.s32 0, %v106
  %v108 = vrot.slane %v103, %v107
  %v111 = vsel %vm33, %v93, 0
  %v114 = vsel %vm33, %v94, 0
  %116 = vmatprep.subr.mxu0 0.0
  %117 = vmatpush1.msra.mxu0 0.0
  %118 = vmatprep.subr.mxu0 0.0
  %119 = vmatpush1.msra.mxu0 0.0
  %120 = vmatprep.subr.mxu0 0.0
  %121 = vmatpush1.msra.mxu0 0.0
  %122 = vmatprep.subr.mxu0 0.0
  %123 = vmatpush1.msra.mxu0 0.0
  %124 = vmatprep.subr.mxu0 0.0
  %125 = vmatpush1.msra.mxu0 0.0
  %126 = vmatprep.subr.mxu0 0.0
  %127 = vmatpush1.msra.mxu0 0.0
  %128 = vmatprep.subr.mxu0 0.0
  %129 = vmatpush1.msra.mxu0 0.0
  %130 = vmatprep.subr.mxu0 0.0
  %131 = vmatpush1.msra.mxu0 0.0
  %132 = vmatprep.subr.mxu0 0.0
  %133 = vmatpush1.msra.mxu0 %v102
  %134 = vmatprep.subr.mxu0 0.0
  %135 = vmatpush1.msra.mxu0 %v101
  %136 = vmatprep.subr.mxu0 0.0
  %137 = vmatpush1.msra.mxu0 %v100
  %138 = vmatprep.subr.mxu0 0.0
  %139 = vmatpush1.msra.mxu0 %v99
  %140 = vmatprep.subr.mxu0 0.0
  %141 = vmatpush1.msra.mxu0 %v98
  %142 = vmatprep.subr.mxu0 0.0
  %143 = vmatpush1.msra.mxu0 %v97
  %144 = vmatprep.subr.mxu0 0.0
  %145 = vmatpush1.msra.mxu0 %v96
  %146 = vmatprep.subr.mxu0 0.0
  %147 = vmatpush1.msra.mxu0 %v95
  %148 = vmatprep.subr.mxu0 0.0
  %149 = vmatpush2.msra.mxu0 0.0
  %150 = vmatprep.subr.mxu0 0.0
  %151 = vmatpush2.msra.mxu0 0.0
  %152 = vmatprep.subr.mxu0 0.0
  %153 = vmatpush2.msra.mxu0 0.0
  %154 = vmatprep.subr.mxu0 0.0
  %155 = vmatpush2.msra.mxu0 0.0
  %156 = vmatprep.subr.mxu0 0.0
  %157 = vmatpush2.msra.mxu0 0.0
  %158 = vmatprep.subr.mxu0 0.0
  %159 = vmatpush2.msra.mxu0 0.0
  %160 = vmatprep.subr.mxu0 0.0
  %161 = vmatpush2.msra.mxu0 0.0
  %162 = vmatprep.subr.mxu0 0.0
  %163 = vmatpush2.msra.mxu0 0.0
  %164 = vmatprep.subr.mxu0 0.0
  %165 = vmatpush2.msra.mxu0 0.0
  %166 = vmatprep.subr.mxu0 0.0
  %167 = vmatpush2.msra.mxu0 0.0
  %168 = vmatprep.subr.mxu0 0.0
  %169 = vmatpush2.msra.mxu0 0.0
  %170 = vmatprep.subr.mxu0 0.0
  %171 = vmatpush2.msra.mxu0 0.0
  %172 = vmatprep.subr.mxu0 0.0
  %173 = vmatpush2.msra.mxu0 0.0
  %174 = vmatprep.subr.mxu0 0.0
  %175 = vmatpush2.msra.mxu0 0.0
  %176 = vmatprep.subr.mxu0 0.0
  %177 = vmatpush2.msra.mxu0 0.0
  %178 = vmatprep.subr.mxu0 0.0
  %179 = vmatpush2.msra.mxu0 0.0
  %180 = vmatprep.mubr.f32.mxu0 0.0
  %181 = vmatmul.mubr.f32.gmra.mxu0 %v111
  %v182 = vpop.f32.mrf.mxu0
  %v183 = vadd.f32 %v108, %v182
  %v184 = vpop.f32.mrf.mxu0
  %185 = vmatprep.mubr.f32.mxu0 0.0
  %186 = vmatmul.mubr.f32.gmra.mxu0 %v114
  %v187 = vpop.f32.mrf.mxu0
  %v188 = vadd.f32 %v108, %v187
  %v189 = vpop.f32.mrf.mxu0
  %190 = vdwg.mxu0
  %v191 = vsub.f32 0.0, %v183
  %v192 = vsub.f32 0.0, %v188
  %v193 = vmul.f32 %v191, 1.442695
  %v194 = vpow.pop %v193
  %v195 = vmul.f32 %v192, 1.442695
  %v196 = vpow.pop %v195
  %v197 = vadd.f32 %v194, 1.0
  %v198 = vadd.f32 %v196, 1.0
  %v199 = vrcp.pop %v197
  %v200 = vmul.f32 1.0, %v199
  %v201 = vrcp.pop %v198
  %v202 = vmul.f32 1.0, %v201
  %v203 = vmul.f32 %v183, %v200
  %v204 = vmul.f32 %v188, %v202
  %v205 = vlaneseq
  %v206 = vshrl.u32 %v205, 7
  %v207 = vld [vmem:[%s0] sm:$0x1]
  %v208 = vlaneseq
  %v209 = vshrl.u32 %v208, 7
  %v210 = vsub.s32 0, %v209
  %v211 = vrot.slane %v207, %v210
  %vm212 = vcmp.eq.s32.totalorder %v206, %v211
  %v213 = vsel %vm212, 1, 0
  %v214 = vcvt.s32.f32 %v213
  %vm215 = vcmask 123904
  %v216 = vsel %vm215, %v214, 0.0
  %217 = vadd.xlane.f32.xlu0 %v216
  %v218 = vpop.xlane.xlu0 %217
  %vm219 = vcmask 130048
  %v221 = vsel %vm219, %v214, 0
  %223 = vmatprep.subr.mxu0 0.0
  %224 = vmatpush1.msra.mxu0 0.0
  %225 = vmatprep.subr.mxu0 0.0
  %226 = vmatpush1.msra.mxu0 0.0
  %227 = vmatprep.subr.mxu0 0.0
  %228 = vmatpush1.msra.mxu0 0.0
  %229 = vmatprep.subr.mxu0 0.0
  %230 = vmatpush1.msra.mxu0 0.0
  %231 = vmatprep.subr.mxu0 0.0
  %232 = vmatpush1.msra.mxu0 0.0
  %233 = vmatprep.subr.mxu0 0.0
  %234 = vmatpush1.msra.mxu0 0.0
  %235 = vmatprep.subr.mxu0 0.0
  %236 = vmatpush1.msra.mxu0 0.0
  %237 = vmatprep.subr.mxu0 0.0
  %238 = vmatpush1.msra.mxu0 0.0
  %239 = vmatprep.subr.mxu0 0.0
  %240 = vmatpush1.msra.mxu0 0.0
  %241 = vmatprep.subr.mxu0 0.0
  %242 = vmatpush1.msra.mxu0 0.0
  %243 = vmatprep.subr.mxu0 0.0
  %244 = vmatpush1.msra.mxu0 0.0
  %245 = vmatprep.subr.mxu0 0.0
  %246 = vmatpush1.msra.mxu0 0.0
  %247 = vmatprep.subr.mxu0 0.0
  %248 = vmatpush1.msra.mxu0 0.0
  %249 = vmatprep.subr.mxu0 0.0
  %250 = vmatpush1.msra.mxu0 0.0
  %251 = vmatprep.subr.mxu0 0.0
  %252 = vmatpush1.msra.mxu0 %v204
  %253 = vmatprep.subr.mxu0 0.0
  %254 = vmatpush1.msra.mxu0 %v203
  %255 = vmatprep.subr.mxu0 0.0
  %256 = vmatpush2.msra.mxu0 0.0
  %257 = vmatprep.subr.mxu0 0.0
  %258 = vmatpush2.msra.mxu0 0.0
  %259 = vmatprep.subr.mxu0 0.0
  %260 = vmatpush2.msra.mxu0 0.0
  %261 = vmatprep.subr.mxu0 0.0
  %262 = vmatpush2.msra.mxu0 0.0
  %263 = vmatprep.subr.mxu0 0.0
  %264 = vmatpush2.msra.mxu0 0.0
  %265 = vmatprep.subr.mxu0 0.0
  %266 = vmatpush2.msra.mxu0 0.0
  %267 = vmatprep.subr.mxu0 0.0
  %268 = vmatpush2.msra.mxu0 0.0
  %269 = vmatprep.subr.mxu0 0.0
  %270 = vmatpush2.msra.mxu0 0.0
  %271 = vmatprep.subr.mxu0 0.0
  %272 = vmatpush2.msra.mxu0 0.0
  %273 = vmatprep.subr.mxu0 0.0
  %274 = vmatpush2.msra.mxu0 0.0
  %275 = vmatprep.subr.mxu0 0.0
  %276 = vmatpush2.msra.mxu0 0.0
  %277 = vmatprep.subr.mxu0 0.0
  %278 = vmatpush2.msra.mxu0 0.0
  %279 = vmatprep.subr.mxu0 0.0
  %280 = vmatpush2.msra.mxu0 0.0
  %281 = vmatprep.subr.mxu0 0.0
  %282 = vmatpush2.msra.mxu0 0.0
  %283 = vmatprep.subr.mxu0 0.0
  %284 = vmatpush2.msra.mxu0 0.0
  %285 = vmatprep.subr.mxu0 0.0
  %286 = vmatpush2.msra.mxu0 0.0
  %287 = vmatprep.mubr.f32.mxu0 0.0
  %288 = vmatmul.mubr.f32.gmra.mxu0 %v221
  %v289 = vpop.f32.mrf.mxu0
  %v290 = vadd.f32 0.0, %v289
  %v291 = vpop.f32.mrf.mxu0
  %292 = vdwg.mxu0
  %v293 = vrcp.pop %v218
  %v294 = vmul.f32 %v290, %v293
  %v295 = vld [vmem:[%s6] sm:$0xff]
  %v296 = vld [vmem:[%s6 + $0x8] sm:$0xff]
  %v297 = vld [vmem:[%s6 + $0x10] sm:$0xff]
  %v298 = vld [vmem:[%s6 + $0x18] sm:$0xff]
  %v299 = vld [vmem:[#allocation2] sm:$0x1]
  %v301 = vlaneseq
  %v302 = vshrl.u32 %v301, 7
  %v303 = vsub.s32 0, %v302
  %v304 = vrot.slane %v299, %v303
  %vm306 = vcmask 261120
  %v308 = vsel %vm306, %v294, 0
  %310 = vmatprep.subr.mxu0 0.0
  %311 = vmatpush1.msra.mxu0 0.0
  %312 = vmatprep.subr.mxu0 0.0
  %313 = vmatpush1.msra.mxu0 0.0
  %314 = vmatprep.subr.mxu0 0.0
  %315 = vmatpush1.msra.mxu0 0.0
  %316 = vmatprep.subr.mxu0 0.0
  %317 = vmatpush1.msra.mxu0 0.0
  %318 = vmatprep.subr.mxu0 0.0
  %319 = vmatpush1.msra.mxu0 0.0
  %320 = vmatprep.subr.mxu0 0.0
  %321 = vmatpush1.msra.mxu0 0.0
  %322 = vmatprep.subr.mxu0 0.0
  %323 = vmatpush1.msra.mxu0 0.0
  %324 = vmatprep.subr.mxu0 0.0
  %325 = vmatpush1.msra.mxu0 0.0
  %326 = vmatprep.subr.mxu0 0.0
  %327 = vmatpush1.msra.mxu0 0.0
  %328 = vmatprep.subr.mxu0 0.0
  %329 = vmatpush1.msra.mxu0 0.0
  %330 = vmatprep.subr.mxu0 0.0
  %331 = vmatpush1.msra.mxu0 0.0
  %332 = vmatprep.subr.mxu0 0.0
  %333 = vmatpush1.msra.mxu0 0.0
  %334 = vmatprep.subr.mxu0 0.0
  %335 = vmatpush1.msra.mxu0 %v298
  %336 = vmatprep.subr.mxu0 0.0
  %337 = vmatpush1.msra.mxu0 %v297
  %338 = vmatprep.subr.mxu0 0.0
  %339 = vmatpush1.msra.mxu0 %v296
  %340 = vmatprep.subr.mxu0 0.0
  %341 = vmatpush1.msra.mxu0 %v295
  %342 = vmatprep.subr.mxu0 0.0
  %343 = vmatpush2.msra.mxu0 0.0
  %344 = vmatprep.subr.mxu0 0.0
  %345 = vmatpush2.msra.mxu0 0.0
  %346 = vmatprep.subr.mxu0 0.0
  %347 = vmatpush2.msra.mxu0 0.0
  %348 = vmatprep.subr.mxu0 0.0
  %349 = vmatpush2.msra.mxu0 0.0
  %350 = vmatprep.subr.mxu0 0.0
  %351 = vmatpush2.msra.mxu0 0.0
  %352 = vmatprep.subr.mxu0 0.0
  %353 = vmatpush2.msra.mxu0 0.0
  %354 = vmatprep.subr.mxu0 0.0
  %355 = vmatpush2.msra.mxu0 0.0
  %356 = vmatprep.subr.mxu0 0.0
  %357 = vmatpush2.msra.mxu0 0.0
  %358 = vmatprep.subr.mxu0 0.0
  %359 = vmatpush2.msra.mxu0 0.0
  %360 = vmatprep.subr.mxu0 0.0
  %361 = vmatpush2.msra.mxu0 0.0
  %362 = vmatprep.subr.mxu0 0.0
  %363 = vmatpush2.msra.mxu0 0.0
  %364 = vmatprep.subr.mxu0 0.0
  %365 = vmatpush2.msra.mxu0 0.0
  %366 = vmatprep.subr.mxu0 0.0
  %367 = vmatpush2.msra.mxu0 0.0
  %368 = vmatprep.subr.mxu0 0.0
  %369 = vmatpush2.msra.mxu0 0.0
  %370 = vmatprep.subr.mxu0 0.0
  %371 = vmatpush2.msra.mxu0 0.0
  %372 = vmatprep.subr.mxu0 0.0
  %373 = vmatpush2.msra.mxu0 0.0
  %374 = vmatprep.mubr.f32.mxu0 0.0
  %375 = vmatmul.mubr.f32.gmra.mxu0 %v308
  %v376 = vpop.f32.mrf.mxu0
  %v377 = vadd.f32 %v304, %v376
  %v378 = vpop.f32.mrf.mxu0
  %379 = vdwg.mxu0
  %vm380 = vcmask 1024
  %381 = vst.msk [vmem:[%s8] sm:$0x3] %vm380, %v377
  // Predicated region
  $region34: #{algnn_forward.11} parent=0 // pred_check
    _
  $region35: #{algnn_forward.11} parent=0 // pred_check_branch
    %383 = sbr.rel (0) target = $region37
  $region36: #{algnn_forward.11} parent=0 // pred_region
    _
  $region37: #{algnn_forward.11} parent=0 // pred_fallthru
    _
  // Predicated region
  $region38: #{algnn_forward.11} parent=0 // pred_check
    _
  $region39: #{algnn_forward.11} parent=0 // pred_check_branch
    %385 = sbr.rel (0) target = $region41
  $region40: #{algnn_forward.11} parent=0 // pred_region
    _
  $region41: #{algnn_forward.11} parent=0 // pred_fallthru
    _

</llo_original>
